<compile_context>
chip_gen: v5e
topology: v5e:2x2
jax: 0.10.0
libtpu: 0.0.40
codegen_flags: <defaults>
</compile_context>

<pallas_src>
import numpy as np
import jax
import jax.numpy as jnp
from jax.experimental import pallas as pl
from jax.experimental.pallas import tpu as pltpu

# ----------------------------- static config --------------------------------
B, T, C, H, W = 2, 3, 4, 16, 16          # batch, time frames, coils, height, width
IBS = 2                                  # i_buffer_size
KBS = 2                                  # k_buffer_size
I_BUFFER_MODE = True
K_BUFFER_MODE = True
DYNAMIC_TYPE = "2D"
N_UNROLL = 2                             # number of (kspace_net, image_net) pairs

CIN_K = 2 * (KBS + 2)                    # kspace_net input channels (buffer + fwd + ref)
HID_K = 8
COUT_K = 2 * KBS
CIN_I = 2 * (IBS + 1)                    # image_net input channels (c == 1)
HID_I = 8
COUT_I = 2 * IBS

N = B * T                                # total frames (all in one grid step)
CN = C * N
HW = H * W
PAD_I1 = (-(CIN_I * N)) % 8              # zero-pad so 3x3-tap slabs are 8-row aligned
FI_ROWS = CIN_I * N + PAD_I1

assert I_BUFFER_MODE and K_BUFFER_MODE and DYNAMIC_TYPE == "2D"
# TODO(synk): the 'XF'/'XT' xfyf_transform path (MWCNN padding + temporal FFT +
# weight sharing) is not translated; only the '2D' dynamic mode is implemented.

# Input-channel permutations so the kernel consumes whole, sublane-aligned slabs.
# kspace net: module order [kb_re.., fwd_re, ref_re, kb_im.., fwd_im, ref_im]
#             kernel order [kb(unsliced), fwd_re, fwd_im, ref_re, ref_im]
K_PERM = (list(range(KBS)) + list(range(KBS + 2, 2 * KBS + 2))
          + [KBS, 2 * KBS + 2, KBS + 1, 2 * KBS + 3])
# image net: module order [ib_re.., bwd_re, ib_im.., bwd_im]
#            kernel order [ib(unsliced), bwd_re, bwd_im]
I_PERM = list(range(IBS)) + list(range(IBS + 1, 2 * IBS + 1)) + [IBS, 2 * IBS + 1]


# ----------------- centered 2-D DFT (Kronecker) matrix for fft2c ------------
def _centered_dft(n):
    eye = np.eye(n)
    x = np.fft.ifftshift(eye, axes=0)
    f = np.fft.fft(x, axis=0, norm="ortho")
    return np.fft.fftshift(f, axes=0)            # complex [n, n]


# X_row_flat @ _K2D == row-major flatten of fft2c(X).  ifft2c uses conj(_K2D).
_K2D = np.kron(_centered_dft(H), _centered_dft(W)).T      # [HW, HW]
_KT_R = jnp.asarray(_K2D.real, jnp.float32)
_KT_I = jnp.asarray(_K2D.imag, jnp.float32)


# ----------------------- 3x3-conv tap boundary masks -------------------------
def _tap_masks():
    hh = np.arange(H)[:, None]
    ww = np.arange(W)[None, :]
    ms = []
    for k in range(9):
        oy, ox = k // 3 - 1, k % 3 - 1
        valid = (hh + oy >= 0) & (hh + oy < H) & (ww + ox >= 0) & (ww + ox < W)
        ms.append(valid.reshape(-1).astype(np.float32))
    return jnp.asarray(np.stack(ms)[:, None, :])            # [9, 1, HW]


_TAPS = _tap_masks()


# ------------------------ coil-combine summation matrix ----------------------
def _sum_matrix():
    s = np.zeros((2 * N, 2 * CN), np.float32)
    for f in range(N):
        for c in range(C):
            s[f, c * N + f] = 1.0            # sum real parts over coils
            s[N + f, CN + c * N + f] = 1.0   # sum imag parts over coils
    return jnp.asarray(s)


_SUM = _sum_matrix()


# ------------------------------ fused kernel ---------------------------------
def _fused_unrolls_kernel(ib_ref, kb_ref, rk_ref, mask_ref, sens_ref,
                          ktr_ref, kti_ref, summ_ref,
                          m1k_ref, b1k_ref, m2k_ref, b2k_ref,
                          m1i_ref, b1i_ref, m2i_ref, b2i_ref, taps_ref,
                          ib_out_ref, kb_out_ref):
    f32 = jnp.float32

    ib = ib_ref[...]                 # [2*IBS*N, HW]   rows: channel-major, frame-minor
    kb = kb_ref[...]                 # [2*KBS*CN, HW]  rows: channel-major, (coil,frame)
    rk = rk_ref[...]                 # [2*CN, HW]
    sens = sens_ref[...]             # [2*CN, HW]
    mask = mask_ref[...]             # [N, HW]
    ktr = ktr_ref[...]               # [HW, HW]  forward centered DFT (real)
    kti = kti_ref[...]               # [HW, HW]  forward centered DFT (imag)
    summ = summ_ref[...]             # [2N, 2CN] coil-combine matrix
    taps = taps_ref[...]             # [9, 1, HW] boundary masks per 3x3 tap

    s_re, s_im = sens[:CN], sens[CN:]
    mask_cn = jnp.tile(mask, (C, 1))                       # [CN, HW]

    def conv3x3(x, w_flat, bias):
        # out[o*N+f, p] = bias[o] + sum_{k,i} w[o,i,ky,kx] * x[i*N+f, p + off(k)]
        pieces = []
        for k in range(9):
            oy, ox = k // 3 - 1, k % 3 - 1
            off = oy * W + ox
            if off == 0:
                pieces.append(x)                           # center tap: no shift/mask
            else:
                pieces.append(pltpu.roll(x, (-off) % HW, axis=1) * taps[k])
        stack = jnp.concatenate(pieces, axis=0)            # [9*rows(x), HW]
        return jnp.dot(w_flat, stack, preferred_element_type=f32) + bias

    for u in range(N_UNROLL):
        # ------------------------ K-domain correction ------------------------
        # ForwardOperator: complex channel 0 of image buffer, per-coil sens multiply,
        # fft2c via merged DFT matmuls (shared 256x256 stationary operand), DC mask.
        img_re = jnp.tile(ib[0:N], (C, 1))                              # [CN, HW]
        img_im = jnp.tile(ib[IBS * N:(IBS + 1) * N], (C, 1))
        pr = img_re * s_re - img_im * s_im
        pi = img_re * s_im + img_im * s_re
        p_stk = jnp.concatenate([pr, pi], axis=0)                       # [2CN, HW]
        a = jnp.dot(p_stk, ktr, preferred_element_type=f32)
        b = jnp.dot(p_stk, kti, preferred_element_type=f32)
        kr = (a[:CN] - b[CN:]) * mask_cn
        ki = (b[:CN] + a[CN:]) * mask_cn

        # feat_k row order: [kb (unsliced), fwd_re, fwd_im, ref_re, ref_im]
        feat_k = jnp.concatenate([kb, kr, ki, rk], axis=0)              # [CIN_K*CN, HW]

        hid_k = jnp.maximum(
            jnp.dot(m1k_ref[u], feat_k, preferred_element_type=f32) + b1k_ref[u], 0.0)
        kb = jnp.dot(m2k_ref[u], hid_k, preferred_element_type=f32) + b2k_ref[u]

        # ------------------------ I-domain correction ------------------------
        # BackwardOperator: complex channel 0 of new kspace buffer (still in VMEM),
        # DC mask, ifft2c via conj(forward DFT), conj(sens) multiply, coil sum.
        kre = kb[:CN] * mask_cn
        kim = kb[KBS * CN:(KBS + 1) * CN] * mask_cn
        q_stk = jnp.concatenate([kre, kim], axis=0)                     # [2CN, HW]
        a2 = jnp.dot(q_stk, ktr, preferred_element_type=f32)
        b2 = jnp.dot(q_stk, kti, preferred_element_type=f32)
        ir = a2[:CN] + b2[CN:]                                          # ifft real
        ii = a2[CN:] - b2[:CN]                                          # ifft imag
        bre = ir * s_re + ii * s_im
        bim = ii * s_re - ir * s_im
        bwd = jnp.dot(summ, jnp.concatenate([bre, bim], axis=0),
                      preferred_element_type=f32)                       # [2N, HW]

        # feat_i row order: [ib (unsliced), bwd_re, bwd_im, zero-pad]
        feat_i = jnp.concatenate(
            [ib, bwd, jnp.zeros((PAD_I1, HW), f32)], axis=0)            # [FI_ROWS, HW]

        hid_i = jnp.maximum(conv3x3(feat_i, m1i_ref[u], b1i_ref[u]), 0.0)
        ib = conv3x3(hid_i, m2i_ref[u], b2i_ref[u])                     # [2*IBS*N, HW]

    ib_out_ref[...] = ib
    kb_out_ref[...] = kb


# --------------------------- wrapper layout helpers ---------------------------
def _pack(x, n_coils, n_ch):
    """[N, n_coils, HW, n_ch] -> [n_ch*n_coils*N, HW] (rows: ch-major, coil, frame)."""
    return jnp.transpose(x, (3, 1, 0, 2)).reshape(n_ch * n_coils * N, HW)


def _unpack(y, n_coils, n_ch):
    """[n_ch*n_coils*N, HW] -> [N, n_coils, HW, n_ch]."""
    return jnp.transpose(y.reshape(n_ch, n_coils, N, HW), (2, 1, 3, 0))


def _prep_knet(params):
    """Expand the 1x1-conv MLP weights into kron(W^T, I_CN) block matrices
    (input channels permuted to the kernel's aligned feat_k order)."""
    w1, b1, w2, b2 = params                      # w1 [CIN_K,HID_K], w2 [HID_K,COUT_K]
    eye = jnp.eye(CN, dtype=jnp.float32)
    m1 = jnp.kron(w1[K_PERM, :].T, eye)          # [HID_K*CN, CIN_K*CN]
    m2 = jnp.kron(w2.T, eye)                     # [COUT_K*CN, HID_K*CN]
    return m1, jnp.repeat(b1, CN)[:, None], m2, jnp.repeat(b2, CN)[:, None]


def _prep_inet(params):
    """Flatten each 3x3-conv layer into ONE matmul: per-tap kron(W[:,:,ky,kx], I_N)
    blocks concatenated along the contraction axis (tap-major), with zero columns for
    the sublane-alignment padding rows of the first layer's input slab."""
    w1, b1, w2, b2 = params                      # w1 [HID_I,CIN_I,3,3], w2 [COUT_I,HID_I,3,3]
    w1p = w1[:, I_PERM, :, :]
    eye = jnp.eye(N, dtype=jnp.float32)
    m1_blocks = []
    for k in range(9):
        blk = jnp.kron(w1p[:, :, k // 3, k % 3], eye)          # [HID_I*N, CIN_I*N]
        blk = jnp.pad(blk, ((0, 0), (0, PAD_I1)))              # [HID_I*N, FI_ROWS]
        m1_blocks.append(blk)
    m1 = jnp.concatenate(m1_blocks, axis=1)                    # [HID_I*N, 9*FI_ROWS]
    m2 = jnp.concatenate(
        [jnp.kron(w2[:, :, k // 3, k % 3], eye) for k in range(9)], axis=1)
    return m1, jnp.repeat(b1, N)[:, None], m2, jnp.repeat(b2, N)[:, None]


def prepare_nets(nets):
    """Precompute (eagerly, once) the stacked per-unroll kernel weight matrices."""
    packs = [[] for _ in range(8)]
    for u in range(N_UNROLL):
        for i, a in enumerate(_prep_knet(nets["kspace_nets"][u])):
            packs[i].append(a)
        for i, a in enumerate(_prep_inet(nets["image_nets"][u])):
            packs[4 + i].append(a)
    names = ["m1k", "b1k", "m2k", "b2k", "m1i", "b1i", "m2i", "b2i"]
    return {n: jnp.stack(p) for n, p in zip(names, packs)}


def xpdnet_forward_all_unrolls(prepped, image_buffer, kspace_buffer,
                               ref_kspace, mask, sens_maps):
    """Fused XPDNetBlock.forward('K', 2u) / .forward('I', 2u+1) for u in range(N_UNROLL),
    all inside one pallas_call.  Returns (image_buffer, kspace_buffer) after the last
    unroll (the kspace buffer equals the last K-domain correction, as in the module)."""
    ib_k = _pack(image_buffer.reshape(N, 1, HW, 2 * IBS), 1, 2 * IBS)
    kb_k = _pack(kspace_buffer.reshape(N, C, HW, 2 * KBS), C, 2 * KBS)
    rk_k = _pack(ref_kspace.reshape(N, C, HW, 2), C, 2)
    sens_k = _pack(jnp.broadcast_to(sens_maps, (B, T, C, H, W, 2)).reshape(N, C, HW, 2),
                   C, 2)
    mask_k = mask[:, :, 0, :, :, 0].reshape(N, HW)

    def fs(shape):
        return pl.BlockSpec(shape, lambda g, _n=len(shape): (0,) * _n)

    ib_out, kb_out = pl.pallas_call(
        _fused_unrolls_kernel,
        out_shape=(jax.ShapeDtypeStruct((2 * IBS * N, HW), jnp.float32),
                   jax.ShapeDtypeStruct((2 * KBS * CN, HW), jnp.float32)),
        grid=(1,),
        in_specs=[
            fs((2 * IBS * N, HW)),                       # image buffer
            fs((2 * KBS * CN, HW)),                      # kspace buffer
            fs((2 * CN, HW)),                            # ref kspace
            fs((N, HW)),                                 # mask
            fs((2 * CN, HW)),                            # sens maps
            fs((HW, HW)), fs((HW, HW)),                  # forward DFT re/im
            fs((2 * N, 2 * CN)),                         # coil-sum matrix
            fs((N_UNROLL, HID_K * CN, CIN_K * CN)), fs((N_UNROLL, HID_K * CN, 1)),
            fs((N_UNROLL, COUT_K * CN, HID_K * CN)), fs((N_UNROLL, COUT_K * CN, 1)),
            fs((N_UNROLL, HID_I * N, 9 * FI_ROWS)), fs((N_UNROLL, HID_I * N, 1)),
            fs((N_UNROLL, COUT_I * N, 9 * HID_I * N)), fs((N_UNROLL, COUT_I * N, 1)),
            fs((9, 1, HW)),
        ],
        out_specs=[
            fs((2 * IBS * N, HW)),
            fs((2 * KBS * CN, HW)),
        ],
        compiler_params=pltpu.CompilerParams(dimension_semantics=("arbitrary",)),
    )(ib_k, kb_k, rk_k, mask_k, sens_k,
      _KT_R, _KT_I, _SUM,
      prepped["m1k"], prepped["b1k"], prepped["m2k"], prepped["b2k"],
      prepped["m1i"], prepped["b1i"], prepped["m2i"], prepped["b2i"], _TAPS)

    kb_new = _unpack(kb_out, C, 2 * KBS).reshape(B, T, C, H, W, 2 * KBS)
    ib_new = _unpack(ib_out, 1, 2 * IBS).reshape(B, T, 1, H, W, 2 * IBS)
    return ib_new, kb_new


# --------------------------- deterministic params ----------------------------
def init_params(key):
    kspace_nets, image_nets = [], []
    keys = jax.random.split(key, 8 * N_UNROLL)
    for u in range(N_UNROLL):
        k = keys[8 * u:8 * (u + 1)]
        kspace_nets.append((
            jax.random.normal(k[0], (CIN_K, HID_K), jnp.float32) * 0.1,
            jax.random.normal(k[1], (HID_K,), jnp.float32) * 0.01,
            jax.random.normal(k[2], (HID_K, COUT_K), jnp.float32) * 0.1,
            jax.random.normal(k[3], (COUT_K,), jnp.float32) * 0.01,
        ))
        image_nets.append((
            jax.random.normal(k[4], (HID_I, CIN_I, 3, 3), jnp.float32) * 0.1,
            jax.random.normal(k[5], (HID_I,), jnp.float32) * 0.01,
            jax.random.normal(k[6], (COUT_I, HID_I, 3, 3), jnp.float32) * 0.1,
            jax.random.normal(k[7], (COUT_I,), jnp.float32) * 0.01,
        ))
    return {"kspace_nets": kspace_nets, "image_nets": image_nets}


# ------------------------------ pure-JAX reference ---------------------------
def _fft2c(x):
    c = x[..., 0] + 1j * x[..., 1]
    c = jnp.fft.fftshift(jnp.fft.fft2(jnp.fft.ifftshift(c, axes=(-2, -1)), norm="ortho"),
                         axes=(-2, -1))
    return jnp.stack([jnp.real(c), jnp.imag(c)], axis=-1)


def _ifft2c(x):
    c = x[..., 0] + 1j * x[..., 1]
    c = jnp.fft.fftshift(jnp.fft.ifft2(jnp.fft.ifftshift(c, axes=(-2, -1)), norm="ortho"),
                         axes=(-2, -1))
    return jnp.stack([jnp.real(c), jnp.imag(c)], axis=-1)


def _ref_conv3x3(x, w, b):
    y = jax.lax.conv_general_dilated(x, w, window_strides=(1, 1),
                                     padding=((1, 1), (1, 1)),
                                     dimension_numbers=("NCHW", "OIHW", "NCHW"))
    return y + b[None, :, None, None]


def ref_k_correction(params, ib, kb, rk, mask, sens):
    w1, b1, w2, b2 = params
    img = jnp.stack([ib[..., 0], ib[..., IBS]], axis=-1)        # [B,T,1,H,W,2]
    pr = img[..., 0] * sens[..., 0] - img[..., 1] * sens[..., 1]
    pi = img[..., 0] * sens[..., 1] + img[..., 1] * sens[..., 0]
    ksp = _fft2c(jnp.stack([pr, pi], axis=-1)) * mask           # [B,T,C,H,W,2]
    reals = [kb[..., j] for j in range(KBS)] + [ksp[..., 0], rk[..., 0]]
    imags = [kb[..., KBS + j] for j in range(KBS)] + [ksp[..., 1], rk[..., 1]]
    feat = jnp.stack(reals + imags, axis=-1)
    return jax.nn.relu(feat @ w1 + b1) @ w2 + b2


def ref_i_correction(params, ib, kb, mask, sens):
    w1, b1, w2, b2 = params
    ksp = jnp.stack([kb[..., 0], kb[..., KBS]], axis=-1) * mask
    img = _ifft2c(ksp)
    re = img[..., 0] * sens[..., 0] + img[..., 1] * sens[..., 1]
    im = img[..., 1] * sens[..., 0] - img[..., 0] * sens[..., 1]
    comb = jnp.stack([re, im], axis=-1).sum(axis=2, keepdims=True)   # [B,T,1,H,W,2]
    reals = [ib[..., j] for j in range(IBS)] + [comb[..., 0]]
    imags = [ib[..., IBS + j] for j in range(IBS)] + [comb[..., 1]]
    feat = jnp.stack(reals + imags, axis=-1)                         # [B,T,1,H,W,CIN_I]
    x = jnp.transpose(feat, (0, 1, 2, 5, 3, 4)).reshape(B * T, CIN_I, H, W)
    x = jax.nn.relu(_ref_conv3x3(x, w1, b1))
    x = _ref_conv3x3(x, w2, b2)
    return jnp.transpose(x.reshape(B, T, 1, COUT_I, H, W), (0, 1, 2, 4, 5, 3))


# ----------------------------------- main ------------------------------------
if __name__ == "__main__":
    key = jax.random.PRNGKey(0)
    kp, k_ib, k_kb, k_rk, k_m, k_s = jax.random.split(key, 6)
    nets = init_params(kp)
    prepped = prepare_nets(nets)          # kron/flatten the weights once, outside jit

    image_buffer = jax.random.normal(k_ib, (B, T, 1, H, W, 2 * IBS), jnp.float32)
    kspace_buffer = jax.random.normal(k_kb, (B, T, C, H, W, 2 * KBS), jnp.float32)
    ref_kspace = jax.random.normal(k_rk, (B, T, C, H, W, 2), jnp.float32)
    mask = (jax.random.uniform(k_m, (B, T, 1, H, W, 1)) > 0.5).astype(jnp.float32)
    sens_maps = jax.random.normal(k_s, (B, 1, C, H, W, 2), jnp.float32) * 0.5

    fused = jax.jit(xpdnet_forward_all_unrolls)

    ib_f, kb_f = fused(prepped, image_buffer, kspace_buffer, ref_kspace, mask, sens_maps)
    jax.block_until_ready((ib_f, kb_f))

    # cross-check against a pure-JAX reference of the same unrolled sweep
    ib_r, kb_r = image_buffer, kspace_buffer
    for u in range(N_UNROLL):
        kb_r = ref_k_correction(nets["kspace_nets"][u], ib_r, kb_r, ref_kspace,
                                mask, sens_maps)
        ib_r = ref_i_correction(nets["image_nets"][u], ib_r, kb_r, mask, sens_maps)
    np.testing.assert_allclose(np.asarray(kb_f), np.asarray(kb_r), atol=1e-2, rtol=1e-2)
    np.testing.assert_allclose(np.asarray(ib_f), np.asarray(ib_r), atol=1e-2, rtol=1e-2)

    print("KERNEL_OK")
</pallas_src>

<mosaic_0001>
module attributes {stable_mosaic.version = 11 : i64} {
  func.func @_fused_unrolls_kernel(%arg0: i32, %arg1: memref<24x256xf32, #tpu.memory_space<vmem>>, %arg2: memref<96x256xf32, #tpu.memory_space<vmem>>, %arg3: memref<48x256xf32, #tpu.memory_space<vmem>>, %arg4: memref<6x256xf32, #tpu.memory_space<vmem>>, %arg5: memref<48x256xf32, #tpu.memory_space<vmem>>, %arg6: memref<256x256xf32, #tpu.memory_space<vmem>>, %arg7: memref<256x256xf32, #tpu.memory_space<vmem>>, %arg8: memref<12x48xf32, #tpu.memory_space<vmem>>, %arg9: memref<2x192x192xf32, #tpu.memory_space<vmem>>, %arg10: memref<2x192x1xf32, #tpu.memory_space<vmem>>, %arg11: memref<2x96x192xf32, #tpu.memory_space<vmem>>, %arg12: memref<2x96x1xf32, #tpu.memory_space<vmem>>, %arg13: memref<2x48x360xf32, #tpu.memory_space<vmem>>, %arg14: memref<2x48x1xf32, #tpu.memory_space<vmem>>, %arg15: memref<2x24x432xf32, #tpu.memory_space<vmem>>, %arg16: memref<2x24x1xf32, #tpu.memory_space<vmem>>, %arg17: memref<9x1x256xf32, #tpu.memory_space<vmem>>, %arg18: memref<24x256xf32, #tpu.memory_space<vmem>>, %arg19: memref<96x256xf32, #tpu.memory_space<vmem>>) attributes {dimension_semantics = [#tpu.dimension_semantics<arbitrary>], iteration_bounds = array<i64: 1>, scalar_prefetch = 0 : i64, scratch_operands = 0 : i64, tpu.core_type = #tpu.core_type<tc>, window_params = [{pipeline_mode = #tpu.pipeline_mode<synchronous>, transform_indices = @transform_0, window_bounds = array<i64: 24, 256>}, {pipeline_mode = #tpu.pipeline_mode<synchronous>, transform_indices = @transform_1, window_bounds = array<i64: 96, 256>}, {pipeline_mode = #tpu.pipeline_mode<synchronous>, transform_indices = @transform_2, window_bounds = array<i64: 48, 256>}, {pipeline_mode = #tpu.pipeline_mode<synchronous>, transform_indices = @transform_3, window_bounds = array<i64: 6, 256>}, {pipeline_mode = #tpu.pipeline_mode<synchronous>, transform_indices = @transform_4, window_bounds = array<i64: 48, 256>}, {pipeline_mode = #tpu.pipeline_mode<synchronous>, transform_indices = @transform_5, window_bounds = array<i64: 256, 256>}, {pipeline_mode = #tpu.pipeline_mode<synchronous>, transform_indices = @transform_6, window_bounds = array<i64: 256, 256>}, {pipeline_mode = #tpu.pipeline_mode<synchronous>, transform_indices = @transform_7, window_bounds = array<i64: 12, 48>}, {pipeline_mode = #tpu.pipeline_mode<synchronous>, transform_indices = @transform_8, window_bounds = array<i64: 2, 192, 192>}, {pipeline_mode = #tpu.pipeline_mode<synchronous>, transform_indices = @transform_9, window_bounds = array<i64: 2, 192, 1>}, {pipeline_mode = #tpu.pipeline_mode<synchronous>, transform_indices = @transform_10, window_bounds = array<i64: 2, 96, 192>}, {pipeline_mode = #tpu.pipeline_mode<synchronous>, transform_indices = @transform_11, window_bounds = array<i64: 2, 96, 1>}, {pipeline_mode = #tpu.pipeline_mode<synchronous>, transform_indices = @transform_12, window_bounds = array<i64: 2, 48, 360>}, {pipeline_mode = #tpu.pipeline_mode<synchronous>, transform_indices = @transform_13, window_bounds = array<i64: 2, 48, 1>}, {pipeline_mode = #tpu.pipeline_mode<synchronous>, transform_indices = @transform_14, window_bounds = array<i64: 2, 24, 432>}, {pipeline_mode = #tpu.pipeline_mode<synchronous>, transform_indices = @transform_15, window_bounds = array<i64: 2, 24, 1>}, {pipeline_mode = #tpu.pipeline_mode<synchronous>, transform_indices = @transform_16, window_bounds = array<i64: 9, 1, 256>}, {pipeline_mode = #tpu.pipeline_mode<synchronous>, transform_indices = @transform_17, window_bounds = array<i64: 24, 256>}, {pipeline_mode = #tpu.pipeline_mode<synchronous>, transform_indices = @transform_18, window_bounds = array<i64: 96, 256>}]} {
    %c0 = arith.constant 0 : index
    %c0_0 = arith.constant 0 : index
    %0 = vector.load %arg1[%c0, %c0_0] : memref<24x256xf32, #tpu.memory_space<vmem>>, vector<24x256xf32>
    %c0_1 = arith.constant 0 : index
    %c0_2 = arith.constant 0 : index
    %1 = vector.load %arg2[%c0_1, %c0_2] : memref<96x256xf32, #tpu.memory_space<vmem>>, vector<96x256xf32>
    %c0_3 = arith.constant 0 : index
    %c0_4 = arith.constant 0 : index
    %2 = vector.load %arg3[%c0_3, %c0_4] : memref<48x256xf32, #tpu.memory_space<vmem>>, vector<48x256xf32>
    %c0_5 = arith.constant 0 : index
    %c0_6 = arith.constant 0 : index
    %3 = vector.load %arg5[%c0_5, %c0_6] : memref<48x256xf32, #tpu.memory_space<vmem>>, vector<48x256xf32>
    %c0_7 = arith.constant 0 : index
    %c0_8 = arith.constant 0 : index
    %4 = vector.load %arg4[%c0_7, %c0_8] : memref<6x256xf32, #tpu.memory_space<vmem>>, vector<6x256xf32>
    %c0_9 = arith.constant 0 : index
    %c0_10 = arith.constant 0 : index
    %5 = vector.load %arg6[%c0_9, %c0_10] : memref<256x256xf32, #tpu.memory_space<vmem>>, vector<256x256xf32>
    %c0_11 = arith.constant 0 : index
    %c0_12 = arith.constant 0 : index
    %6 = vector.load %arg7[%c0_11, %c0_12] : memref<256x256xf32, #tpu.memory_space<vmem>>, vector<256x256xf32>
    %c0_13 = arith.constant 0 : index
    %c0_14 = arith.constant 0 : index
    %7 = vector.load %arg8[%c0_13, %c0_14] : memref<12x48xf32, #tpu.memory_space<vmem>>, vector<12x48xf32>
    %c0_15 = arith.constant 0 : index
    %c0_16 = arith.constant 0 : index
    %c0_17 = arith.constant 0 : index
    %8 = vector.load %arg17[%c0_15, %c0_16, %c0_17] : memref<9x1x256xf32, #tpu.memory_space<vmem>>, vector<9x1x256xf32>
    %9 = vector.extract_strided_slice %3 {offsets = [0, 0], sizes = [24, 256], strides = [1, 1]} : vector<48x256xf32> to vector<24x256xf32>
    %10 = vector.extract_strided_slice %3 {offsets = [24, 0], sizes = [24, 256], strides = [1, 1]} : vector<48x256xf32> to vector<24x256xf32>
    %11 = tpu.concatenate %4, %4, %4, %4 in 0 : vector<6x256xf32>, vector<6x256xf32>, vector<6x256xf32>, vector<6x256xf32> -> vector<24x256xf32>
    %12 = vector.extract_strided_slice %0 {offsets = [0, 0], sizes = [6, 256], strides = [1, 1]} : vector<24x256xf32> to vector<6x256xf32>
    %13 = tpu.concatenate %12, %12, %12, %12 in 0 : vector<6x256xf32>, vector<6x256xf32>, vector<6x256xf32>, vector<6x256xf32> -> vector<24x256xf32>
    %14 = vector.extract_strided_slice %0 {offsets = [12, 0], sizes = [6, 256], strides = [1, 1]} : vector<24x256xf32> to vector<6x256xf32>
    %15 = tpu.concatenate %14, %14, %14, %14 in 0 : vector<6x256xf32>, vector<6x256xf32>, vector<6x256xf32>, vector<6x256xf32> -> vector<24x256xf32>
    %16 = arith.mulf %13, %9 : vector<24x256xf32>
    %17 = arith.mulf %15, %10 : vector<24x256xf32>
    %18 = arith.subf %16, %17 : vector<24x256xf32>
    %19 = arith.mulf %13, %10 : vector<24x256xf32>
    %20 = arith.mulf %15, %9 : vector<24x256xf32>
    %21 = arith.addf %19, %20 : vector<24x256xf32>
    %22 = tpu.concatenate %18, %21 in 0 : vector<24x256xf32>, vector<24x256xf32> -> vector<48x256xf32>
    %cst = arith.constant dense<0.000000e+00> : vector<48x256xf32>
    %23 = tpu.matmul %22, %5, %cst {dimension_numbers = #tpu.dot_dimension_numbers<[1], [0], [0], [1], [0, 0, 1, 1], [], []>} : vector<48x256xf32>, vector<256x256xf32>, vector<48x256xf32> -> vector<48x256xf32>
    %cst_18 = arith.constant dense<0.000000e+00> : vector<48x256xf32>
    %24 = tpu.matmul %22, %6, %cst_18 {dimension_numbers = #tpu.dot_dimension_numbers<[1], [0], [0], [1], [0, 0, 1, 1], [], []>} : vector<48x256xf32>, vector<256x256xf32>, vector<48x256xf32> -> vector<48x256xf32>
    %25 = vector.extract_strided_slice %23 {offsets = [0, 0], sizes = [24, 256], strides = [1, 1]} : vector<48x256xf32> to vector<24x256xf32>
    %26 = vector.extract_strided_slice %24 {offsets = [24, 0], sizes = [24, 256], strides = [1, 1]} : vector<48x256xf32> to vector<24x256xf32>
    %27 = arith.subf %25, %26 : vector<24x256xf32>
    %28 = arith.mulf %27, %11 : vector<24x256xf32>
    %29 = vector.extract_strided_slice %24 {offsets = [0, 0], sizes = [24, 256], strides = [1, 1]} : vector<48x256xf32> to vector<24x256xf32>
    %30 = vector.extract_strided_slice %23 {offsets = [24, 0], sizes = [24, 256], strides = [1, 1]} : vector<48x256xf32> to vector<24x256xf32>
    %31 = arith.addf %29, %30 : vector<24x256xf32>
    %32 = arith.mulf %31, %11 : vector<24x256xf32>
    %33 = tpu.concatenate %1, %28, %32, %2 in 0 : vector<96x256xf32>, vector<24x256xf32>, vector<24x256xf32>, vector<48x256xf32> -> vector<192x256xf32>
    %c0_19 = arith.constant 0 : index
    %c0_20 = arith.constant 0 : index
    %c0_21 = arith.constant 0 : index
    %34 = vector.load %arg9[%c0_19, %c0_20, %c0_21] : memref<2x192x192xf32, #tpu.memory_space<vmem>>, vector<1x192x192xf32>
    %35 = vector.shape_cast %34 : vector<1x192x192xf32> to vector<192x192xf32>
    %cst_22 = arith.constant dense<0.000000e+00> : vector<192x256xf32>
    %36 = tpu.matmul %35, %33, %cst_22 {dimension_numbers = #tpu.dot_dimension_numbers<[1], [0], [0], [1], [0, 0, 1, 1], [], []>} : vector<192x192xf32>, vector<192x256xf32>, vector<192x256xf32> -> vector<192x256xf32>
    %c0_23 = arith.constant 0 : index
    %c0_24 = arith.constant 0 : index
    %c0_25 = arith.constant 0 : index
    %37 = vector.load %arg10[%c0_23, %c0_24, %c0_25] : memref<2x192x1xf32, #tpu.memory_space<vmem>>, vector<1x192x1xf32>
    %38 = vector.shape_cast %37 : vector<1x192x1xf32> to vector<192x1xf32>
    %39 = vector.broadcast %38 : vector<192x1xf32> to vector<192x256xf32>
    %40 = arith.addf %36, %39 : vector<192x256xf32>
    %cst_26 = arith.constant 0.000000e+00 : f32
    %41 = vector.broadcast %cst_26 : f32 to vector<192x256xf32>
    %42 = arith.maximumf %40, %41 : vector<192x256xf32>
    %c0_27 = arith.constant 0 : index
    %c0_28 = arith.constant 0 : index
    %c0_29 = arith.constant 0 : index
    %43 = vector.load %arg11[%c0_27, %c0_28, %c0_29] : memref<2x96x192xf32, #tpu.memory_space<vmem>>, vector<1x96x192xf32>
    %44 = vector.shape_cast %43 : vector<1x96x192xf32> to vector<96x192xf32>
    %cst_30 = arith.constant dense<0.000000e+00> : vector<96x256xf32>
    %45 = tpu.matmul %44, %42, %cst_30 {dimension_numbers = #tpu.dot_dimension_numbers<[1], [0], [0], [1], [0, 0, 1, 1], [], []>} : vector<96x192xf32>, vector<192x256xf32>, vector<96x256xf32> -> vector<96x256xf32>
    %c0_31 = arith.constant 0 : index
    %c0_32 = arith.constant 0 : index
    %c0_33 = arith.constant 0 : index
    %46 = vector.load %arg12[%c0_31, %c0_32, %c0_33] : memref<2x96x1xf32, #tpu.memory_space<vmem>>, vector<1x96x1xf32>
    %47 = vector.shape_cast %46 : vector<1x96x1xf32> to vector<96x1xf32>
    %48 = vector.broadcast %47 : vector<96x1xf32> to vector<96x256xf32>
    %49 = arith.addf %45, %48 : vector<96x256xf32>
    %50 = vector.extract_strided_slice %49 {offsets = [0, 0], sizes = [24, 256], strides = [1, 1]} : vector<96x256xf32> to vector<24x256xf32>
    %51 = arith.mulf %50, %11 : vector<24x256xf32>
    %52 = vector.extract_strided_slice %49 {offsets = [48, 0], sizes = [24, 256], strides = [1, 1]} : vector<96x256xf32> to vector<24x256xf32>
    %53 = arith.mulf %52, %11 : vector<24x256xf32>
    %54 = tpu.concatenate %51, %53 in 0 : vector<24x256xf32>, vector<24x256xf32> -> vector<48x256xf32>
    %cst_34 = arith.constant dense<0.000000e+00> : vector<48x256xf32>
    %55 = tpu.matmul %54, %5, %cst_34 {dimension_numbers = #tpu.dot_dimension_numbers<[1], [0], [0], [1], [0, 0, 1, 1], [], []>} : vector<48x256xf32>, vector<256x256xf32>, vector<48x256xf32> -> vector<48x256xf32>
    %cst_35 = arith.constant dense<0.000000e+00> : vector<48x256xf32>
    %56 = tpu.matmul %54, %6, %cst_35 {dimension_numbers = #tpu.dot_dimension_numbers<[1], [0], [0], [1], [0, 0, 1, 1], [], []>} : vector<48x256xf32>, vector<256x256xf32>, vector<48x256xf32> -> vector<48x256xf32>
    %57 = vector.extract_strided_slice %55 {offsets = [0, 0], sizes = [24, 256], strides = [1, 1]} : vector<48x256xf32> to vector<24x256xf32>
    %58 = vector.extract_strided_slice %56 {offsets = [24, 0], sizes = [24, 256], strides = [1, 1]} : vector<48x256xf32> to vector<24x256xf32>
    %59 = arith.addf %57, %58 : vector<24x256xf32>
    %60 = vector.extract_strided_slice %55 {offsets = [24, 0], sizes = [24, 256], strides = [1, 1]} : vector<48x256xf32> to vector<24x256xf32>
    %61 = vector.extract_strided_slice %56 {offsets = [0, 0], sizes = [24, 256], strides = [1, 1]} : vector<48x256xf32> to vector<24x256xf32>
    %62 = arith.subf %60, %61 : vector<24x256xf32>
    %63 = arith.mulf %59, %9 : vector<24x256xf32>
    %64 = arith.mulf %62, %10 : vector<24x256xf32>
    %65 = arith.addf %63, %64 : vector<24x256xf32>
    %66 = arith.mulf %62, %9 : vector<24x256xf32>
    %67 = arith.mulf %59, %10 : vector<24x256xf32>
    %68 = arith.subf %66, %67 : vector<24x256xf32>
    %69 = tpu.concatenate %65, %68 in 0 : vector<24x256xf32>, vector<24x256xf32> -> vector<48x256xf32>
    %cst_36 = arith.constant dense<0.000000e+00> : vector<12x256xf32>
    %70 = tpu.matmul %7, %69, %cst_36 {dimension_numbers = #tpu.dot_dimension_numbers<[1], [0], [0], [1], [0, 0, 1, 1], [], []>} : vector<12x48xf32>, vector<48x256xf32>, vector<12x256xf32> -> vector<12x256xf32>
    %cst_37 = arith.constant 0.000000e+00 : f32
    %71 = vector.broadcast %cst_37 : f32 to vector<4x256xf32>
    %72 = tpu.concatenate %0, %70, %71 in 0 : vector<24x256xf32>, vector<12x256xf32>, vector<4x256xf32> -> vector<40x256xf32>
    %c0_38 = arith.constant 0 : index
    %c0_39 = arith.constant 0 : index
    %c0_40 = arith.constant 0 : index
    %73 = vector.load %arg13[%c0_38, %c0_39, %c0_40] : memref<2x48x360xf32, #tpu.memory_space<vmem>>, vector<1x48x360xf32>
    %74 = vector.shape_cast %73 : vector<1x48x360xf32> to vector<48x360xf32>
    %c0_41 = arith.constant 0 : index
    %c0_42 = arith.constant 0 : index
    %c0_43 = arith.constant 0 : index
    %75 = vector.load %arg14[%c0_41, %c0_42, %c0_43] : memref<2x48x1xf32, #tpu.memory_space<vmem>>, vector<1x48x1xf32>
    %76 = vector.shape_cast %75 : vector<1x48x1xf32> to vector<48x1xf32>
    %c17_i32 = arith.constant 17 : i32
    %77 = tpu.dynamic_rotate %72 by %c17_i32 dim 1 : vector<40x256xf32>, i32 -> vector<40x256xf32>
    %78 = vector.extract_strided_slice %8 {offsets = [0, 0, 0], sizes = [1, 1, 256], strides = [1, 1, 1]} : vector<9x1x256xf32> to vector<1x1x256xf32>
    %79 = vector.shape_cast %78 : vector<1x1x256xf32> to vector<1x256xf32>
    %80 = vector.broadcast %79 : vector<1x256xf32> to vector<40x256xf32>
    %81 = arith.mulf %77, %80 : vector<40x256xf32>
    %c16_i32 = arith.constant 16 : i32
    %82 = tpu.dynamic_rotate %72 by %c16_i32 dim 1 : vector<40x256xf32>, i32 -> vector<40x256xf32>
    %83 = vector.extract_strided_slice %8 {offsets = [1, 0, 0], sizes = [1, 1, 256], strides = [1, 1, 1]} : vector<9x1x256xf32> to vector<1x1x256xf32>
    %84 = vector.shape_cast %83 : vector<1x1x256xf32> to vector<1x256xf32>
    %85 = vector.broadcast %84 : vector<1x256xf32> to vector<40x256xf32>
    %86 = arith.mulf %82, %85 : vector<40x256xf32>
    %c15_i32 = arith.constant 15 : i32
    %87 = tpu.dynamic_rotate %72 by %c15_i32 dim 1 : vector<40x256xf32>, i32 -> vector<40x256xf32>
    %88 = vector.extract_strided_slice %8 {offsets = [2, 0, 0], sizes = [1, 1, 256], strides = [1, 1, 1]} : vector<9x1x256xf32> to vector<1x1x256xf32>
    %89 = vector.shape_cast %88 : vector<1x1x256xf32> to vector<1x256xf32>
    %90 = vector.broadcast %89 : vector<1x256xf32> to vector<40x256xf32>
    %91 = arith.mulf %87, %90 : vector<40x256xf32>
    %c1_i32 = arith.constant 1 : i32
    %92 = tpu.dynamic_rotate %72 by %c1_i32 dim 1 : vector<40x256xf32>, i32 -> vector<40x256xf32>
    %93 = vector.extract_strided_slice %8 {offsets = [3, 0, 0], sizes = [1, 1, 256], strides = [1, 1, 1]} : vector<9x1x256xf32> to vector<1x1x256xf32>
    %94 = vector.shape_cast %93 : vector<1x1x256xf32> to vector<1x256xf32>
    %95 = vector.broadcast %94 : vector<1x256xf32> to vector<40x256xf32>
    %96 = arith.mulf %92, %95 : vector<40x256xf32>
    %c255_i32 = arith.constant 255 : i32
    %97 = tpu.dynamic_rotate %72 by %c255_i32 dim 1 : vector<40x256xf32>, i32 -> vector<40x256xf32>
    %98 = vector.extract_strided_slice %8 {offsets = [5, 0, 0], sizes = [1, 1, 256], strides = [1, 1, 1]} : vector<9x1x256xf32> to vector<1x1x256xf32>
    %99 = vector.shape_cast %98 : vector<1x1x256xf32> to vector<1x256xf32>
    %100 = vector.broadcast %99 : vector<1x256xf32> to vector<40x256xf32>
    %101 = arith.mulf %97, %100 : vector<40x256xf32>
    %c241_i32 = arith.constant 241 : i32
    %102 = tpu.dynamic_rotate %72 by %c241_i32 dim 1 : vector<40x256xf32>, i32 -> vector<40x256xf32>
    %103 = vector.extract_strided_slice %8 {offsets = [6, 0, 0], sizes = [1, 1, 256], strides = [1, 1, 1]} : vector<9x1x256xf32> to vector<1x1x256xf32>
    %104 = vector.shape_cast %103 : vector<1x1x256xf32> to vector<1x256xf32>
    %105 = vector.broadcast %104 : vector<1x256xf32> to vector<40x256xf32>
    %106 = arith.mulf %102, %105 : vector<40x256xf32>
    %c240_i32 = arith.constant 240 : i32
    %107 = tpu.dynamic_rotate %72 by %c240_i32 dim 1 : vector<40x256xf32>, i32 -> vector<40x256xf32>
    %108 = vector.extract_strided_slice %8 {offsets = [7, 0, 0], sizes = [1, 1, 256], strides = [1, 1, 1]} : vector<9x1x256xf32> to vector<1x1x256xf32>
    %109 = vector.shape_cast %108 : vector<1x1x256xf32> to vector<1x256xf32>
    %110 = vector.broadcast %109 : vector<1x256xf32> to vector<40x256xf32>
    %111 = arith.mulf %107, %110 : vector<40x256xf32>
    %c239_i32 = arith.constant 239 : i32
    %112 = tpu.dynamic_rotate %72 by %c239_i32 dim 1 : vector<40x256xf32>, i32 -> vector<40x256xf32>
    %113 = vector.extract_strided_slice %8 {offsets = [8, 0, 0], sizes = [1, 1, 256], strides = [1, 1, 1]} : vector<9x1x256xf32> to vector<1x1x256xf32>
    %114 = vector.shape_cast %113 : vector<1x1x256xf32> to vector<1x256xf32>
    %115 = vector.broadcast %114 : vector<1x256xf32> to vector<40x256xf32>
    %116 = arith.mulf %112, %115 : vector<40x256xf32>
    %117 = tpu.concatenate %81, %86, %91, %96, %72, %101, %106, %111, %116 in 0 : vector<40x256xf32>, vector<40x256xf32>, vector<40x256xf32>, vector<40x256xf32>, vector<40x256xf32>, vector<40x256xf32>, vector<40x256xf32>, vector<40x256xf32>, vector<40x256xf32> -> vector<360x256xf32>
    %cst_44 = arith.constant dense<0.000000e+00> : vector<48x256xf32>
    %118 = tpu.matmul %74, %117, %cst_44 {dimension_numbers = #tpu.dot_dimension_numbers<[1], [0], [0], [1], [0, 0, 1, 1], [], []>} : vector<48x360xf32>, vector<360x256xf32>, vector<48x256xf32> -> vector<48x256xf32>
    %119 = vector.broadcast %76 : vector<48x1xf32> to vector<48x256xf32>
    %120 = arith.addf %118, %119 : vector<48x256xf32>
    %cst_45 = arith.constant 0.000000e+00 : f32
    %121 = vector.broadcast %cst_45 : f32 to vector<48x256xf32>
    %122 = arith.maximumf %120, %121 : vector<48x256xf32>
    %c0_46 = arith.constant 0 : index
    %c0_47 = arith.constant 0 : index
    %c0_48 = arith.constant 0 : index
    %123 = vector.load %arg15[%c0_46, %c0_47, %c0_48] : memref<2x24x432xf32, #tpu.memory_space<vmem>>, vector<1x24x432xf32>
    %124 = vector.shape_cast %123 : vector<1x24x432xf32> to vector<24x432xf32>
    %c0_49 = arith.constant 0 : index
    %c0_50 = arith.constant 0 : index
    %c0_51 = arith.constant 0 : index
    %125 = vector.load %arg16[%c0_49, %c0_50, %c0_51] : memref<2x24x1xf32, #tpu.memory_space<vmem>>, vector<1x24x1xf32>
    %126 = vector.shape_cast %125 : vector<1x24x1xf32> to vector<24x1xf32>
    %c17_i32_52 = arith.constant 17 : i32
    %127 = tpu.dynamic_rotate %122 by %c17_i32_52 dim 1 : vector<48x256xf32>, i32 -> vector<48x256xf32>
    %128 = vector.extract_strided_slice %8 {offsets = [0, 0, 0], sizes = [1, 1, 256], strides = [1, 1, 1]} : vector<9x1x256xf32> to vector<1x1x256xf32>
    %129 = vector.shape_cast %128 : vector<1x1x256xf32> to vector<1x256xf32>
    %130 = vector.broadcast %129 : vector<1x256xf32> to vector<48x256xf32>
    %131 = arith.mulf %127, %130 : vector<48x256xf32>
    %c16_i32_53 = arith.constant 16 : i32
    %132 = tpu.dynamic_rotate %122 by %c16_i32_53 dim 1 : vector<48x256xf32>, i32 -> vector<48x256xf32>
    %133 = vector.extract_strided_slice %8 {offsets = [1, 0, 0], sizes = [1, 1, 256], strides = [1, 1, 1]} : vector<9x1x256xf32> to vector<1x1x256xf32>
    %134 = vector.shape_cast %133 : vector<1x1x256xf32> to vector<1x256xf32>
    %135 = vector.broadcast %134 : vector<1x256xf32> to vector<48x256xf32>
    %136 = arith.mulf %132, %135 : vector<48x256xf32>
    %c15_i32_54 = arith.constant 15 : i32
    %137 = tpu.dynamic_rotate %122 by %c15_i32_54 dim 1 : vector<48x256xf32>, i32 -> vector<48x256xf32>
    %138 = vector.extract_strided_slice %8 {offsets = [2, 0, 0], sizes = [1, 1, 256], strides = [1, 1, 1]} : vector<9x1x256xf32> to vector<1x1x256xf32>
    %139 = vector.shape_cast %138 : vector<1x1x256xf32> to vector<1x256xf32>
    %140 = vector.broadcast %139 : vector<1x256xf32> to vector<48x256xf32>
    %141 = arith.mulf %137, %140 : vector<48x256xf32>
    %c1_i32_55 = arith.constant 1 : i32
    %142 = tpu.dynamic_rotate %122 by %c1_i32_55 dim 1 : vector<48x256xf32>, i32 -> vector<48x256xf32>
    %143 = vector.extract_strided_slice %8 {offsets = [3, 0, 0], sizes = [1, 1, 256], strides = [1, 1, 1]} : vector<9x1x256xf32> to vector<1x1x256xf32>
    %144 = vector.shape_cast %143 : vector<1x1x256xf32> to vector<1x256xf32>
    %145 = vector.broadcast %144 : vector<1x256xf32> to vector<48x256xf32>
    %146 = arith.mulf %142, %145 : vector<48x256xf32>
    %c255_i32_56 = arith.constant 255 : i32
    %147 = tpu.dynamic_rotate %122 by %c255_i32_56 dim 1 : vector<48x256xf32>, i32 -> vector<48x256xf32>
    %148 = vector.extract_strided_slice %8 {offsets = [5, 0, 0], sizes = [1, 1, 256], strides = [1, 1, 1]} : vector<9x1x256xf32> to vector<1x1x256xf32>
    %149 = vector.shape_cast %148 : vector<1x1x256xf32> to vector<1x256xf32>
    %150 = vector.broadcast %149 : vector<1x256xf32> to vector<48x256xf32>
    %151 = arith.mulf %147, %150 : vector<48x256xf32>
    %c241_i32_57 = arith.constant 241 : i32
    %152 = tpu.dynamic_rotate %122 by %c241_i32_57 dim 1 : vector<48x256xf32>, i32 -> vector<48x256xf32>
    %153 = vector.extract_strided_slice %8 {offsets = [6, 0, 0], sizes = [1, 1, 256], strides = [1, 1, 1]} : vector<9x1x256xf32> to vector<1x1x256xf32>
    %154 = vector.shape_cast %153 : vector<1x1x256xf32> to vector<1x256xf32>
    %155 = vector.broadcast %154 : vector<1x256xf32> to vector<48x256xf32>
    %156 = arith.mulf %152, %155 : vector<48x256xf32>
    %c240_i32_58 = arith.constant 240 : i32
    %157 = tpu.dynamic_rotate %122 by %c240_i32_58 dim 1 : vector<48x256xf32>, i32 -> vector<48x256xf32>
    %158 = vector.extract_strided_slice %8 {offsets = [7, 0, 0], sizes = [1, 1, 256], strides = [1, 1, 1]} : vector<9x1x256xf32> to vector<1x1x256xf32>
    %159 = vector.shape_cast %158 : vector<1x1x256xf32> to vector<1x256xf32>
    %160 = vector.broadcast %159 : vector<1x256xf32> to vector<48x256xf32>
    %161 = arith.mulf %157, %160 : vector<48x256xf32>
    %c239_i32_59 = arith.constant 239 : i32
    %162 = tpu.dynamic_rotate %122 by %c239_i32_59 dim 1 : vector<48x256xf32>, i32 -> vector<48x256xf32>
    %163 = vector.extract_strided_slice %8 {offsets = [8, 0, 0], sizes = [1, 1, 256], strides = [1, 1, 1]} : vector<9x1x256xf32> to vector<1x1x256xf32>
    %164 = vector.shape_cast %163 : vector<1x1x256xf32> to vector<1x256xf32>
    %165 = vector.broadcast %164 : vector<1x256xf32> to vector<48x256xf32>
    %166 = arith.mulf %162, %165 : vector<48x256xf32>
    %167 = tpu.concatenate %131, %136, %141, %146, %122, %151, %156, %161, %166 in 0 : vector<48x256xf32>, vector<48x256xf32>, vector<48x256xf32>, vector<48x256xf32>, vector<48x256xf32>, vector<48x256xf32>, vector<48x256xf32>, vector<48x256xf32>, vector<48x256xf32> -> vector<432x256xf32>
    %cst_60 = arith.constant dense<0.000000e+00> : vector<24x256xf32>
    %168 = tpu.matmul %124, %167, %cst_60 {dimension_numbers = #tpu.dot_dimension_numbers<[1], [0], [0], [1], [0, 0, 1, 1], [], []>} : vector<24x432xf32>, vector<432x256xf32>, vector<24x256xf32> -> vector<24x256xf32>
    %169 = vector.broadcast %126 : vector<24x1xf32> to vector<24x256xf32>
    %170 = arith.addf %168, %169 : vector<24x256xf32>
    %171 = vector.extract_strided_slice %170 {offsets = [0, 0], sizes = [6, 256], strides = [1, 1]} : vector<24x256xf32> to vector<6x256xf32>
    %172 = tpu.concatenate %171, %171, %171, %171 in 0 : vector<6x256xf32>, vector<6x256xf32>, vector<6x256xf32>, vector<6x256xf32> -> vector<24x256xf32>
    %173 = vector.extract_strided_slice %170 {offsets = [12, 0], sizes = [6, 256], strides = [1, 1]} : vector<24x256xf32> to vector<6x256xf32>
    %174 = tpu.concatenate %173, %173, %173, %173 in 0 : vector<6x256xf32>, vector<6x256xf32>, vector<6x256xf32>, vector<6x256xf32> -> vector<24x256xf32>
    %175 = arith.mulf %172, %9 : vector<24x256xf32>
    %176 = arith.mulf %174, %10 : vector<24x256xf32>
    %177 = arith.subf %175, %176 : vector<24x256xf32>
    %178 = arith.mulf %172, %10 : vector<24x256xf32>
    %179 = arith.mulf %174, %9 : vector<24x256xf32>
    %180 = arith.addf %178, %179 : vector<24x256xf32>
    %181 = tpu.concatenate %177, %180 in 0 : vector<24x256xf32>, vector<24x256xf32> -> vector<48x256xf32>
    %cst_61 = arith.constant dense<0.000000e+00> : vector<48x256xf32>
    %182 = tpu.matmul %181, %5, %cst_61 {dimension_numbers = #tpu.dot_dimension_numbers<[1], [0], [0], [1], [0, 0, 1, 1], [], []>} : vector<48x256xf32>, vector<256x256xf32>, vector<48x256xf32> -> vector<48x256xf32>
    %cst_62 = arith.constant dense<0.000000e+00> : vector<48x256xf32>
    %183 = tpu.matmul %181, %6, %cst_62 {dimension_numbers = #tpu.dot_dimension_numbers<[1], [0], [0], [1], [0, 0, 1, 1], [], []>} : vector<48x256xf32>, vector<256x256xf32>, vector<48x256xf32> -> vector<48x256xf32>
    %184 = vector.extract_strided_slice %182 {offsets = [0, 0], sizes = [24, 256], strides = [1, 1]} : vector<48x256xf32> to vector<24x256xf32>
    %185 = vector.extract_strided_slice %183 {offsets = [24, 0], sizes = [24, 256], strides = [1, 1]} : vector<48x256xf32> to vector<24x256xf32>
    %186 = arith.subf %184, %185 : vector<24x256xf32>
    %187 = arith.mulf %186, %11 : vector<24x256xf32>
    %188 = vector.extract_strided_slice %183 {offsets = [0, 0], sizes = [24, 256], strides = [1, 1]} : vector<48x256xf32> to vector<24x256xf32>
    %189 = vector.extract_strided_slice %182 {offsets = [24, 0], sizes = [24, 256], strides = [1, 1]} : vector<48x256xf32> to vector<24x256xf32>
    %190 = arith.addf %188, %189 : vector<24x256xf32>
    %191 = arith.mulf %190, %11 : vector<24x256xf32>
    %192 = tpu.concatenate %49, %187, %191, %2 in 0 : vector<96x256xf32>, vector<24x256xf32>, vector<24x256xf32>, vector<48x256xf32> -> vector<192x256xf32>
    %c1 = arith.constant 1 : index
    %c0_63 = arith.constant 0 : index
    %c0_64 = arith.constant 0 : index
    %193 = vector.load %arg9[%c1, %c0_63, %c0_64] : memref<2x192x192xf32, #tpu.memory_space<vmem>>, vector<1x192x192xf32>
    %194 = vector.shape_cast %193 : vector<1x192x192xf32> to vector<192x192xf32>
    %cst_65 = arith.constant dense<0.000000e+00> : vector<192x256xf32>
    %195 = tpu.matmul %194, %192, %cst_65 {dimension_numbers = #tpu.dot_dimension_numbers<[1], [0], [0], [1], [0, 0, 1, 1], [], []>} : vector<192x192xf32>, vector<192x256xf32>, vector<192x256xf32> -> vector<192x256xf32>
    %c1_66 = arith.constant 1 : index
    %c0_67 = arith.constant 0 : index
    %c0_68 = arith.constant 0 : index
    %196 = vector.load %arg10[%c1_66, %c0_67, %c0_68] : memref<2x192x1xf32, #tpu.memory_space<vmem>>, vector<1x192x1xf32>
    %197 = vector.shape_cast %196 : vector<1x192x1xf32> to vector<192x1xf32>
    %198 = vector.broadcast %197 : vector<192x1xf32> to vector<192x256xf32>
    %199 = arith.addf %195, %198 : vector<192x256xf32>
    %cst_69 = arith.constant 0.000000e+00 : f32
    %200 = vector.broadcast %cst_69 : f32 to vector<192x256xf32>
    %201 = arith.maximumf %199, %200 : vector<192x256xf32>
    %c1_70 = arith.constant 1 : index
    %c0_71 = arith.constant 0 : index
    %c0_72 = arith.constant 0 : index
    %202 = vector.load %arg11[%c1_70, %c0_71, %c0_72] : memref<2x96x192xf32, #tpu.memory_space<vmem>>, vector<1x96x192xf32>
    %203 = vector.shape_cast %202 : vector<1x96x192xf32> to vector<96x192xf32>
    %cst_73 = arith.constant dense<0.000000e+00> : vector<96x256xf32>
    %204 = tpu.matmul %203, %201, %cst_73 {dimension_numbers = #tpu.dot_dimension_numbers<[1], [0], [0], [1], [0, 0, 1, 1], [], []>} : vector<96x192xf32>, vector<192x256xf32>, vector<96x256xf32> -> vector<96x256xf32>
    %c1_74 = arith.constant 1 : index
    %c0_75 = arith.constant 0 : index
    %c0_76 = arith.constant 0 : index
    %205 = vector.load %arg12[%c1_74, %c0_75, %c0_76] : memref<2x96x1xf32, #tpu.memory_space<vmem>>, vector<1x96x1xf32>
    %206 = vector.shape_cast %205 : vector<1x96x1xf32> to vector<96x1xf32>
    %207 = vector.broadcast %206 : vector<96x1xf32> to vector<96x256xf32>
    %208 = arith.addf %204, %207 : vector<96x256xf32>
    %209 = vector.extract_strided_slice %208 {offsets = [0, 0], sizes = [24, 256], strides = [1, 1]} : vector<96x256xf32> to vector<24x256xf32>
    %210 = arith.mulf %209, %11 : vector<24x256xf32>
    %211 = vector.extract_strided_slice %208 {offsets = [48, 0], sizes = [24, 256], strides = [1, 1]} : vector<96x256xf32> to vector<24x256xf32>
    %212 = arith.mulf %211, %11 : vector<24x256xf32>
    %213 = tpu.concatenate %210, %212 in 0 : vector<24x256xf32>, vector<24x256xf32> -> vector<48x256xf32>
    %cst_77 = arith.constant dense<0.000000e+00> : vector<48x256xf32>
    %214 = tpu.matmul %213, %5, %cst_77 {dimension_numbers = #tpu.dot_dimension_numbers<[1], [0], [0], [1], [0, 0, 1, 1], [], []>} : vector<48x256xf32>, vector<256x256xf32>, vector<48x256xf32> -> vector<48x256xf32>
    %cst_78 = arith.constant dense<0.000000e+00> : vector<48x256xf32>
    %215 = tpu.matmul %213, %6, %cst_78 {dimension_numbers = #tpu.dot_dimension_numbers<[1], [0], [0], [1], [0, 0, 1, 1], [], []>} : vector<48x256xf32>, vector<256x256xf32>, vector<48x256xf32> -> vector<48x256xf32>
    %216 = vector.extract_strided_slice %214 {offsets = [0, 0], sizes = [24, 256], strides = [1, 1]} : vector<48x256xf32> to vector<24x256xf32>
    %217 = vector.extract_strided_slice %215 {offsets = [24, 0], sizes = [24, 256], strides = [1, 1]} : vector<48x256xf32> to vector<24x256xf32>
    %218 = arith.addf %216, %217 : vector<24x256xf32>
    %219 = vector.extract_strided_slice %214 {offsets = [24, 0], sizes = [24, 256], strides = [1, 1]} : vector<48x256xf32> to vector<24x256xf32>
    %220 = vector.extract_strided_slice %215 {offsets = [0, 0], sizes = [24, 256], strides = [1, 1]} : vector<48x256xf32> to vector<24x256xf32>
    %221 = arith.subf %219, %220 : vector<24x256xf32>
    %222 = arith.mulf %218, %9 : vector<24x256xf32>
    %223 = arith.mulf %221, %10 : vector<24x256xf32>
    %224 = arith.addf %222, %223 : vector<24x256xf32>
    %225 = arith.mulf %221, %9 : vector<24x256xf32>
    %226 = arith.mulf %218, %10 : vector<24x256xf32>
    %227 = arith.subf %225, %226 : vector<24x256xf32>
    %228 = tpu.concatenate %224, %227 in 0 : vector<24x256xf32>, vector<24x256xf32> -> vector<48x256xf32>
    %cst_79 = arith.constant dense<0.000000e+00> : vector<12x256xf32>
    %229 = tpu.matmul %7, %228, %cst_79 {dimension_numbers = #tpu.dot_dimension_numbers<[1], [0], [0], [1], [0, 0, 1, 1], [], []>} : vector<12x48xf32>, vector<48x256xf32>, vector<12x256xf32> -> vector<12x256xf32>
    %cst_80 = arith.constant 0.000000e+00 : f32
    %230 = vector.broadcast %cst_80 : f32 to vector<4x256xf32>
    %231 = tpu.concatenate %170, %229, %230 in 0 : vector<24x256xf32>, vector<12x256xf32>, vector<4x256xf32> -> vector<40x256xf32>
    %c1_81 = arith.constant 1 : index
    %c0_82 = arith.constant 0 : index
    %c0_83 = arith.constant 0 : index
    %232 = vector.load %arg13[%c1_81, %c0_82, %c0_83] : memref<2x48x360xf32, #tpu.memory_space<vmem>>, vector<1x48x360xf32>
    %233 = vector.shape_cast %232 : vector<1x48x360xf32> to vector<48x360xf32>
    %c1_84 = arith.constant 1 : index
    %c0_85 = arith.constant 0 : index
    %c0_86 = arith.constant 0 : index
    %234 = vector.load %arg14[%c1_84, %c0_85, %c0_86] : memref<2x48x1xf32, #tpu.memory_space<vmem>>, vector<1x48x1xf32>
    %235 = vector.shape_cast %234 : vector<1x48x1xf32> to vector<48x1xf32>
    %c17_i32_87 = arith.constant 17 : i32
    %236 = tpu.dynamic_rotate %231 by %c17_i32_87 dim 1 : vector<40x256xf32>, i32 -> vector<40x256xf32>
    %237 = vector.extract_strided_slice %8 {offsets = [0, 0, 0], sizes = [1, 1, 256], strides = [1, 1, 1]} : vector<9x1x256xf32> to vector<1x1x256xf32>
    %238 = vector.shape_cast %237 : vector<1x1x256xf32> to vector<1x256xf32>
    %239 = vector.broadcast %238 : vector<1x256xf32> to vector<40x256xf32>
    %240 = arith.mulf %236, %239 : vector<40x256xf32>
    %c16_i32_88 = arith.constant 16 : i32
    %241 = tpu.dynamic_rotate %231 by %c16_i32_88 dim 1 : vector<40x256xf32>, i32 -> vector<40x256xf32>
    %242 = vector.extract_strided_slice %8 {offsets = [1, 0, 0], sizes = [1, 1, 256], strides = [1, 1, 1]} : vector<9x1x256xf32> to vector<1x1x256xf32>
    %243 = vector.shape_cast %242 : vector<1x1x256xf32> to vector<1x256xf32>
    %244 = vector.broadcast %243 : vector<1x256xf32> to vector<40x256xf32>
    %245 = arith.mulf %241, %244 : vector<40x256xf32>
    %c15_i32_89 = arith.constant 15 : i32
    %246 = tpu.dynamic_rotate %231 by %c15_i32_89 dim 1 : vector<40x256xf32>, i32 -> vector<40x256xf32>
    %247 = vector.extract_strided_slice %8 {offsets = [2, 0, 0], sizes = [1, 1, 256], strides = [1, 1, 1]} : vector<9x1x256xf32> to vector<1x1x256xf32>
    %248 = vector.shape_cast %247 : vector<1x1x256xf32> to vector<1x256xf32>
    %249 = vector.broadcast %248 : vector<1x256xf32> to vector<40x256xf32>
    %250 = arith.mulf %246, %249 : vector<40x256xf32>
    %c1_i32_90 = arith.constant 1 : i32
    %251 = tpu.dynamic_rotate %231 by %c1_i32_90 dim 1 : vector<40x256xf32>, i32 -> vector<40x256xf32>
    %252 = vector.extract_strided_slice %8 {offsets = [3, 0, 0], sizes = [1, 1, 256], strides = [1, 1, 1]} : vector<9x1x256xf32> to vector<1x1x256xf32>
    %253 = vector.shape_cast %252 : vector<1x1x256xf32> to vector<1x256xf32>
    %254 = vector.broadcast %253 : vector<1x256xf32> to vector<40x256xf32>
    %255 = arith.mulf %251, %254 : vector<40x256xf32>
    %c255_i32_91 = arith.constant 255 : i32
    %256 = tpu.dynamic_rotate %231 by %c255_i32_91 dim 1 : vector<40x256xf32>, i32 -> vector<40x256xf32>
    %257 = vector.extract_strided_slice %8 {offsets = [5, 0, 0], sizes = [1, 1, 256], strides = [1, 1, 1]} : vector<9x1x256xf32> to vector<1x1x256xf32>
    %258 = vector.shape_cast %257 : vector<1x1x256xf32> to vector<1x256xf32>
    %259 = vector.broadcast %258 : vector<1x256xf32> to vector<40x256xf32>
    %260 = arith.mulf %256, %259 : vector<40x256xf32>
    %c241_i32_92 = arith.constant 241 : i32
    %261 = tpu.dynamic_rotate %231 by %c241_i32_92 dim 1 : vector<40x256xf32>, i32 -> vector<40x256xf32>
    %262 = vector.extract_strided_slice %8 {offsets = [6, 0, 0], sizes = [1, 1, 256], strides = [1, 1, 1]} : vector<9x1x256xf32> to vector<1x1x256xf32>
    %263 = vector.shape_cast %262 : vector<1x1x256xf32> to vector<1x256xf32>
    %264 = vector.broadcast %263 : vector<1x256xf32> to vector<40x256xf32>
    %265 = arith.mulf %261, %264 : vector<40x256xf32>
    %c240_i32_93 = arith.constant 240 : i32
    %266 = tpu.dynamic_rotate %231 by %c240_i32_93 dim 1 : vector<40x256xf32>, i32 -> vector<40x256xf32>
    %267 = vector.extract_strided_slice %8 {offsets = [7, 0, 0], sizes = [1, 1, 256], strides = [1, 1, 1]} : vector<9x1x256xf32> to vector<1x1x256xf32>
    %268 = vector.shape_cast %267 : vector<1x1x256xf32> to vector<1x256xf32>
    %269 = vector.broadcast %268 : vector<1x256xf32> to vector<40x256xf32>
    %270 = arith.mulf %266, %269 : vector<40x256xf32>
    %c239_i32_94 = arith.constant 239 : i32
    %271 = tpu.dynamic_rotate %231 by %c239_i32_94 dim 1 : vector<40x256xf32>, i32 -> vector<40x256xf32>
    %272 = vector.extract_strided_slice %8 {offsets = [8, 0, 0], sizes = [1, 1, 256], strides = [1, 1, 1]} : vector<9x1x256xf32> to vector<1x1x256xf32>
    %273 = vector.shape_cast %272 : vector<1x1x256xf32> to vector<1x256xf32>
    %274 = vector.broadcast %273 : vector<1x256xf32> to vector<40x256xf32>
    %275 = arith.mulf %271, %274 : vector<40x256xf32>
    %276 = tpu.concatenate %240, %245, %250, %255, %231, %260, %265, %270, %275 in 0 : vector<40x256xf32>, vector<40x256xf32>, vector<40x256xf32>, vector<40x256xf32>, vector<40x256xf32>, vector<40x256xf32>, vector<40x256xf32>, vector<40x256xf32>, vector<40x256xf32> -> vector<360x256xf32>
    %cst_95 = arith.constant dense<0.000000e+00> : vector<48x256xf32>
    %277 = tpu.matmul %233, %276, %cst_95 {dimension_numbers = #tpu.dot_dimension_numbers<[1], [0], [0], [1], [0, 0, 1, 1], [], []>} : vector<48x360xf32>, vector<360x256xf32>, vector<48x256xf32> -> vector<48x256xf32>
    %278 = vector.broadcast %235 : vector<48x1xf32> to vector<48x256xf32>
    %279 = arith.addf %277, %278 : vector<48x256xf32>
    %cst_96 = arith.constant 0.000000e+00 : f32
    %280 = vector.broadcast %cst_96 : f32 to vector<48x256xf32>
    %281 = arith.maximumf %279, %280 : vector<48x256xf32>
    %c1_97 = arith.constant 1 : index
    %c0_98 = arith.constant 0 : index
    %c0_99 = arith.constant 0 : index
    %282 = vector.load %arg15[%c1_97, %c0_98, %c0_99] : memref<2x24x432xf32, #tpu.memory_space<vmem>>, vector<1x24x432xf32>
    %283 = vector.shape_cast %282 : vector<1x24x432xf32> to vector<24x432xf32>
    %c1_100 = arith.constant 1 : index
    %c0_101 = arith.constant 0 : index
    %c0_102 = arith.constant 0 : index
    %284 = vector.load %arg16[%c1_100, %c0_101, %c0_102] : memref<2x24x1xf32, #tpu.memory_space<vmem>>, vector<1x24x1xf32>
    %285 = vector.shape_cast %284 : vector<1x24x1xf32> to vector<24x1xf32>
    %c17_i32_103 = arith.constant 17 : i32
    %286 = tpu.dynamic_rotate %281 by %c17_i32_103 dim 1 : vector<48x256xf32>, i32 -> vector<48x256xf32>
    %287 = vector.extract_strided_slice %8 {offsets = [0, 0, 0], sizes = [1, 1, 256], strides = [1, 1, 1]} : vector<9x1x256xf32> to vector<1x1x256xf32>
    %288 = vector.shape_cast %287 : vector<1x1x256xf32> to vector<1x256xf32>
    %289 = vector.broadcast %288 : vector<1x256xf32> to vector<48x256xf32>
    %290 = arith.mulf %286, %289 : vector<48x256xf32>
    %c16_i32_104 = arith.constant 16 : i32
    %291 = tpu.dynamic_rotate %281 by %c16_i32_104 dim 1 : vector<48x256xf32>, i32 -> vector<48x256xf32>
    %292 = vector.extract_strided_slice %8 {offsets = [1, 0, 0], sizes = [1, 1, 256], strides = [1, 1, 1]} : vector<9x1x256xf32> to vector<1x1x256xf32>
    %293 = vector.shape_cast %292 : vector<1x1x256xf32> to vector<1x256xf32>
    %294 = vector.broadcast %293 : vector<1x256xf32> to vector<48x256xf32>
    %295 = arith.mulf %291, %294 : vector<48x256xf32>
    %c15_i32_105 = arith.constant 15 : i32
    %296 = tpu.dynamic_rotate %281 by %c15_i32_105 dim 1 : vector<48x256xf32>, i32 -> vector<48x256xf32>
    %297 = vector.extract_strided_slice %8 {offsets = [2, 0, 0], sizes = [1, 1, 256], strides = [1, 1, 1]} : vector<9x1x256xf32> to vector<1x1x256xf32>
    %298 = vector.shape_cast %297 : vector<1x1x256xf32> to vector<1x256xf32>
    %299 = vector.broadcast %298 : vector<1x256xf32> to vector<48x256xf32>
    %300 = arith.mulf %296, %299 : vector<48x256xf32>
    %c1_i32_106 = arith.constant 1 : i32
    %301 = tpu.dynamic_rotate %281 by %c1_i32_106 dim 1 : vector<48x256xf32>, i32 -> vector<48x256xf32>
    %302 = vector.extract_strided_slice %8 {offsets = [3, 0, 0], sizes = [1, 1, 256], strides = [1, 1, 1]} : vector<9x1x256xf32> to vector<1x1x256xf32>
    %303 = vector.shape_cast %302 : vector<1x1x256xf32> to vector<1x256xf32>
    %304 = vector.broadcast %303 : vector<1x256xf32> to vector<48x256xf32>
    %305 = arith.mulf %301, %304 : vector<48x256xf32>
    %c255_i32_107 = arith.constant 255 : i32
    %306 = tpu.dynamic_rotate %281 by %c255_i32_107 dim 1 : vector<48x256xf32>, i32 -> vector<48x256xf32>
    %307 = vector.extract_strided_slice %8 {offsets = [5, 0, 0], sizes = [1, 1, 256], strides = [1, 1, 1]} : vector<9x1x256xf32> to vector<1x1x256xf32>
    %308 = vector.shape_cast %307 : vector<1x1x256xf32> to vector<1x256xf32>
    %309 = vector.broadcast %308 : vector<1x256xf32> to vector<48x256xf32>
    %310 = arith.mulf %306, %309 : vector<48x256xf32>
    %c241_i32_108 = arith.constant 241 : i32
    %311 = tpu.dynamic_rotate %281 by %c241_i32_108 dim 1 : vector<48x256xf32>, i32 -> vector<48x256xf32>
    %312 = vector.extract_strided_slice %8 {offsets = [6, 0, 0], sizes = [1, 1, 256], strides = [1, 1, 1]} : vector<9x1x256xf32> to vector<1x1x256xf32>
    %313 = vector.shape_cast %312 : vector<1x1x256xf32> to vector<1x256xf32>
    %314 = vector.broadcast %313 : vector<1x256xf32> to vector<48x256xf32>
    %315 = arith.mulf %311, %314 : vector<48x256xf32>
    %c240_i32_109 = arith.constant 240 : i32
    %316 = tpu.dynamic_rotate %281 by %c240_i32_109 dim 1 : vector<48x256xf32>, i32 -> vector<48x256xf32>
    %317 = vector.extract_strided_slice %8 {offsets = [7, 0, 0], sizes = [1, 1, 256], strides = [1, 1, 1]} : vector<9x1x256xf32> to vector<1x1x256xf32>
    %318 = vector.shape_cast %317 : vector<1x1x256xf32> to vector<1x256xf32>
    %319 = vector.broadcast %318 : vector<1x256xf32> to vector<48x256xf32>
    %320 = arith.mulf %316, %319 : vector<48x256xf32>
    %c239_i32_110 = arith.constant 239 : i32
    %321 = tpu.dynamic_rotate %281 by %c239_i32_110 dim 1 : vector<48x256xf32>, i32 -> vector<48x256xf32>
    %322 = vector.extract_strided_slice %8 {offsets = [8, 0, 0], sizes = [1, 1, 256], strides = [1, 1, 1]} : vector<9x1x256xf32> to vector<1x1x256xf32>
    %323 = vector.shape_cast %322 : vector<1x1x256xf32> to vector<1x256xf32>
    %324 = vector.broadcast %323 : vector<1x256xf32> to vector<48x256xf32>
    %325 = arith.mulf %321, %324 : vector<48x256xf32>
    %326 = tpu.concatenate %290, %295, %300, %305, %281, %310, %315, %320, %325 in 0 : vector<48x256xf32>, vector<48x256xf32>, vector<48x256xf32>, vector<48x256xf32>, vector<48x256xf32>, vector<48x256xf32>, vector<48x256xf32>, vector<48x256xf32>, vector<48x256xf32> -> vector<432x256xf32>
    %cst_111 = arith.constant dense<0.000000e+00> : vector<24x256xf32>
    %327 = tpu.matmul %283, %326, %cst_111 {dimension_numbers = #tpu.dot_dimension_numbers<[1], [0], [0], [1], [0, 0, 1, 1], [], []>} : vector<24x432xf32>, vector<432x256xf32>, vector<24x256xf32> -> vector<24x256xf32>
    %328 = vector.broadcast %285 : vector<24x1xf32> to vector<24x256xf32>
    %329 = arith.addf %327, %328 : vector<24x256xf32>
    %c0_112 = arith.constant 0 : index
    %c0_113 = arith.constant 0 : index
    %330 = vector.load %arg18[%c0_112, %c0_113] : memref<24x256xf32, #tpu.memory_space<vmem>>, vector<24x256xf32>
    tpu.vector_store %arg18[%c0_112, %c0_113], %329 {strides = array<i32>} : memref<24x256xf32, #tpu.memory_space<vmem>>, vector<24x256xf32>,
    %c0_114 = arith.constant 0 : index
    %c0_115 = arith.constant 0 : index
    %331 = vector.load %arg19[%c0_114, %c0_115] : memref<96x256xf32, #tpu.memory_space<vmem>>, vector<96x256xf32>
    tpu.vector_store %arg19[%c0_114, %c0_115], %208 {strides = array<i32>} : memref<96x256xf32, #tpu.memory_space<vmem>>, vector<96x256xf32>,
    return
  }
  func.func @transform_0(%arg0: i32) -> (i32, i32) {
    %c0_i32 = arith.constant 0 : i32
    %c0_i32_0 = arith.constant 0 : i32
    %c0_i32_1 = arith.constant 0 : i32
    return %c0_i32, %c0_i32_0 : i32, i32
  }
  func.func @transform_1(%arg0: i32) -> (i32, i32) {
    %c0_i32 = arith.constant 0 : i32
    %c0_i32_0 = arith.constant 0 : i32
    %c0_i32_1 = arith.constant 0 : i32
    return %c0_i32, %c0_i32_0 : i32, i32
  }
  func.func @transform_2(%arg0: i32) -> (i32, i32) {
    %c0_i32 = arith.constant 0 : i32
    %c0_i32_0 = arith.constant 0 : i32
    %c0_i32_1 = arith.constant 0 : i32
    return %c0_i32, %c0_i32_0 : i32, i32
  }
  func.func @transform_3(%arg0: i32) -> (i32, i32) {
    %c0_i32 = arith.constant 0 : i32
    %c0_i32_0 = arith.constant 0 : i32
    %c0_i32_1 = arith.constant 0 : i32
    return %c0_i32, %c0_i32_0 : i32, i32
  }
  func.func @transform_4(%arg0: i32) -> (i32, i32) {
    %c0_i32 = arith.constant 0 : i32
    %c0_i32_0 = arith.constant 0 : i32
    %c0_i32_1 = arith.constant 0 : i32
    return %c0_i32, %c0_i32_0 : i32, i32
  }
  func.func @transform_5(%arg0: i32) -> (i32, i32) {
    %c0_i32 = arith.constant 0 : i32
    %c0_i32_0 = arith.constant 0 : i32
    %c0_i32_1 = arith.constant 0 : i32
    return %c0_i32, %c0_i32_0 : i32, i32
  }
  func.func @transform_6(%arg0: i32) -> (i32, i32) {
    %c0_i32 = arith.constant 0 : i32
    %c0_i32_0 = arith.constant 0 : i32
    %c0_i32_1 = arith.constant 0 : i32
    return %c0_i32, %c0_i32_0 : i32, i32
  }
  func.func @transform_7(%arg0: i32) -> (i32, i32) {
    %c0_i32 = arith.constant 0 : i32
    %c0_i32_0 = arith.constant 0 : i32
    %c0_i32_1 = arith.constant 0 : i32
    return %c0_i32, %c0_i32_0 : i32, i32
  }
  func.func @transform_8(%arg0: i32) -> (i32, i32, i32) {
    %c0_i32 = arith.constant 0 : i32
    %c0_i32_0 = arith.constant 0 : i32
    %c0_i32_1 = arith.constant 0 : i32
    %c0_i32_2 = arith.constant 0 : i32
    return %c0_i32, %c0_i32_0, %c0_i32_1 : i32, i32, i32
  }
  func.func @transform_9(%arg0: i32) -> (i32, i32, i32) {
    %c0_i32 = arith.constant 0 : i32
    %c0_i32_0 = arith.constant 0 : i32
    %c0_i32_1 = arith.constant 0 : i32
    %c0_i32_2 = arith.constant 0 : i32
    return %c0_i32, %c0_i32_0, %c0_i32_1 : i32, i32, i32
  }
  func.func @transform_10(%arg0: i32) -> (i32, i32, i32) {
    %c0_i32 = arith.constant 0 : i32
    %c0_i32_0 = arith.constant 0 : i32
    %c0_i32_1 = arith.constant 0 : i32
    %c0_i32_2 = arith.constant 0 : i32
    return %c0_i32, %c0_i32_0, %c0_i32_1 : i32, i32, i32
  }
  func.func @transform_11(%arg0: i32) -> (i32, i32, i32) {
    %c0_i32 = arith.constant 0 : i32
    %c0_i32_0 = arith.constant 0 : i32
    %c0_i32_1 = arith.constant 0 : i32
    %c0_i32_2 = arith.constant 0 : i32
    return %c0_i32, %c0_i32_0, %c0_i32_1 : i32, i32, i32
  }
  func.func @transform_12(%arg0: i32) -> (i32, i32, i32) {
    %c0_i32 = arith.constant 0 : i32
    %c0_i32_0 = arith.constant 0 : i32
    %c0_i32_1 = arith.constant 0 : i32
    %c0_i32_2 = arith.constant 0 : i32
    return %c0_i32, %c0_i32_0, %c0_i32_1 : i32, i32, i32
  }
  func.func @transform_13(%arg0: i32) -> (i32, i32, i32) {
    %c0_i32 = arith.constant 0 : i32
    %c0_i32_0 = arith.constant 0 : i32
    %c0_i32_1 = arith.constant 0 : i32
    %c0_i32_2 = arith.constant 0 : i32
    return %c0_i32, %c0_i32_0, %c0_i32_1 : i32, i32, i32
  }
  func.func @transform_14(%arg0: i32) -> (i32, i32, i32) {
    %c0_i32 = arith.constant 0 : i32
    %c0_i32_0 = arith.constant 0 : i32
    %c0_i32_1 = arith.constant 0 : i32
    %c0_i32_2 = arith.constant 0 : i32
    return %c0_i32, %c0_i32_0, %c0_i32_1 : i32, i32, i32
  }
  func.func @transform_15(%arg0: i32) -> (i32, i32, i32) {
    %c0_i32 = arith.constant 0 : i32
    %c0_i32_0 = arith.constant 0 : i32
    %c0_i32_1 = arith.constant 0 : i32
    %c0_i32_2 = arith.constant 0 : i32
    return %c0_i32, %c0_i32_0, %c0_i32_1 : i32, i32, i32
  }
  func.func @transform_16(%arg0: i32) -> (i32, i32, i32) {
    %c0_i32 = arith.constant 0 : i32
    %c0_i32_0 = arith.constant 0 : i32
    %c0_i32_1 = arith.constant 0 : i32
    %c0_i32_2 = arith.constant 0 : i32
    return %c0_i32, %c0_i32_0, %c0_i32_1 : i32, i32, i32
  }
  func.func @transform_17(%arg0: i32) -> (i32, i32) {
    %c0_i32 = arith.constant 0 : i32
    %c0_i32_0 = arith.constant 0 : i32
    %c0_i32_1 = arith.constant 0 : i32
    return %c0_i32, %c0_i32_0 : i32, i32
  }
  func.func @transform_18(%arg0: i32) -> (i32, i32) {
    %c0_i32 = arith.constant 0 : i32
    %c0_i32_0 = arith.constant 0 : i32
    %c0_i32_1 = arith.constant 0 : i32
    return %c0_i32, %c0_i32_0 : i32, i32
  }
}

</mosaic_0001>

<llo_original>
// kernel: squeeze.1
$region0: #{squeeze.1}
  %s0 = inlined_call_operand.vmem [shape: f32[2,3,16,16], index: 0, kind: input, shape index: {}]
  %s1 = inlined_call_operand.vmem [shape: f32[6,256], index: 1, kind: output, shape index: {}]
  %v2 = vld [vmem:[%s0] ss:$8 sm:$0xf]
  %v3 = vld [vmem:[%s0] ss:$8 sm:$0xf0]
  %vm4 = vcmask 1047556
  %v5 = vsel %vm4, %v3, %v2
  %vm6 = vcmask 130048
  %7 = vst.msk [vmem:[%s1] ss:$8 sm:$0x3] %vm6, %v5
  %s8 = scalar_lea.vmem %s1, 4294967281
  %9 = vst.msk [vmem:[%s8] ss:$8 sm:$0xc] %vm6, %v5
  %s10 = scalar_lea.vmem %s1, 4294967266
  %11 = vst.msk [vmem:[%s10] ss:$8 sm:$0x30] %vm6, %v5
  %s12 = scalar_lea.vmem %s1, 4294967251
  %13 = vst.msk [vmem:[%s12] ss:$8 sm:$0xc0] %vm6, %v5
  %s14 = scalar_lea.vmem %s0, 64
  %v15 = vld [vmem:[%s14] ss:$8 sm:$0xf]
  %vm16 = vcmask 130048
  %s17 = scalar_lea.vmem %s1, 4
  %18 = vst.msk [vmem:[%s17] ss:$8 sm:$0x3] %vm16, %v15
  %s19 = scalar_lea.vmem %s1, 4294967285
  %20 = vst.msk [vmem:[%s19] ss:$8 sm:$0xc] %vm16, %v15
  %s21 = scalar_lea.vmem %s0, 7
  %s22 = smov 3
  %v23 = vld [vmem:[%s21] ss:$16 sm:%s22]
  %s24 = scalar_lea.vmem %s0, 7
  %s25 = smov 12
  %v26 = vld [vmem:[%s24] ss:$16 sm:%s25]
  %vm27 = vcmask 1043458
  %v28 = vsel %vm27, %v26, %v23
  %s29 = scalar_lea.vmem %s0, 7
  %s30 = smov 48
  %v31 = vld [vmem:[%s29] ss:$16 sm:%s30]
  %vm32 = vcmask 1045508
  %v33 = vsel %vm32, %v31, %v28
  %s34 = scalar_lea.vmem %s0, 4294967215
  %s35 = smov 192
  %v36 = vld [vmem:[%s34] ss:$16 sm:%s35]
  %vm37 = vcmask 1047558
  %v38 = vsel %vm37, %v36, %v33
  %39 = vrot.lane.b32.xlu0 %v38, 112
  %v40 = vpop.permute.xlu0 %39
  %vm41 = vcmask 1048448
  %42 = vst.msk [vmem:[%s1] sm:$0x3f] %vm41, %v40
  %s43 = scalar_lea.vmem %s1, 2
  %44 = vst.msk [vmem:[%s43] sm:$0xc0] %vm41, %v40
  %s45 = scalar_lea.vmem %s0, 47
  %s46 = smov 3
  %v47 = vld [vmem:[%s45] ss:$16 sm:%s46]
  %s48 = scalar_lea.vmem %s0, 47
  %s49 = smov 12
  %v50 = vld [vmem:[%s48] ss:$16 sm:%s49]
  %vm51 = vcmask 1043458
  %v52 = vsel %vm51, %v50, %v47
  %53 = vrot.lane.b32.xlu0 %v52, 112
  %v54 = vpop.permute.xlu0 %53
  %vm55 = vcmask 1048448
  %s56 = scalar_lea.vmem %s1, 10
  %57 = vst.msk [vmem:[%s56] sm:$0xf] %vm55, %v54
  %s58 = scalar_lea.vmem %s0, 6
  %s59 = smov 3
  %v60 = vld [vmem:[%s58] ss:$16 sm:%s59]
  %s61 = scalar_lea.vmem %s0, 6
  %s62 = smov 12
  %v63 = vld [vmem:[%s61] ss:$16 sm:%s62]
  %vm64 = vcmask 1043458
  %v65 = vsel %vm64, %v63, %v60
  %s66 = scalar_lea.vmem %s0, 6
  %s67 = smov 48
  %v68 = vld [vmem:[%s66] ss:$16 sm:%s67]
  %vm69 = vcmask 1045508
  %v70 = vsel %vm69, %v68, %v65
  %s71 = scalar_lea.vmem %s0, 4294967214
  %s72 = smov 192
  %v73 = vld [vmem:[%s71] ss:$16 sm:%s72]
  %vm74 = vcmask 1047558
  %v75 = vsel %vm74, %v73, %v70
  %76 = vrot.lane.b32.xlu0 %v75, 96
  %v77 = vpop.permute.xlu0 %76
  %vm78 = vcmask 917248
  %79 = vst.msk [vmem:[%s1] sm:$0x3f] %vm78, %v77
  %s80 = scalar_lea.vmem %s1, 2
  %81 = vst.msk [vmem:[%s80] sm:$0xc0] %vm78, %v77
  %s82 = scalar_lea.vmem %s0, 46
  %s83 = smov 3
  %v84 = vld [vmem:[%s82] ss:$16 sm:%s83]
  %s85 = scalar_lea.vmem %s0, 46
  %s86 = smov 12
  %v87 = vld [vmem:[%s85] ss:$16 sm:%s86]
  %vm88 = vcmask 1043458
  %v89 = vsel %vm88, %v87, %v84
  %90 = vrot.lane.b32.xlu0 %v89, 96
  %v91 = vpop.permute.xlu0 %90
  %vm92 = vcmask 917248
  %s93 = scalar_lea.vmem %s1, 10
  %94 = vst.msk [vmem:[%s93] sm:$0xf] %vm92, %v91
  %s95 = scalar_lea.vmem %s0, 5
  %s96 = smov 3
  %v97 = vld [vmem:[%s95] ss:$16 sm:%s96]
  %s98 = scalar_lea.vmem %s0, 5
  %s99 = smov 12
  %v100 = vld [vmem:[%s98] ss:$16 sm:%s99]
  %vm101 = vcmask 1043458
  %v102 = vsel %vm101, %v100, %v97
  %s103 = scalar_lea.vmem %s0, 5
  %s104 = smov 48
  %v105 = vld [vmem:[%s103] ss:$16 sm:%s104]
  %vm106 = vcmask 1045508
  %v107 = vsel %vm106, %v105, %v102
  %s108 = scalar_lea.vmem %s0, 4294967213
  %s109 = smov 192
  %v110 = vld [vmem:[%s108] ss:$16 sm:%s109]
  %vm111 = vcmask 1047558
  %v112 = vsel %vm111, %v110, %v107
  %113 = vrot.lane.b32.xlu0 %v112, 80
  %v114 = vpop.permute.xlu0 %113
  %vm115 = vcmask 786048
  %116 = vst.msk [vmem:[%s1] sm:$0x3f] %vm115, %v114
  %s117 = scalar_lea.vmem %s1, 2
  %118 = vst.msk [vmem:[%s117] sm:$0xc0] %vm115, %v114
  %s119 = scalar_lea.vmem %s0, 45
  %s120 = smov 3
  %v121 = vld [vmem:[%s119] ss:$16 sm:%s120]
  %s122 = scalar_lea.vmem %s0, 45
  %s123 = smov 12
  %v124 = vld [vmem:[%s122] ss:$16 sm:%s123]
  %vm125 = vcmask 1043458
  %v126 = vsel %vm125, %v124, %v121
  %127 = vrot.lane.b32.xlu0 %v126, 80
  %v128 = vpop.permute.xlu0 %127
  %vm129 = vcmask 786048
  %s130 = scalar_lea.vmem %s1, 10
  %131 = vst.msk [vmem:[%s130] sm:$0xf] %vm129, %v128
  %s132 = scalar_lea.vmem %s0, 4
  %s133 = smov 3
  %v134 = vld [vmem:[%s132] ss:$16 sm:%s133]
  %s135 = scalar_lea.vmem %s0, 4
  %s136 = smov 12
  %v137 = vld [vmem:[%s135] ss:$16 sm:%s136]
  %vm138 = vcmask 1043458
  %v139 = vsel %vm138, %v137, %v134
  %s140 = scalar_lea.vmem %s0, 4
  %s141 = smov 48
  %v142 = vld [vmem:[%s140] ss:$16 sm:%s141]
  %vm143 = vcmask 1045508
  %v144 = vsel %vm143, %v142, %v139
  %s145 = scalar_lea.vmem %s0, 4294967212
  %s146 = smov 192
  %v147 = vld [vmem:[%s145] ss:$16 sm:%s146]
  %vm148 = vcmask 1047558
  %v149 = vsel %vm148, %v147, %v144
  %150 = vrot.lane.b32.xlu0 %v149, 64
  %v151 = vpop.permute.xlu0 %150
  %vm152 = vcmask 654848
  %153 = vst.msk [vmem:[%s1] sm:$0x3f] %vm152, %v151
  %s154 = scalar_lea.vmem %s1, 2
  %155 = vst.msk [vmem:[%s154] sm:$0xc0] %vm152, %v151
  %s156 = scalar_lea.vmem %s0, 44
  %s157 = smov 3
  %v158 = vld [vmem:[%s156] ss:$16 sm:%s157]
  %s159 = scalar_lea.vmem %s0, 44
  %s160 = smov 12
  %v161 = vld [vmem:[%s159] ss:$16 sm:%s160]
  %vm162 = vcmask 1043458
  %v163 = vsel %vm162, %v161, %v158
  %164 = vrot.lane.b32.xlu0 %v163, 64
  %v165 = vpop.permute.xlu0 %164
  %vm166 = vcmask 654848
  %s167 = scalar_lea.vmem %s1, 10
  %168 = vst.msk [vmem:[%s167] sm:$0xf] %vm166, %v165
  %s169 = scalar_lea.vmem %s0, 3
  %s170 = smov 3
  %v171 = vld [vmem:[%s169] ss:$16 sm:%s170]
  %s172 = scalar_lea.vmem %s0, 3
  %s173 = smov 12
  %v174 = vld [vmem:[%s172] ss:$16 sm:%s173]
  %vm175 = vcmask 1043458
  %v176 = vsel %vm175, %v174, %v171
  %s177 = scalar_lea.vmem %s0, 3
  %s178 = smov 48
  %v179 = vld [vmem:[%s177] ss:$16 sm:%s178]
  %vm180 = vcmask 1045508
  %v181 = vsel %vm180, %v179, %v176
  %s182 = scalar_lea.vmem %s0, 4294967211
  %s183 = smov 192
  %v184 = vld [vmem:[%s182] ss:$16 sm:%s183]
  %vm185 = vcmask 1047558
  %v186 = vsel %vm185, %v184, %v181
  %187 = vrot.lane.b32.xlu0 %v186, 48
  %v188 = vpop.permute.xlu0 %187
  %vm189 = vcmask 523648
  %190 = vst.msk [vmem:[%s1] sm:$0x3f] %vm189, %v188
  %s191 = scalar_lea.vmem %s1, 2
  %192 = vst.msk [vmem:[%s191] sm:$0xc0] %vm189, %v188
  %s193 = scalar_lea.vmem %s0, 43
  %s194 = smov 3
  %v195 = vld [vmem:[%s193] ss:$16 sm:%s194]
  %s196 = scalar_lea.vmem %s0, 43
  %s197 = smov 12
  %v198 = vld [vmem:[%s196] ss:$16 sm:%s197]
  %vm199 = vcmask 1043458
  %v200 = vsel %vm199, %v198, %v195
  %201 = vrot.lane.b32.xlu0 %v200, 48
  %v202 = vpop.permute.xlu0 %201
  %vm203 = vcmask 523648
  %s204 = scalar_lea.vmem %s1, 10
  %205 = vst.msk [vmem:[%s204] sm:$0xf] %vm203, %v202
  %s206 = scalar_lea.vmem %s0, 2
  %s207 = smov 3
  %v208 = vld [vmem:[%s206] ss:$16 sm:%s207]
  %s209 = scalar_lea.vmem %s0, 2
  %s210 = smov 12
  %v211 = vld [vmem:[%s209] ss:$16 sm:%s210]
  %vm212 = vcmask 1043458
  %v213 = vsel %vm212, %v211, %v208
  %s214 = scalar_lea.vmem %s0, 2
  %s215 = smov 48
  %v216 = vld [vmem:[%s214] ss:$16 sm:%s215]
  %vm217 = vcmask 1045508
  %v218 = vsel %vm217, %v216, %v213
  %s219 = scalar_lea.vmem %s0, 4294967210
  %s220 = smov 192
  %v221 = vld [vmem:[%s219] ss:$16 sm:%s220]
  %vm222 = vcmask 1047558
  %v223 = vsel %vm222, %v221, %v218
  %224 = vrot.lane.b32.xlu0 %v223, 32
  %v225 = vpop.permute.xlu0 %224
  %vm226 = vcmask 392448
  %227 = vst.msk [vmem:[%s1] sm:$0x3f] %vm226, %v225
  %s228 = scalar_lea.vmem %s1, 2
  %229 = vst.msk [vmem:[%s228] sm:$0xc0] %vm226, %v225
  %s230 = scalar_lea.vmem %s0, 42
  %s231 = smov 3
  %v232 = vld [vmem:[%s230] ss:$16 sm:%s231]
  %s233 = scalar_lea.vmem %s0, 42
  %s234 = smov 12
  %v235 = vld [vmem:[%s233] ss:$16 sm:%s234]
  %vm236 = vcmask 1043458
  %v237 = vsel %vm236, %v235, %v232
  %238 = vrot.lane.b32.xlu0 %v237, 32
  %v239 = vpop.permute.xlu0 %238
  %vm240 = vcmask 392448
  %s241 = scalar_lea.vmem %s1, 10
  %242 = vst.msk [vmem:[%s241] sm:$0xf] %vm240, %v239
  %s243 = scalar_lea.vmem %s0, 1
  %s244 = smov 3
  %v245 = vld [vmem:[%s243] ss:$16 sm:%s244]
  %s246 = scalar_lea.vmem %s0, 1
  %s247 = smov 12
  %v248 = vld [vmem:[%s246] ss:$16 sm:%s247]
  %vm249 = vcmask 1043458
  %v250 = vsel %vm249, %v248, %v245
  %s251 = scalar_lea.vmem %s0, 1
  %s252 = smov 48
  %v253 = vld [vmem:[%s251] ss:$16 sm:%s252]
  %vm254 = vcmask 1045508
  %v255 = vsel %vm254, %v253, %v250
  %s256 = scalar_lea.vmem %s0, 4294967209
  %s257 = smov 192
  %v258 = vld [vmem:[%s256] ss:$16 sm:%s257]
  %vm259 = vcmask 1047558
  %v260 = vsel %vm259, %v258, %v255
  %261 = vrot.lane.b32.xlu0 %v260, 16
  %v262 = vpop.permute.xlu0 %261
  %vm263 = vcmask 261248
  %264 = vst.msk [vmem:[%s1] sm:$0x3f] %vm263, %v262
  %s265 = scalar_lea.vmem %s1, 2
  %266 = vst.msk [vmem:[%s265] sm:$0xc0] %vm263, %v262
  %s267 = scalar_lea.vmem %s0, 41
  %s268 = smov 3
  %v269 = vld [vmem:[%s267] ss:$16 sm:%s268]
  %s270 = scalar_lea.vmem %s0, 41
  %s271 = smov 12
  %v272 = vld [vmem:[%s270] ss:$16 sm:%s271]
  %vm273 = vcmask 1043458
  %v274 = vsel %vm273, %v272, %v269
  %275 = vrot.lane.b32.xlu0 %v274, 16
  %v276 = vpop.permute.xlu0 %275
  %vm277 = vcmask 261248
  %s278 = scalar_lea.vmem %s1, 10
  %279 = vst.msk [vmem:[%s278] sm:$0xf] %vm277, %v276

// kernel: xpdnet_forward_all_unrolls.1
$region0: #{xpdnet_forward_all_unrolls.1}
  #allocation0 [shape = 'u32[]', space=smem, size = 0x4, offset = 0x4, fixed_abs, tag = 'smem constant byte address 0x4 - core index']
  #allocation1 [shape = 'u32[72,128]{1,0:T(1,128)}', space=vmem, size = 0x9000, scoped, tag = 'internal scratch']
  %s0 = inlined_call_operand.vmem [shape: f32[24,256], index: 0, kind: input, shape index: {}]
  %s1 = inlined_call_operand.vmem [shape: f32[96,256], index: 1, kind: input, shape index: {}]
  %s2 = inlined_call_operand.vmem [shape: f32[48,256], index: 2, kind: input, shape index: {}]
  %s3 = inlined_call_operand.vmem [shape: f32[6,256], index: 3, kind: input, shape index: {}]
  %s4 = inlined_call_operand.vmem [shape: f32[48,256], index: 4, kind: input, shape index: {}]
  %s5 = inlined_call_operand.vmem [shape: f32[256,256], index: 5, kind: input, shape index: {}]
  %s6 = inlined_call_operand.vmem [shape: f32[256,256], index: 6, kind: input, shape index: {}]
  %s7 = inlined_call_operand.vmem [shape: f32[12,48], index: 7, kind: input, shape index: {}]
  %s8 = inlined_call_operand.vmem [shape: f32[2,192,192], index: 8, kind: input, shape index: {}]
  %s9 = inlined_call_operand.vmem [shape: f32[2,192,1], index: 9, kind: input, shape index: {}]
  %s10 = inlined_call_operand.vmem [shape: f32[2,96,192], index: 10, kind: input, shape index: {}]
  %s11 = inlined_call_operand.vmem [shape: f32[2,96,1], index: 11, kind: input, shape index: {}]
  %s12 = inlined_call_operand.vmem [shape: f32[2,48,360], index: 12, kind: input, shape index: {}]
  %s13 = inlined_call_operand.vmem [shape: f32[2,48,1], index: 13, kind: input, shape index: {}]
  %s14 = inlined_call_operand.vmem [shape: f32[2,24,432], index: 14, kind: input, shape index: {}]
  %s15 = inlined_call_operand.vmem [shape: f32[2,24,1], index: 15, kind: input, shape index: {}]
  %s16 = inlined_call_operand.vmem [shape: f32[9,1,256], index: 16, kind: input, shape index: {}]
  %s17 = inlined_call_operand.vmem [shape: f32[24,256], index: 17, kind: output, shape index: {0}]
  %s18 = inlined_call_operand.vmem [shape: f32[96,256], index: 18, kind: output, shape index: {1}]
  %19 = xla_tuple %s17, %s18
  %s20 = sld [smem:[#allocation0]]
  $region86: #{xpdnet_forward_all_unrolls.1} parent=0
    _
  %s22 = ssub.s32 1, %s20
  %s23 = scalar_select 0, %s22, %s20
  // Predicated region
  $region2: #{xpdnet_forward_all_unrolls.1} parent=0 // pred_check
    _
  $region3: #{xpdnet_forward_all_unrolls.1} parent=0 // pred_check_branch
    %25 = sbr.rel (0) target = $region5
  $region4: #{xpdnet_forward_all_unrolls.1} parent=0 // pred_region
    _
  $region5: #{xpdnet_forward_all_unrolls.1} parent=0 // pred_fallthru
    _
  // Predicated region
  $region6: #{xpdnet_forward_all_unrolls.1} parent=0 // pred_check
    _
  $region7: #{xpdnet_forward_all_unrolls.1} parent=0 // pred_check_branch
    %27 = sbr.rel (0) target = $region9
  $region8: #{xpdnet_forward_all_unrolls.1} parent=0 // pred_region
    _
  $region9: #{xpdnet_forward_all_unrolls.1} parent=0 // pred_fallthru
    _
  // Predicated region
  $region10: #{xpdnet_forward_all_unrolls.1} parent=0 // pred_check
    _
  $region11: #{xpdnet_forward_all_unrolls.1} parent=0 // pred_check_branch
    %29 = sbr.rel (0) target = $region13
  $region12: #{xpdnet_forward_all_unrolls.1} parent=0 // pred_region
    _
  $region13: #{xpdnet_forward_all_unrolls.1} parent=0 // pred_fallthru
    _
  // Predicated region
  $region14: #{xpdnet_forward_all_unrolls.1} parent=0 // pred_check
    _
  $region15: #{xpdnet_forward_all_unrolls.1} parent=0 // pred_check_branch
    %31 = sbr.rel (0) target = $region17
  $region16: #{xpdnet_forward_all_unrolls.1} parent=0 // pred_region
    _
  $region17: #{xpdnet_forward_all_unrolls.1} parent=0 // pred_fallthru
    _
  // Predicated region
  $region18: #{xpdnet_forward_all_unrolls.1} parent=0 // pred_check
    _
  $region19: #{xpdnet_forward_all_unrolls.1} parent=0 // pred_check_branch
    %33 = sbr.rel (0) target = $region21
  $region20: #{xpdnet_forward_all_unrolls.1} parent=0 // pred_region
    _
  $region21: #{xpdnet_forward_all_unrolls.1} parent=0 // pred_fallthru
    _
  // Predicated region
  $region22: #{xpdnet_forward_all_unrolls.1} parent=0 // pred_check
    _
  $region23: #{xpdnet_forward_all_unrolls.1} parent=0 // pred_check_branch
    %35 = sbr.rel (0) target = $region25
  $region24: #{xpdnet_forward_all_unrolls.1} parent=0 // pred_region
    _
  $region25: #{xpdnet_forward_all_unrolls.1} parent=0 // pred_fallthru
    _
  // Predicated region
  $region26: #{xpdnet_forward_all_unrolls.1} parent=0 // pred_check
    _
  $region27: #{xpdnet_forward_all_unrolls.1} parent=0 // pred_check_branch
    %37 = sbr.rel (0) target = $region29
  $region28: #{xpdnet_forward_all_unrolls.1} parent=0 // pred_region
    _
  $region29: #{xpdnet_forward_all_unrolls.1} parent=0 // pred_fallthru
    _
  // Predicated region
  $region30: #{xpdnet_forward_all_unrolls.1} parent=0 // pred_check
    _
  $region31: #{xpdnet_forward_all_unrolls.1} parent=0 // pred_check_branch
    %39 = sbr.rel (0) target = $region33
  $region32: #{xpdnet_forward_all_unrolls.1} parent=0 // pred_region
    _
  $region33: #{xpdnet_forward_all_unrolls.1} parent=0 // pred_fallthru
    _
  // Predicated region
  $region34: #{xpdnet_forward_all_unrolls.1} parent=0 // pred_check
    _
  $region35: #{xpdnet_forward_all_unrolls.1} parent=0 // pred_check_branch
    %41 = sbr.rel (0) target = $region37
  $region36: #{xpdnet_forward_all_unrolls.1} parent=0 // pred_region
    _
  $region37: #{xpdnet_forward_all_unrolls.1} parent=0 // pred_fallthru
    _
  // Predicated region
  $region38: #{xpdnet_forward_all_unrolls.1} parent=0 // pred_check
    _
  $region39: #{xpdnet_forward_all_unrolls.1} parent=0 // pred_check_branch
    %43 = sbr.rel (0) target = $region41
  $region40: #{xpdnet_forward_all_unrolls.1} parent=0 // pred_region
    _
  $region41: #{xpdnet_forward_all_unrolls.1} parent=0 // pred_fallthru
    _
  // Predicated region
  $region42: #{xpdnet_forward_all_unrolls.1} parent=0 // pred_check
    _
  $region43: #{xpdnet_forward_all_unrolls.1} parent=0 // pred_check_branch
    %45 = sbr.rel (0) target = $region45
  $region44: #{xpdnet_forward_all_unrolls.1} parent=0 // pred_region
    _
  $region45: #{xpdnet_forward_all_unrolls.1} parent=0 // pred_fallthru
    _
  // Predicated region
  $region46: #{xpdnet_forward_all_unrolls.1} parent=0 // pred_check
    _
  $region47: #{xpdnet_forward_all_unrolls.1} parent=0 // pred_check_branch
    %47 = sbr.rel (0) target = $region49
  $region48: #{xpdnet_forward_all_unrolls.1} parent=0 // pred_region
    _
  $region49: #{xpdnet_forward_all_unrolls.1} parent=0 // pred_fallthru
    _
  // Predicated region
  $region50: #{xpdnet_forward_all_unrolls.1} parent=0 // pred_check
    _
  $region51: #{xpdnet_forward_all_unrolls.1} parent=0 // pred_check_branch
    %49 = sbr.rel (0) target = $region53
  $region52: #{xpdnet_forward_all_unrolls.1} parent=0 // pred_region
    _
  $region53: #{xpdnet_forward_all_unrolls.1} parent=0 // pred_fallthru
    _
  // Predicated region
  $region54: #{xpdnet_forward_all_unrolls.1} parent=0 // pred_check
    _
  $region55: #{xpdnet_forward_all_unrolls.1} parent=0 // pred_check_branch
    %51 = sbr.rel (0) target = $region57
  $region56: #{xpdnet_forward_all_unrolls.1} parent=0 // pred_region
    _
  $region57: #{xpdnet_forward_all_unrolls.1} parent=0 // pred_fallthru
    _
  // Predicated region
  $region58: #{xpdnet_forward_all_unrolls.1} parent=0 // pred_check
    _
  $region59: #{xpdnet_forward_all_unrolls.1} parent=0 // pred_check_branch
    %53 = sbr.rel (0) target = $region61
  $region60: #{xpdnet_forward_all_unrolls.1} parent=0 // pred_region
    _
  $region61: #{xpdnet_forward_all_unrolls.1} parent=0 // pred_fallthru
    _
  // Predicated region
  $region62: #{xpdnet_forward_all_unrolls.1} parent=0 // pred_check
    _
  $region63: #{xpdnet_forward_all_unrolls.1} parent=0 // pred_check_branch
    %55 = sbr.rel (0) target = $region65
  $region64: #{xpdnet_forward_all_unrolls.1} parent=0 // pred_region
    _
  $region65: #{xpdnet_forward_all_unrolls.1} parent=0 // pred_fallthru
    _
  // Predicated region
  $region66: #{xpdnet_forward_all_unrolls.1} parent=0 // pred_check
    _
  $region67: #{xpdnet_forward_all_unrolls.1} parent=0 // pred_check_branch
    %57 = sbr.rel (0) target = $region69
  $region68: #{xpdnet_forward_all_unrolls.1} parent=0 // pred_region
    _
  $region69: #{xpdnet_forward_all_unrolls.1} parent=0 // pred_fallthru
    _
  %v58 = vld [vmem:[%s0] sm:$0xff]
  %v59 = vld [vmem:[%s0 + $0x8] sm:$0xff]
  %v60 = vld [vmem:[%s0 + $0x10] sm:$0xff]
  %v61 = vld [vmem:[%s0 + $0x18] sm:$0xff]
  %v62 = vld [vmem:[%s0 + $0x20] sm:$0xff]
  %v63 = vld [vmem:[%s0 + $0x28] sm:$0xff]
  %v64 = vld [vmem:[%s1] sm:$0xff]
  %v65 = vld [vmem:[%s1 + $0x8] sm:$0xff]
  %v66 = vld [vmem:[%s1 + $0x10] sm:$0xff]
  %v67 = vld [vmem:[%s1 + $0x18] sm:$0xff]
  %v68 = vld [vmem:[%s1 + $0x20] sm:$0xff]
  %v69 = vld [vmem:[%s1 + $0x28] sm:$0xff]
  %v70 = vld [vmem:[%s1 + $0x30] sm:$0xff]
  %v71 = vld [vmem:[%s1 + $0x38] sm:$0xff]
  %v72 = vld [vmem:[%s1 + $0x40] sm:$0xff]
  %v73 = vld [vmem:[%s1 + $0x48] sm:$0xff]
  %v74 = vld [vmem:[%s1 + $0x50] sm:$0xff]
  %v75 = vld [vmem:[%s1 + $0x58] sm:$0xff]
  %v76 = vld [vmem:[%s1 + $0x60] sm:$0xff]
  %v77 = vld [vmem:[%s1 + $0x68] sm:$0xff]
  %v78 = vld [vmem:[%s1 + $0x70] sm:$0xff]
  %v79 = vld [vmem:[%s1 + $0x78] sm:$0xff]
  %v80 = vld [vmem:[%s1 + $0x80] sm:$0xff]
  %v81 = vld [vmem:[%s1 + $0x88] sm:$0xff]
  %v82 = vld [vmem:[%s1 + $0x90] sm:$0xff]
  %v83 = vld [vmem:[%s1 + $0x98] sm:$0xff]
  %v84 = vld [vmem:[%s1 + $0xa0] sm:$0xff]
  %v85 = vld [vmem:[%s1 + $0xa8] sm:$0xff]
  %v86 = vld [vmem:[%s1 + $0xb0] sm:$0xff]
  %v87 = vld [vmem:[%s1 + $0xb8] sm:$0xff]
  %v88 = vld [vmem:[%s2] sm:$0xff]
  %v89 = vld [vmem:[%s2 + $0x8] sm:$0xff]
  %v90 = vld [vmem:[%s2 + $0x10] sm:$0xff]
  %v91 = vld [vmem:[%s2 + $0x18] sm:$0xff]
  %v92 = vld [vmem:[%s2 + $0x20] sm:$0xff]
  %v93 = vld [vmem:[%s2 + $0x28] sm:$0xff]
  %v94 = vld [vmem:[%s2 + $0x30] sm:$0xff]
  %v95 = vld [vmem:[%s2 + $0x38] sm:$0xff]
  %v96 = vld [vmem:[%s2 + $0x40] sm:$0xff]
  %v97 = vld [vmem:[%s2 + $0x48] sm:$0xff]
  %v98 = vld [vmem:[%s2 + $0x50] sm:$0xff]
  %v99 = vld [vmem:[%s2 + $0x58] sm:$0xff]
  %v100 = vld [vmem:[%s4] sm:$0xff]
  %v101 = vld [vmem:[%s4 + $0x8] sm:$0xff]
  %v102 = vld [vmem:[%s4 + $0x10] sm:$0xff]
  %v103 = vld [vmem:[%s4 + $0x18] sm:$0xff]
  %v104 = vld [vmem:[%s4 + $0x20] sm:$0xff]
  %v105 = vld [vmem:[%s4 + $0x28] sm:$0xff]
  %v106 = vld [vmem:[%s4 + $0x30] sm:$0xff]
  %v107 = vld [vmem:[%s4 + $0x38] sm:$0xff]
  %v108 = vld [vmem:[%s4 + $0x40] sm:$0xff]
  %v109 = vld [vmem:[%s4 + $0x48] sm:$0xff]
  %v110 = vld [vmem:[%s4 + $0x50] sm:$0xff]
  %v111 = vld [vmem:[%s4 + $0x58] sm:$0xff]
  %v112 = vld [vmem:[%s3] sm:$0x3f]
  %v113 = vld [vmem:[%s3 + $0x8] sm:$0x3f]
  %v114 = vld [vmem:[%s5] sm:$0xff]
  %v115 = vld [vmem:[%s5 + $0x8] sm:$0xff]
  %v116 = vld [vmem:[%s5 + $0x10] sm:$0xff]
  %v117 = vld [vmem:[%s5 + $0x18] sm:$0xff]
  %v118 = vld [vmem:[%s5 + $0x20] sm:$0xff]
  %v119 = vld [vmem:[%s5 + $0x28] sm:$0xff]
  %v120 = vld [vmem:[%s5 + $0x30] sm:$0xff]
  %v121 = vld [vmem:[%s5 + $0x38] sm:$0xff]
  %v122 = vld [vmem:[%s5 + $0x40] sm:$0xff]
  %v123 = vld [vmem:[%s5 + $0x48] sm:$0xff]
  %v124 = vld [vmem:[%s5 + $0x50] sm:$0xff]
  %v125 = vld [vmem:[%s5 + $0x58] sm:$0xff]
  %v126 = vld [vmem:[%s5 + $0x60] sm:$0xff]
  %v127 = vld [vmem:[%s5 + $0x68] sm:$0xff]
  %v128 = vld [vmem:[%s5 + $0x70] sm:$0xff]
  %v129 = vld [vmem:[%s5 + $0x78] sm:$0xff]
  %v130 = vld [vmem:[%s5 + $0x80] sm:$0xff]
  %v131 = vld [vmem:[%s5 + $0x88] sm:$0xff]
  %v132 = vld [vmem:[%s5 + $0x90] sm:$0xff]
  %v133 = vld [vmem:[%s5 + $0x98] sm:$0xff]
  %v134 = vld [vmem:[%s5 + $0xa0] sm:$0xff]
  %v135 = vld [vmem:[%s5 + $0xa8] sm:$0xff]
  %v136 = vld [vmem:[%s5 + $0xb0] sm:$0xff]
  %v137 = vld [vmem:[%s5 + $0xb8] sm:$0xff]
  %v138 = vld [vmem:[%s5 + $0xc0] sm:$0xff]
  %v139 = vld [vmem:[%s5 + $0xc8] sm:$0xff]
  %v140 = vld [vmem:[%s5 + $0xd0] sm:$0xff]
  %v141 = vld [vmem:[%s5 + $0xd8] sm:$0xff]
  %v142 = vld [vmem:[%s5 + $0xe0] sm:$0xff]
  %v143 = vld [vmem:[%s5 + $0xe8] sm:$0xff]
  %v144 = vld [vmem:[%s5 + $0xf0] sm:$0xff]
  %v145 = vld [vmem:[%s5 + $0xf8] sm:$0xff]
  %v146 = vld [vmem:[%s5 + $0x100] sm:$0xff]
  %v147 = vld [vmem:[%s5 + $0x108] sm:$0xff]
  %v148 = vld [vmem:[%s5 + $0x110] sm:$0xff]
  %v149 = vld [vmem:[%s5 + $0x118] sm:$0xff]
  %v150 = vld [vmem:[%s5 + $0x120] sm:$0xff]
  %v151 = vld [vmem:[%s5 + $0x128] sm:$0xff]
  %v152 = vld [vmem:[%s5 + $0x130] sm:$0xff]
  %v153 = vld [vmem:[%s5 + $0x138] sm:$0xff]
  %v154 = vld [vmem:[%s5 + $0x140] sm:$0xff]
  %v155 = vld [vmem:[%s5 + $0x148] sm:$0xff]
  %v156 = vld [vmem:[%s5 + $0x150] sm:$0xff]
  %v157 = vld [vmem:[%s5 + $0x158] sm:$0xff]
  %v158 = vld [vmem:[%s5 + $0x160] sm:$0xff]
  %v159 = vld [vmem:[%s5 + $0x168] sm:$0xff]
  %v160 = vld [vmem:[%s5 + $0x170] sm:$0xff]
  %v161 = vld [vmem:[%s5 + $0x178] sm:$0xff]
  %v162 = vld [vmem:[%s5 + $0x180] sm:$0xff]
  %v163 = vld [vmem:[%s5 + $0x188] sm:$0xff]
  %v164 = vld [vmem:[%s5 + $0x190] sm:$0xff]
  %v165 = vld [vmem:[%s5 + $0x198] sm:$0xff]
  %v166 = vld [vmem:[%s5 + $0x1a0] sm:$0xff]
  %v167 = vld [vmem:[%s5 + $0x1a8] sm:$0xff]
  %v168 = vld [vmem:[%s5 + $0x1b0] sm:$0xff]
  %v169 = vld [vmem:[%s5 + $0x1b8] sm:$0xff]
  %v170 = vld [vmem:[%s5 + $0x1c0] sm:$0xff]
  %v171 = vld [vmem:[%s5 + $0x1c8] sm:$0xff]
  %v172 = vld [vmem:[%s5 + $0x1d0] sm:$0xff]
  %v173 = vld [vmem:[%s5 + $0x1d8] sm:$0xff]
  %v174 = vld [vmem:[%s5 + $0x1e0] sm:$0xff]
  %v175 = vld [vmem:[%s5 + $0x1e8] sm:$0xff]
  %v176 = vld [vmem:[%s5 + $0x1f0] sm:$0xff]
  %v177 = vld [vmem:[%s5 + $0x1f8] sm:$0xff]
  %v178 = vld [vmem:[%s6] sm:$0xff]
  %v179 = vld [vmem:[%s6 + $0x8] sm:$0xff]
  %v180 = vld [vmem:[%s6 + $0x10] sm:$0xff]
  %v181 = vld [vmem:[%s6 + $0x18] sm:$0xff]
  %v182 = vld [vmem:[%s6 + $0x20] sm:$0xff]
  %v183 = vld [vmem:[%s6 + $0x28] sm:$0xff]
  %v184 = vld [vmem:[%s6 + $0x30] sm:$0xff]
  %v185 = vld [vmem:[%s6 + $0x38] sm:$0xff]
  %v186 = vld [vmem:[%s6 + $0x40] sm:$0xff]
  %v187 = vld [vmem:[%s6 + $0x48] sm:$0xff]
  %v188 = vld [vmem:[%s6 + $0x50] sm:$0xff]
  %v189 = vld [vmem:[%s6 + $0x58] sm:$0xff]
  %v190 = vld [vmem:[%s6 + $0x60] sm:$0xff]
  %v191 = vld [vmem:[%s6 + $0x68] sm:$0xff]
  %v192 = vld [vmem:[%s6 + $0x70] sm:$0xff]
  %v193 = vld [vmem:[%s6 + $0x78] sm:$0xff]
  %v194 = vld [vmem:[%s6 + $0x80] sm:$0xff]
  %v195 = vld [vmem:[%s6 + $0x88] sm:$0xff]
  %v196 = vld [vmem:[%s6 + $0x90] sm:$0xff]
  %v197 = vld [vmem:[%s6 + $0x98] sm:$0xff]
  %v198 = vld [vmem:[%s6 + $0xa0] sm:$0xff]
  %v199 = vld [vmem:[%s6 + $0xa8] sm:$0xff]
  %v200 = vld [vmem:[%s6 + $0xb0] sm:$0xff]
  %v201 = vld [vmem:[%s6 + $0xb8] sm:$0xff]
  %v202 = vld [vmem:[%s6 + $0xc0] sm:$0xff]
  %v203 = vld [vmem:[%s6 + $0xc8] sm:$0xff]
  %v204 = vld [vmem:[%s6 + $0xd0] sm:$0xff]
  %v205 = vld [vmem:[%s6 + $0xd8] sm:$0xff]
  %v206 = vld [vmem:[%s6 + $0xe0] sm:$0xff]
  %v207 = vld [vmem:[%s6 + $0xe8] sm:$0xff]
  %v208 = vld [vmem:[%s6 + $0xf0] sm:$0xff]
  %v209 = vld [vmem:[%s6 + $0xf8] sm:$0xff]
  %v210 = vld [vmem:[%s6 + $0x100] sm:$0xff]
  %v211 = vld [vmem:[%s6 + $0x108] sm:$0xff]
  %v212 = vld [vmem:[%s6 + $0x110] sm:$0xff]
  %v213 = vld [vmem:[%s6 + $0x118] sm:$0xff]
  %v214 = vld [vmem:[%s6 + $0x120] sm:$0xff]
  %v215 = vld [vmem:[%s6 + $0x128] sm:$0xff]
  %v216 = vld [vmem:[%s6 + $0x130] sm:$0xff]
  %v217 = vld [vmem:[%s6 + $0x138] sm:$0xff]
  %v218 = vld [vmem:[%s6 + $0x140] sm:$0xff]
  %v219 = vld [vmem:[%s6 + $0x148] sm:$0xff]
  %v220 = vld [vmem:[%s6 + $0x150] sm:$0xff]
  %v221 = vld [vmem:[%s6 + $0x158] sm:$0xff]
  %v222 = vld [vmem:[%s6 + $0x160] sm:$0xff]
  %v223 = vld [vmem:[%s6 + $0x168] sm:$0xff]
  %v224 = vld [vmem:[%s6 + $0x170] sm:$0xff]
  %v225 = vld [vmem:[%s6 + $0x178] sm:$0xff]
  %v226 = vld [vmem:[%s6 + $0x180] sm:$0xff]
  %v227 = vld [vmem:[%s6 + $0x188] sm:$0xff]
  %v228 = vld [vmem:[%s6 + $0x190] sm:$0xff]
  %v229 = vld [vmem:[%s6 + $0x198] sm:$0xff]
  %v230 = vld [vmem:[%s6 + $0x1a0] sm:$0xff]
  %v231 = vld [vmem:[%s6 + $0x1a8] sm:$0xff]
  %v232 = vld [vmem:[%s6 + $0x1b0] sm:$0xff]
  %v233 = vld [vmem:[%s6 + $0x1b8] sm:$0xff]
  %v234 = vld [vmem:[%s6 + $0x1c0] sm:$0xff]
  %v235 = vld [vmem:[%s6 + $0x1c8] sm:$0xff]
  %v236 = vld [vmem:[%s6 + $0x1d0] sm:$0xff]
  %v237 = vld [vmem:[%s6 + $0x1d8] sm:$0xff]
  %v238 = vld [vmem:[%s6 + $0x1e0] sm:$0xff]
  %v239 = vld [vmem:[%s6 + $0x1e8] sm:$0xff]
  %v240 = vld [vmem:[%s6 + $0x1f0] sm:$0xff]
  %v241 = vld [vmem:[%s6 + $0x1f8] sm:$0xff]
  %v242 = vld [vmem:[%s7] sm:$0xff]
  %v243 = vld [vmem:[%s7 + $0x8] sm:$0xf]
  %v244 = vld [vmem:[%s16] sm:$0x3]
  %v245 = vld [vmem:[%s16 + $0x2] sm:$0x3]
  %v246 = vld [vmem:[%s16 + $0x4] sm:$0x3]
  %v247 = vld [vmem:[%s16 + $0x6] sm:$0x3]
  %v248 = vld [vmem:[%s16 + $0xa] sm:$0x3]
  %v249 = vld [vmem:[%s16 + $0xc] sm:$0x3]
  %v250 = vld [vmem:[%s16 + $0xe] sm:$0x3]
  %v251 = vld [vmem:[%s16 + $0x10] sm:$0x3]
  %v254 = vrot.slane %v112, 2
  %v255 = vrot.slane %v113, 2
  %v258 = vrot.slane %v112, 4
  %v259 = vrot.slane %v113, 4
  %v262 = vrot.slane %v112, 6
  %v263 = vrot.slane %v113, 6
  %vm266 = vcmask 1045504
  %v267 = vsel %vm266, %v112, %v254
  %v268 = vsel %vm266, %v113, %v255
  %vm269 = vcmask 1043456
  %v270 = vsel %vm269, %v254, %v258
  %v271 = vsel %vm269, %v255, %v259
  %vm272 = vcmask 1041408
  %v273 = vsel %vm272, %v258, %v262
  %v274 = vsel %vm272, %v259, %v263
  %v277 = vrot.slane %v58, 2
  %v278 = vrot.slane %v59, 2
  %v281 = vrot.slane %v58, 4
  %v282 = vrot.slane %v59, 4
  %v285 = vrot.slane %v58, 6
  %v286 = vrot.slane %v59, 6
  %v289 = vsel %vm266, %v58, %v277
  %v290 = vsel %vm266, %v59, %v278
  %v291 = vsel %vm269, %v277, %v281
  %v292 = vsel %vm269, %v278, %v282
  %v293 = vsel %vm272, %v281, %v285
  %v294 = vsel %vm272, %v282, %v286
  %v299 = vrot.slane %v60, 4
  %v300 = vrot.slane %v62, 4
  %v301 = vsel %vm269, %v299, %v300
  %v302 = vrot.slane %v61, 4
  %v303 = vrot.slane %v63, 4
  %v304 = vsel %vm269, %v302, %v303
  %v307 = vrot.slane %v60, 6
  %v308 = vrot.slane %v61, 6
  %v309 = vrot.slane %v62, 6
  %v310 = vsel %vm272, %v307, %v309
  %v311 = vrot.slane %v63, 6
  %v312 = vsel %vm272, %v308, %v311
  %v317 = vrot.slane %v60, 2
  %v318 = vrot.slane %v62, 2
  %v319 = vsel %vm266, %v317, %v318
  %v320 = vrot.slane %v61, 2
  %v321 = vrot.slane %v63, 2
  %v322 = vsel %vm266, %v320, %v321
  %v325 = vsel %vm266, %v301, %v307
  %v326 = vsel %vm266, %v304, %v308
  %v327 = vsel %vm269, %v310, %v60
  %v328 = vsel %vm269, %v312, %v61
  %v329 = vsel %vm272, %v62, %v319
  %v330 = vsel %vm272, %v63, %v322
  %v331 = vmul.f32 %v289, %v100
  %v332 = vmul.f32 %v290, %v101
  %v333 = vmul.f32 %v291, %v102
  %v334 = vmul.f32 %v292, %v103
  %v335 = vmul.f32 %v293, %v104
  %v336 = vmul.f32 %v294, %v105
  %v337 = vmul.f32 %v325, %v106
  %v338 = vmul.f32 %v326, %v107
  %v339 = vmul.f32 %v327, %v108
  %v340 = vmul.f32 %v328, %v109
  %v341 = vmul.f32 %v329, %v110
  %v342 = vmul.f32 %v330, %v111
  %v343 = vsub.f32 %v331, %v337
  %v344 = vsub.f32 %v332, %v338
  %v345 = vsub.f32 %v333, %v339
  %v346 = vsub.f32 %v334, %v340
  %v347 = vsub.f32 %v335, %v341
  %v348 = vsub.f32 %v336, %v342
  %v349 = vmul.f32 %v289, %v106
  %v350 = vmul.f32 %v290, %v107
  %v351 = vmul.f32 %v291, %v108
  %v352 = vmul.f32 %v292, %v109
  %v353 = vmul.f32 %v293, %v110
  %v354 = vmul.f32 %v294, %v111
  %v355 = vmul.f32 %v325, %v100
  %v356 = vmul.f32 %v326, %v101
  %v357 = vmul.f32 %v327, %v102
  %v358 = vmul.f32 %v328, %v103
  %v359 = vmul.f32 %v329, %v104
  %v360 = vmul.f32 %v330, %v105
  %v361 = vadd.f32 %v349, %v355
  %v362 = vadd.f32 %v350, %v356
  %v363 = vadd.f32 %v351, %v357
  %v364 = vadd.f32 %v352, %v358
  %v365 = vadd.f32 %v353, %v359
  %v366 = vadd.f32 %v354, %v360
  %367 = vmatpush.msra.mxu0 %v144
  %368 = vmatpush.msra.mxu0 %v142
  %369 = vmatpush.msra.mxu0 %v140
  %370 = vmatpush.msra.mxu0 %v138
  %371 = vmatpush.msra.mxu0 %v136
  %372 = vmatpush.msra.mxu0 %v134
  %373 = vmatpush.msra.mxu0 %v132
  %374 = vmatpush.msra.mxu0 %v130
  %375 = vmatpush.msra.mxu0 %v128
  %376 = vmatpush.msra.mxu0 %v126
  %377 = vmatpush.msra.mxu0 %v124
  %378 = vmatpush.msra.mxu0 %v122
  %379 = vmatpush.msra.mxu0 %v120
  %380 = vmatpush.msra.mxu0 %v118
  %381 = vmatpush.msra.mxu0 %v116
  %382 = vmatpush.msra.mxu0 %v114
  %383 = vmatmul.f32.gmra.mxu0 %v343
  %v384 = vpop.f32.mrf.mxu0
  %v385 = vadd.f32 0.0, %v384
  %386 = vmatmul.f32.gmra.mxu0 %v345
  %v387 = vpop.f32.mrf.mxu0
  %v388 = vadd.f32 0.0, %v387
  %389 = vmatmul.f32.gmra.mxu0 %v347
  %v390 = vpop.f32.mrf.mxu0
  %v391 = vadd.f32 0.0, %v390
  %392 = vmatmul.f32.gmra.mxu0 %v361
  %v393 = vpop.f32.mrf.mxu0
  %v394 = vadd.f32 0.0, %v393
  %395 = vmatmul.f32.gmra.mxu0 %v363
  %v396 = vpop.f32.mrf.mxu0
  %v397 = vadd.f32 0.0, %v396
  %398 = vmatmul.f32.gmra.mxu0 %v365
  %v399 = vpop.f32.mrf.mxu0
  %v400 = vadd.f32 0.0, %v399
  %401 = vdwg.mxu0
  %402 = vmatpush.msra.mxu0 %v176
  %403 = vmatpush.msra.mxu0 %v174
  %404 = vmatpush.msra.mxu0 %v172
  %405 = vmatpush.msra.mxu0 %v170
  %406 = vmatpush.msra.mxu0 %v168
  %407 = vmatpush.msra.mxu0 %v166
  %408 = vmatpush.msra.mxu0 %v164
  %409 = vmatpush.msra.mxu0 %v162
  %410 = vmatpush.msra.mxu0 %v160
  %411 = vmatpush.msra.mxu0 %v158
  %412 = vmatpush.msra.mxu0 %v156
  %413 = vmatpush.msra.mxu0 %v154
  %414 = vmatpush.msra.mxu0 %v152
  %415 = vmatpush.msra.mxu0 %v150
  %416 = vmatpush.msra.mxu0 %v148
  %417 = vmatpush.msra.mxu0 %v146
  %418 = vmatmul.f32.gmra.mxu0 %v344
  %v419 = vpop.f32.mrf.mxu0
  %v420 = vadd.f32 %v385, %v419
  %421 = vmatmul.f32.gmra.mxu0 %v346
  %v422 = vpop.f32.mrf.mxu0
  %v423 = vadd.f32 %v388, %v422
  %424 = vmatmul.f32.gmra.mxu0 %v348
  %v425 = vpop.f32.mrf.mxu0
  %v426 = vadd.f32 %v391, %v425
  %427 = vmatmul.f32.gmra.mxu0 %v362
  %v428 = vpop.f32.mrf.mxu0
  %v429 = vadd.f32 %v394, %v428
  %430 = vmatmul.f32.gmra.mxu0 %v364
  %v431 = vpop.f32.mrf.mxu0
  %v432 = vadd.f32 %v397, %v431
  %433 = vmatmul.f32.gmra.mxu0 %v366
  %v434 = vpop.f32.mrf.mxu0
  %v435 = vadd.f32 %v400, %v434
  %436 = vdwg.mxu0
  %437 = vmatpush.msra.mxu0 %v145
  %438 = vmatpush.msra.mxu0 %v143
  %439 = vmatpush.msra.mxu0 %v141
  %440 = vmatpush.msra.mxu0 %v139
  %441 = vmatpush.msra.mxu0 %v137
  %442 = vmatpush.msra.mxu0 %v135
  %443 = vmatpush.msra.mxu0 %v133
  %444 = vmatpush.msra.mxu0 %v131
  %445 = vmatpush.msra.mxu0 %v129
  %446 = vmatpush.msra.mxu0 %v127
  %447 = vmatpush.msra.mxu0 %v125
  %448 = vmatpush.msra.mxu0 %v123
  %449 = vmatpush.msra.mxu0 %v121
  %450 = vmatpush.msra.mxu0 %v119
  %451 = vmatpush.msra.mxu0 %v117
  %452 = vmatpush.msra.mxu0 %v115
  %453 = vmatmul.f32.gmra.mxu0 %v343
  %v454 = vpop.f32.mrf.mxu0
  %v455 = vadd.f32 0.0, %v454
  %456 = vmatmul.f32.gmra.mxu0 %v345
  %v457 = vpop.f32.mrf.mxu0
  %v458 = vadd.f32 0.0, %v457
  %459 = vmatmul.f32.gmra.mxu0 %v347
  %v460 = vpop.f32.mrf.mxu0
  %v461 = vadd.f32 0.0, %v460
  %462 = vmatmul.f32.gmra.mxu0 %v361
  %v463 = vpop.f32.mrf.mxu0
  %v464 = vadd.f32 0.0, %v463
  %465 = vmatmul.f32.gmra.mxu0 %v363
  %v466 = vpop.f32.mrf.mxu0
  %v467 = vadd.f32 0.0, %v466
  %468 = vmatmul.f32.gmra.mxu0 %v365
  %v469 = vpop.f32.mrf.mxu0
  %v470 = vadd.f32 0.0, %v469
  %471 = vdwg.mxu0
  %472 = vmatpush.msra.mxu0 %v177
  %473 = vmatpush.msra.mxu0 %v175
  %474 = vmatpush.msra.mxu0 %v173
  %475 = vmatpush.msra.mxu0 %v171
  %476 = vmatpush.msra.mxu0 %v169
  %477 = vmatpush.msra.mxu0 %v167
  %478 = vmatpush.msra.mxu0 %v165
  %479 = vmatpush.msra.mxu0 %v163
  %480 = vmatpush.msra.mxu0 %v161
  %481 = vmatpush.msra.mxu0 %v159
  %482 = vmatpush.msra.mxu0 %v157
  %483 = vmatpush.msra.mxu0 %v155
  %484 = vmatpush.msra.mxu0 %v153
  %485 = vmatpush.msra.mxu0 %v151
  %486 = vmatpush.msra.mxu0 %v149
  %487 = vmatpush.msra.mxu0 %v147
  %488 = vmatmul.f32.gmra.mxu0 %v344
  %v489 = vpop.f32.mrf.mxu0
  %v490 = vadd.f32 %v455, %v489
  %491 = vmatmul.f32.gmra.mxu0 %v346
  %v492 = vpop.f32.mrf.mxu0
  %v493 = vadd.f32 %v458, %v492
  %494 = vmatmul.f32.gmra.mxu0 %v348
  %v495 = vpop.f32.mrf.mxu0
  %v496 = vadd.f32 %v461, %v495
  %497 = vmatmul.f32.gmra.mxu0 %v362
  %v498 = vpop.f32.mrf.mxu0
  %v499 = vadd.f32 %v464, %v498
  %500 = vmatmul.f32.gmra.mxu0 %v364
  %v501 = vpop.f32.mrf.mxu0
  %v502 = vadd.f32 %v467, %v501
  %503 = vmatmul.f32.gmra.mxu0 %v366
  %v504 = vpop.f32.mrf.mxu0
  %v505 = vadd.f32 %v470, %v504
  %506 = vdwg.mxu0
  %507 = vmatpush.msra.mxu0 %v208
  %508 = vmatpush.msra.mxu0 %v206
  %509 = vmatpush.msra.mxu0 %v204
  %510 = vmatpush.msra.mxu0 %v202
  %511 = vmatpush.msra.mxu0 %v200
  %512 = vmatpush.msra.mxu0 %v198
  %513 = vmatpush.msra.mxu0 %v196
  %514 = vmatpush.msra.mxu0 %v194
  %515 = vmatpush.msra.mxu0 %v192
  %516 = vmatpush.msra.mxu0 %v190
  %517 = vmatpush.msra.mxu0 %v188
  %518 = vmatpush.msra.mxu0 %v186
  %519 = vmatpush.msra.mxu0 %v184
  %520 = vmatpush.msra.mxu0 %v182
  %521 = vmatpush.msra.mxu0 %v180
  %522 = vmatpush.msra.mxu0 %v178
  %523 = vmatmul.f32.gmra.mxu0 %v343
  %v524 = vpop.f32.mrf.mxu0
  %v525 = vadd.f32 0.0, %v524
  %526 = vmatmul.f32.gmra.mxu0 %v345
  %v527 = vpop.f32.mrf.mxu0
  %v528 = vadd.f32 0.0, %v527
  %529 = vmatmul.f32.gmra.mxu0 %v347
  %v530 = vpop.f32.mrf.mxu0
  %v531 = vadd.f32 0.0, %v530
  %532 = vmatmul.f32.gmra.mxu0 %v361
  %v533 = vpop.f32.mrf.mxu0
  %v534 = vadd.f32 0.0, %v533
  %535 = vmatmul.f32.gmra.mxu0 %v363
  %v536 = vpop.f32.mrf.mxu0
  %v537 = vadd.f32 0.0, %v536
  %538 = vmatmul.f32.gmra.mxu0 %v365
  %v539 = vpop.f32.mrf.mxu0
  %v540 = vadd.f32 0.0, %v539
  %541 = vdwg.mxu0
  %542 = vmatpush.msra.mxu0 %v240
  %543 = vmatpush.msra.mxu0 %v238
  %544 = vmatpush.msra.mxu0 %v236
  %545 = vmatpush.msra.mxu0 %v234
  %546 = vmatpush.msra.mxu0 %v232
  %547 = vmatpush.msra.mxu0 %v230
  %548 = vmatpush.msra.mxu0 %v228
  %549 = vmatpush.msra.mxu0 %v226
  %550 = vmatpush.msra.mxu0 %v224
  %551 = vmatpush.msra.mxu0 %v222
  %552 = vmatpush.msra.mxu0 %v220
  %553 = vmatpush.msra.mxu0 %v218
  %554 = vmatpush.msra.mxu0 %v216
  %555 = vmatpush.msra.mxu0 %v214
  %556 = vmatpush.msra.mxu0 %v212
  %557 = vmatpush.msra.mxu0 %v210
  %558 = vmatmul.f32.gmra.mxu0 %v344
  %v559 = vpop.f32.mrf.mxu0
  %v560 = vadd.f32 %v525, %v559
  %561 = vmatmul.f32.gmra.mxu0 %v346
  %v562 = vpop.f32.mrf.mxu0
  %v563 = vadd.f32 %v528, %v562
  %564 = vmatmul.f32.gmra.mxu0 %v348
  %v565 = vpop.f32.mrf.mxu0
  %v566 = vadd.f32 %v531, %v565
  %567 = vmatmul.f32.gmra.mxu0 %v362
  %v568 = vpop.f32.mrf.mxu0
  %v569 = vadd.f32 %v534, %v568
  %570 = vmatmul.f32.gmra.mxu0 %v364
  %v571 = vpop.f32.mrf.mxu0
  %v572 = vadd.f32 %v537, %v571
  %573 = vmatmul.f32.gmra.mxu0 %v366
  %v574 = vpop.f32.mrf.mxu0
  %v575 = vadd.f32 %v540, %v574
  %576 = vdwg.mxu0
  %577 = vmatpush.msra.mxu0 %v209
  %578 = vmatpush.msra.mxu0 %v207
  %579 = vmatpush.msra.mxu0 %v205
  %580 = vmatpush.msra.mxu0 %v203
  %581 = vmatpush.msra.mxu0 %v201
  %582 = vmatpush.msra.mxu0 %v199
  %583 = vmatpush.msra.mxu0 %v197
  %584 = vmatpush.msra.mxu0 %v195
  %585 = vmatpush.msra.mxu0 %v193
  %586 = vmatpush.msra.mxu0 %v191
  %587 = vmatpush.msra.mxu0 %v189
  %588 = vmatpush.msra.mxu0 %v187
  %589 = vmatpush.msra.mxu0 %v185
  %590 = vmatpush.msra.mxu0 %v183
  %591 = vmatpush.msra.mxu0 %v181
  %592 = vmatpush.msra.mxu0 %v179
  %593 = vmatmul.f32.gmra.mxu0 %v343
  %v594 = vpop.f32.mrf.mxu0
  %v595 = vadd.f32 0.0, %v594
  %596 = vmatmul.f32.gmra.mxu0 %v345
  %v597 = vpop.f32.mrf.mxu0
  %v598 = vadd.f32 0.0, %v597
  %599 = vmatmul.f32.gmra.mxu0 %v347
  %v600 = vpop.f32.mrf.mxu0
  %v601 = vadd.f32 0.0, %v600
  %602 = vmatmul.f32.gmra.mxu0 %v361
  %v603 = vpop.f32.mrf.mxu0
  %v604 = vadd.f32 0.0, %v603
  %605 = vmatmul.f32.gmra.mxu0 %v363
  %v606 = vpop.f32.mrf.mxu0
  %v607 = vadd.f32 0.0, %v606
  %608 = vmatmul.f32.gmra.mxu0 %v365
  %v609 = vpop.f32.mrf.mxu0
  %v610 = vadd.f32 0.0, %v609
  %611 = vdwg.mxu0
  %612 = vmatpush.msra.mxu0 %v241
  %613 = vmatpush.msra.mxu0 %v239
  %614 = vmatpush.msra.mxu0 %v237
  %615 = vmatpush.msra.mxu0 %v235
  %616 = vmatpush.msra.mxu0 %v233
  %617 = vmatpush.msra.mxu0 %v231
  %618 = vmatpush.msra.mxu0 %v229
  %619 = vmatpush.msra.mxu0 %v227
  %620 = vmatpush.msra.mxu0 %v225
  %621 = vmatpush.msra.mxu0 %v223
  %622 = vmatpush.msra.mxu0 %v221
  %623 = vmatpush.msra.mxu0 %v219
  %624 = vmatpush.msra.mxu0 %v217
  %625 = vmatpush.msra.mxu0 %v215
  %626 = vmatpush.msra.mxu0 %v213
  %627 = vmatpush.msra.mxu0 %v211
  %628 = vmatmul.f32.gmra.mxu0 %v344
  %v629 = vpop.f32.mrf.mxu0
  %v630 = vadd.f32 %v595, %v629
  %631 = vmatmul.f32.gmra.mxu0 %v346
  %v632 = vpop.f32.mrf.mxu0
  %v633 = vadd.f32 %v598, %v632
  %634 = vmatmul.f32.gmra.mxu0 %v348
  %v635 = vpop.f32.mrf.mxu0
  %v636 = vadd.f32 %v601, %v635
  %637 = vmatmul.f32.gmra.mxu0 %v362
  %v638 = vpop.f32.mrf.mxu0
  %v639 = vadd.f32 %v604, %v638
  %640 = vmatmul.f32.gmra.mxu0 %v364
  %v641 = vpop.f32.mrf.mxu0
  %v642 = vadd.f32 %v607, %v641
  %643 = vmatmul.f32.gmra.mxu0 %v366
  %v644 = vpop.f32.mrf.mxu0
  %v645 = vadd.f32 %v610, %v644
  %646 = vdwg.mxu0
  %v647 = vsub.f32 %v420, %v569
  %v648 = vsub.f32 %v490, %v639
  %v649 = vsub.f32 %v423, %v572
  %v650 = vsub.f32 %v493, %v642
  %v651 = vsub.f32 %v426, %v575
  %v652 = vsub.f32 %v496, %v645
  %v653 = vmul.f32 %v647, %v267
  %v654 = vmul.f32 %v648, %v268
  %v655 = vmul.f32 %v649, %v270
  %v656 = vmul.f32 %v650, %v271
  %v657 = vmul.f32 %v651, %v273
  %v658 = vmul.f32 %v652, %v274
  %v659 = vadd.f32 %v560, %v429
  %v660 = vadd.f32 %v630, %v499
  %v661 = vadd.f32 %v563, %v432
  %v662 = vadd.f32 %v633, %v502
  %v663 = vadd.f32 %v566, %v435
  %v664 = vadd.f32 %v636, %v505
  %v665 = vmul.f32 %v659, %v267
  %v666 = vmul.f32 %v660, %v268
  %v667 = vmul.f32 %v661, %v270
  %v668 = vmul.f32 %v662, %v271
  %v669 = vmul.f32 %v663, %v273
  %v670 = vmul.f32 %v664, %v274
  %v671 = vld [vmem:[%s8] sm:$0xff]
  %v672 = vld [vmem:[%s8 + $0x8] sm:$0xff]
  %v673 = vld [vmem:[%s8 + $0x10] sm:$0xff]
  %v674 = vld [vmem:[%s8 + $0x18] sm:$0xff]
  %v675 = vld [vmem:[%s8 + $0x20] sm:$0xff]
  %v676 = vld [vmem:[%s8 + $0x28] sm:$0xff]
  %v677 = vld [vmem:[%s8 + $0x30] sm:$0xff]
  %v678 = vld [vmem:[%s8 + $0x38] sm:$0xff]
  %v679 = vld [vmem:[%s8 + $0x40] sm:$0xff]
  %v680 = vld [vmem:[%s8 + $0x48] sm:$0xff]
  %v681 = vld [vmem:[%s8 + $0x50] sm:$0xff]
  %v682 = vld [vmem:[%s8 + $0x58] sm:$0xff]
  %v683 = vld [vmem:[%s8 + $0x60] sm:$0xff]
  %v684 = vld [vmem:[%s8 + $0x68] sm:$0xff]
  %v685 = vld [vmem:[%s8 + $0x70] sm:$0xff]
  %v686 = vld [vmem:[%s8 + $0x78] sm:$0xff]
  %v687 = vld [vmem:[%s8 + $0x80] sm:$0xff]
  %v688 = vld [vmem:[%s8 + $0x88] sm:$0xff]
  %v689 = vld [vmem:[%s8 + $0x90] sm:$0xff]
  %v690 = vld [vmem:[%s8 + $0x98] sm:$0xff]
  %v691 = vld [vmem:[%s8 + $0xa0] sm:$0xff]
  %v692 = vld [vmem:[%s8 + $0xa8] sm:$0xff]
  %v693 = vld [vmem:[%s8 + $0xb0] sm:$0xff]
  %v694 = vld [vmem:[%s8 + $0xb8] sm:$0xff]
  %v695 = vld [vmem:[%s8 + $0xc0] sm:$0xff]
  %v696 = vld [vmem:[%s8 + $0xc8] sm:$0xff]
  %v697 = vld [vmem:[%s8 + $0xd0] sm:$0xff]
  %v698 = vld [vmem:[%s8 + $0xd8] sm:$0xff]
  %v699 = vld [vmem:[%s8 + $0xe0] sm:$0xff]
  %v700 = vld [vmem:[%s8 + $0xe8] sm:$0xff]
  %v701 = vld [vmem:[%s8 + $0xf0] sm:$0xff]
  %v702 = vld [vmem:[%s8 + $0xf8] sm:$0xff]
  %v703 = vld [vmem:[%s8 + $0x100] sm:$0xff]
  %v704 = vld [vmem:[%s8 + $0x108] sm:$0xff]
  %v705 = vld [vmem:[%s8 + $0x110] sm:$0xff]
  %v706 = vld [vmem:[%s8 + $0x118] sm:$0xff]
  %v707 = vld [vmem:[%s8 + $0x120] sm:$0xff]
  %v708 = vld [vmem:[%s8 + $0x128] sm:$0xff]
  %v709 = vld [vmem:[%s8 + $0x130] sm:$0xff]
  %v710 = vld [vmem:[%s8 + $0x138] sm:$0xff]
  %v711 = vld [vmem:[%s8 + $0x140] sm:$0xff]
  %v712 = vld [vmem:[%s8 + $0x148] sm:$0xff]
  %v713 = vld [vmem:[%s8 + $0x150] sm:$0xff]
  %v714 = vld [vmem:[%s8 + $0x158] sm:$0xff]
  %v715 = vld [vmem:[%s8 + $0x160] sm:$0xff]
  %v716 = vld [vmem:[%s8 + $0x168] sm:$0xff]
  %v717 = vld [vmem:[%s8 + $0x170] sm:$0xff]
  %v718 = vld [vmem:[%s8 + $0x178] sm:$0xff]
  %v719 = vld [vmem:[%s9] sm:$0xff]
  %v720 = vld [vmem:[%s9 + $0x8] sm:$0xff]
  %v721 = vld [vmem:[%s9 + $0x10] sm:$0xff]
  %v722 = vld [vmem:[%s9 + $0x18] sm:$0xff]
  %v723 = vld [vmem:[%s9 + $0x20] sm:$0xff]
  %v724 = vld [vmem:[%s9 + $0x28] sm:$0xff]
  %v725 = vld [vmem:[%s9 + $0x30] sm:$0xff]
  %v726 = vld [vmem:[%s9 + $0x38] sm:$0xff]
  %v727 = vld [vmem:[%s9 + $0x40] sm:$0xff]
  %v728 = vld [vmem:[%s9 + $0x48] sm:$0xff]
  %v729 = vld [vmem:[%s9 + $0x50] sm:$0xff]
  %v730 = vld [vmem:[%s9 + $0x58] sm:$0xff]
  %v731 = vld [vmem:[%s9 + $0x60] sm:$0xff]
  %v732 = vld [vmem:[%s9 + $0x68] sm:$0xff]
  %v733 = vld [vmem:[%s9 + $0x70] sm:$0xff]
  %v734 = vld [vmem:[%s9 + $0x78] sm:$0xff]
  %v735 = vld [vmem:[%s9 + $0x80] sm:$0xff]
  %v736 = vld [vmem:[%s9 + $0x88] sm:$0xff]
  %v737 = vld [vmem:[%s9 + $0x90] sm:$0xff]
  %v738 = vld [vmem:[%s9 + $0x98] sm:$0xff]
  %v739 = vld [vmem:[%s9 + $0xa0] sm:$0xff]
  %v740 = vld [vmem:[%s9 + $0xa8] sm:$0xff]
  %v741 = vld [vmem:[%s9 + $0xb0] sm:$0xff]
  %v742 = vld [vmem:[%s9 + $0xb8] sm:$0xff]
  %744 = vset.pattern.permute.xlu0 0
  %745 = vperm.xlu0 %744, %v719
  %v746 = vpop.permute.xlu0 %745
  %749 = vset.pattern.permute.xlu0 0
  %750 = vperm.xlu0 %749, %v720
  %v751 = vpop.permute.xlu0 %750
  %754 = vset.pattern.permute.xlu0 0
  %755 = vperm.xlu0 %754, %v721
  %v756 = vpop.permute.xlu0 %755
  %759 = vset.pattern.permute.xlu0 0
  %760 = vperm.xlu0 %759, %v722
  %v761 = vpop.permute.xlu0 %760
  %764 = vset.pattern.permute.xlu0 0
  %765 = vperm.xlu0 %764, %v723
  %v766 = vpop.permute.xlu0 %765
  %769 = vset.pattern.permute.xlu0 0
  %770 = vperm.xlu0 %769, %v724
  %v771 = vpop.permute.xlu0 %770
  %774 = vset.pattern.permute.xlu0 0
  %775 = vperm.xlu0 %774, %v725
  %v776 = vpop.permute.xlu0 %775
  %779 = vset.pattern.permute.xlu0 0
  %780 = vperm.xlu0 %779, %v726
  %v781 = vpop.permute.xlu0 %780
  %784 = vset.pattern.permute.xlu0 0
  %785 = vperm.xlu0 %784, %v727
  %v786 = vpop.permute.xlu0 %785
  %789 = vset.pattern.permute.xlu0 0
  %790 = vperm.xlu0 %789, %v728
  %v791 = vpop.permute.xlu0 %790
  %794 = vset.pattern.permute.xlu0 0
  %795 = vperm.xlu0 %794, %v729
  %v796 = vpop.permute.xlu0 %795
  %799 = vset.pattern.permute.xlu0 0
  %800 = vperm.xlu0 %799, %v730
  %v801 = vpop.permute.xlu0 %800
  %804 = vset.pattern.permute.xlu0 0
  %805 = vperm.xlu0 %804, %v731
  %v806 = vpop.permute.xlu0 %805
  %809 = vset.pattern.permute.xlu0 0
  %810 = vperm.xlu0 %809, %v732
  %v811 = vpop.permute.xlu0 %810
  %814 = vset.pattern.permute.xlu0 0
  %815 = vperm.xlu0 %814, %v733
  %v816 = vpop.permute.xlu0 %815
  %819 = vset.pattern.permute.xlu0 0
  %820 = vperm.xlu0 %819, %v734
  %v821 = vpop.permute.xlu0 %820
  %824 = vset.pattern.permute.xlu0 0
  %825 = vperm.xlu0 %824, %v735
  %v826 = vpop.permute.xlu0 %825
  %829 = vset.pattern.permute.xlu0 0
  %830 = vperm.xlu0 %829, %v736
  %v831 = vpop.permute.xlu0 %830
  %834 = vset.pattern.permute.xlu0 0
  %835 = vperm.xlu0 %834, %v737
  %v836 = vpop.permute.xlu0 %835
  %839 = vset.pattern.permute.xlu0 0
  %840 = vperm.xlu0 %839, %v738
  %v841 = vpop.permute.xlu0 %840
  %844 = vset.pattern.permute.xlu0 0
  %845 = vperm.xlu0 %844, %v739
  %v846 = vpop.permute.xlu0 %845
  %849 = vset.pattern.permute.xlu0 0
  %850 = vperm.xlu0 %849, %v740
  %v851 = vpop.permute.xlu0 %850
  %854 = vset.pattern.permute.xlu0 0
  %855 = vperm.xlu0 %854, %v741
  %v856 = vpop.permute.xlu0 %855
  %859 = vset.pattern.permute.xlu0 0
  %860 = vperm.xlu0 %859, %v742
  %v861 = vpop.permute.xlu0 %860
  %vm863 = vcmask 523264
  %v865 = vsel %vm863, %v672, 0
  %v868 = vsel %vm863, %v674, 0
  %v871 = vsel %vm863, %v676, 0
  %v874 = vsel %vm863, %v678, 0
  %v877 = vsel %vm863, %v680, 0
  %v880 = vsel %vm863, %v682, 0
  %v883 = vsel %vm863, %v684, 0
  %v886 = vsel %vm863, %v686, 0
  %v889 = vsel %vm863, %v688, 0
  %v892 = vsel %vm863, %v690, 0
  %v895 = vsel %vm863, %v692, 0
  %v898 = vsel %vm863, %v694, 0
  %v901 = vsel %vm863, %v696, 0
  %v904 = vsel %vm863, %v698, 0
  %v907 = vsel %vm863, %v700, 0
  %v910 = vsel %vm863, %v702, 0
  %v913 = vsel %vm863, %v704, 0
  %v916 = vsel %vm863, %v706, 0
  %v919 = vsel %vm863, %v708, 0
  %v922 = vsel %vm863, %v710, 0
  %v925 = vsel %vm863, %v712, 0
  %v928 = vsel %vm863, %v714, 0
  %v931 = vsel %vm863, %v716, 0
  %v934 = vsel %vm863, %v718, 0
  %936 = vmatpush.msra.mxu0 %v665
  %937 = vmatpush.msra.mxu0 %v657
  %938 = vmatpush.msra.mxu0 %v655
  %939 = vmatpush.msra.mxu0 %v653
  %940 = vmatpush.msra.mxu0 %v86
  %941 = vmatpush.msra.mxu0 %v84
  %942 = vmatpush.msra.mxu0 %v82
  %943 = vmatpush.msra.mxu0 %v80
  %944 = vmatpush.msra.mxu0 %v78
  %945 = vmatpush.msra.mxu0 %v76
  %946 = vmatpush.msra.mxu0 %v74
  %947 = vmatpush.msra.mxu0 %v72
  %948 = vmatpush.msra.mxu0 %v70
  %949 = vmatpush.msra.mxu0 %v68
  %950 = vmatpush.msra.mxu0 %v66
  %951 = vmatpush.msra.mxu0 %v64
  %952 = vmatmul.f32.gmra.mxu0 %v671
  %v953 = vpop.f32.mrf.mxu0
  %v954 = vadd.f32 %v746, %v953
  %955 = vmatmul.f32.gmra.mxu0 %v673
  %v956 = vpop.f32.mrf.mxu0
  %v957 = vadd.f32 %v751, %v956
  %958 = vmatmul.f32.gmra.mxu0 %v675
  %v959 = vpop.f32.mrf.mxu0
  %v960 = vadd.f32 %v756, %v959
  %961 = vmatmul.f32.gmra.mxu0 %v677
  %v962 = vpop.f32.mrf.mxu0
  %v963 = vadd.f32 %v761, %v962
  %964 = vmatmul.f32.gmra.mxu0 %v679
  %v965 = vpop.f32.mrf.mxu0
  %v966 = vadd.f32 %v766, %v965
  %967 = vmatmul.f32.gmra.mxu0 %v681
  %v968 = vpop.f32.mrf.mxu0
  %v969 = vadd.f32 %v771, %v968
  %970 = vmatmul.f32.gmra.mxu0 %v683
  %v971 = vpop.f32.mrf.mxu0
  %v972 = vadd.f32 %v776, %v971
  %973 = vmatmul.f32.gmra.mxu0 %v685
  %v974 = vpop.f32.mrf.mxu0
  %v975 = vadd.f32 %v781, %v974
  %976 = vmatmul.f32.gmra.mxu0 %v687
  %v977 = vpop.f32.mrf.mxu0
  %v978 = vadd.f32 %v786, %v977
  %979 = vmatmul.f32.gmra.mxu0 %v689
  %v980 = vpop.f32.mrf.mxu0
  %v981 = vadd.f32 %v791, %v980
  %982 = vmatmul.f32.gmra.mxu0 %v691
  %v983 = vpop.f32.mrf.mxu0
  %v984 = vadd.f32 %v796, %v983
  %985 = vmatmul.f32.gmra.mxu0 %v693
  %v986 = vpop.f32.mrf.mxu0
  %v987 = vadd.f32 %v801, %v986
  %988 = vmatmul.f32.gmra.mxu0 %v695
  %v989 = vpop.f32.mrf.mxu0
  %v990 = vadd.f32 %v806, %v989
  %991 = vmatmul.f32.gmra.mxu0 %v697
  %v992 = vpop.f32.mrf.mxu0
  %v993 = vadd.f32 %v811, %v992
  %994 = vmatmul.f32.gmra.mxu0 %v699
  %v995 = vpop.f32.mrf.mxu0
  %v996 = vadd.f32 %v816, %v995
  %997 = vmatmul.f32.gmra.mxu0 %v701
  %v998 = vpop.f32.mrf.mxu0
  %v999 = vadd.f32 %v821, %v998
  %1000 = vmatmul.f32.gmra.mxu0 %v703
  %v1001 = vpop.f32.mrf.mxu0
  %v1002 = vadd.f32 %v826, %v1001
  %1003 = vmatmul.f32.gmra.mxu0 %v705
  %v1004 = vpop.f32.mrf.mxu0
  %v1005 = vadd.f32 %v831, %v1004
  %1006 = vmatmul.f32.gmra.mxu0 %v707
  %v1007 = vpop.f32.mrf.mxu0
  %v1008 = vadd.f32 %v836, %v1007
  %1009 = vmatmul.f32.gmra.mxu0 %v709
  %v1010 = vpop.f32.mrf.mxu0
  %v1011 = vadd.f32 %v841, %v1010
  %1012 = vmatmul.f32.gmra.mxu0 %v711
  %v1013 = vpop.f32.mrf.mxu0
  %v1014 = vadd.f32 %v846, %v1013
  %1015 = vmatmul.f32.gmra.mxu0 %v713
  %v1016 = vpop.f32.mrf.mxu0
  %v1017 = vadd.f32 %v851, %v1016
  %1018 = vmatmul.f32.gmra.mxu0 %v715
  %v1019 = vpop.f32.mrf.mxu0
  %v1020 = vadd.f32 %v856, %v1019
  %1021 = vmatmul.f32.gmra.mxu0 %v717
  %v1022 = vpop.f32.mrf.mxu0
  %v1023 = vadd.f32 %v861, %v1022
  %1024 = vdwg.mxu0
  %1025 = vmatpush.msra.mxu0 0.0
  %1026 = vmatpush.msra.mxu0 0.0
  %1027 = vmatpush.msra.mxu0 0.0
  %1028 = vmatpush.msra.mxu0 0.0
  %1029 = vmatpush.msra.mxu0 0.0
  %1030 = vmatpush.msra.mxu0 0.0
  %1031 = vmatpush.msra.mxu0 0.0
  %1032 = vmatpush.msra.mxu0 0.0
  %1033 = vmatpush.msra.mxu0 %v98
  %1034 = vmatpush.msra.mxu0 %v96
  %1035 = vmatpush.msra.mxu0 %v94
  %1036 = vmatpush.msra.mxu0 %v92
  %1037 = vmatpush.msra.mxu0 %v90
  %1038 = vmatpush.msra.mxu0 %v88
  %1039 = vmatpush.msra.mxu0 %v669
  %1040 = vmatpush.msra.mxu0 %v667
  %1041 = vmatmul.f32.gmra.mxu0 %v865
  %v1042 = vpop.f32.mrf.mxu0
  %v1043 = vadd.f32 %v954, %v1042
  %1044 = vmatmul.f32.gmra.mxu0 %v868
  %v1045 = vpop.f32.mrf.mxu0
  %v1046 = vadd.f32 %v957, %v1045
  %1047 = vmatmul.f32.gmra.mxu0 %v871
  %v1048 = vpop.f32.mrf.mxu0
  %v1049 = vadd.f32 %v960, %v1048
  %1050 = vmatmul.f32.gmra.mxu0 %v874
  %v1051 = vpop.f32.mrf.mxu0
  %v1052 = vadd.f32 %v963, %v1051
  %1053 = vmatmul.f32.gmra.mxu0 %v877
  %v1054 = vpop.f32.mrf.mxu0
  %v1055 = vadd.f32 %v966, %v1054
  %1056 = vmatmul.f32.gmra.mxu0 %v880
  %v1057 = vpop.f32.mrf.mxu0
  %v1058 = vadd.f32 %v969, %v1057
  %1059 = vmatmul.f32.gmra.mxu0 %v883
  %v1060 = vpop.f32.mrf.mxu0
  %v1061 = vadd.f32 %v972, %v1060
  %1062 = vmatmul.f32.gmra.mxu0 %v886
  %v1063 = vpop.f32.mrf.mxu0
  %v1064 = vadd.f32 %v975, %v1063
  %1065 = vmatmul.f32.gmra.mxu0 %v889
  %v1066 = vpop.f32.mrf.mxu0
  %v1067 = vadd.f32 %v978, %v1066
  %1068 = vmatmul.f32.gmra.mxu0 %v892
  %v1069 = vpop.f32.mrf.mxu0
  %v1070 = vadd.f32 %v981, %v1069
  %1071 = vmatmul.f32.gmra.mxu0 %v895
  %v1072 = vpop.f32.mrf.mxu0
  %v1073 = vadd.f32 %v984, %v1072
  %1074 = vmatmul.f32.gmra.mxu0 %v898
  %v1075 = vpop.f32.mrf.mxu0
  %v1076 = vadd.f32 %v987, %v1075
  %1077 = vmatmul.f32.gmra.mxu0 %v901
  %v1078 = vpop.f32.mrf.mxu0
  %v1079 = vadd.f32 %v990, %v1078
  %1080 = vmatmul.f32.gmra.mxu0 %v904
  %v1081 = vpop.f32.mrf.mxu0
  %v1082 = vadd.f32 %v993, %v1081
  %1083 = vmatmul.f32.gmra.mxu0 %v907
  %v1084 = vpop.f32.mrf.mxu0
  %v1085 = vadd.f32 %v996, %v1084
  %1086 = vmatmul.f32.gmra.mxu0 %v910
  %v1087 = vpop.f32.mrf.mxu0
  %v1088 = vadd.f32 %v999, %v1087
  %1089 = vmatmul.f32.gmra.mxu0 %v913
  %v1090 = vpop.f32.mrf.mxu0
  %v1091 = vadd.f32 %v1002, %v1090
  %1092 = vmatmul.f32.gmra.mxu0 %v916
  %v1093 = vpop.f32.mrf.mxu0
  %v1094 = vadd.f32 %v1005, %v1093
  %1095 = vmatmul.f32.gmra.mxu0 %v919
  %v1096 = vpop.f32.mrf.mxu0
  %v1097 = vadd.f32 %v1008, %v1096
  %1098 = vmatmul.f32.gmra.mxu0 %v922
  %v1099 = vpop.f32.mrf.mxu0
  %v1100 = vadd.f32 %v1011, %v1099
  %1101 = vmatmul.f32.gmra.mxu0 %v925
  %v1102 = vpop.f32.mrf.mxu0
  %v1103 = vadd.f32 %v1014, %v1102
  %1104 = vmatmul.f32.gmra.mxu0 %v928
  %v1105 = vpop.f32.mrf.mxu0
  %v1106 = vadd.f32 %v1017, %v1105
  %1107 = vmatmul.f32.gmra.mxu0 %v931
  %v1108 = vpop.f32.mrf.mxu0
  %v1109 = vadd.f32 %v1020, %v1108
  %1110 = vmatmul.f32.gmra.mxu0 %v934
  %v1111 = vpop.f32.mrf.mxu0
  %v1112 = vadd.f32 %v1023, %v1111
  %1113 = vdwg.mxu0
  %1114 = vmatpush.msra.mxu0 %v666
  %1115 = vmatpush.msra.mxu0 %v658
  %1116 = vmatpush.msra.mxu0 %v656
  %1117 = vmatpush.msra.mxu0 %v654
  %1118 = vmatpush.msra.mxu0 %v87
  %1119 = vmatpush.msra.mxu0 %v85
  %1120 = vmatpush.msra.mxu0 %v83
  %1121 = vmatpush.msra.mxu0 %v81
  %1122 = vmatpush.msra.mxu0 %v79
  %1123 = vmatpush.msra.mxu0 %v77
  %1124 = vmatpush.msra.mxu0 %v75
  %1125 = vmatpush.msra.mxu0 %v73
  %1126 = vmatpush.msra.mxu0 %v71
  %1127 = vmatpush.msra.mxu0 %v69
  %1128 = vmatpush.msra.mxu0 %v67
  %1129 = vmatpush.msra.mxu0 %v65
  %1130 = vmatmul.f32.gmra.mxu0 %v671
  %v1131 = vpop.f32.mrf.mxu0
  %v1132 = vadd.f32 %v746, %v1131
  %1133 = vmatmul.f32.gmra.mxu0 %v673
  %v1134 = vpop.f32.mrf.mxu0
  %v1135 = vadd.f32 %v751, %v1134
  %1136 = vmatmul.f32.gmra.mxu0 %v675
  %v1137 = vpop.f32.mrf.mxu0
  %v1138 = vadd.f32 %v756, %v1137
  %1139 = vmatmul.f32.gmra.mxu0 %v677
  %v1140 = vpop.f32.mrf.mxu0
  %v1141 = vadd.f32 %v761, %v1140
  %1142 = vmatmul.f32.gmra.mxu0 %v679
  %v1143 = vpop.f32.mrf.mxu0
  %v1144 = vadd.f32 %v766, %v1143
  %1145 = vmatmul.f32.gmra.mxu0 %v681
  %v1146 = vpop.f32.mrf.mxu0
  %v1147 = vadd.f32 %v771, %v1146
  %1148 = vmatmul.f32.gmra.mxu0 %v683
  %v1149 = vpop.f32.mrf.mxu0
  %v1150 = vadd.f32 %v776, %v1149
  %1151 = vmatmul.f32.gmra.mxu0 %v685
  %v1152 = vpop.f32.mrf.mxu0
  %v1153 = vadd.f32 %v781, %v1152
  %1154 = vmatmul.f32.gmra.mxu0 %v687
  %v1155 = vpop.f32.mrf.mxu0
  %v1156 = vadd.f32 %v786, %v1155
  %1157 = vmatmul.f32.gmra.mxu0 %v689
  %v1158 = vpop.f32.mrf.mxu0
  %v1159 = vadd.f32 %v791, %v1158
  %1160 = vmatmul.f32.gmra.mxu0 %v691
  %v1161 = vpop.f32.mrf.mxu0
  %v1162 = vadd.f32 %v796, %v1161
  %1163 = vmatmul.f32.gmra.mxu0 %v693
  %v1164 = vpop.f32.mrf.mxu0
  %v1165 = vadd.f32 %v801, %v1164
  %1166 = vmatmul.f32.gmra.mxu0 %v695
  %v1167 = vpop.f32.mrf.mxu0
  %v1168 = vadd.f32 %v806, %v1167
  %1169 = vmatmul.f32.gmra.mxu0 %v697
  %v1170 = vpop.f32.mrf.mxu0
  %v1171 = vadd.f32 %v811, %v1170
  %1172 = vmatmul.f32.gmra.mxu0 %v699
  %v1173 = vpop.f32.mrf.mxu0
  %v1174 = vadd.f32 %v816, %v1173
  %1175 = vmatmul.f32.gmra.mxu0 %v701
  %v1176 = vpop.f32.mrf.mxu0
  %v1177 = vadd.f32 %v821, %v1176
  %1178 = vmatmul.f32.gmra.mxu0 %v703
  %v1179 = vpop.f32.mrf.mxu0
  %v1180 = vadd.f32 %v826, %v1179
  %1181 = vmatmul.f32.gmra.mxu0 %v705
  %v1182 = vpop.f32.mrf.mxu0
  %v1183 = vadd.f32 %v831, %v1182
  %1184 = vmatmul.f32.gmra.mxu0 %v707
  %v1185 = vpop.f32.mrf.mxu0
  %v1186 = vadd.f32 %v836, %v1185
  %1187 = vmatmul.f32.gmra.mxu0 %v709
  %v1188 = vpop.f32.mrf.mxu0
  %v1189 = vadd.f32 %v841, %v1188
  %1190 = vmatmul.f32.gmra.mxu0 %v711
  %v1191 = vpop.f32.mrf.mxu0
  %v1192 = vadd.f32 %v846, %v1191
  %1193 = vmatmul.f32.gmra.mxu0 %v713
  %v1194 = vpop.f32.mrf.mxu0
  %v1195 = vadd.f32 %v851, %v1194
  %1196 = vmatmul.f32.gmra.mxu0 %v715
  %v1197 = vpop.f32.mrf.mxu0
  %v1198 = vadd.f32 %v856, %v1197
  %1199 = vmatmul.f32.gmra.mxu0 %v717
  %v1200 = vpop.f32.mrf.mxu0
  %v1201 = vadd.f32 %v861, %v1200
  %1202 = vdwg.mxu0
  %1203 = vmatpush.msra.mxu0 0.0
  %1204 = vmatpush.msra.mxu0 0.0
  %1205 = vmatpush.msra.mxu0 0.0
  %1206 = vmatpush.msra.mxu0 0.0
  %1207 = vmatpush.msra.mxu0 0.0
  %1208 = vmatpush.msra.mxu0 0.0
  %1209 = vmatpush.msra.mxu0 0.0
  %1210 = vmatpush.msra.mxu0 0.0
  %1211 = vmatpush.msra.mxu0 %v99
  %1212 = vmatpush.msra.mxu0 %v97
  %1213 = vmatpush.msra.mxu0 %v95
  %1214 = vmatpush.msra.mxu0 %v93
  %1215 = vmatpush.msra.mxu0 %v91
  %1216 = vmatpush.msra.mxu0 %v89
  %1217 = vmatpush.msra.mxu0 %v670
  %1218 = vmatpush.msra.mxu0 %v668
  %1219 = vmatmul.f32.gmra.mxu0 %v865
  %v1220 = vpop.f32.mrf.mxu0
  %v1221 = vadd.f32 %v1132, %v1220
  %1222 = vmatmul.f32.gmra.mxu0 %v868
  %v1223 = vpop.f32.mrf.mxu0
  %v1224 = vadd.f32 %v1135, %v1223
  %1225 = vmatmul.f32.gmra.mxu0 %v871
  %v1226 = vpop.f32.mrf.mxu0
  %v1227 = vadd.f32 %v1138, %v1226
  %1228 = vmatmul.f32.gmra.mxu0 %v874
  %v1229 = vpop.f32.mrf.mxu0
  %v1230 = vadd.f32 %v1141, %v1229
  %1231 = vmatmul.f32.gmra.mxu0 %v877
  %v1232 = vpop.f32.mrf.mxu0
  %v1233 = vadd.f32 %v1144, %v1232
  %1234 = vmatmul.f32.gmra.mxu0 %v880
  %v1235 = vpop.f32.mrf.mxu0
  %v1236 = vadd.f32 %v1147, %v1235
  %1237 = vmatmul.f32.gmra.mxu0 %v883
  %v1238 = vpop.f32.mrf.mxu0
  %v1239 = vadd.f32 %v1150, %v1238
  %1240 = vmatmul.f32.gmra.mxu0 %v886
  %v1241 = vpop.f32.mrf.mxu0
  %v1242 = vadd.f32 %v1153, %v1241
  %1243 = vmatmul.f32.gmra.mxu0 %v889
  %v1244 = vpop.f32.mrf.mxu0
  %v1245 = vadd.f32 %v1156, %v1244
  %1246 = vmatmul.f32.gmra.mxu0 %v892
  %v1247 = vpop.f32.mrf.mxu0
  %v1248 = vadd.f32 %v1159, %v1247
  %1249 = vmatmul.f32.gmra.mxu0 %v895
  %v1250 = vpop.f32.mrf.mxu0
  %v1251 = vadd.f32 %v1162, %v1250
  %1252 = vmatmul.f32.gmra.mxu0 %v898
  %v1253 = vpop.f32.mrf.mxu0
  %v1254 = vadd.f32 %v1165, %v1253
  %1255 = vmatmul.f32.gmra.mxu0 %v901
  %v1256 = vpop.f32.mrf.mxu0
  %v1257 = vadd.f32 %v1168, %v1256
  %1258 = vmatmul.f32.gmra.mxu0 %v904
  %v1259 = vpop.f32.mrf.mxu0
  %v1260 = vadd.f32 %v1171, %v1259
  %1261 = vmatmul.f32.gmra.mxu0 %v907
  %v1262 = vpop.f32.mrf.mxu0
  %v1263 = vadd.f32 %v1174, %v1262
  %1264 = vmatmul.f32.gmra.mxu0 %v910
  %v1265 = vpop.f32.mrf.mxu0
  %v1266 = vadd.f32 %v1177, %v1265
  %1267 = vmatmul.f32.gmra.mxu0 %v913
  %v1268 = vpop.f32.mrf.mxu0
  %v1269 = vadd.f32 %v1180, %v1268
  %1270 = vmatmul.f32.gmra.mxu0 %v916
  %v1271 = vpop.f32.mrf.mxu0
  %v1272 = vadd.f32 %v1183, %v1271
  %1273 = vmatmul.f32.gmra.mxu0 %v919
  %v1274 = vpop.f32.mrf.mxu0
  %v1275 = vadd.f32 %v1186, %v1274
  %1276 = vmatmul.f32.gmra.mxu0 %v922
  %v1277 = vpop.f32.mrf.mxu0
  %v1278 = vadd.f32 %v1189, %v1277
  %1279 = vmatmul.f32.gmra.mxu0 %v925
  %v1280 = vpop.f32.mrf.mxu0
  %v1281 = vadd.f32 %v1192, %v1280
  %1282 = vmatmul.f32.gmra.mxu0 %v928
  %v1283 = vpop.f32.mrf.mxu0
  %v1284 = vadd.f32 %v1195, %v1283
  %1285 = vmatmul.f32.gmra.mxu0 %v931
  %v1286 = vpop.f32.mrf.mxu0
  %v1287 = vadd.f32 %v1198, %v1286
  %1288 = vmatmul.f32.gmra.mxu0 %v934
  %v1289 = vpop.f32.mrf.mxu0
  %v1290 = vadd.f32 %v1201, %v1289
  %1291 = vdwg.mxu0
  %v1292 = vmax.f32 %v1043, 0.0
  %v1293 = vmax.f32 %v1221, 0.0
  %v1294 = vmax.f32 %v1046, 0.0
  %v1295 = vmax.f32 %v1224, 0.0
  %v1296 = vmax.f32 %v1049, 0.0
  %v1297 = vmax.f32 %v1227, 0.0
  %v1298 = vmax.f32 %v1052, 0.0
  %v1299 = vmax.f32 %v1230, 0.0
  %v1300 = vmax.f32 %v1055, 0.0
  %v1301 = vmax.f32 %v1233, 0.0
  %v1302 = vmax.f32 %v1058, 0.0
  %v1303 = vmax.f32 %v1236, 0.0
  %v1304 = vmax.f32 %v1061, 0.0
  %v1305 = vmax.f32 %v1239, 0.0
  %v1306 = vmax.f32 %v1064, 0.0
  %v1307 = vmax.f32 %v1242, 0.0
  %v1308 = vmax.f32 %v1067, 0.0
  %v1309 = vmax.f32 %v1245, 0.0
  %v1310 = vmax.f32 %v1070, 0.0
  %v1311 = vmax.f32 %v1248, 0.0
  %v1312 = vmax.f32 %v1073, 0.0
  %v1313 = vmax.f32 %v1251, 0.0
  %v1314 = vmax.f32 %v1076, 0.0
  %v1315 = vmax.f32 %v1254, 0.0
  %v1316 = vmax.f32 %v1079, 0.0
  %v1317 = vmax.f32 %v1257, 0.0
  %v1318 = vmax.f32 %v1082, 0.0
  %v1319 = vmax.f32 %v1260, 0.0
  %v1320 = vmax.f32 %v1085, 0.0
  %v1321 = vmax.f32 %v1263, 0.0
  %v1322 = vmax.f32 %v1088, 0.0
  %v1323 = vmax.f32 %v1266, 0.0
  %v1324 = vmax.f32 %v1091, 0.0
  %v1325 = vmax.f32 %v1269, 0.0
  %v1326 = vmax.f32 %v1094, 0.0
  %v1327 = vmax.f32 %v1272, 0.0
  %v1328 = vmax.f32 %v1097, 0.0
  %v1329 = vmax.f32 %v1275, 0.0
  %v1330 = vmax.f32 %v1100, 0.0
  %v1331 = vmax.f32 %v1278, 0.0
  %v1332 = vmax.f32 %v1103, 0.0
  %v1333 = vmax.f32 %v1281, 0.0
  %v1334 = vmax.f32 %v1106, 0.0
  %v1335 = vmax.f32 %v1284, 0.0
  %v1336 = vmax.f32 %v1109, 0.0
  %v1337 = vmax.f32 %v1287, 0.0
  %v1338 = vmax.f32 %v1112, 0.0
  %v1339 = vmax.f32 %v1290, 0.0
  %v1340 = vld [vmem:[%s10] sm:$0xff]
  %v1341 = vld [vmem:[%s10 + $0x8] sm:$0xff]
  %v1342 = vld [vmem:[%s10 + $0x10] sm:$0xff]
  %v1343 = vld [vmem:[%s10 + $0x18] sm:$0xff]
  %v1344 = vld [vmem:[%s10 + $0x20] sm:$0xff]
  %v1345 = vld [vmem:[%s10 + $0x28] sm:$0xff]
  %v1346 = vld [vmem:[%s10 + $0x30] sm:$0xff]
  %v1347 = vld [vmem:[%s10 + $0x38] sm:$0xff]
  %v1348 = vld [vmem:[%s10 + $0x40] sm:$0xff]
  %v1349 = vld [vmem:[%s10 + $0x48] sm:$0xff]
  %v1350 = vld [vmem:[%s10 + $0x50] sm:$0xff]
  %v1351 = vld [vmem:[%s10 + $0x58] sm:$0xff]
  %v1352 = vld [vmem:[%s10 + $0x60] sm:$0xff]
  %v1353 = vld [vmem:[%s10 + $0x68] sm:$0xff]
  %v1354 = vld [vmem:[%s10 + $0x70] sm:$0xff]
  %v1355 = vld [vmem:[%s10 + $0x78] sm:$0xff]
  %v1356 = vld [vmem:[%s10 + $0x80] sm:$0xff]
  %v1357 = vld [vmem:[%s10 + $0x88] sm:$0xff]
  %v1358 = vld [vmem:[%s10 + $0x90] sm:$0xff]
  %v1359 = vld [vmem:[%s10 + $0x98] sm:$0xff]
  %v1360 = vld [vmem:[%s10 + $0xa0] sm:$0xff]
  %v1361 = vld [vmem:[%s10 + $0xa8] sm:$0xff]
  %v1362 = vld [vmem:[%s10 + $0xb0] sm:$0xff]
  %v1363 = vld [vmem:[%s10 + $0xb8] sm:$0xff]
  %v1364 = vld [vmem:[%s11] sm:$0xff]
  %v1365 = vld [vmem:[%s11 + $0x8] sm:$0xff]
  %v1366 = vld [vmem:[%s11 + $0x10] sm:$0xff]
  %v1367 = vld [vmem:[%s11 + $0x18] sm:$0xff]
  %v1368 = vld [vmem:[%s11 + $0x20] sm:$0xff]
  %v1369 = vld [vmem:[%s11 + $0x28] sm:$0xff]
  %v1370 = vld [vmem:[%s11 + $0x30] sm:$0xff]
  %v1371 = vld [vmem:[%s11 + $0x38] sm:$0xff]
  %v1372 = vld [vmem:[%s11 + $0x40] sm:$0xff]
  %v1373 = vld [vmem:[%s11 + $0x48] sm:$0xff]
  %v1374 = vld [vmem:[%s11 + $0x50] sm:$0xff]
  %v1375 = vld [vmem:[%s11 + $0x58] sm:$0xff]
  %1377 = vset.pattern.permute.xlu0 0
  %1378 = vperm.xlu0 %1377, %v1364
  %v1379 = vpop.permute.xlu0 %1378
  %1382 = vset.pattern.permute.xlu0 0
  %1383 = vperm.xlu0 %1382, %v1365
  %v1384 = vpop.permute.xlu0 %1383
  %1387 = vset.pattern.permute.xlu0 0
  %1388 = vperm.xlu0 %1387, %v1366
  %v1389 = vpop.permute.xlu0 %1388
  %1392 = vset.pattern.permute.xlu0 0
  %1393 = vperm.xlu0 %1392, %v1367
  %v1394 = vpop.permute.xlu0 %1393
  %1397 = vset.pattern.permute.xlu0 0
  %1398 = vperm.xlu0 %1397, %v1368
  %v1399 = vpop.permute.xlu0 %1398
  %1402 = vset.pattern.permute.xlu0 0
  %1403 = vperm.xlu0 %1402, %v1369
  %v1404 = vpop.permute.xlu0 %1403
  %1407 = vset.pattern.permute.xlu0 0
  %1408 = vperm.xlu0 %1407, %v1370
  %v1409 = vpop.permute.xlu0 %1408
  %1412 = vset.pattern.permute.xlu0 0
  %1413 = vperm.xlu0 %1412, %v1371
  %v1414 = vpop.permute.xlu0 %1413
  %1417 = vset.pattern.permute.xlu0 0
  %1418 = vperm.xlu0 %1417, %v1372
  %v1419 = vpop.permute.xlu0 %1418
  %1422 = vset.pattern.permute.xlu0 0
  %1423 = vperm.xlu0 %1422, %v1373
  %v1424 = vpop.permute.xlu0 %1423
  %1427 = vset.pattern.permute.xlu0 0
  %1428 = vperm.xlu0 %1427, %v1374
  %v1429 = vpop.permute.xlu0 %1428
  %1432 = vset.pattern.permute.xlu0 0
  %1433 = vperm.xlu0 %1432, %v1375
  %v1434 = vpop.permute.xlu0 %1433
  %v1437 = vsel %vm863, %v1341, 0
  %v1440 = vsel %vm863, %v1343, 0
  %v1443 = vsel %vm863, %v1345, 0
  %v1446 = vsel %vm863, %v1347, 0
  %v1449 = vsel %vm863, %v1349, 0
  %v1452 = vsel %vm863, %v1351, 0
  %v1455 = vsel %vm863, %v1353, 0
  %v1458 = vsel %vm863, %v1355, 0
  %v1461 = vsel %vm863, %v1357, 0
  %v1464 = vsel %vm863, %v1359, 0
  %v1467 = vsel %vm863, %v1361, 0
  %v1470 = vsel %vm863, %v1363, 0
  %1472 = vmatpush.msra.mxu0 %v1322
  %1473 = vmatpush.msra.mxu0 %v1320
  %1474 = vmatpush.msra.mxu0 %v1318
  %1475 = vmatpush.msra.mxu0 %v1316
  %1476 = vmatpush.msra.mxu0 %v1314
  %1477 = vmatpush.msra.mxu0 %v1312
  %1478 = vmatpush.msra.mxu0 %v1310
  %1479 = vmatpush.msra.mxu0 %v1308
  %1480 = vmatpush.msra.mxu0 %v1306
  %1481 = vmatpush.msra.mxu0 %v1304
  %1482 = vmatpush.msra.mxu0 %v1302
  %1483 = vmatpush.msra.mxu0 %v1300
  %1484 = vmatpush.msra.mxu0 %v1298
  %1485 = vmatpush.msra.mxu0 %v1296
  %1486 = vmatpush.msra.mxu0 %v1294
  %1487 = vmatpush.msra.mxu0 %v1292
  %1488 = vmatmul.f32.gmra.mxu0 %v1340
  %v1489 = vpop.f32.mrf.mxu0
  %v1490 = vadd.f32 %v1379, %v1489
  %1491 = vmatmul.f32.gmra.mxu0 %v1342
  %v1492 = vpop.f32.mrf.mxu0
  %v1493 = vadd.f32 %v1384, %v1492
  %1494 = vmatmul.f32.gmra.mxu0 %v1344
  %v1495 = vpop.f32.mrf.mxu0
  %v1496 = vadd.f32 %v1389, %v1495
  %1497 = vmatmul.f32.gmra.mxu0 %v1346
  %v1498 = vpop.f32.mrf.mxu0
  %v1499 = vadd.f32 %v1394, %v1498
  %1500 = vmatmul.f32.gmra.mxu0 %v1348
  %v1501 = vpop.f32.mrf.mxu0
  %v1502 = vadd.f32 %v1399, %v1501
  %1503 = vmatmul.f32.gmra.mxu0 %v1350
  %v1504 = vpop.f32.mrf.mxu0
  %v1505 = vadd.f32 %v1404, %v1504
  %1506 = vmatmul.f32.gmra.mxu0 %v1352
  %v1507 = vpop.f32.mrf.mxu0
  %v1508 = vadd.f32 %v1409, %v1507
  %1509 = vmatmul.f32.gmra.mxu0 %v1354
  %v1510 = vpop.f32.mrf.mxu0
  %v1511 = vadd.f32 %v1414, %v1510
  %1512 = vmatmul.f32.gmra.mxu0 %v1356
  %v1513 = vpop.f32.mrf.mxu0
  %v1514 = vadd.f32 %v1419, %v1513
  %1515 = vmatmul.f32.gmra.mxu0 %v1358
  %v1516 = vpop.f32.mrf.mxu0
  %v1517 = vadd.f32 %v1424, %v1516
  %1518 = vmatmul.f32.gmra.mxu0 %v1360
  %v1519 = vpop.f32.mrf.mxu0
  %v1520 = vadd.f32 %v1429, %v1519
  %1521 = vmatmul.f32.gmra.mxu0 %v1362
  %v1522 = vpop.f32.mrf.mxu0
  %v1523 = vadd.f32 %v1434, %v1522
  %1524 = vdwg.mxu0
  %1525 = vmatpush.msra.mxu0 0.0
  %1526 = vmatpush.msra.mxu0 0.0
  %1527 = vmatpush.msra.mxu0 0.0
  %1528 = vmatpush.msra.mxu0 0.0
  %1529 = vmatpush.msra.mxu0 0.0
  %1530 = vmatpush.msra.mxu0 0.0
  %1531 = vmatpush.msra.mxu0 0.0
  %1532 = vmatpush.msra.mxu0 0.0
  %1533 = vmatpush.msra.mxu0 %v1338
  %1534 = vmatpush.msra.mxu0 %v1336
  %1535 = vmatpush.msra.mxu0 %v1334
  %1536 = vmatpush.msra.mxu0 %v1332
  %1537 = vmatpush.msra.mxu0 %v1330
  %1538 = vmatpush.msra.mxu0 %v1328
  %1539 = vmatpush.msra.mxu0 %v1326
  %1540 = vmatpush.msra.mxu0 %v1324
  %1541 = vmatmul.f32.gmra.mxu0 %v1437
  %v1542 = vpop.f32.mrf.mxu0
  %v1543 = vadd.f32 %v1490, %v1542
  %1544 = vmatmul.f32.gmra.mxu0 %v1440
  %v1545 = vpop.f32.mrf.mxu0
  %v1546 = vadd.f32 %v1493, %v1545
  %1547 = vmatmul.f32.gmra.mxu0 %v1443
  %v1548 = vpop.f32.mrf.mxu0
  %v1549 = vadd.f32 %v1496, %v1548
  %1550 = vmatmul.f32.gmra.mxu0 %v1446
  %v1551 = vpop.f32.mrf.mxu0
  %v1552 = vadd.f32 %v1499, %v1551
  %1553 = vmatmul.f32.gmra.mxu0 %v1449
  %v1554 = vpop.f32.mrf.mxu0
  %v1555 = vadd.f32 %v1502, %v1554
  %1556 = vmatmul.f32.gmra.mxu0 %v1452
  %v1557 = vpop.f32.mrf.mxu0
  %v1558 = vadd.f32 %v1505, %v1557
  %1559 = vmatmul.f32.gmra.mxu0 %v1455
  %v1560 = vpop.f32.mrf.mxu0
  %v1561 = vadd.f32 %v1508, %v1560
  %1562 = vmatmul.f32.gmra.mxu0 %v1458
  %v1563 = vpop.f32.mrf.mxu0
  %v1564 = vadd.f32 %v1511, %v1563
  %1565 = vmatmul.f32.gmra.mxu0 %v1461
  %v1566 = vpop.f32.mrf.mxu0
  %v1567 = vadd.f32 %v1514, %v1566
  %1568 = vmatmul.f32.gmra.mxu0 %v1464
  %v1569 = vpop.f32.mrf.mxu0
  %v1570 = vadd.f32 %v1517, %v1569
  %1571 = vmatmul.f32.gmra.mxu0 %v1467
  %v1572 = vpop.f32.mrf.mxu0
  %v1573 = vadd.f32 %v1520, %v1572
  %1574 = vmatmul.f32.gmra.mxu0 %v1470
  %v1575 = vpop.f32.mrf.mxu0
  %v1576 = vadd.f32 %v1523, %v1575
  %1577 = vdwg.mxu0
  %1578 = vmatpush.msra.mxu0 %v1323
  %1579 = vmatpush.msra.mxu0 %v1321
  %1580 = vmatpush.msra.mxu0 %v1319
  %1581 = vmatpush.msra.mxu0 %v1317
  %1582 = vmatpush.msra.mxu0 %v1315
  %1583 = vmatpush.msra.mxu0 %v1313
  %1584 = vmatpush.msra.mxu0 %v1311
  %1585 = vmatpush.msra.mxu0 %v1309
  %1586 = vmatpush.msra.mxu0 %v1307
  %1587 = vmatpush.msra.mxu0 %v1305
  %1588 = vmatpush.msra.mxu0 %v1303
  %1589 = vmatpush.msra.mxu0 %v1301
  %1590 = vmatpush.msra.mxu0 %v1299
  %1591 = vmatpush.msra.mxu0 %v1297
  %1592 = vmatpush.msra.mxu0 %v1295
  %1593 = vmatpush.msra.mxu0 %v1293
  %1594 = vmatmul.f32.gmra.mxu0 %v1340
  %v1595 = vpop.f32.mrf.mxu0
  %v1596 = vadd.f32 %v1379, %v1595
  %1597 = vmatmul.f32.gmra.mxu0 %v1342
  %v1598 = vpop.f32.mrf.mxu0
  %v1599 = vadd.f32 %v1384, %v1598
  %1600 = vmatmul.f32.gmra.mxu0 %v1344
  %v1601 = vpop.f32.mrf.mxu0
  %v1602 = vadd.f32 %v1389, %v1601
  %1603 = vmatmul.f32.gmra.mxu0 %v1346
  %v1604 = vpop.f32.mrf.mxu0
  %v1605 = vadd.f32 %v1394, %v1604
  %1606 = vmatmul.f32.gmra.mxu0 %v1348
  %v1607 = vpop.f32.mrf.mxu0
  %v1608 = vadd.f32 %v1399, %v1607
  %1609 = vmatmul.f32.gmra.mxu0 %v1350
  %v1610 = vpop.f32.mrf.mxu0
  %v1611 = vadd.f32 %v1404, %v1610
  %1612 = vmatmul.f32.gmra.mxu0 %v1352
  %v1613 = vpop.f32.mrf.mxu0
  %v1614 = vadd.f32 %v1409, %v1613
  %1615 = vmatmul.f32.gmra.mxu0 %v1354
  %v1616 = vpop.f32.mrf.mxu0
  %v1617 = vadd.f32 %v1414, %v1616
  %1618 = vmatmul.f32.gmra.mxu0 %v1356
  %v1619 = vpop.f32.mrf.mxu0
  %v1620 = vadd.f32 %v1419, %v1619
  %1621 = vmatmul.f32.gmra.mxu0 %v1358
  %v1622 = vpop.f32.mrf.mxu0
  %v1623 = vadd.f32 %v1424, %v1622
  %1624 = vmatmul.f32.gmra.mxu0 %v1360
  %v1625 = vpop.f32.mrf.mxu0
  %v1626 = vadd.f32 %v1429, %v1625
  %1627 = vmatmul.f32.gmra.mxu0 %v1362
  %v1628 = vpop.f32.mrf.mxu0
  %v1629 = vadd.f32 %v1434, %v1628
  %1630 = vdwg.mxu0
  %1631 = vmatpush.msra.mxu0 0.0
  %1632 = vmatpush.msra.mxu0 0.0
  %1633 = vmatpush.msra.mxu0 0.0
  %1634 = vmatpush.msra.mxu0 0.0
  %1635 = vmatpush.msra.mxu0 0.0
  %1636 = vmatpush.msra.mxu0 0.0
  %1637 = vmatpush.msra.mxu0 0.0
  %1638 = vmatpush.msra.mxu0 0.0
  %1639 = vmatpush.msra.mxu0 %v1339
  %1640 = vmatpush.msra.mxu0 %v1337
  %1641 = vmatpush.msra.mxu0 %v1335
  %1642 = vmatpush.msra.mxu0 %v1333
  %1643 = vmatpush.msra.mxu0 %v1331
  %1644 = vmatpush.msra.mxu0 %v1329
  %1645 = vmatpush.msra.mxu0 %v1327
  %1646 = vmatpush.msra.mxu0 %v1325
  %1647 = vmatmul.f32.gmra.mxu0 %v1437
  %v1648 = vpop.f32.mrf.mxu0
  %v1649 = vadd.f32 %v1596, %v1648
  %1650 = vmatmul.f32.gmra.mxu0 %v1440
  %v1651 = vpop.f32.mrf.mxu0
  %v1652 = vadd.f32 %v1599, %v1651
  %1653 = vmatmul.f32.gmra.mxu0 %v1443
  %v1654 = vpop.f32.mrf.mxu0
  %v1655 = vadd.f32 %v1602, %v1654
  %1656 = vmatmul.f32.gmra.mxu0 %v1446
  %v1657 = vpop.f32.mrf.mxu0
  %v1658 = vadd.f32 %v1605, %v1657
  %1659 = vmatmul.f32.gmra.mxu0 %v1449
  %v1660 = vpop.f32.mrf.mxu0
  %v1661 = vadd.f32 %v1608, %v1660
  %1662 = vmatmul.f32.gmra.mxu0 %v1452
  %v1663 = vpop.f32.mrf.mxu0
  %v1664 = vadd.f32 %v1611, %v1663
  %1665 = vmatmul.f32.gmra.mxu0 %v1455
  %v1666 = vpop.f32.mrf.mxu0
  %v1667 = vadd.f32 %v1614, %v1666
  %1668 = vmatmul.f32.gmra.mxu0 %v1458
  %v1669 = vpop.f32.mrf.mxu0
  %v1670 = vadd.f32 %v1617, %v1669
  %1671 = vmatmul.f32.gmra.mxu0 %v1461
  %v1672 = vpop.f32.mrf.mxu0
  %v1673 = vadd.f32 %v1620, %v1672
  %1674 = vmatmul.f32.gmra.mxu0 %v1464
  %v1675 = vpop.f32.mrf.mxu0
  %v1676 = vadd.f32 %v1623, %v1675
  %1677 = vmatmul.f32.gmra.mxu0 %v1467
  %v1678 = vpop.f32.mrf.mxu0
  %v1679 = vadd.f32 %v1626, %v1678
  %1680 = vmatmul.f32.gmra.mxu0 %v1470
  %v1681 = vpop.f32.mrf.mxu0
  %v1682 = vadd.f32 %v1629, %v1681
  %1683 = vdwg.mxu0
  %v1684 = vmul.f32 %v1543, %v267
  %v1685 = vmul.f32 %v1649, %v268
  %v1686 = vmul.f32 %v1546, %v270
  %v1687 = vmul.f32 %v1652, %v271
  %v1688 = vmul.f32 %v1549, %v273
  %v1689 = vmul.f32 %v1655, %v274
  %v1690 = vmul.f32 %v1561, %v267
  %v1691 = vmul.f32 %v1667, %v268
  %v1692 = vmul.f32 %v1564, %v270
  %v1693 = vmul.f32 %v1670, %v271
  %v1694 = vmul.f32 %v1567, %v273
  %v1695 = vmul.f32 %v1673, %v274
  %1696 = vmatpush.msra.mxu0 %v144
  %1697 = vmatpush.msra.mxu0 %v142
  %1698 = vmatpush.msra.mxu0 %v140
  %1699 = vmatpush.msra.mxu0 %v138
  %1700 = vmatpush.msra.mxu0 %v136
  %1701 = vmatpush.msra.mxu0 %v134
  %1702 = vmatpush.msra.mxu0 %v132
  %1703 = vmatpush.msra.mxu0 %v130
  %1704 = vmatpush.msra.mxu0 %v128
  %1705 = vmatpush.msra.mxu0 %v126
  %1706 = vmatpush.msra.mxu0 %v124
  %1707 = vmatpush.msra.mxu0 %v122
  %1708 = vmatpush.msra.mxu0 %v120
  %1709 = vmatpush.msra.mxu0 %v118
  %1710 = vmatpush.msra.mxu0 %v116
  %1711 = vmatpush.msra.mxu0 %v114
  %1712 = vmatmul.f32.gmra.mxu0 %v1684
  %v1713 = vpop.f32.mrf.mxu0
  %v1714 = vadd.f32 0.0, %v1713
  %1715 = vmatmul.f32.gmra.mxu0 %v1686
  %v1716 = vpop.f32.mrf.mxu0
  %v1717 = vadd.f32 0.0, %v1716
  %1718 = vmatmul.f32.gmra.mxu0 %v1688
  %v1719 = vpop.f32.mrf.mxu0
  %v1720 = vadd.f32 0.0, %v1719
  %1721 = vmatmul.f32.gmra.mxu0 %v1690
  %v1722 = vpop.f32.mrf.mxu0
  %v1723 = vadd.f32 0.0, %v1722
  %1724 = vmatmul.f32.gmra.mxu0 %v1692
  %v1725 = vpop.f32.mrf.mxu0
  %v1726 = vadd.f32 0.0, %v1725
  %1727 = vmatmul.f32.gmra.mxu0 %v1694
  %v1728 = vpop.f32.mrf.mxu0
  %v1729 = vadd.f32 0.0, %v1728
  %1730 = vdwg.mxu0
  %1731 = vmatpush.msra.mxu0 %v176
  %1732 = vmatpush.msra.mxu0 %v174
  %1733 = vmatpush.msra.mxu0 %v172
  %1734 = vmatpush.msra.mxu0 %v170
  %1735 = vmatpush.msra.mxu0 %v168
  %1736 = vmatpush.msra.mxu0 %v166
  %1737 = vmatpush.msra.mxu0 %v164
  %1738 = vmatpush.msra.mxu0 %v162
  %1739 = vmatpush.msra.mxu0 %v160
  %1740 = vmatpush.msra.mxu0 %v158
  %1741 = vmatpush.msra.mxu0 %v156
  %1742 = vmatpush.msra.mxu0 %v154
  %1743 = vmatpush.msra.mxu0 %v152
  %1744 = vmatpush.msra.mxu0 %v150
  %1745 = vmatpush.msra.mxu0 %v148
  %1746 = vmatpush.msra.mxu0 %v146
  %1747 = vmatmul.f32.gmra.mxu0 %v1685
  %v1748 = vpop.f32.mrf.mxu0
  %v1749 = vadd.f32 %v1714, %v1748
  %1750 = vmatmul.f32.gmra.mxu0 %v1687
  %v1751 = vpop.f32.mrf.mxu0
  %v1752 = vadd.f32 %v1717, %v1751
  %1753 = vmatmul.f32.gmra.mxu0 %v1689
  %v1754 = vpop.f32.mrf.mxu0
  %v1755 = vadd.f32 %v1720, %v1754
  %1756 = vmatmul.f32.gmra.mxu0 %v1691
  %v1757 = vpop.f32.mrf.mxu0
  %v1758 = vadd.f32 %v1723, %v1757
  %1759 = vmatmul.f32.gmra.mxu0 %v1693
  %v1760 = vpop.f32.mrf.mxu0
  %v1761 = vadd.f32 %v1726, %v1760
  %1762 = vmatmul.f32.gmra.mxu0 %v1695
  %v1763 = vpop.f32.mrf.mxu0
  %v1764 = vadd.f32 %v1729, %v1763
  %1765 = vdwg.mxu0
  %1766 = vmatpush.msra.mxu0 %v145
  %1767 = vmatpush.msra.mxu0 %v143
  %1768 = vmatpush.msra.mxu0 %v141
  %1769 = vmatpush.msra.mxu0 %v139
  %1770 = vmatpush.msra.mxu0 %v137
  %1771 = vmatpush.msra.mxu0 %v135
  %1772 = vmatpush.msra.mxu0 %v133
  %1773 = vmatpush.msra.mxu0 %v131
  %1774 = vmatpush.msra.mxu0 %v129
  %1775 = vmatpush.msra.mxu0 %v127
  %1776 = vmatpush.msra.mxu0 %v125
  %1777 = vmatpush.msra.mxu0 %v123
  %1778 = vmatpush.msra.mxu0 %v121
  %1779 = vmatpush.msra.mxu0 %v119
  %1780 = vmatpush.msra.mxu0 %v117
  %1781 = vmatpush.msra.mxu0 %v115
  %1782 = vmatmul.f32.gmra.mxu0 %v1684
  %v1783 = vpop.f32.mrf.mxu0
  %v1784 = vadd.f32 0.0, %v1783
  %1785 = vmatmul.f32.gmra.mxu0 %v1686
  %v1786 = vpop.f32.mrf.mxu0
  %v1787 = vadd.f32 0.0, %v1786
  %1788 = vmatmul.f32.gmra.mxu0 %v1688
  %v1789 = vpop.f32.mrf.mxu0
  %v1790 = vadd.f32 0.0, %v1789
  %1791 = vmatmul.f32.gmra.mxu0 %v1690
  %v1792 = vpop.f32.mrf.mxu0
  %v1793 = vadd.f32 0.0, %v1792
  %1794 = vmatmul.f32.gmra.mxu0 %v1692
  %v1795 = vpop.f32.mrf.mxu0
  %v1796 = vadd.f32 0.0, %v1795
  %1797 = vmatmul.f32.gmra.mxu0 %v1694
  %v1798 = vpop.f32.mrf.mxu0
  %v1799 = vadd.f32 0.0, %v1798
  %1800 = vdwg.mxu0
  %1801 = vmatpush.msra.mxu0 %v177
  %1802 = vmatpush.msra.mxu0 %v175
  %1803 = vmatpush.msra.mxu0 %v173
  %1804 = vmatpush.msra.mxu0 %v171
  %1805 = vmatpush.msra.mxu0 %v169
  %1806 = vmatpush.msra.mxu0 %v167
  %1807 = vmatpush.msra.mxu0 %v165
  %1808 = vmatpush.msra.mxu0 %v163
  %1809 = vmatpush.msra.mxu0 %v161
  %1810 = vmatpush.msra.mxu0 %v159
  %1811 = vmatpush.msra.mxu0 %v157
  %1812 = vmatpush.msra.mxu0 %v155
  %1813 = vmatpush.msra.mxu0 %v153
  %1814 = vmatpush.msra.mxu0 %v151
  %1815 = vmatpush.msra.mxu0 %v149
  %1816 = vmatpush.msra.mxu0 %v147
  %1817 = vmatmul.f32.gmra.mxu0 %v1685
  %v1818 = vpop.f32.mrf.mxu0
  %v1819 = vadd.f32 %v1784, %v1818
  %1820 = vmatmul.f32.gmra.mxu0 %v1687
  %v1821 = vpop.f32.mrf.mxu0
  %v1822 = vadd.f32 %v1787, %v1821
  %1823 = vmatmul.f32.gmra.mxu0 %v1689
  %v1824 = vpop.f32.mrf.mxu0
  %v1825 = vadd.f32 %v1790, %v1824
  %1826 = vmatmul.f32.gmra.mxu0 %v1691
  %v1827 = vpop.f32.mrf.mxu0
  %v1828 = vadd.f32 %v1793, %v1827
  %1829 = vmatmul.f32.gmra.mxu0 %v1693
  %v1830 = vpop.f32.mrf.mxu0
  %v1831 = vadd.f32 %v1796, %v1830
  %1832 = vmatmul.f32.gmra.mxu0 %v1695
  %v1833 = vpop.f32.mrf.mxu0
  %v1834 = vadd.f32 %v1799, %v1833
  %1835 = vdwg.mxu0
  %1836 = vmatpush.msra.mxu0 %v208
  %1837 = vmatpush.msra.mxu0 %v206
  %1838 = vmatpush.msra.mxu0 %v204
  %1839 = vmatpush.msra.mxu0 %v202
  %1840 = vmatpush.msra.mxu0 %v200
  %1841 = vmatpush.msra.mxu0 %v198
  %1842 = vmatpush.msra.mxu0 %v196
  %1843 = vmatpush.msra.mxu0 %v194
  %1844 = vmatpush.msra.mxu0 %v192
  %1845 = vmatpush.msra.mxu0 %v190
  %1846 = vmatpush.msra.mxu0 %v188
  %1847 = vmatpush.msra.mxu0 %v186
  %1848 = vmatpush.msra.mxu0 %v184
  %1849 = vmatpush.msra.mxu0 %v182
  %1850 = vmatpush.msra.mxu0 %v180
  %1851 = vmatpush.msra.mxu0 %v178
  %1852 = vmatmul.f32.gmra.mxu0 %v1684
  %v1853 = vpop.f32.mrf.mxu0
  %v1854 = vadd.f32 0.0, %v1853
  %1855 = vmatmul.f32.gmra.mxu0 %v1686
  %v1856 = vpop.f32.mrf.mxu0
  %v1857 = vadd.f32 0.0, %v1856
  %1858 = vmatmul.f32.gmra.mxu0 %v1688
  %v1859 = vpop.f32.mrf.mxu0
  %v1860 = vadd.f32 0.0, %v1859
  %1861 = vmatmul.f32.gmra.mxu0 %v1690
  %v1862 = vpop.f32.mrf.mxu0
  %v1863 = vadd.f32 0.0, %v1862
  %1864 = vmatmul.f32.gmra.mxu0 %v1692
  %v1865 = vpop.f32.mrf.mxu0
  %v1866 = vadd.f32 0.0, %v1865
  %1867 = vmatmul.f32.gmra.mxu0 %v1694
  %v1868 = vpop.f32.mrf.mxu0
  %v1869 = vadd.f32 0.0, %v1868
  %1870 = vdwg.mxu0
  %1871 = vmatpush.msra.mxu0 %v240
  %1872 = vmatpush.msra.mxu0 %v238
  %1873 = vmatpush.msra.mxu0 %v236
  %1874 = vmatpush.msra.mxu0 %v234
  %1875 = vmatpush.msra.mxu0 %v232
  %1876 = vmatpush.msra.mxu0 %v230
  %1877 = vmatpush.msra.mxu0 %v228
  %1878 = vmatpush.msra.mxu0 %v226
  %1879 = vmatpush.msra.mxu0 %v224
  %1880 = vmatpush.msra.mxu0 %v222
  %1881 = vmatpush.msra.mxu0 %v220
  %1882 = vmatpush.msra.mxu0 %v218
  %1883 = vmatpush.msra.mxu0 %v216
  %1884 = vmatpush.msra.mxu0 %v214
  %1885 = vmatpush.msra.mxu0 %v212
  %1886 = vmatpush.msra.mxu0 %v210
  %1887 = vmatmul.f32.gmra.mxu0 %v1685
  %v1888 = vpop.f32.mrf.mxu0
  %v1889 = vadd.f32 %v1854, %v1888
  %1890 = vmatmul.f32.gmra.mxu0 %v1687
  %v1891 = vpop.f32.mrf.mxu0
  %v1892 = vadd.f32 %v1857, %v1891
  %1893 = vmatmul.f32.gmra.mxu0 %v1689
  %v1894 = vpop.f32.mrf.mxu0
  %v1895 = vadd.f32 %v1860, %v1894
  %1896 = vmatmul.f32.gmra.mxu0 %v1691
  %v1897 = vpop.f32.mrf.mxu0
  %v1898 = vadd.f32 %v1863, %v1897
  %1899 = vmatmul.f32.gmra.mxu0 %v1693
  %v1900 = vpop.f32.mrf.mxu0
  %v1901 = vadd.f32 %v1866, %v1900
  %1902 = vmatmul.f32.gmra.mxu0 %v1695
  %v1903 = vpop.f32.mrf.mxu0
  %v1904 = vadd.f32 %v1869, %v1903
  %1905 = vdwg.mxu0
  %1906 = vmatpush.msra.mxu0 %v209
  %1907 = vmatpush.msra.mxu0 %v207
  %1908 = vmatpush.msra.mxu0 %v205
  %1909 = vmatpush.msra.mxu0 %v203
  %1910 = vmatpush.msra.mxu0 %v201
  %1911 = vmatpush.msra.mxu0 %v199
  %1912 = vmatpush.msra.mxu0 %v197
  %1913 = vmatpush.msra.mxu0 %v195
  %1914 = vmatpush.msra.mxu0 %v193
  %1915 = vmatpush.msra.mxu0 %v191
  %1916 = vmatpush.msra.mxu0 %v189
  %1917 = vmatpush.msra.mxu0 %v187
  %1918 = vmatpush.msra.mxu0 %v185
  %1919 = vmatpush.msra.mxu0 %v183
  %1920 = vmatpush.msra.mxu0 %v181
  %1921 = vmatpush.msra.mxu0 %v179
  %1922 = vmatmul.f32.gmra.mxu0 %v1684
  %v1923 = vpop.f32.mrf.mxu0
  %v1924 = vadd.f32 0.0, %v1923
  %1925 = vmatmul.f32.gmra.mxu0 %v1686
  %v1926 = vpop.f32.mrf.mxu0
  %v1927 = vadd.f32 0.0, %v1926
  %1928 = vmatmul.f32.gmra.mxu0 %v1688
  %v1929 = vpop.f32.mrf.mxu0
  %v1930 = vadd.f32 0.0, %v1929
  %1931 = vmatmul.f32.gmra.mxu0 %v1690
  %v1932 = vpop.f32.mrf.mxu0
  %v1933 = vadd.f32 0.0, %v1932
  %1934 = vmatmul.f32.gmra.mxu0 %v1692
  %v1935 = vpop.f32.mrf.mxu0
  %v1936 = vadd.f32 0.0, %v1935
  %1937 = vmatmul.f32.gmra.mxu0 %v1694
  %v1938 = vpop.f32.mrf.mxu0
  %v1939 = vadd.f32 0.0, %v1938
  %1940 = vdwg.mxu0
  %1941 = vmatpush.msra.mxu0 %v241
  %1942 = vmatpush.msra.mxu0 %v239
  %1943 = vmatpush.msra.mxu0 %v237
  %1944 = vmatpush.msra.mxu0 %v235
  %1945 = vmatpush.msra.mxu0 %v233
  %1946 = vmatpush.msra.mxu0 %v231
  %1947 = vmatpush.msra.mxu0 %v229
  %1948 = vmatpush.msra.mxu0 %v227
  %1949 = vmatpush.msra.mxu0 %v225
  %1950 = vmatpush.msra.mxu0 %v223
  %1951 = vmatpush.msra.mxu0 %v221
  %1952 = vmatpush.msra.mxu0 %v219
  %1953 = vmatpush.msra.mxu0 %v217
  %1954 = vmatpush.msra.mxu0 %v215
  %1955 = vmatpush.msra.mxu0 %v213
  %1956 = vmatpush.msra.mxu0 %v211
  %1957 = vmatmul.f32.gmra.mxu0 %v1685
  %v1958 = vpop.f32.mrf.mxu0
  %v1959 = vadd.f32 %v1924, %v1958
  %1960 = vmatmul.f32.gmra.mxu0 %v1687
  %v1961 = vpop.f32.mrf.mxu0
  %v1962 = vadd.f32 %v1927, %v1961
  %1963 = vmatmul.f32.gmra.mxu0 %v1689
  %v1964 = vpop.f32.mrf.mxu0
  %v1965 = vadd.f32 %v1930, %v1964
  %1966 = vmatmul.f32.gmra.mxu0 %v1691
  %v1967 = vpop.f32.mrf.mxu0
  %v1968 = vadd.f32 %v1933, %v1967
  %1969 = vmatmul.f32.gmra.mxu0 %v1693
  %v1970 = vpop.f32.mrf.mxu0
  %v1971 = vadd.f32 %v1936, %v1970
  %1972 = vmatmul.f32.gmra.mxu0 %v1695
  %v1973 = vpop.f32.mrf.mxu0
  %v1974 = vadd.f32 %v1939, %v1973
  %1975 = vdwg.mxu0
  %v1976 = vadd.f32 %v1749, %v1898
  %v1977 = vadd.f32 %v1819, %v1968
  %v1978 = vadd.f32 %v1752, %v1901
  %v1979 = vadd.f32 %v1822, %v1971
  %v1980 = vadd.f32 %v1755, %v1904
  %v1981 = vadd.f32 %v1825, %v1974
  %v1982 = vsub.f32 %v1758, %v1889
  %v1983 = vsub.f32 %v1828, %v1959
  %v1984 = vsub.f32 %v1761, %v1892
  %v1985 = vsub.f32 %v1831, %v1962
  %v1986 = vsub.f32 %v1764, %v1895
  %v1987 = vsub.f32 %v1834, %v1965
  %v1988 = vmul.f32 %v1976, %v100
  %v1989 = vmul.f32 %v1977, %v101
  %v1990 = vmul.f32 %v1978, %v102
  %v1991 = vmul.f32 %v1979, %v103
  %v1992 = vmul.f32 %v1980, %v104
  %v1993 = vmul.f32 %v1981, %v105
  %v1994 = vmul.f32 %v1982, %v106
  %v1995 = vmul.f32 %v1983, %v107
  %v1996 = vmul.f32 %v1984, %v108
  %v1997 = vmul.f32 %v1985, %v109
  %v1998 = vmul.f32 %v1986, %v110
  %v1999 = vmul.f32 %v1987, %v111
  %v2000 = vadd.f32 %v1988, %v1994
  %v2001 = vadd.f32 %v1989, %v1995
  %v2002 = vadd.f32 %v1990, %v1996
  %v2003 = vadd.f32 %v1991, %v1997
  %v2004 = vadd.f32 %v1992, %v1998
  %v2005 = vadd.f32 %v1993, %v1999
  %v2006 = vmul.f32 %v1982, %v100
  %v2007 = vmul.f32 %v1983, %v101
  %v2008 = vmul.f32 %v1984, %v102
  %v2009 = vmul.f32 %v1985, %v103
  %v2010 = vmul.f32 %v1986, %v104
  %v2011 = vmul.f32 %v1987, %v105
  %v2012 = vmul.f32 %v1976, %v106
  %v2013 = vmul.f32 %v1977, %v107
  %v2014 = vmul.f32 %v1978, %v108
  %v2015 = vmul.f32 %v1979, %v109
  %v2016 = vmul.f32 %v1980, %v110
  %v2017 = vmul.f32 %v1981, %v111
  %v2018 = vsub.f32 %v2006, %v2012
  %v2019 = vsub.f32 %v2007, %v2013
  %v2020 = vsub.f32 %v2008, %v2014
  %v2021 = vsub.f32 %v2009, %v2015
  %v2022 = vsub.f32 %v2010, %v2016
  %v2023 = vsub.f32 %v2011, %v2017
  %vm2024 = vcmask 392192
  %v2026 = vsel %vm2024, %v242, 0
  %v2029 = vsel %vm2024, %v243, 0
  %2031 = vmatpush.msra.mxu0 0.0
  %2032 = vmatpush.msra.mxu0 0.0
  %2033 = vmatpush.msra.mxu0 0.0
  %2034 = vmatpush.msra.mxu0 0.0
  %2035 = vmatpush.msra.mxu0 0.0
  %2036 = vmatpush.msra.mxu0 0.0
  %2037 = vmatpush.msra.mxu0 0.0
  %2038 = vmatpush.msra.mxu0 0.0
  %2039 = vmatpush.msra.mxu0 0.0
  %2040 = vmatpush.msra.mxu0 0.0
  %2041 = vmatpush.msra.mxu0 %v2022
  %2042 = vmatpush.msra.mxu0 %v2020
  %2043 = vmatpush.msra.mxu0 %v2018
  %2044 = vmatpush.msra.mxu0 %v2004
  %2045 = vmatpush.msra.mxu0 %v2002
  %2046 = vmatpush.msra.mxu0 %v2000
  %2047 = vmatmul.f32.gmra.mxu0 %v2026
  %v2048 = vpop.f32.mrf.mxu0
  %v2049 = vadd.f32 0.0, %v2048
  %2050 = vmatmul.f32.gmra.mxu0 %v2029
  %v2051 = vpop.f32.mrf.mxu0
  %v2052 = vadd.f32 0.0, %v2051
  %2053 = vdwg.mxu0
  %2054 = vmatpush.msra.mxu0 0.0
  %2055 = vmatpush.msra.mxu0 0.0
  %2056 = vmatpush.msra.mxu0 0.0
  %2057 = vmatpush.msra.mxu0 0.0
  %2058 = vmatpush.msra.mxu0 0.0
  %2059 = vmatpush.msra.mxu0 0.0
  %2060 = vmatpush.msra.mxu0 0.0
  %2061 = vmatpush.msra.mxu0 0.0
  %2062 = vmatpush.msra.mxu0 0.0
  %2063 = vmatpush.msra.mxu0 0.0
  %2064 = vmatpush.msra.mxu0 %v2023
  %2065 = vmatpush.msra.mxu0 %v2021
  %2066 = vmatpush.msra.mxu0 %v2019
  %2067 = vmatpush.msra.mxu0 %v2005
  %2068 = vmatpush.msra.mxu0 %v2003
  %2069 = vmatpush.msra.mxu0 %v2001
  %2070 = vmatmul.f32.gmra.mxu0 %v2026
  %v2071 = vpop.f32.mrf.mxu0
  %v2072 = vadd.f32 0.0, %v2071
  %2073 = vmatmul.f32.gmra.mxu0 %v2029
  %v2074 = vpop.f32.mrf.mxu0
  %v2075 = vadd.f32 0.0, %v2074
  %2076 = vdwg.mxu0
  %v2077 = vsel %vm269, %v2052, 0.0
  %v2078 = vsel %vm269, %v2075, 0.0
  %v2079 = vld [vmem:[%s12] sm:$0xff]
  %v2080 = vld [vmem:[%s12 + $0x8] sm:$0xff]
  %v2081 = vld [vmem:[%s12 + $0x10] sm:$0xff]
  %v2082 = vld [vmem:[%s12 + $0x18] sm:$0xff]
  %v2083 = vld [vmem:[%s12 + $0x20] sm:$0xff]
  %v2084 = vld [vmem:[%s12 + $0x28] sm:$0xff]
  %v2085 = vld [vmem:[%s12 + $0x30] sm:$0xff]
  %v2086 = vld [vmem:[%s12 + $0x38] sm:$0xff]
  %v2087 = vld [vmem:[%s12 + $0x40] sm:$0xff]
  %v2088 = vld [vmem:[%s12 + $0x48] sm:$0xff]
  %v2089 = vld [vmem:[%s12 + $0x50] sm:$0xff]
  %v2090 = vld [vmem:[%s12 + $0x58] sm:$0xff]
  %v2091 = vld [vmem:[%s12 + $0x60] sm:$0xff]
  %v2092 = vld [vmem:[%s12 + $0x68] sm:$0xff]
  %v2093 = vld [vmem:[%s12 + $0x70] sm:$0xff]
  %v2094 = vld [vmem:[%s12 + $0x78] sm:$0xff]
  %v2095 = vld [vmem:[%s12 + $0x80] sm:$0xff]
  %v2096 = vld [vmem:[%s12 + $0x88] sm:$0xff]
  %v2097 = vld [vmem:[%s13] sm:$0xff]
  %v2098 = vld [vmem:[%s13 + $0x8] sm:$0xff]
  %v2099 = vld [vmem:[%s13 + $0x10] sm:$0xff]
  %v2100 = vld [vmem:[%s13 + $0x18] sm:$0xff]
  %v2101 = vld [vmem:[%s13 + $0x20] sm:$0xff]
  %v2102 = vld [vmem:[%s13 + $0x28] sm:$0xff]
  %2103 = vrot.lane.b32.xlu0 %v58, 17
  %v2104 = vpop.permute.xlu0 %2103
  %2105 = vrot.lane.b32.xlu0 %v60, 17
  %v2106 = vpop.permute.xlu0 %2105
  %2107 = vrot.lane.b32.xlu0 %v62, 17
  %v2108 = vpop.permute.xlu0 %2107
  %2109 = vrot.lane.b32.xlu0 %v2049, 17
  %v2110 = vpop.permute.xlu0 %2109
  %2111 = vrot.lane.b32.xlu0 %v2077, 17
  %v2112 = vpop.permute.xlu0 %2111
  %2113 = vrot.lane.b32.xlu0 %v59, 17
  %v2114 = vpop.permute.xlu0 %2113
  %2115 = vrot.lane.b32.xlu0 %v61, 17
  %v2116 = vpop.permute.xlu0 %2115
  %2117 = vrot.lane.b32.xlu0 %v63, 17
  %v2118 = vpop.permute.xlu0 %2117
  %2119 = vrot.lane.b32.xlu0 %v2072, 17
  %v2120 = vpop.permute.xlu0 %2119
  %2121 = vrot.lane.b32.xlu0 %v2078, 17
  %v2122 = vpop.permute.xlu0 %2121
  %v2123 = vlaneseq
  %v2124 = vand.u32 %v2123, 127
  %vm2125 = vcmp.lt.s32.totalorder %v2124, 17
  %v2126 = vsel %vm2125, %v2104, %v2114
  %v2127 = vsel %vm2125, %v2106, %v2116
  %v2128 = vsel %vm2125, %v2108, %v2118
  %v2129 = vsel %vm2125, %v2110, %v2120
  %v2130 = vsel %vm2125, %v2112, %v2122
  %v2131 = vsel %vm2125, %v2114, %v2104
  %v2132 = vsel %vm2125, %v2116, %v2106
  %v2133 = vsel %vm2125, %v2118, %v2108
  %v2134 = vsel %vm2125, %v2120, %v2110
  %v2135 = vsel %vm2125, %v2122, %v2112
  %v2137 = vperm.slane %v244, 0
  %v2138 = vperm.slane %v244, 1
  %v2141 = vmul.f32 %v2131, %v2137
  %v2142 = vmul.f32 %v2126, %v2138
  %v2143 = vmul.f32 %v2132, %v2137
  %v2144 = vmul.f32 %v2127, %v2138
  %v2145 = vmul.f32 %v2133, %v2137
  %v2146 = vmul.f32 %v2128, %v2138
  %v2147 = vmul.f32 %v2134, %v2137
  %v2148 = vmul.f32 %v2129, %v2138
  %v2149 = vmul.f32 %v2135, %v2137
  %v2150 = vmul.f32 %v2130, %v2138
  %2151 = vrot.lane.b32.xlu0 %v58, 16
  %v2152 = vpop.permute.xlu0 %2151
  %2153 = vrot.lane.b32.xlu0 %v60, 16
  %v2154 = vpop.permute.xlu0 %2153
  %2155 = vrot.lane.b32.xlu0 %v62, 16
  %v2156 = vpop.permute.xlu0 %2155
  %2157 = vrot.lane.b32.xlu0 %v2049, 16
  %v2158 = vpop.permute.xlu0 %2157
  %2159 = vrot.lane.b32.xlu0 %v2077, 16
  %v2160 = vpop.permute.xlu0 %2159
  %2161 = vrot.lane.b32.xlu0 %v59, 16
  %v2162 = vpop.permute.xlu0 %2161
  %2163 = vrot.lane.b32.xlu0 %v61, 16
  %v2164 = vpop.permute.xlu0 %2163
  %2165 = vrot.lane.b32.xlu0 %v63, 16
  %v2166 = vpop.permute.xlu0 %2165
  %2167 = vrot.lane.b32.xlu0 %v2072, 16
  %v2168 = vpop.permute.xlu0 %2167
  %2169 = vrot.lane.b32.xlu0 %v2078, 16
  %v2170 = vpop.permute.xlu0 %2169
  %vm2171 = vcmp.lt.s32.totalorder %v2124, 16
  %v2172 = vsel %vm2171, %v2152, %v2162
  %v2173 = vsel %vm2171, %v2154, %v2164
  %v2174 = vsel %vm2171, %v2156, %v2166
  %v2175 = vsel %vm2171, %v2158, %v2168
  %v2176 = vsel %vm2171, %v2160, %v2170
  %v2177 = vsel %vm2171, %v2162, %v2152
  %v2178 = vsel %vm2171, %v2164, %v2154
  %v2179 = vsel %vm2171, %v2166, %v2156
  %v2180 = vsel %vm2171, %v2168, %v2158
  %v2181 = vsel %vm2171, %v2170, %v2160
  %v2183 = vperm.slane %v245, 0
  %v2184 = vperm.slane %v245, 1
  %v2187 = vmul.f32 %v2177, %v2183
  %v2188 = vmul.f32 %v2172, %v2184
  %v2189 = vmul.f32 %v2178, %v2183
  %v2190 = vmul.f32 %v2173, %v2184
  %v2191 = vmul.f32 %v2179, %v2183
  %v2192 = vmul.f32 %v2174, %v2184
  %v2193 = vmul.f32 %v2180, %v2183
  %v2194 = vmul.f32 %v2175, %v2184
  %v2195 = vmul.f32 %v2181, %v2183
  %v2196 = vmul.f32 %v2176, %v2184
  %2197 = vrot.lane.b32.xlu0 %v58, 15
  %v2198 = vpop.permute.xlu0 %2197
  %2199 = vrot.lane.b32.xlu0 %v60, 15
  %v2200 = vpop.permute.xlu0 %2199
  %2201 = vrot.lane.b32.xlu0 %v62, 15
  %v2202 = vpop.permute.xlu0 %2201
  %2203 = vrot.lane.b32.xlu0 %v2049, 15
  %v2204 = vpop.permute.xlu0 %2203
  %2205 = vrot.lane.b32.xlu0 %v2077, 15
  %v2206 = vpop.permute.xlu0 %2205
  %2207 = vrot.lane.b32.xlu0 %v59, 15
  %v2208 = vpop.permute.xlu0 %2207
  %2209 = vrot.lane.b32.xlu0 %v61, 15
  %v2210 = vpop.permute.xlu0 %2209
  %2211 = vrot.lane.b32.xlu0 %v63, 15
  %v2212 = vpop.permute.xlu0 %2211
  %2213 = vrot.lane.b32.xlu0 %v2072, 15
  %v2214 = vpop.permute.xlu0 %2213
  %2215 = vrot.lane.b32.xlu0 %v2078, 15
  %v2216 = vpop.permute.xlu0 %2215
  %vm2217 = vcmp.lt.s32.totalorder %v2124, 15
  %v2218 = vsel %vm2217, %v2198, %v2208
  %v2219 = vsel %vm2217, %v2200, %v2210
  %v2220 = vsel %vm2217, %v2202, %v2212
  %v2221 = vsel %vm2217, %v2204, %v2214
  %v2222 = vsel %vm2217, %v2206, %v2216
  %v2223 = vsel %vm2217, %v2208, %v2198
  %v2224 = vsel %vm2217, %v2210, %v2200
  %v2225 = vsel %vm2217, %v2212, %v2202
  %v2226 = vsel %vm2217, %v2214, %v2204
  %v2227 = vsel %vm2217, %v2216, %v2206
  %v2229 = vperm.slane %v246, 0
  %v2230 = vperm.slane %v246, 1
  %v2233 = vmul.f32 %v2223, %v2229
  %v2234 = vmul.f32 %v2218, %v2230
  %v2235 = vmul.f32 %v2224, %v2229
  %v2236 = vmul.f32 %v2219, %v2230
  %v2237 = vmul.f32 %v2225, %v2229
  %v2238 = vmul.f32 %v2220, %v2230
  %v2239 = vmul.f32 %v2226, %v2229
  %v2240 = vmul.f32 %v2221, %v2230
  %v2241 = vmul.f32 %v2227, %v2229
  %v2242 = vmul.f32 %v2222, %v2230
  %2243 = vrot.lane.b32.xlu0 %v58, 1
  %v2244 = vpop.permute.xlu0 %2243
  %2245 = vrot.lane.b32.xlu0 %v60, 1
  %v2246 = vpop.permute.xlu0 %2245
  %2247 = vrot.lane.b32.xlu0 %v62, 1
  %v2248 = vpop.permute.xlu0 %2247
  %2249 = vrot.lane.b32.xlu0 %v2049, 1
  %v2250 = vpop.permute.xlu0 %2249
  %2251 = vrot.lane.b32.xlu0 %v2077, 1
  %v2252 = vpop.permute.xlu0 %2251
  %2253 = vrot.lane.b32.xlu0 %v59, 1
  %v2254 = vpop.permute.xlu0 %2253
  %2255 = vrot.lane.b32.xlu0 %v61, 1
  %v2256 = vpop.permute.xlu0 %2255
  %2257 = vrot.lane.b32.xlu0 %v63, 1
  %v2258 = vpop.permute.xlu0 %2257
  %2259 = vrot.lane.b32.xlu0 %v2072, 1
  %v2260 = vpop.permute.xlu0 %2259
  %2261 = vrot.lane.b32.xlu0 %v2078, 1
  %v2262 = vpop.permute.xlu0 %2261
  %vm2263 = vcmp.lt.s32.totalorder %v2124, 1
  %v2264 = vsel %vm2263, %v2244, %v2254
  %v2265 = vsel %vm2263, %v2246, %v2256
  %v2266 = vsel %vm2263, %v2248, %v2258
  %v2267 = vsel %vm2263, %v2250, %v2260
  %v2268 = vsel %vm2263, %v2252, %v2262
  %v2269 = vsel %vm2263, %v2254, %v2244
  %v2270 = vsel %vm2263, %v2256, %v2246
  %v2271 = vsel %vm2263, %v2258, %v2248
  %v2272 = vsel %vm2263, %v2260, %v2250
  %v2273 = vsel %vm2263, %v2262, %v2252
  %v2275 = vperm.slane %v247, 0
  %v2276 = vperm.slane %v247, 1
  %v2279 = vmul.f32 %v2269, %v2275
  %v2280 = vmul.f32 %v2264, %v2276
  %v2281 = vmul.f32 %v2270, %v2275
  %v2282 = vmul.f32 %v2265, %v2276
  %v2283 = vmul.f32 %v2271, %v2275
  %v2284 = vmul.f32 %v2266, %v2276
  %v2285 = vmul.f32 %v2272, %v2275
  %v2286 = vmul.f32 %v2267, %v2276
  %v2287 = vmul.f32 %v2273, %v2275
  %v2288 = vmul.f32 %v2268, %v2276
  %2289 = vrot.lane.b32.xlu0 %v58, 127
  %v2290 = vpop.permute.xlu0 %2289
  %2291 = vrot.lane.b32.xlu0 %v60, 127
  %v2292 = vpop.permute.xlu0 %2291
  %2293 = vrot.lane.b32.xlu0 %v62, 127
  %v2294 = vpop.permute.xlu0 %2293
  %2295 = vrot.lane.b32.xlu0 %v2049, 127
  %v2296 = vpop.permute.xlu0 %2295
  %2297 = vrot.lane.b32.xlu0 %v2077, 127
  %v2298 = vpop.permute.xlu0 %2297
  %2299 = vrot.lane.b32.xlu0 %v59, 127
  %v2300 = vpop.permute.xlu0 %2299
  %2301 = vrot.lane.b32.xlu0 %v61, 127
  %v2302 = vpop.permute.xlu0 %2301
  %2303 = vrot.lane.b32.xlu0 %v63, 127
  %v2304 = vpop.permute.xlu0 %2303
  %2305 = vrot.lane.b32.xlu0 %v2072, 127
  %v2306 = vpop.permute.xlu0 %2305
  %2307 = vrot.lane.b32.xlu0 %v2078, 127
  %v2308 = vpop.permute.xlu0 %2307
  %vm2309 = vcmp.lt.s32.totalorder %v2124, 127
  %v2310 = vsel %vm2309, %v2290, %v2300
  %v2311 = vsel %vm2309, %v2292, %v2302
  %v2312 = vsel %vm2309, %v2294, %v2304
  %v2313 = vsel %vm2309, %v2296, %v2306
  %v2314 = vsel %vm2309, %v2298, %v2308
  %v2315 = vsel %vm2309, %v2300, %v2290
  %v2316 = vsel %vm2309, %v2302, %v2292
  %v2317 = vsel %vm2309, %v2304, %v2294
  %v2318 = vsel %vm2309, %v2306, %v2296
  %v2319 = vsel %vm2309, %v2308, %v2298
  %v2321 = vperm.slane %v248, 0
  %v2322 = vperm.slane %v248, 1
  %v2325 = vmul.f32 %v2310, %v2321
  %v2326 = vmul.f32 %v2315, %v2322
  %v2327 = vmul.f32 %v2311, %v2321
  %v2328 = vmul.f32 %v2316, %v2322
  %v2329 = vmul.f32 %v2312, %v2321
  %v2330 = vmul.f32 %v2317, %v2322
  %v2331 = vmul.f32 %v2313, %v2321
  %v2332 = vmul.f32 %v2318, %v2322
  %v2333 = vmul.f32 %v2314, %v2321
  %v2334 = vmul.f32 %v2319, %v2322
  %2335 = vrot.lane.b32.xlu0 %v58, 113
  %v2336 = vpop.permute.xlu0 %2335
  %2337 = vrot.lane.b32.xlu0 %v60, 113
  %v2338 = vpop.permute.xlu0 %2337
  %2339 = vrot.lane.b32.xlu0 %v62, 113
  %v2340 = vpop.permute.xlu0 %2339
  %2341 = vrot.lane.b32.xlu0 %v2049, 113
  %v2342 = vpop.permute.xlu0 %2341
  %2343 = vrot.lane.b32.xlu0 %v2077, 113
  %v2344 = vpop.permute.xlu0 %2343
  %2345 = vrot.lane.b32.xlu0 %v59, 113
  %v2346 = vpop.permute.xlu0 %2345
  %2347 = vrot.lane.b32.xlu0 %v61, 113
  %v2348 = vpop.permute.xlu0 %2347
  %2349 = vrot.lane.b32.xlu0 %v63, 113
  %v2350 = vpop.permute.xlu0 %2349
  %2351 = vrot.lane.b32.xlu0 %v2072, 113
  %v2352 = vpop.permute.xlu0 %2351
  %2353 = vrot.lane.b32.xlu0 %v2078, 113
  %v2354 = vpop.permute.xlu0 %2353
  %vm2355 = vcmp.lt.s32.totalorder %v2124, 113
  %v2356 = vsel %vm2355, %v2336, %v2346
  %v2357 = vsel %vm2355, %v2338, %v2348
  %v2358 = vsel %vm2355, %v2340, %v2350
  %v2359 = vsel %vm2355, %v2342, %v2352
  %v2360 = vsel %vm2355, %v2344, %v2354
  %v2361 = vsel %vm2355, %v2346, %v2336
  %v2362 = vsel %vm2355, %v2348, %v2338
  %v2363 = vsel %vm2355, %v2350, %v2340
  %v2364 = vsel %vm2355, %v2352, %v2342
  %v2365 = vsel %vm2355, %v2354, %v2344
  %v2367 = vperm.slane %v249, 0
  %v2368 = vperm.slane %v249, 1
  %v2371 = vmul.f32 %v2356, %v2367
  %v2372 = vmul.f32 %v2361, %v2368
  %v2373 = vmul.f32 %v2357, %v2367
  %v2374 = vmul.f32 %v2362, %v2368
  %v2375 = vmul.f32 %v2358, %v2367
  %v2376 = vmul.f32 %v2363, %v2368
  %v2377 = vmul.f32 %v2359, %v2367
  %v2378 = vmul.f32 %v2364, %v2368
  %v2379 = vmul.f32 %v2360, %v2367
  %v2380 = vmul.f32 %v2365, %v2368
  %2381 = vrot.lane.b32.xlu0 %v58, 112
  %v2382 = vpop.permute.xlu0 %2381
  %2383 = vrot.lane.b32.xlu0 %v60, 112
  %v2384 = vpop.permute.xlu0 %2383
  %2385 = vrot.lane.b32.xlu0 %v62, 112
  %v2386 = vpop.permute.xlu0 %2385
  %2387 = vrot.lane.b32.xlu0 %v2049, 112
  %v2388 = vpop.permute.xlu0 %2387
  %2389 = vrot.lane.b32.xlu0 %v2077, 112
  %v2390 = vpop.permute.xlu0 %2389
  %2391 = vrot.lane.b32.xlu0 %v59, 112
  %v2392 = vpop.permute.xlu0 %2391
  %2393 = vrot.lane.b32.xlu0 %v61, 112
  %v2394 = vpop.permute.xlu0 %2393
  %2395 = vrot.lane.b32.xlu0 %v63, 112
  %v2396 = vpop.permute.xlu0 %2395
  %2397 = vrot.lane.b32.xlu0 %v2072, 112
  %v2398 = vpop.permute.xlu0 %2397
  %2399 = vrot.lane.b32.xlu0 %v2078, 112
  %v2400 = vpop.permute.xlu0 %2399
  %vm2401 = vcmp.lt.s32.totalorder %v2124, 112
  %v2402 = vsel %vm2401, %v2382, %v2392
  %v2403 = vsel %vm2401, %v2384, %v2394
  %v2404 = vsel %vm2401, %v2386, %v2396
  %v2405 = vsel %vm2401, %v2388, %v2398
  %v2406 = vsel %vm2401, %v2390, %v2400
  %v2407 = vsel %vm2401, %v2392, %v2382
  %v2408 = vsel %vm2401, %v2394, %v2384
  %v2409 = vsel %vm2401, %v2396, %v2386
  %v2410 = vsel %vm2401, %v2398, %v2388
  %v2411 = vsel %vm2401, %v2400, %v2390
  %v2413 = vperm.slane %v250, 0
  %v2414 = vperm.slane %v250, 1
  %v2417 = vmul.f32 %v2402, %v2413
  %v2418 = vmul.f32 %v2407, %v2414
  %v2419 = vmul.f32 %v2403, %v2413
  %v2420 = vmul.f32 %v2408, %v2414
  %v2421 = vmul.f32 %v2404, %v2413
  %v2422 = vmul.f32 %v2409, %v2414
  %v2423 = vmul.f32 %v2405, %v2413
  %v2424 = vmul.f32 %v2410, %v2414
  %v2425 = vmul.f32 %v2406, %v2413
  %v2426 = vmul.f32 %v2411, %v2414
  %2427 = vrot.lane.b32.xlu0 %v58, 111
  %v2428 = vpop.permute.xlu0 %2427
  %2429 = vrot.lane.b32.xlu0 %v60, 111
  %v2430 = vpop.permute.xlu0 %2429
  %2431 = vrot.lane.b32.xlu0 %v62, 111
  %v2432 = vpop.permute.xlu0 %2431
  %2433 = vrot.lane.b32.xlu0 %v2049, 111
  %v2434 = vpop.permute.xlu0 %2433
  %2435 = vrot.lane.b32.xlu0 %v2077, 111
  %v2436 = vpop.permute.xlu0 %2435
  %2437 = vrot.lane.b32.xlu0 %v59, 111
  %v2438 = vpop.permute.xlu0 %2437
  %2439 = vrot.lane.b32.xlu0 %v61, 111
  %v2440 = vpop.permute.xlu0 %2439
  %2441 = vrot.lane.b32.xlu0 %v63, 111
  %v2442 = vpop.permute.xlu0 %2441
  %2443 = vrot.lane.b32.xlu0 %v2072, 111
  %v2444 = vpop.permute.xlu0 %2443
  %2445 = vrot.lane.b32.xlu0 %v2078, 111
  %v2446 = vpop.permute.xlu0 %2445
  %vm2447 = vcmp.lt.s32.totalorder %v2124, 111
  %v2448 = vsel %vm2447, %v2428, %v2438
  %v2449 = vsel %vm2447, %v2430, %v2440
  %v2450 = vsel %vm2447, %v2432, %v2442
  %v2451 = vsel %vm2447, %v2434, %v2444
  %v2452 = vsel %vm2447, %v2436, %v2446
  %v2453 = vsel %vm2447, %v2438, %v2428
  %v2454 = vsel %vm2447, %v2440, %v2430
  %v2455 = vsel %vm2447, %v2442, %v2432
  %v2456 = vsel %vm2447, %v2444, %v2434
  %v2457 = vsel %vm2447, %v2446, %v2436
  %v2459 = vperm.slane %v251, 0
  %v2460 = vperm.slane %v251, 1
  %v2463 = vmul.f32 %v2448, %v2459
  %v2464 = vmul.f32 %v2453, %v2460
  %v2465 = vmul.f32 %v2449, %v2459
  %v2466 = vmul.f32 %v2454, %v2460
  %v2467 = vmul.f32 %v2450, %v2459
  %v2468 = vmul.f32 %v2455, %v2460
  %v2469 = vmul.f32 %v2451, %v2459
  %v2470 = vmul.f32 %v2456, %v2460
  %v2471 = vmul.f32 %v2452, %v2459
  %v2472 = vmul.f32 %v2457, %v2460
  %2474 = vset.pattern.permute.xlu0 0
  %2475 = vperm.xlu0 %2474, %v2097
  %v2476 = vpop.permute.xlu0 %2475
  %2479 = vset.pattern.permute.xlu0 0
  %2480 = vperm.xlu0 %2479, %v2098
  %v2481 = vpop.permute.xlu0 %2480
  %2484 = vset.pattern.permute.xlu0 0
  %2485 = vperm.xlu0 %2484, %v2099
  %v2486 = vpop.permute.xlu0 %2485
  %2489 = vset.pattern.permute.xlu0 0
  %2490 = vperm.xlu0 %2489, %v2100
  %v2491 = vpop.permute.xlu0 %2490
  %2494 = vset.pattern.permute.xlu0 0
  %2495 = vperm.xlu0 %2494, %v2101
  %v2496 = vpop.permute.xlu0 %2495
  %2499 = vset.pattern.permute.xlu0 0
  %2500 = vperm.xlu0 %2499, %v2102
  %v2501 = vpop.permute.xlu0 %2500
  %vm2503 = vcmask 850944
  %v2505 = vsel %vm2503, %v2081, 0
  %v2508 = vsel %vm2503, %v2084, 0
  %v2511 = vsel %vm2503, %v2087, 0
  %v2514 = vsel %vm2503, %v2090, 0
  %v2517 = vsel %vm2503, %v2093, 0
  %v2520 = vsel %vm2503, %v2096, 0
  %2522 = vmatpush.msra.mxu0 %v2279
  %2523 = vmatpush.msra.mxu0 %v2241
  %2524 = vmatpush.msra.mxu0 %v2239
  %2525 = vmatpush.msra.mxu0 %v2237
  %2526 = vmatpush.msra.mxu0 %v2235
  %2527 = vmatpush.msra.mxu0 %v2233
  %2528 = vmatpush.msra.mxu0 %v2195
  %2529 = vmatpush.msra.mxu0 %v2193
  %2530 = vmatpush.msra.mxu0 %v2191
  %2531 = vmatpush.msra.mxu0 %v2189
  %2532 = vmatpush.msra.mxu0 %v2187
  %2533 = vmatpush.msra.mxu0 %v2149
  %2534 = vmatpush.msra.mxu0 %v2147
  %2535 = vmatpush.msra.mxu0 %v2145
  %2536 = vmatpush.msra.mxu0 %v2143
  %2537 = vmatpush.msra.mxu0 %v2141
  %2538 = vmatmul.f32.gmra.mxu0 %v2079
  %v2539 = vpop.f32.mrf.mxu0
  %v2540 = vadd.f32 %v2476, %v2539
  %2541 = vmatmul.f32.gmra.mxu0 %v2082
  %v2542 = vpop.f32.mrf.mxu0
  %v2543 = vadd.f32 %v2481, %v2542
  %2544 = vmatmul.f32.gmra.mxu0 %v2085
  %v2545 = vpop.f32.mrf.mxu0
  %v2546 = vadd.f32 %v2486, %v2545
  %2547 = vmatmul.f32.gmra.mxu0 %v2088
  %v2548 = vpop.f32.mrf.mxu0
  %v2549 = vadd.f32 %v2491, %v2548
  %2550 = vmatmul.f32.gmra.mxu0 %v2091
  %v2551 = vpop.f32.mrf.mxu0
  %v2552 = vadd.f32 %v2496, %v2551
  %2553 = vmatmul.f32.gmra.mxu0 %v2094
  %v2554 = vpop.f32.mrf.mxu0
  %v2555 = vadd.f32 %v2501, %v2554
  %2556 = vdwg.mxu0
  %2557 = vmatpush.msra.mxu0 %v2373
  %2558 = vmatpush.msra.mxu0 %v2371
  %2559 = vmatpush.msra.mxu0 %v2333
  %2560 = vmatpush.msra.mxu0 %v2331
  %2561 = vmatpush.msra.mxu0 %v2329
  %2562 = vmatpush.msra.mxu0 %v2327
  %2563 = vmatpush.msra.mxu0 %v2325
  %2564 = vmatpush.msra.mxu0 %v2077
  %2565 = vmatpush.msra.mxu0 %v2049
  %2566 = vmatpush.msra.mxu0 %v62
  %2567 = vmatpush.msra.mxu0 %v60
  %2568 = vmatpush.msra.mxu0 %v58
  %2569 = vmatpush.msra.mxu0 %v2287
  %2570 = vmatpush.msra.mxu0 %v2285
  %2571 = vmatpush.msra.mxu0 %v2283
  %2572 = vmatpush.msra.mxu0 %v2281
  %2573 = vmatmul.f32.gmra.mxu0 %v2080
  %v2574 = vpop.f32.mrf.mxu0
  %v2575 = vadd.f32 %v2540, %v2574
  %2576 = vmatmul.f32.gmra.mxu0 %v2083
  %v2577 = vpop.f32.mrf.mxu0
  %v2578 = vadd.f32 %v2543, %v2577
  %2579 = vmatmul.f32.gmra.mxu0 %v2086
  %v2580 = vpop.f32.mrf.mxu0
  %v2581 = vadd.f32 %v2546, %v2580
  %2582 = vmatmul.f32.gmra.mxu0 %v2089
  %v2583 = vpop.f32.mrf.mxu0
  %v2584 = vadd.f32 %v2549, %v2583
  %2585 = vmatmul.f32.gmra.mxu0 %v2092
  %v2586 = vpop.f32.mrf.mxu0
  %v2587 = vadd.f32 %v2552, %v2586
  %2588 = vmatmul.f32.gmra.mxu0 %v2095
  %v2589 = vpop.f32.mrf.mxu0
  %v2590 = vadd.f32 %v2555, %v2589
  %2591 = vdwg.mxu0
  %2592 = vmatpush.msra.mxu0 0.0
  %2593 = vmatpush.msra.mxu0 0.0
  %2594 = vmatpush.msra.mxu0 0.0
  %2595 = vmatpush.msra.mxu0 %v2471
  %2596 = vmatpush.msra.mxu0 %v2469
  %2597 = vmatpush.msra.mxu0 %v2467
  %2598 = vmatpush.msra.mxu0 %v2465
  %2599 = vmatpush.msra.mxu0 %v2463
  %2600 = vmatpush.msra.mxu0 %v2425
  %2601 = vmatpush.msra.mxu0 %v2423
  %2602 = vmatpush.msra.mxu0 %v2421
  %2603 = vmatpush.msra.mxu0 %v2419
  %2604 = vmatpush.msra.mxu0 %v2417
  %2605 = vmatpush.msra.mxu0 %v2379
  %2606 = vmatpush.msra.mxu0 %v2377
  %2607 = vmatpush.msra.mxu0 %v2375
  %2608 = vmatmul.f32.gmra.mxu0 %v2505
  %v2609 = vpop.f32.mrf.mxu0
  %v2610 = vadd.f32 %v2575, %v2609
  %2611 = vmatmul.f32.gmra.mxu0 %v2508
  %v2612 = vpop.f32.mrf.mxu0
  %v2613 = vadd.f32 %v2578, %v2612
  %2614 = vmatmul.f32.gmra.mxu0 %v2511
  %v2615 = vpop.f32.mrf.mxu0
  %v2616 = vadd.f32 %v2581, %v2615
  %2617 = vmatmul.f32.gmra.mxu0 %v2514
  %v2618 = vpop.f32.mrf.mxu0
  %v2619 = vadd.f32 %v2584, %v2618
  %2620 = vmatmul.f32.gmra.mxu0 %v2517
  %v2621 = vpop.f32.mrf.mxu0
  %v2622 = vadd.f32 %v2587, %v2621
  %2623 = vmatmul.f32.gmra.mxu0 %v2520
  %v2624 = vpop.f32.mrf.mxu0
  %v2625 = vadd.f32 %v2590, %v2624
  %2626 = vdwg.mxu0
  %2627 = vmatpush.msra.mxu0 %v2280
  %2628 = vmatpush.msra.mxu0 %v2242
  %2629 = vmatpush.msra.mxu0 %v2240
  %2630 = vmatpush.msra.mxu0 %v2238
  %2631 = vmatpush.msra.mxu0 %v2236
  %2632 = vmatpush.msra.mxu0 %v2234
  %2633 = vmatpush.msra.mxu0 %v2196
  %2634 = vmatpush.msra.mxu0 %v2194
  %2635 = vmatpush.msra.mxu0 %v2192
  %2636 = vmatpush.msra.mxu0 %v2190
  %2637 = vmatpush.msra.mxu0 %v2188
  %2638 = vmatpush.msra.mxu0 %v2150
  %2639 = vmatpush.msra.mxu0 %v2148
  %2640 = vmatpush.msra.mxu0 %v2146
  %2641 = vmatpush.msra.mxu0 %v2144
  %2642 = vmatpush.msra.mxu0 %v2142
  %2643 = vmatmul.f32.gmra.mxu0 %v2079
  %v2644 = vpop.f32.mrf.mxu0
  %v2645 = vadd.f32 %v2476, %v2644
  %2646 = vmatmul.f32.gmra.mxu0 %v2082
  %v2647 = vpop.f32.mrf.mxu0
  %v2648 = vadd.f32 %v2481, %v2647
  %2649 = vmatmul.f32.gmra.mxu0 %v2085
  %v2650 = vpop.f32.mrf.mxu0
  %v2651 = vadd.f32 %v2486, %v2650
  %2652 = vmatmul.f32.gmra.mxu0 %v2088
  %v2653 = vpop.f32.mrf.mxu0
  %v2654 = vadd.f32 %v2491, %v2653
  %2655 = vmatmul.f32.gmra.mxu0 %v2091
  %v2656 = vpop.f32.mrf.mxu0
  %v2657 = vadd.f32 %v2496, %v2656
  %2658 = vmatmul.f32.gmra.mxu0 %v2094
  %v2659 = vpop.f32.mrf.mxu0
  %v2660 = vadd.f32 %v2501, %v2659
  %2661 = vdwg.mxu0
  %2662 = vmatpush.msra.mxu0 %v2374
  %2663 = vmatpush.msra.mxu0 %v2372
  %2664 = vmatpush.msra.mxu0 %v2334
  %2665 = vmatpush.msra.mxu0 %v2332
  %2666 = vmatpush.msra.mxu0 %v2330
  %2667 = vmatpush.msra.mxu0 %v2328
  %2668 = vmatpush.msra.mxu0 %v2326
  %2669 = vmatpush.msra.mxu0 %v2078
  %2670 = vmatpush.msra.mxu0 %v2072
  %2671 = vmatpush.msra.mxu0 %v63
  %2672 = vmatpush.msra.mxu0 %v61
  %2673 = vmatpush.msra.mxu0 %v59
  %2674 = vmatpush.msra.mxu0 %v2288
  %2675 = vmatpush.msra.mxu0 %v2286
  %2676 = vmatpush.msra.mxu0 %v2284
  %2677 = vmatpush.msra.mxu0 %v2282
  %2678 = vmatmul.f32.gmra.mxu0 %v2080
  %v2679 = vpop.f32.mrf.mxu0
  %v2680 = vadd.f32 %v2645, %v2679
  %2681 = vmatmul.f32.gmra.mxu0 %v2083
  %v2682 = vpop.f32.mrf.mxu0
  %v2683 = vadd.f32 %v2648, %v2682
  %2684 = vmatmul.f32.gmra.mxu0 %v2086
  %v2685 = vpop.f32.mrf.mxu0
  %v2686 = vadd.f32 %v2651, %v2685
  %2687 = vmatmul.f32.gmra.mxu0 %v2089
  %v2688 = vpop.f32.mrf.mxu0
  %v2689 = vadd.f32 %v2654, %v2688
  %2690 = vmatmul.f32.gmra.mxu0 %v2092
  %v2691 = vpop.f32.mrf.mxu0
  %v2692 = vadd.f32 %v2657, %v2691
  %2693 = vmatmul.f32.gmra.mxu0 %v2095
  %v2694 = vpop.f32.mrf.mxu0
  %v2695 = vadd.f32 %v2660, %v2694
  %2696 = vdwg.mxu0
  %2697 = vmatpush.msra.mxu0 0.0
  %2698 = vmatpush.msra.mxu0 0.0
  %2699 = vmatpush.msra.mxu0 0.0
  %2700 = vmatpush.msra.mxu0 %v2472
  %2701 = vmatpush.msra.mxu0 %v2470
  %2702 = vmatpush.msra.mxu0 %v2468
  %2703 = vmatpush.msra.mxu0 %v2466
  %2704 = vmatpush.msra.mxu0 %v2464
  %2705 = vmatpush.msra.mxu0 %v2426
  %2706 = vmatpush.msra.mxu0 %v2424
  %2707 = vmatpush.msra.mxu0 %v2422
  %2708 = vmatpush.msra.mxu0 %v2420
  %2709 = vmatpush.msra.mxu0 %v2418
  %2710 = vmatpush.msra.mxu0 %v2380
  %2711 = vmatpush.msra.mxu0 %v2378
  %2712 = vmatpush.msra.mxu0 %v2376
  %2713 = vmatmul.f32.gmra.mxu0 %v2505
  %v2714 = vpop.f32.mrf.mxu0
  %v2715 = vadd.f32 %v2680, %v2714
  %2716 = vmatmul.f32.gmra.mxu0 %v2508
  %v2717 = vpop.f32.mrf.mxu0
  %v2718 = vadd.f32 %v2683, %v2717
  %2719 = vmatmul.f32.gmra.mxu0 %v2511
  %v2720 = vpop.f32.mrf.mxu0
  %v2721 = vadd.f32 %v2686, %v2720
  %2722 = vmatmul.f32.gmra.mxu0 %v2514
  %v2723 = vpop.f32.mrf.mxu0
  %v2724 = vadd.f32 %v2689, %v2723
  %2725 = vmatmul.f32.gmra.mxu0 %v2517
  %v2726 = vpop.f32.mrf.mxu0
  %v2727 = vadd.f32 %v2692, %v2726
  %2728 = vmatmul.f32.gmra.mxu0 %v2520
  %v2729 = vpop.f32.mrf.mxu0
  %v2730 = vadd.f32 %v2695, %v2729
  %2731 = vdwg.mxu0
  %v2732 = vmax.f32 %v2610, 0.0
  %v2733 = vmax.f32 %v2715, 0.0
  %v2734 = vmax.f32 %v2613, 0.0
  %v2735 = vmax.f32 %v2718, 0.0
  %v2736 = vmax.f32 %v2616, 0.0
  %v2737 = vmax.f32 %v2721, 0.0
  %v2738 = vmax.f32 %v2619, 0.0
  %v2739 = vmax.f32 %v2724, 0.0
  %v2740 = vmax.f32 %v2622, 0.0
  %v2741 = vmax.f32 %v2727, 0.0
  %v2742 = vmax.f32 %v2625, 0.0
  %v2743 = vmax.f32 %v2730, 0.0
  %v2744 = vld [vmem:[%s14] sm:$0xff]
  %v2745 = vld [vmem:[%s14 + $0x8] sm:$0xff]
  %v2746 = vld [vmem:[%s14 + $0x10] sm:$0xff]
  %v2747 = vld [vmem:[%s14 + $0x18] sm:$0xff]
  %v2748 = vld [vmem:[%s14 + $0x20] sm:$0xff]
  %v2749 = vld [vmem:[%s14 + $0x28] sm:$0xff]
  %v2750 = vld [vmem:[%s14 + $0x30] sm:$0xff]
  %v2751 = vld [vmem:[%s14 + $0x38] sm:$0xff]
  %v2752 = vld [vmem:[%s14 + $0x40] sm:$0xff]
  %v2753 = vld [vmem:[%s14 + $0x48] sm:$0xff]
  %v2754 = vld [vmem:[%s14 + $0x50] sm:$0xff]
  %v2755 = vld [vmem:[%s14 + $0x58] sm:$0xff]
  %v2756 = vld [vmem:[%s15] sm:$0xff]
  %v2757 = vld [vmem:[%s15 + $0x8] sm:$0xff]
  %v2758 = vld [vmem:[%s15 + $0x10] sm:$0xff]
  %2759 = vrot.lane.b32.xlu0 %v2732, 17
  %v2760 = vpop.permute.xlu0 %2759
  %2761 = vrot.lane.b32.xlu0 %v2734, 17
  %v2762 = vpop.permute.xlu0 %2761
  %2763 = vrot.lane.b32.xlu0 %v2736, 17
  %v2764 = vpop.permute.xlu0 %2763
  %2765 = vrot.lane.b32.xlu0 %v2738, 17
  %v2766 = vpop.permute.xlu0 %2765
  %2767 = vrot.lane.b32.xlu0 %v2740, 17
  %v2768 = vpop.permute.xlu0 %2767
  %2769 = vrot.lane.b32.xlu0 %v2742, 17
  %v2770 = vpop.permute.xlu0 %2769
  %2771 = vrot.lane.b32.xlu0 %v2733, 17
  %v2772 = vpop.permute.xlu0 %2771
  %2773 = vrot.lane.b32.xlu0 %v2735, 17
  %v2774 = vpop.permute.xlu0 %2773
  %2775 = vrot.lane.b32.xlu0 %v2737, 17
  %v2776 = vpop.permute.xlu0 %2775
  %2777 = vrot.lane.b32.xlu0 %v2739, 17
  %v2778 = vpop.permute.xlu0 %2777
  %2779 = vrot.lane.b32.xlu0 %v2741, 17
  %v2780 = vpop.permute.xlu0 %2779
  %2781 = vrot.lane.b32.xlu0 %v2743, 17
  %v2782 = vpop.permute.xlu0 %2781
  %v2783 = vsel %vm2125, %v2760, %v2772
  %v2784 = vsel %vm2125, %v2762, %v2774
  %v2785 = vsel %vm2125, %v2764, %v2776
  %v2786 = vsel %vm2125, %v2766, %v2778
  %v2787 = vsel %vm2125, %v2768, %v2780
  %v2788 = vsel %vm2125, %v2770, %v2782
  %v2789 = vsel %vm2125, %v2772, %v2760
  %v2790 = vsel %vm2125, %v2774, %v2762
  %v2791 = vsel %vm2125, %v2776, %v2764
  %v2792 = vsel %vm2125, %v2778, %v2766
  %v2793 = vsel %vm2125, %v2780, %v2768
  %v2794 = vsel %vm2125, %v2782, %v2770
  %v2795 = vmul.f32 %v2789, %v2137
  %v2796 = vmul.f32 %v2783, %v2138
  %v2797 = vmul.f32 %v2790, %v2137
  %v2798 = vmul.f32 %v2784, %v2138
  %v2799 = vmul.f32 %v2791, %v2137
  %v2800 = vmul.f32 %v2785, %v2138
  %v2801 = vmul.f32 %v2792, %v2137
  %v2802 = vmul.f32 %v2786, %v2138
  %v2803 = vmul.f32 %v2793, %v2137
  %v2804 = vmul.f32 %v2787, %v2138
  %v2805 = vmul.f32 %v2794, %v2137
  %v2806 = vmul.f32 %v2788, %v2138
  %2807 = vrot.lane.b32.xlu0 %v2732, 16
  %v2808 = vpop.permute.xlu0 %2807
  %2809 = vrot.lane.b32.xlu0 %v2734, 16
  %v2810 = vpop.permute.xlu0 %2809
  %2811 = vrot.lane.b32.xlu0 %v2736, 16
  %v2812 = vpop.permute.xlu0 %2811
  %2813 = vrot.lane.b32.xlu0 %v2738, 16
  %v2814 = vpop.permute.xlu0 %2813
  %2815 = vrot.lane.b32.xlu0 %v2740, 16
  %v2816 = vpop.permute.xlu0 %2815
  %2817 = vrot.lane.b32.xlu0 %v2742, 16
  %v2818 = vpop.permute.xlu0 %2817
  %2819 = vrot.lane.b32.xlu0 %v2733, 16
  %v2820 = vpop.permute.xlu0 %2819
  %2821 = vrot.lane.b32.xlu0 %v2735, 16
  %v2822 = vpop.permute.xlu0 %2821
  %2823 = vrot.lane.b32.xlu0 %v2737, 16
  %v2824 = vpop.permute.xlu0 %2823
  %2825 = vrot.lane.b32.xlu0 %v2739, 16
  %v2826 = vpop.permute.xlu0 %2825
  %2827 = vrot.lane.b32.xlu0 %v2741, 16
  %v2828 = vpop.permute.xlu0 %2827
  %2829 = vrot.lane.b32.xlu0 %v2743, 16
  %v2830 = vpop.permute.xlu0 %2829
  %v2831 = vsel %vm2171, %v2808, %v2820
  %v2832 = vsel %vm2171, %v2810, %v2822
  %v2833 = vsel %vm2171, %v2812, %v2824
  %v2834 = vsel %vm2171, %v2814, %v2826
  %v2835 = vsel %vm2171, %v2816, %v2828
  %v2836 = vsel %vm2171, %v2818, %v2830
  %v2837 = vsel %vm2171, %v2820, %v2808
  %v2838 = vsel %vm2171, %v2822, %v2810
  %v2839 = vsel %vm2171, %v2824, %v2812
  %v2840 = vsel %vm2171, %v2826, %v2814
  %v2841 = vsel %vm2171, %v2828, %v2816
  %v2842 = vsel %vm2171, %v2830, %v2818
  %v2843 = vmul.f32 %v2837, %v2183
  %v2844 = vmul.f32 %v2831, %v2184
  %v2845 = vmul.f32 %v2838, %v2183
  %v2846 = vmul.f32 %v2832, %v2184
  %v2847 = vmul.f32 %v2839, %v2183
  %v2848 = vmul.f32 %v2833, %v2184
  %v2849 = vmul.f32 %v2840, %v2183
  %v2850 = vmul.f32 %v2834, %v2184
  %v2851 = vmul.f32 %v2841, %v2183
  %v2852 = vmul.f32 %v2835, %v2184
  %v2853 = vmul.f32 %v2842, %v2183
  %v2854 = vmul.f32 %v2836, %v2184
  %2855 = vrot.lane.b32.xlu0 %v2732, 15
  %v2856 = vpop.permute.xlu0 %2855
  %2857 = vrot.lane.b32.xlu0 %v2734, 15
  %v2858 = vpop.permute.xlu0 %2857
  %2859 = vrot.lane.b32.xlu0 %v2736, 15
  %v2860 = vpop.permute.xlu0 %2859
  %2861 = vrot.lane.b32.xlu0 %v2738, 15
  %v2862 = vpop.permute.xlu0 %2861
  %2863 = vrot.lane.b32.xlu0 %v2740, 15
  %v2864 = vpop.permute.xlu0 %2863
  %2865 = vrot.lane.b32.xlu0 %v2742, 15
  %v2866 = vpop.permute.xlu0 %2865
  %2867 = vrot.lane.b32.xlu0 %v2733, 15
  %v2868 = vpop.permute.xlu0 %2867
  %2869 = vrot.lane.b32.xlu0 %v2735, 15
  %v2870 = vpop.permute.xlu0 %2869
  %2871 = vrot.lane.b32.xlu0 %v2737, 15
  %v2872 = vpop.permute.xlu0 %2871
  %2873 = vrot.lane.b32.xlu0 %v2739, 15
  %v2874 = vpop.permute.xlu0 %2873
  %2875 = vrot.lane.b32.xlu0 %v2741, 15
  %v2876 = vpop.permute.xlu0 %2875
  %2877 = vrot.lane.b32.xlu0 %v2743, 15
  %v2878 = vpop.permute.xlu0 %2877
  %v2879 = vsel %vm2217, %v2856, %v2868
  %v2880 = vsel %vm2217, %v2858, %v2870
  %v2881 = vsel %vm2217, %v2860, %v2872
  %v2882 = vsel %vm2217, %v2862, %v2874
  %v2883 = vsel %vm2217, %v2864, %v2876
  %v2884 = vsel %vm2217, %v2866, %v2878
  %v2885 = vsel %vm2217, %v2868, %v2856
  %v2886 = vsel %vm2217, %v2870, %v2858
  %v2887 = vsel %vm2217, %v2872, %v2860
  %v2888 = vsel %vm2217, %v2874, %v2862
  %v2889 = vsel %vm2217, %v2876, %v2864
  %v2890 = vsel %vm2217, %v2878, %v2866
  %v2891 = vmul.f32 %v2885, %v2229
  %v2892 = vmul.f32 %v2879, %v2230
  %v2893 = vmul.f32 %v2886, %v2229
  %v2894 = vmul.f32 %v2880, %v2230
  %v2895 = vmul.f32 %v2887, %v2229
  %v2896 = vmul.f32 %v2881, %v2230
  %v2897 = vmul.f32 %v2888, %v2229
  %v2898 = vmul.f32 %v2882, %v2230
  %v2899 = vmul.f32 %v2889, %v2229
  %v2900 = vmul.f32 %v2883, %v2230
  %v2901 = vmul.f32 %v2890, %v2229
  %v2902 = vmul.f32 %v2884, %v2230
  %2903 = vrot.lane.b32.xlu0 %v2732, 1
  %v2904 = vpop.permute.xlu0 %2903
  %2905 = vrot.lane.b32.xlu0 %v2734, 1
  %v2906 = vpop.permute.xlu0 %2905
  %2907 = vrot.lane.b32.xlu0 %v2736, 1
  %v2908 = vpop.permute.xlu0 %2907
  %2909 = vrot.lane.b32.xlu0 %v2738, 1
  %v2910 = vpop.permute.xlu0 %2909
  %2911 = vrot.lane.b32.xlu0 %v2740, 1
  %v2912 = vpop.permute.xlu0 %2911
  %2913 = vrot.lane.b32.xlu0 %v2742, 1
  %v2914 = vpop.permute.xlu0 %2913
  %2915 = vrot.lane.b32.xlu0 %v2733, 1
  %v2916 = vpop.permute.xlu0 %2915
  %2917 = vrot.lane.b32.xlu0 %v2735, 1
  %v2918 = vpop.permute.xlu0 %2917
  %2919 = vrot.lane.b32.xlu0 %v2737, 1
  %v2920 = vpop.permute.xlu0 %2919
  %2921 = vrot.lane.b32.xlu0 %v2739, 1
  %v2922 = vpop.permute.xlu0 %2921
  %2923 = vrot.lane.b32.xlu0 %v2741, 1
  %v2924 = vpop.permute.xlu0 %2923
  %2925 = vrot.lane.b32.xlu0 %v2743, 1
  %v2926 = vpop.permute.xlu0 %2925
  %v2927 = vsel %vm2263, %v2904, %v2916
  %v2928 = vsel %vm2263, %v2906, %v2918
  %v2929 = vsel %vm2263, %v2908, %v2920
  %v2930 = vsel %vm2263, %v2910, %v2922
  %v2931 = vsel %vm2263, %v2912, %v2924
  %v2932 = vsel %vm2263, %v2914, %v2926
  %v2933 = vsel %vm2263, %v2916, %v2904
  %v2934 = vsel %vm2263, %v2918, %v2906
  %v2935 = vsel %vm2263, %v2920, %v2908
  %v2936 = vsel %vm2263, %v2922, %v2910
  %v2937 = vsel %vm2263, %v2924, %v2912
  %v2938 = vsel %vm2263, %v2926, %v2914
  %v2939 = vmul.f32 %v2933, %v2275
  %v2940 = vmul.f32 %v2927, %v2276
  %v2941 = vmul.f32 %v2934, %v2275
  %v2942 = vmul.f32 %v2928, %v2276
  %v2943 = vmul.f32 %v2935, %v2275
  %v2944 = vmul.f32 %v2929, %v2276
  %v2945 = vmul.f32 %v2936, %v2275
  %v2946 = vmul.f32 %v2930, %v2276
  %v2947 = vmul.f32 %v2937, %v2275
  %v2948 = vmul.f32 %v2931, %v2276
  %v2949 = vmul.f32 %v2938, %v2275
  %v2950 = vmul.f32 %v2932, %v2276
  %2951 = vrot.lane.b32.xlu0 %v2732, 127
  %v2952 = vpop.permute.xlu0 %2951
  %2953 = vrot.lane.b32.xlu0 %v2734, 127
  %v2954 = vpop.permute.xlu0 %2953
  %2955 = vrot.lane.b32.xlu0 %v2736, 127
  %v2956 = vpop.permute.xlu0 %2955
  %2957 = vrot.lane.b32.xlu0 %v2738, 127
  %v2958 = vpop.permute.xlu0 %2957
  %2959 = vrot.lane.b32.xlu0 %v2740, 127
  %v2960 = vpop.permute.xlu0 %2959
  %2961 = vrot.lane.b32.xlu0 %v2742, 127
  %v2962 = vpop.permute.xlu0 %2961
  %2963 = vrot.lane.b32.xlu0 %v2733, 127
  %v2964 = vpop.permute.xlu0 %2963
  %2965 = vrot.lane.b32.xlu0 %v2735, 127
  %v2966 = vpop.permute.xlu0 %2965
  %2967 = vrot.lane.b32.xlu0 %v2737, 127
  %v2968 = vpop.permute.xlu0 %2967
  %2969 = vrot.lane.b32.xlu0 %v2739, 127
  %v2970 = vpop.permute.xlu0 %2969
  %2971 = vrot.lane.b32.xlu0 %v2741, 127
  %v2972 = vpop.permute.xlu0 %2971
  %2973 = vrot.lane.b32.xlu0 %v2743, 127
  %v2974 = vpop.permute.xlu0 %2973
  %v2975 = vsel %vm2309, %v2952, %v2964
  %v2976 = vsel %vm2309, %v2954, %v2966
  %v2977 = vsel %vm2309, %v2956, %v2968
  %v2978 = vsel %vm2309, %v2958, %v2970
  %v2979 = vsel %vm2309, %v2960, %v2972
  %v2980 = vsel %vm2309, %v2962, %v2974
  %v2981 = vsel %vm2309, %v2964, %v2952
  %v2982 = vsel %vm2309, %v2966, %v2954
  %v2983 = vsel %vm2309, %v2968, %v2956
  %v2984 = vsel %vm2309, %v2970, %v2958
  %v2985 = vsel %vm2309, %v2972, %v2960
  %v2986 = vsel %vm2309, %v2974, %v2962
  %v2987 = vmul.f32 %v2975, %v2321
  %v2988 = vmul.f32 %v2981, %v2322
  %v2989 = vmul.f32 %v2976, %v2321
  %v2990 = vmul.f32 %v2982, %v2322
  %v2991 = vmul.f32 %v2977, %v2321
  %v2992 = vmul.f32 %v2983, %v2322
  %v2993 = vmul.f32 %v2978, %v2321
  %v2994 = vmul.f32 %v2984, %v2322
  %v2995 = vmul.f32 %v2979, %v2321
  %v2996 = vmul.f32 %v2985, %v2322
  %v2997 = vmul.f32 %v2980, %v2321
  %v2998 = vmul.f32 %v2986, %v2322
  %2999 = vrot.lane.b32.xlu0 %v2732, 113
  %v3000 = vpop.permute.xlu0 %2999
  %3001 = vrot.lane.b32.xlu0 %v2734, 113
  %v3002 = vpop.permute.xlu0 %3001
  %3003 = vrot.lane.b32.xlu0 %v2736, 113
  %v3004 = vpop.permute.xlu0 %3003
  %3005 = vrot.lane.b32.xlu0 %v2738, 113
  %v3006 = vpop.permute.xlu0 %3005
  %3007 = vrot.lane.b32.xlu0 %v2740, 113
  %v3008 = vpop.permute.xlu0 %3007
  %3009 = vrot.lane.b32.xlu0 %v2742, 113
  %v3010 = vpop.permute.xlu0 %3009
  %3011 = vrot.lane.b32.xlu0 %v2733, 113
  %v3012 = vpop.permute.xlu0 %3011
  %3013 = vrot.lane.b32.xlu0 %v2735, 113
  %v3014 = vpop.permute.xlu0 %3013
  %3015 = vrot.lane.b32.xlu0 %v2737, 113
  %v3016 = vpop.permute.xlu0 %3015
  %3017 = vrot.lane.b32.xlu0 %v2739, 113
  %v3018 = vpop.permute.xlu0 %3017
  %3019 = vrot.lane.b32.xlu0 %v2741, 113
  %v3020 = vpop.permute.xlu0 %3019
  %3021 = vrot.lane.b32.xlu0 %v2743, 113
  %v3022 = vpop.permute.xlu0 %3021
  %v3023 = vsel %vm2355, %v3000, %v3012
  %v3024 = vsel %vm2355, %v3002, %v3014
  %v3025 = vsel %vm2355, %v3004, %v3016
  %v3026 = vsel %vm2355, %v3006, %v3018
  %v3027 = vsel %vm2355, %v3008, %v3020
  %v3028 = vsel %vm2355, %v3010, %v3022
  %v3029 = vsel %vm2355, %v3012, %v3000
  %v3030 = vsel %vm2355, %v3014, %v3002
  %v3031 = vsel %vm2355, %v3016, %v3004
  %v3032 = vsel %vm2355, %v3018, %v3006
  %v3033 = vsel %vm2355, %v3020, %v3008
  %v3034 = vsel %vm2355, %v3022, %v3010
  %v3035 = vmul.f32 %v3023, %v2367
  %v3036 = vmul.f32 %v3029, %v2368
  %v3037 = vmul.f32 %v3024, %v2367
  %v3038 = vmul.f32 %v3030, %v2368
  %v3039 = vmul.f32 %v3025, %v2367
  %v3040 = vmul.f32 %v3031, %v2368
  %v3041 = vmul.f32 %v3026, %v2367
  %v3042 = vmul.f32 %v3032, %v2368
  %v3043 = vmul.f32 %v3027, %v2367
  %v3044 = vmul.f32 %v3033, %v2368
  %v3045 = vmul.f32 %v3028, %v2367
  %v3046 = vmul.f32 %v3034, %v2368
  %3047 = vrot.lane.b32.xlu0 %v2732, 112
  %v3048 = vpop.permute.xlu0 %3047
  %3049 = vrot.lane.b32.xlu0 %v2734, 112
  %v3050 = vpop.permute.xlu0 %3049
  %3051 = vrot.lane.b32.xlu0 %v2736, 112
  %v3052 = vpop.permute.xlu0 %3051
  %3053 = vrot.lane.b32.xlu0 %v2738, 112
  %v3054 = vpop.permute.xlu0 %3053
  %3055 = vrot.lane.b32.xlu0 %v2740, 112
  %v3056 = vpop.permute.xlu0 %3055
  %3057 = vrot.lane.b32.xlu0 %v2742, 112
  %v3058 = vpop.permute.xlu0 %3057
  %3059 = vrot.lane.b32.xlu0 %v2733, 112
  %v3060 = vpop.permute.xlu0 %3059
  %3061 = vrot.lane.b32.xlu0 %v2735, 112
  %v3062 = vpop.permute.xlu0 %3061
  %3063 = vrot.lane.b32.xlu0 %v2737, 112
  %v3064 = vpop.permute.xlu0 %3063
  %3065 = vrot.lane.b32.xlu0 %v2739, 112
  %v3066 = vpop.permute.xlu0 %3065
  %3067 = vrot.lane.b32.xlu0 %v2741, 112
  %v3068 = vpop.permute.xlu0 %3067
  %3069 = vrot.lane.b32.xlu0 %v2743, 112
  %v3070 = vpop.permute.xlu0 %3069
  %v3071 = vsel %vm2401, %v3048, %v3060
  %v3072 = vsel %vm2401, %v3050, %v3062
  %v3073 = vsel %vm2401, %v3052, %v3064
  %v3074 = vsel %vm2401, %v3054, %v3066
  %v3075 = vsel %vm2401, %v3056, %v3068
  %v3076 = vsel %vm2401, %v3058, %v3070
  %v3077 = vsel %vm2401, %v3060, %v3048
  %v3078 = vsel %vm2401, %v3062, %v3050
  %v3079 = vsel %vm2401, %v3064, %v3052
  %v3080 = vsel %vm2401, %v3066, %v3054
  %v3081 = vsel %vm2401, %v3068, %v3056
  %v3082 = vsel %vm2401, %v3070, %v3058
  %v3083 = vmul.f32 %v3071, %v2413
  %v3084 = vmul.f32 %v3077, %v2414
  %v3085 = vmul.f32 %v3072, %v2413
  %v3086 = vmul.f32 %v3078, %v2414
  %v3087 = vmul.f32 %v3073, %v2413
  %v3088 = vmul.f32 %v3079, %v2414
  %v3089 = vmul.f32 %v3074, %v2413
  %v3090 = vmul.f32 %v3080, %v2414
  %v3091 = vmul.f32 %v3075, %v2413
  %v3092 = vmul.f32 %v3081, %v2414
  %v3093 = vmul.f32 %v3076, %v2413
  %v3094 = vmul.f32 %v3082, %v2414
  %3095 = vrot.lane.b32.xlu0 %v2732, 111
  %v3096 = vpop.permute.xlu0 %3095
  %3097 = vrot.lane.b32.xlu0 %v2734, 111
  %v3098 = vpop.permute.xlu0 %3097
  %3099 = vrot.lane.b32.xlu0 %v2736, 111
  %v3100 = vpop.permute.xlu0 %3099
  %3101 = vrot.lane.b32.xlu0 %v2738, 111
  %v3102 = vpop.permute.xlu0 %3101
  %3103 = vrot.lane.b32.xlu0 %v2740, 111
  %v3104 = vpop.permute.xlu0 %3103
  %3105 = vrot.lane.b32.xlu0 %v2742, 111
  %v3106 = vpop.permute.xlu0 %3105
  %3107 = vrot.lane.b32.xlu0 %v2733, 111
  %v3108 = vpop.permute.xlu0 %3107
  %3109 = vrot.lane.b32.xlu0 %v2735, 111
  %v3110 = vpop.permute.xlu0 %3109
  %3111 = vrot.lane.b32.xlu0 %v2737, 111
  %v3112 = vpop.permute.xlu0 %3111
  %3113 = vrot.lane.b32.xlu0 %v2739, 111
  %v3114 = vpop.permute.xlu0 %3113
  %3115 = vrot.lane.b32.xlu0 %v2741, 111
  %v3116 = vpop.permute.xlu0 %3115
  %3117 = vrot.lane.b32.xlu0 %v2743, 111
  %v3118 = vpop.permute.xlu0 %3117
  %v3119 = vsel %vm2447, %v3096, %v3108
  %v3120 = vsel %vm2447, %v3098, %v3110
  %v3121 = vsel %vm2447, %v3100, %v3112
  %v3122 = vsel %vm2447, %v3102, %v3114
  %v3123 = vsel %vm2447, %v3104, %v3116
  %v3124 = vsel %vm2447, %v3106, %v3118
  %v3125 = vsel %vm2447, %v3108, %v3096
  %v3126 = vsel %vm2447, %v3110, %v3098
  %v3127 = vsel %vm2447, %v3112, %v3100
  %v3128 = vsel %vm2447, %v3114, %v3102
  %v3129 = vsel %vm2447, %v3116, %v3104
  %v3130 = vsel %vm2447, %v3118, %v3106
  %v3131 = vmul.f32 %v3119, %v2459
  %v3132 = vmul.f32 %v3125, %v2460
  %v3133 = vmul.f32 %v3120, %v2459
  %v3134 = vmul.f32 %v3126, %v2460
  %v3135 = vmul.f32 %v3121, %v2459
  %v3136 = vmul.f32 %v3127, %v2460
  %v3137 = vmul.f32 %v3122, %v2459
  %v3138 = vmul.f32 %v3128, %v2460
  %v3139 = vmul.f32 %v3123, %v2459
  %v3140 = vmul.f32 %v3129, %v2460
  %v3141 = vmul.f32 %v3124, %v2459
  %v3142 = vmul.f32 %v3130, %v2460
  %3144 = vset.pattern.permute.xlu0 0
  %3145 = vperm.xlu0 %3144, %v2756
  %v3146 = vpop.permute.xlu0 %3145
  %3149 = vset.pattern.permute.xlu0 0
  %3150 = vperm.xlu0 %3149, %v2757
  %v3151 = vpop.permute.xlu0 %3150
  %3154 = vset.pattern.permute.xlu0 0
  %3155 = vperm.xlu0 %3154, %v2758
  %v3156 = vpop.permute.xlu0 %3155
  %v3159 = vsel %vm2024, %v2747, 0
  %v3162 = vsel %vm2024, %v2751, 0
  %v3165 = vsel %vm2024, %v2755, 0
  %3167 = vmatpush.msra.mxu0 %v2897
  %3168 = vmatpush.msra.mxu0 %v2895
  %3169 = vmatpush.msra.mxu0 %v2893
  %3170 = vmatpush.msra.mxu0 %v2891
  %3171 = vmatpush.msra.mxu0 %v2853
  %3172 = vmatpush.msra.mxu0 %v2851
  %3173 = vmatpush.msra.mxu0 %v2849
  %3174 = vmatpush.msra.mxu0 %v2847
  %3175 = vmatpush.msra.mxu0 %v2845
  %3176 = vmatpush.msra.mxu0 %v2843
  %3177 = vmatpush.msra.mxu0 %v2805
  %3178 = vmatpush.msra.mxu0 %v2803
  %3179 = vmatpush.msra.mxu0 %v2801
  %3180 = vmatpush.msra.mxu0 %v2799
  %3181 = vmatpush.msra.mxu0 %v2797
  %3182 = vmatpush.msra.mxu0 %v2795
  %3183 = vmatmul.f32.gmra.mxu0 %v2744
  %v3184 = vpop.f32.mrf.mxu0
  %v3185 = vadd.f32 %v3146, %v3184
  %3186 = vmatmul.f32.gmra.mxu0 %v2748
  %v3187 = vpop.f32.mrf.mxu0
  %v3188 = vadd.f32 %v3151, %v3187
  %3189 = vmatmul.f32.gmra.mxu0 %v2752
  %v3190 = vpop.f32.mrf.mxu0
  %v3191 = vadd.f32 %v3156, %v3190
  %3192 = vdwg.mxu0
  %3193 = vmatpush.msra.mxu0 %v2989
  %3194 = vmatpush.msra.mxu0 %v2987
  %3195 = vmatpush.msra.mxu0 %v2742
  %3196 = vmatpush.msra.mxu0 %v2740
  %3197 = vmatpush.msra.mxu0 %v2738
  %3198 = vmatpush.msra.mxu0 %v2736
  %3199 = vmatpush.msra.mxu0 %v2734
  %3200 = vmatpush.msra.mxu0 %v2732
  %3201 = vmatpush.msra.mxu0 %v2949
  %3202 = vmatpush.msra.mxu0 %v2947
  %3203 = vmatpush.msra.mxu0 %v2945
  %3204 = vmatpush.msra.mxu0 %v2943
  %3205 = vmatpush.msra.mxu0 %v2941
  %3206 = vmatpush.msra.mxu0 %v2939
  %3207 = vmatpush.msra.mxu0 %v2901
  %3208 = vmatpush.msra.mxu0 %v2899
  %3209 = vmatmul.f32.gmra.mxu0 %v2745
  %v3210 = vpop.f32.mrf.mxu0
  %v3211 = vadd.f32 %v3185, %v3210
  %3212 = vmatmul.f32.gmra.mxu0 %v2749
  %v3213 = vpop.f32.mrf.mxu0
  %v3214 = vadd.f32 %v3188, %v3213
  %3215 = vmatmul.f32.gmra.mxu0 %v2753
  %v3216 = vpop.f32.mrf.mxu0
  %v3217 = vadd.f32 %v3191, %v3216
  %3218 = vdwg.mxu0
  %3219 = vmatpush.msra.mxu0 %v3093
  %3220 = vmatpush.msra.mxu0 %v3091
  %3221 = vmatpush.msra.mxu0 %v3089
  %3222 = vmatpush.msra.mxu0 %v3087
  %3223 = vmatpush.msra.mxu0 %v3085
  %3224 = vmatpush.msra.mxu0 %v3083
  %3225 = vmatpush.msra.mxu0 %v3045
  %3226 = vmatpush.msra.mxu0 %v3043
  %3227 = vmatpush.msra.mxu0 %v3041
  %3228 = vmatpush.msra.mxu0 %v3039
  %3229 = vmatpush.msra.mxu0 %v3037
  %3230 = vmatpush.msra.mxu0 %v3035
  %3231 = vmatpush.msra.mxu0 %v2997
  %3232 = vmatpush.msra.mxu0 %v2995
  %3233 = vmatpush.msra.mxu0 %v2993
  %3234 = vmatpush.msra.mxu0 %v2991
  %3235 = vmatmul.f32.gmra.mxu0 %v2746
  %v3236 = vpop.f32.mrf.mxu0
  %v3237 = vadd.f32 %v3211, %v3236
  %3238 = vmatmul.f32.gmra.mxu0 %v2750
  %v3239 = vpop.f32.mrf.mxu0
  %v3240 = vadd.f32 %v3214, %v3239
  %3241 = vmatmul.f32.gmra.mxu0 %v2754
  %v3242 = vpop.f32.mrf.mxu0
  %v3243 = vadd.f32 %v3217, %v3242
  %3244 = vdwg.mxu0
  %3245 = vmatpush.msra.mxu0 0.0
  %3246 = vmatpush.msra.mxu0 0.0
  %3247 = vmatpush.msra.mxu0 0.0
  %3248 = vmatpush.msra.mxu0 0.0
  %3249 = vmatpush.msra.mxu0 0.0
  %3250 = vmatpush.msra.mxu0 0.0
  %3251 = vmatpush.msra.mxu0 0.0
  %3252 = vmatpush.msra.mxu0 0.0
  %3253 = vmatpush.msra.mxu0 0.0
  %3254 = vmatpush.msra.mxu0 0.0
  %3255 = vmatpush.msra.mxu0 %v3141
  %3256 = vmatpush.msra.mxu0 %v3139
  %3257 = vmatpush.msra.mxu0 %v3137
  %3258 = vmatpush.msra.mxu0 %v3135
  %3259 = vmatpush.msra.mxu0 %v3133
  %3260 = vmatpush.msra.mxu0 %v3131
  %3261 = vmatmul.f32.gmra.mxu0 %v3159
  %v3262 = vpop.f32.mrf.mxu0
  %v3263 = vadd.f32 %v3237, %v3262
  %3264 = vmatmul.f32.gmra.mxu0 %v3162
  %v3265 = vpop.f32.mrf.mxu0
  %v3266 = vadd.f32 %v3240, %v3265
  %3267 = vmatmul.f32.gmra.mxu0 %v3165
  %v3268 = vpop.f32.mrf.mxu0
  %v3269 = vadd.f32 %v3243, %v3268
  %3270 = vdwg.mxu0
  %3271 = vmatpush.msra.mxu0 %v2898
  %3272 = vmatpush.msra.mxu0 %v2896
  %3273 = vmatpush.msra.mxu0 %v2894
  %3274 = vmatpush.msra.mxu0 %v2892
  %3275 = vmatpush.msra.mxu0 %v2854
  %3276 = vmatpush.msra.mxu0 %v2852
  %3277 = vmatpush.msra.mxu0 %v2850
  %3278 = vmatpush.msra.mxu0 %v2848
  %3279 = vmatpush.msra.mxu0 %v2846
  %3280 = vmatpush.msra.mxu0 %v2844
  %3281 = vmatpush.msra.mxu0 %v2806
  %3282 = vmatpush.msra.mxu0 %v2804
  %3283 = vmatpush.msra.mxu0 %v2802
  %3284 = vmatpush.msra.mxu0 %v2800
  %3285 = vmatpush.msra.mxu0 %v2798
  %3286 = vmatpush.msra.mxu0 %v2796
  %3287 = vmatmul.f32.gmra.mxu0 %v2744
  %v3288 = vpop.f32.mrf.mxu0
  %v3289 = vadd.f32 %v3146, %v3288
  %3290 = vmatmul.f32.gmra.mxu0 %v2748
  %v3291 = vpop.f32.mrf.mxu0
  %v3292 = vadd.f32 %v3151, %v3291
  %3293 = vmatmul.f32.gmra.mxu0 %v2752
  %v3294 = vpop.f32.mrf.mxu0
  %v3295 = vadd.f32 %v3156, %v3294
  %3296 = vdwg.mxu0
  %3297 = vmatpush.msra.mxu0 %v2990
  %3298 = vmatpush.msra.mxu0 %v2988
  %3299 = vmatpush.msra.mxu0 %v2743
  %3300 = vmatpush.msra.mxu0 %v2741
  %3301 = vmatpush.msra.mxu0 %v2739
  %3302 = vmatpush.msra.mxu0 %v2737
  %3303 = vmatpush.msra.mxu0 %v2735
  %3304 = vmatpush.msra.mxu0 %v2733
  %3305 = vmatpush.msra.mxu0 %v2950
  %3306 = vmatpush.msra.mxu0 %v2948
  %3307 = vmatpush.msra.mxu0 %v2946
  %3308 = vmatpush.msra.mxu0 %v2944
  %3309 = vmatpush.msra.mxu0 %v2942
  %3310 = vmatpush.msra.mxu0 %v2940
  %3311 = vmatpush.msra.mxu0 %v2902
  %3312 = vmatpush.msra.mxu0 %v2900
  %3313 = vmatmul.f32.gmra.mxu0 %v2745
  %v3314 = vpop.f32.mrf.mxu0
  %v3315 = vadd.f32 %v3289, %v3314
  %3316 = vmatmul.f32.gmra.mxu0 %v2749
  %v3317 = vpop.f32.mrf.mxu0
  %v3318 = vadd.f32 %v3292, %v3317
  %3319 = vmatmul.f32.gmra.mxu0 %v2753
  %v3320 = vpop.f32.mrf.mxu0
  %v3321 = vadd.f32 %v3295, %v3320
  %3322 = vdwg.mxu0
  %3323 = vmatpush.msra.mxu0 %v3094
  %3324 = vmatpush.msra.mxu0 %v3092
  %3325 = vmatpush.msra.mxu0 %v3090
  %3326 = vmatpush.msra.mxu0 %v3088
  %3327 = vmatpush.msra.mxu0 %v3086
  %3328 = vmatpush.msra.mxu0 %v3084
  %3329 = vmatpush.msra.mxu0 %v3046
  %3330 = vmatpush.msra.mxu0 %v3044
  %3331 = vmatpush.msra.mxu0 %v3042
  %3332 = vmatpush.msra.mxu0 %v3040
  %3333 = vmatpush.msra.mxu0 %v3038
  %3334 = vmatpush.msra.mxu0 %v3036
  %3335 = vmatpush.msra.mxu0 %v2998
  %3336 = vmatpush.msra.mxu0 %v2996
  %3337 = vmatpush.msra.mxu0 %v2994
  %3338 = vmatpush.msra.mxu0 %v2992
  %3339 = vmatmul.f32.gmra.mxu0 %v2746
  %v3340 = vpop.f32.mrf.mxu0
  %v3341 = vadd.f32 %v3315, %v3340
  %3342 = vmatmul.f32.gmra.mxu0 %v2750
  %v3343 = vpop.f32.mrf.mxu0
  %v3344 = vadd.f32 %v3318, %v3343
  %3345 = vmatmul.f32.gmra.mxu0 %v2754
  %v3346 = vpop.f32.mrf.mxu0
  %v3347 = vadd.f32 %v3321, %v3346
  %3348 = vdwg.mxu0
  %3349 = vmatpush.msra.mxu0 0.0
  %3350 = vmatpush.msra.mxu0 0.0
  %3351 = vmatpush.msra.mxu0 0.0
  %3352 = vmatpush.msra.mxu0 0.0
  %3353 = vmatpush.msra.mxu0 0.0
  %3354 = vmatpush.msra.mxu0 0.0
  %3355 = vmatpush.msra.mxu0 0.0
  %3356 = vmatpush.msra.mxu0 0.0
  %3357 = vmatpush.msra.mxu0 0.0
  %3358 = vmatpush.msra.mxu0 0.0
  %3359 = vmatpush.msra.mxu0 %v3142
  %3360 = vmatpush.msra.mxu0 %v3140
  %3361 = vmatpush.msra.mxu0 %v3138
  %3362 = vmatpush.msra.mxu0 %v3136
  %3363 = vmatpush.msra.mxu0 %v3134
  %3364 = vmatpush.msra.mxu0 %v3132
  %3365 = vmatmul.f32.gmra.mxu0 %v3159
  %v3366 = vpop.f32.mrf.mxu0
  %v3367 = vadd.f32 %v3341, %v3366
  %3368 = vmatmul.f32.gmra.mxu0 %v3162
  %v3369 = vpop.f32.mrf.mxu0
  %v3370 = vadd.f32 %v3344, %v3369
  %3371 = vmatmul.f32.gmra.mxu0 %v3165
  %v3372 = vpop.f32.mrf.mxu0
  %v3373 = vadd.f32 %v3347, %v3372
  %3374 = vdwg.mxu0
  %v3377 = vrot.slane %v3263, 2
  %v3378 = vrot.slane %v3367, 2
  %v3381 = vrot.slane %v3263, 4
  %v3382 = vrot.slane %v3367, 4
  %v3385 = vrot.slane %v3263, 6
  %v3386 = vrot.slane %v3367, 6
  %v3389 = vsel %vm266, %v3263, %v3377
  %v3390 = vsel %vm266, %v3367, %v3378
  %v3391 = vsel %vm269, %v3377, %v3381
  %v3392 = vsel %vm269, %v3378, %v3382
  %v3393 = vsel %vm272, %v3381, %v3385
  %v3394 = vsel %vm272, %v3382, %v3386
  %v3399 = vrot.slane %v3266, 4
  %v3400 = vrot.slane %v3269, 4
  %v3401 = vsel %vm269, %v3399, %v3400
  %v3402 = vrot.slane %v3370, 4
  %v3403 = vrot.slane %v3373, 4
  %v3404 = vsel %vm269, %v3402, %v3403
  %v3407 = vrot.slane %v3266, 6
  %v3408 = vrot.slane %v3370, 6
  %v3409 = vrot.slane %v3269, 6
  %v3410 = vsel %vm272, %v3407, %v3409
  %v3411 = vrot.slane %v3373, 6
  %v3412 = vsel %vm272, %v3408, %v3411
  %v3417 = vrot.slane %v3266, 2
  %v3418 = vrot.slane %v3269, 2
  %v3419 = vsel %vm266, %v3417, %v3418
  %v3420 = vrot.slane %v3370, 2
  %v3421 = vrot.slane %v3373, 2
  %v3422 = vsel %vm266, %v3420, %v3421
  %v3425 = vsel %vm266, %v3401, %v3407
  %v3426 = vsel %vm266, %v3404, %v3408
  %v3427 = vsel %vm269, %v3410, %v3266
  %v3428 = vsel %vm269, %v3412, %v3370
  %v3429 = vsel %vm272, %v3269, %v3419
  %v3430 = vsel %vm272, %v3373, %v3422
  %v3431 = vmul.f32 %v3389, %v100
  %v3432 = vmul.f32 %v3390, %v101
  %v3433 = vmul.f32 %v3391, %v102
  %v3434 = vmul.f32 %v3392, %v103
  %v3435 = vmul.f32 %v3393, %v104
  %v3436 = vmul.f32 %v3394, %v105
  %v3437 = vmul.f32 %v3425, %v106
  %v3438 = vmul.f32 %v3426, %v107
  %v3439 = vmul.f32 %v3427, %v108
  %v3440 = vmul.f32 %v3428, %v109
  %v3441 = vmul.f32 %v3429, %v110
  %v3442 = vmul.f32 %v3430, %v111
  %v3443 = vsub.f32 %v3431, %v3437
  %v3444 = vsub.f32 %v3432, %v3438
  %v3445 = vsub.f32 %v3433, %v3439
  %v3446 = vsub.f32 %v3434, %v3440
  %v3447 = vsub.f32 %v3435, %v3441
  %v3448 = vsub.f32 %v3436, %v3442
  %v3449 = vmul.f32 %v3389, %v106
  %v3450 = vmul.f32 %v3390, %v107
  %v3451 = vmul.f32 %v3391, %v108
  %v3452 = vmul.f32 %v3392, %v109
  %v3453 = vmul.f32 %v3393, %v110
  %v3454 = vmul.f32 %v3394, %v111
  %v3455 = vmul.f32 %v3425, %v100
  %v3456 = vmul.f32 %v3426, %v101
  %v3457 = vmul.f32 %v3427, %v102
  %v3458 = vmul.f32 %v3428, %v103
  %v3459 = vmul.f32 %v3429, %v104
  %v3460 = vmul.f32 %v3430, %v105
  %v3461 = vadd.f32 %v3449, %v3455
  %v3462 = vadd.f32 %v3450, %v3456
  %v3463 = vadd.f32 %v3451, %v3457
  %v3464 = vadd.f32 %v3452, %v3458
  %v3465 = vadd.f32 %v3453, %v3459
  %v3466 = vadd.f32 %v3454, %v3460
  %3467 = vmatpush.msra.mxu0 %v144
  %3468 = vmatpush.msra.mxu0 %v142
  %3469 = vmatpush.msra.mxu0 %v140
  %3470 = vmatpush.msra.mxu0 %v138
  %3471 = vmatpush.msra.mxu0 %v136
  %3472 = vmatpush.msra.mxu0 %v134
  %3473 = vmatpush.msra.mxu0 %v132
  %3474 = vmatpush.msra.mxu0 %v130
  %3475 = vmatpush.msra.mxu0 %v128
  %3476 = vmatpush.msra.mxu0 %v126
  %3477 = vmatpush.msra.mxu0 %v124
  %3478 = vmatpush.msra.mxu0 %v122
  %3479 = vmatpush.msra.mxu0 %v120
  %3480 = vmatpush.msra.mxu0 %v118
  %3481 = vmatpush.msra.mxu0 %v116
  %3482 = vmatpush.msra.mxu0 %v114
  %3483 = vmatmul.f32.gmra.mxu0 %v3443
  %v3484 = vpop.f32.mrf.mxu0
  %v3485 = vadd.f32 0.0, %v3484
  %3486 = vmatmul.f32.gmra.mxu0 %v3445
  %v3487 = vpop.f32.mrf.mxu0
  %v3488 = vadd.f32 0.0, %v3487
  %3489 = vmatmul.f32.gmra.mxu0 %v3447
  %v3490 = vpop.f32.mrf.mxu0
  %v3491 = vadd.f32 0.0, %v3490
  %3492 = vmatmul.f32.gmra.mxu0 %v3461
  %v3493 = vpop.f32.mrf.mxu0
  %v3494 = vadd.f32 0.0, %v3493
  %3495 = vmatmul.f32.gmra.mxu0 %v3463
  %v3496 = vpop.f32.mrf.mxu0
  %v3497 = vadd.f32 0.0, %v3496
  %3498 = vmatmul.f32.gmra.mxu0 %v3465
  %v3499 = vpop.f32.mrf.mxu0
  %v3500 = vadd.f32 0.0, %v3499
  %3501 = vdwg.mxu0
  %3502 = vmatpush.msra.mxu0 %v176
  %3503 = vmatpush.msra.mxu0 %v174
  %3504 = vmatpush.msra.mxu0 %v172
  %3505 = vmatpush.msra.mxu0 %v170
  %3506 = vmatpush.msra.mxu0 %v168
  %3507 = vmatpush.msra.mxu0 %v166
  %3508 = vmatpush.msra.mxu0 %v164
  %3509 = vmatpush.msra.mxu0 %v162
  %3510 = vmatpush.msra.mxu0 %v160
  %3511 = vmatpush.msra.mxu0 %v158
  %3512 = vmatpush.msra.mxu0 %v156
  %3513 = vmatpush.msra.mxu0 %v154
  %3514 = vmatpush.msra.mxu0 %v152
  %3515 = vmatpush.msra.mxu0 %v150
  %3516 = vmatpush.msra.mxu0 %v148
  %3517 = vmatpush.msra.mxu0 %v146
  %3518 = vmatmul.f32.gmra.mxu0 %v3444
  %v3519 = vpop.f32.mrf.mxu0
  %v3520 = vadd.f32 %v3485, %v3519
  %3521 = vmatmul.f32.gmra.mxu0 %v3446
  %v3522 = vpop.f32.mrf.mxu0
  %v3523 = vadd.f32 %v3488, %v3522
  %3524 = vmatmul.f32.gmra.mxu0 %v3448
  %v3525 = vpop.f32.mrf.mxu0
  %v3526 = vadd.f32 %v3491, %v3525
  %3527 = vmatmul.f32.gmra.mxu0 %v3462
  %v3528 = vpop.f32.mrf.mxu0
  %v3529 = vadd.f32 %v3494, %v3528
  %3530 = vmatmul.f32.gmra.mxu0 %v3464
  %v3531 = vpop.f32.mrf.mxu0
  %v3532 = vadd.f32 %v3497, %v3531
  %3533 = vmatmul.f32.gmra.mxu0 %v3466
  %v3534 = vpop.f32.mrf.mxu0
  %v3535 = vadd.f32 %v3500, %v3534
  %3536 = vdwg.mxu0
  %3537 = vmatpush.msra.mxu0 %v145
  %3538 = vmatpush.msra.mxu0 %v143
  %3539 = vmatpush.msra.mxu0 %v141
  %3540 = vmatpush.msra.mxu0 %v139
  %3541 = vmatpush.msra.mxu0 %v137
  %3542 = vmatpush.msra.mxu0 %v135
  %3543 = vmatpush.msra.mxu0 %v133
  %3544 = vmatpush.msra.mxu0 %v131
  %3545 = vmatpush.msra.mxu0 %v129
  %3546 = vmatpush.msra.mxu0 %v127
  %3547 = vmatpush.msra.mxu0 %v125
  %3548 = vmatpush.msra.mxu0 %v123
  %3549 = vmatpush.msra.mxu0 %v121
  %3550 = vmatpush.msra.mxu0 %v119
  %3551 = vmatpush.msra.mxu0 %v117
  %3552 = vmatpush.msra.mxu0 %v115
  %3553 = vmatmul.f32.gmra.mxu0 %v3443
  %v3554 = vpop.f32.mrf.mxu0
  %v3555 = vadd.f32 0.0, %v3554
  %3556 = vmatmul.f32.gmra.mxu0 %v3445
  %v3557 = vpop.f32.mrf.mxu0
  %v3558 = vadd.f32 0.0, %v3557
  %3559 = vmatmul.f32.gmra.mxu0 %v3447
  %v3560 = vpop.f32.mrf.mxu0
  %v3561 = vadd.f32 0.0, %v3560
  %3562 = vmatmul.f32.gmra.mxu0 %v3461
  %v3563 = vpop.f32.mrf.mxu0
  %v3564 = vadd.f32 0.0, %v3563
  %3565 = vmatmul.f32.gmra.mxu0 %v3463
  %v3566 = vpop.f32.mrf.mxu0
  %v3567 = vadd.f32 0.0, %v3566
  %3568 = vmatmul.f32.gmra.mxu0 %v3465
  %v3569 = vpop.f32.mrf.mxu0
  %v3570 = vadd.f32 0.0, %v3569
  %3571 = vdwg.mxu0
  %3572 = vmatpush.msra.mxu0 %v177
  %3573 = vmatpush.msra.mxu0 %v175
  %3574 = vmatpush.msra.mxu0 %v173
  %3575 = vmatpush.msra.mxu0 %v171
  %3576 = vmatpush.msra.mxu0 %v169
  %3577 = vmatpush.msra.mxu0 %v167
  %3578 = vmatpush.msra.mxu0 %v165
  %3579 = vmatpush.msra.mxu0 %v163
  %3580 = vmatpush.msra.mxu0 %v161
  %3581 = vmatpush.msra.mxu0 %v159
  %3582 = vmatpush.msra.mxu0 %v157
  %3583 = vmatpush.msra.mxu0 %v155
  %3584 = vmatpush.msra.mxu0 %v153
  %3585 = vmatpush.msra.mxu0 %v151
  %3586 = vmatpush.msra.mxu0 %v149
  %3587 = vmatpush.msra.mxu0 %v147
  %3588 = vmatmul.f32.gmra.mxu0 %v3444
  %v3589 = vpop.f32.mrf.mxu0
  %v3590 = vadd.f32 %v3555, %v3589
  %3591 = vmatmul.f32.gmra.mxu0 %v3446
  %v3592 = vpop.f32.mrf.mxu0
  %v3593 = vadd.f32 %v3558, %v3592
  %3594 = vmatmul.f32.gmra.mxu0 %v3448
  %v3595 = vpop.f32.mrf.mxu0
  %v3596 = vadd.f32 %v3561, %v3595
  %3597 = vmatmul.f32.gmra.mxu0 %v3462
  %v3598 = vpop.f32.mrf.mxu0
  %v3599 = vadd.f32 %v3564, %v3598
  %3600 = vmatmul.f32.gmra.mxu0 %v3464
  %v3601 = vpop.f32.mrf.mxu0
  %v3602 = vadd.f32 %v3567, %v3601
  %3603 = vmatmul.f32.gmra.mxu0 %v3466
  %v3604 = vpop.f32.mrf.mxu0
  %v3605 = vadd.f32 %v3570, %v3604
  %3606 = vdwg.mxu0
  %3607 = vmatpush.msra.mxu0 %v208
  %3608 = vmatpush.msra.mxu0 %v206
  %3609 = vmatpush.msra.mxu0 %v204
  %3610 = vmatpush.msra.mxu0 %v202
  %3611 = vmatpush.msra.mxu0 %v200
  %3612 = vmatpush.msra.mxu0 %v198
  %3613 = vmatpush.msra.mxu0 %v196
  %3614 = vmatpush.msra.mxu0 %v194
  %3615 = vmatpush.msra.mxu0 %v192
  %3616 = vmatpush.msra.mxu0 %v190
  %3617 = vmatpush.msra.mxu0 %v188
  %3618 = vmatpush.msra.mxu0 %v186
  %3619 = vmatpush.msra.mxu0 %v184
  %3620 = vmatpush.msra.mxu0 %v182
  %3621 = vmatpush.msra.mxu0 %v180
  %3622 = vmatpush.msra.mxu0 %v178
  %3623 = vmatmul.f32.gmra.mxu0 %v3443
  %v3624 = vpop.f32.mrf.mxu0
  %v3625 = vadd.f32 0.0, %v3624
  %3626 = vmatmul.f32.gmra.mxu0 %v3445
  %v3627 = vpop.f32.mrf.mxu0
  %v3628 = vadd.f32 0.0, %v3627
  %3629 = vmatmul.f32.gmra.mxu0 %v3447
  %v3630 = vpop.f32.mrf.mxu0
  %v3631 = vadd.f32 0.0, %v3630
  %3632 = vmatmul.f32.gmra.mxu0 %v3461
  %v3633 = vpop.f32.mrf.mxu0
  %v3634 = vadd.f32 0.0, %v3633
  %3635 = vmatmul.f32.gmra.mxu0 %v3463
  %v3636 = vpop.f32.mrf.mxu0
  %v3637 = vadd.f32 0.0, %v3636
  %3638 = vmatmul.f32.gmra.mxu0 %v3465
  %v3639 = vpop.f32.mrf.mxu0
  %v3640 = vadd.f32 0.0, %v3639
  %3641 = vdwg.mxu0
  %3642 = vmatpush.msra.mxu0 %v240
  %3643 = vmatpush.msra.mxu0 %v238
  %3644 = vmatpush.msra.mxu0 %v236
  %3645 = vmatpush.msra.mxu0 %v234
  %3646 = vmatpush.msra.mxu0 %v232
  %3647 = vmatpush.msra.mxu0 %v230
  %3648 = vmatpush.msra.mxu0 %v228
  %3649 = vmatpush.msra.mxu0 %v226
  %3650 = vmatpush.msra.mxu0 %v224
  %3651 = vmatpush.msra.mxu0 %v222
  %3652 = vmatpush.msra.mxu0 %v220
  %3653 = vmatpush.msra.mxu0 %v218
  %3654 = vmatpush.msra.mxu0 %v216
  %3655 = vmatpush.msra.mxu0 %v214
  %3656 = vmatpush.msra.mxu0 %v212
  %3657 = vmatpush.msra.mxu0 %v210
  %3658 = vmatmul.f32.gmra.mxu0 %v3444
  %v3659 = vpop.f32.mrf.mxu0
  %v3660 = vadd.f32 %v3625, %v3659
  %3661 = vmatmul.f32.gmra.mxu0 %v3446
  %v3662 = vpop.f32.mrf.mxu0
  %v3663 = vadd.f32 %v3628, %v3662
  %3664 = vmatmul.f32.gmra.mxu0 %v3448
  %v3665 = vpop.f32.mrf.mxu0
  %v3666 = vadd.f32 %v3631, %v3665
  %3667 = vmatmul.f32.gmra.mxu0 %v3462
  %v3668 = vpop.f32.mrf.mxu0
  %v3669 = vadd.f32 %v3634, %v3668
  %3670 = vmatmul.f32.gmra.mxu0 %v3464
  %v3671 = vpop.f32.mrf.mxu0
  %v3672 = vadd.f32 %v3637, %v3671
  %3673 = vmatmul.f32.gmra.mxu0 %v3466
  %v3674 = vpop.f32.mrf.mxu0
  %v3675 = vadd.f32 %v3640, %v3674
  %3676 = vdwg.mxu0
  %3677 = vmatpush.msra.mxu0 %v209
  %3678 = vmatpush.msra.mxu0 %v207
  %3679 = vmatpush.msra.mxu0 %v205
  %3680 = vmatpush.msra.mxu0 %v203
  %3681 = vmatpush.msra.mxu0 %v201
  %3682 = vmatpush.msra.mxu0 %v199
  %3683 = vmatpush.msra.mxu0 %v197
  %3684 = vmatpush.msra.mxu0 %v195
  %3685 = vmatpush.msra.mxu0 %v193
  %3686 = vmatpush.msra.mxu0 %v191
  %3687 = vmatpush.msra.mxu0 %v189
  %3688 = vmatpush.msra.mxu0 %v187
  %3689 = vmatpush.msra.mxu0 %v185
  %3690 = vmatpush.msra.mxu0 %v183
  %3691 = vmatpush.msra.mxu0 %v181
  %3692 = vmatpush.msra.mxu0 %v179
  %3693 = vmatmul.f32.gmra.mxu0 %v3443
  %v3694 = vpop.f32.mrf.mxu0
  %v3695 = vadd.f32 0.0, %v3694
  %3696 = vmatmul.f32.gmra.mxu0 %v3445
  %v3697 = vpop.f32.mrf.mxu0
  %v3698 = vadd.f32 0.0, %v3697
  %3699 = vmatmul.f32.gmra.mxu0 %v3447
  %v3700 = vpop.f32.mrf.mxu0
  %v3701 = vadd.f32 0.0, %v3700
  %3702 = vmatmul.f32.gmra.mxu0 %v3461
  %v3703 = vpop.f32.mrf.mxu0
  %v3704 = vadd.f32 0.0, %v3703
  %3705 = vmatmul.f32.gmra.mxu0 %v3463
  %v3706 = vpop.f32.mrf.mxu0
  %v3707 = vadd.f32 0.0, %v3706
  %3708 = vmatmul.f32.gmra.mxu0 %v3465
  %v3709 = vpop.f32.mrf.mxu0
  %v3710 = vadd.f32 0.0, %v3709
  %3711 = vdwg.mxu0
  %3712 = vmatpush.msra.mxu0 %v241
  %3713 = vmatpush.msra.mxu0 %v239
  %3714 = vmatpush.msra.mxu0 %v237
  %3715 = vmatpush.msra.mxu0 %v235
  %3716 = vmatpush.msra.mxu0 %v233
  %3717 = vmatpush.msra.mxu0 %v231
  %3718 = vmatpush.msra.mxu0 %v229
  %3719 = vmatpush.msra.mxu0 %v227
  %3720 = vmatpush.msra.mxu0 %v225
  %3721 = vmatpush.msra.mxu0 %v223
  %3722 = vmatpush.msra.mxu0 %v221
  %3723 = vmatpush.msra.mxu0 %v219
  %3724 = vmatpush.msra.mxu0 %v217
  %3725 = vmatpush.msra.mxu0 %v215
  %3726 = vmatpush.msra.mxu0 %v213
  %3727 = vmatpush.msra.mxu0 %v211
  %3728 = vmatmul.f32.gmra.mxu0 %v3444
  %v3729 = vpop.f32.mrf.mxu0
  %v3730 = vadd.f32 %v3695, %v3729
  %3731 = vmatmul.f32.gmra.mxu0 %v3446
  %v3732 = vpop.f32.mrf.mxu0
  %v3733 = vadd.f32 %v3698, %v3732
  %3734 = vmatmul.f32.gmra.mxu0 %v3448
  %v3735 = vpop.f32.mrf.mxu0
  %v3736 = vadd.f32 %v3701, %v3735
  %3737 = vmatmul.f32.gmra.mxu0 %v3462
  %v3738 = vpop.f32.mrf.mxu0
  %v3739 = vadd.f32 %v3704, %v3738
  %3740 = vmatmul.f32.gmra.mxu0 %v3464
  %v3741 = vpop.f32.mrf.mxu0
  %v3742 = vadd.f32 %v3707, %v3741
  %3743 = vmatmul.f32.gmra.mxu0 %v3466
  %v3744 = vpop.f32.mrf.mxu0
  %v3745 = vadd.f32 %v3710, %v3744
  %3746 = vdwg.mxu0
  %v3747 = vsub.f32 %v3520, %v3669
  %v3748 = vsub.f32 %v3590, %v3739
  %v3749 = vsub.f32 %v3523, %v3672
  %v3750 = vsub.f32 %v3593, %v3742
  %v3751 = vsub.f32 %v3526, %v3675
  %v3752 = vsub.f32 %v3596, %v3745
  %v3753 = vmul.f32 %v3747, %v267
  %v3754 = vmul.f32 %v3748, %v268
  %v3755 = vmul.f32 %v3749, %v270
  %v3756 = vmul.f32 %v3750, %v271
  %v3757 = vmul.f32 %v3751, %v273
  %v3758 = vmul.f32 %v3752, %v274
  %v3759 = vadd.f32 %v3660, %v3529
  %v3760 = vadd.f32 %v3730, %v3599
  %v3761 = vadd.f32 %v3663, %v3532
  %v3762 = vadd.f32 %v3733, %v3602
  %v3763 = vadd.f32 %v3666, %v3535
  %v3764 = vadd.f32 %v3736, %v3605
  %v3765 = vmul.f32 %v3759, %v267
  %v3766 = vmul.f32 %v3760, %v268
  %v3767 = vmul.f32 %v3761, %v270
  %v3768 = vmul.f32 %v3762, %v271
  %v3769 = vmul.f32 %v3763, %v273
  %v3770 = vmul.f32 %v3764, %v274
  %s3771 = scalar_lea.vmem %s8, 384
  %v3772 = vld [vmem:[%s3771] sm:$0xff]
  %v3773 = vld [vmem:[%s3771 + $0x8] sm:$0xff]
  %v3774 = vld [vmem:[%s3771 + $0x10] sm:$0xff]
  %v3775 = vld [vmem:[%s3771 + $0x18] sm:$0xff]
  %v3776 = vld [vmem:[%s3771 + $0x20] sm:$0xff]
  %v3777 = vld [vmem:[%s3771 + $0x28] sm:$0xff]
  %v3778 = vld [vmem:[%s3771 + $0x30] sm:$0xff]
  %v3779 = vld [vmem:[%s3771 + $0x38] sm:$0xff]
  %v3780 = vld [vmem:[%s3771 + $0x40] sm:$0xff]
  %v3781 = vld [vmem:[%s3771 + $0x48] sm:$0xff]
  %v3782 = vld [vmem:[%s3771 + $0x50] sm:$0xff]
  %v3783 = vld [vmem:[%s3771 + $0x58] sm:$0xff]
  %v3784 = vld [vmem:[%s3771 + $0x60] sm:$0xff]
  %v3785 = vld [vmem:[%s3771 + $0x68] sm:$0xff]
  %v3786 = vld [vmem:[%s3771 + $0x70] sm:$0xff]
  %v3787 = vld [vmem:[%s3771 + $0x78] sm:$0xff]
  %v3788 = vld [vmem:[%s3771 + $0x80] sm:$0xff]
  %v3789 = vld [vmem:[%s3771 + $0x88] sm:$0xff]
  %v3790 = vld [vmem:[%s3771 + $0x90] sm:$0xff]
  %v3791 = vld [vmem:[%s3771 + $0x98] sm:$0xff]
  %v3792 = vld [vmem:[%s3771 + $0xa0] sm:$0xff]
  %v3793 = vld [vmem:[%s3771 + $0xa8] sm:$0xff]
  %v3794 = vld [vmem:[%s3771 + $0xb0] sm:$0xff]
  %v3795 = vld [vmem:[%s3771 + $0xb8] sm:$0xff]
  %v3796 = vld [vmem:[%s3771 + $0xc0] sm:$0xff]
  %v3797 = vld [vmem:[%s3771 + $0xc8] sm:$0xff]
  %v3798 = vld [vmem:[%s3771 + $0xd0] sm:$0xff]
  %v3799 = vld [vmem:[%s3771 + $0xd8] sm:$0xff]
  %v3800 = vld [vmem:[%s3771 + $0xe0] sm:$0xff]
  %v3801 = vld [vmem:[%s3771 + $0xe8] sm:$0xff]
  %v3802 = vld [vmem:[%s3771 + $0xf0] sm:$0xff]
  %v3803 = vld [vmem:[%s3771 + $0xf8] sm:$0xff]
  %v3804 = vld [vmem:[%s3771 + $0x100] sm:$0xff]
  %v3805 = vld [vmem:[%s3771 + $0x108] sm:$0xff]
  %v3806 = vld [vmem:[%s3771 + $0x110] sm:$0xff]
  %v3807 = vld [vmem:[%s3771 + $0x118] sm:$0xff]
  %v3808 = vld [vmem:[%s3771 + $0x120] sm:$0xff]
  %v3809 = vld [vmem:[%s3771 + $0x128] sm:$0xff]
  %v3810 = vld [vmem:[%s3771 + $0x130] sm:$0xff]
  %v3811 = vld [vmem:[%s3771 + $0x138] sm:$0xff]
  %v3812 = vld [vmem:[%s3771 + $0x140] sm:$0xff]
  %v3813 = vld [vmem:[%s3771 + $0x148] sm:$0xff]
  %v3814 = vld [vmem:[%s3771 + $0x150] sm:$0xff]
  %v3815 = vld [vmem:[%s3771 + $0x158] sm:$0xff]
  %v3816 = vld [vmem:[%s3771 + $0x160] sm:$0xff]
  %v3817 = vld [vmem:[%s3771 + $0x168] sm:$0xff]
  %v3818 = vld [vmem:[%s3771 + $0x170] sm:$0xff]
  %v3819 = vld [vmem:[%s3771 + $0x178] sm:$0xff]
  %s3820 = scalar_lea.vmem %s9, 192
  %v3821 = vld [vmem:[%s3820] sm:$0xff]
  %v3822 = vld [vmem:[%s3820 + $0x8] sm:$0xff]
  %v3823 = vld [vmem:[%s3820 + $0x10] sm:$0xff]
  %v3824 = vld [vmem:[%s3820 + $0x18] sm:$0xff]
  %v3825 = vld [vmem:[%s3820 + $0x20] sm:$0xff]
  %v3826 = vld [vmem:[%s3820 + $0x28] sm:$0xff]
  %v3827 = vld [vmem:[%s3820 + $0x30] sm:$0xff]
  %v3828 = vld [vmem:[%s3820 + $0x38] sm:$0xff]
  %v3829 = vld [vmem:[%s3820 + $0x40] sm:$0xff]
  %v3830 = vld [vmem:[%s3820 + $0x48] sm:$0xff]
  %v3831 = vld [vmem:[%s3820 + $0x50] sm:$0xff]
  %v3832 = vld [vmem:[%s3820 + $0x58] sm:$0xff]
  %v3833 = vld [vmem:[%s3820 + $0x60] sm:$0xff]
  %v3834 = vld [vmem:[%s3820 + $0x68] sm:$0xff]
  %v3835 = vld [vmem:[%s3820 + $0x70] sm:$0xff]
  %v3836 = vld [vmem:[%s3820 + $0x78] sm:$0xff]
  %v3837 = vld [vmem:[%s3820 + $0x80] sm:$0xff]
  %v3838 = vld [vmem:[%s3820 + $0x88] sm:$0xff]
  %v3839 = vld [vmem:[%s3820 + $0x90] sm:$0xff]
  %v3840 = vld [vmem:[%s3820 + $0x98] sm:$0xff]
  %v3841 = vld [vmem:[%s3820 + $0xa0] sm:$0xff]
  %v3842 = vld [vmem:[%s3820 + $0xa8] sm:$0xff]
  %v3843 = vld [vmem:[%s3820 + $0xb0] sm:$0xff]
  %v3844 = vld [vmem:[%s3820 + $0xb8] sm:$0xff]
  %3846 = vset.pattern.permute.xlu0 0
  %3847 = vperm.xlu0 %3846, %v3821
  %v3848 = vpop.permute.xlu0 %3847
  %3851 = vset.pattern.permute.xlu0 0
  %3852 = vperm.xlu0 %3851, %v3822
  %v3853 = vpop.permute.xlu0 %3852
  %3856 = vset.pattern.permute.xlu0 0
  %3857 = vperm.xlu0 %3856, %v3823
  %v3858 = vpop.permute.xlu0 %3857
  %3861 = vset.pattern.permute.xlu0 0
  %3862 = vperm.xlu0 %3861, %v3824
  %v3863 = vpop.permute.xlu0 %3862
  %3866 = vset.pattern.permute.xlu0 0
  %3867 = vperm.xlu0 %3866, %v3825
  %v3868 = vpop.permute.xlu0 %3867
  %3871 = vset.pattern.permute.xlu0 0
  %3872 = vperm.xlu0 %3871, %v3826
  %v3873 = vpop.permute.xlu0 %3872
  %3876 = vset.pattern.permute.xlu0 0
  %3877 = vperm.xlu0 %3876, %v3827
  %v3878 = vpop.permute.xlu0 %3877
  %3881 = vset.pattern.permute.xlu0 0
  %3882 = vperm.xlu0 %3881, %v3828
  %v3883 = vpop.permute.xlu0 %3882
  %3886 = vset.pattern.permute.xlu0 0
  %3887 = vperm.xlu0 %3886, %v3829
  %v3888 = vpop.permute.xlu0 %3887
  %3891 = vset.pattern.permute.xlu0 0
  %3892 = vperm.xlu0 %3891, %v3830
  %v3893 = vpop.permute.xlu0 %3892
  %3896 = vset.pattern.permute.xlu0 0
  %3897 = vperm.xlu0 %3896, %v3831
  %v3898 = vpop.permute.xlu0 %3897
  %3901 = vset.pattern.permute.xlu0 0
  %3902 = vperm.xlu0 %3901, %v3832
  %v3903 = vpop.permute.xlu0 %3902
  %3906 = vset.pattern.permute.xlu0 0
  %3907 = vperm.xlu0 %3906, %v3833
  %v3908 = vpop.permute.xlu0 %3907
  %3911 = vset.pattern.permute.xlu0 0
  %3912 = vperm.xlu0 %3911, %v3834
  %v3913 = vpop.permute.xlu0 %3912
  %3916 = vset.pattern.permute.xlu0 0
  %3917 = vperm.xlu0 %3916, %v3835
  %v3918 = vpop.permute.xlu0 %3917
  %3921 = vset.pattern.permute.xlu0 0
  %3922 = vperm.xlu0 %3921, %v3836
  %v3923 = vpop.permute.xlu0 %3922
  %3926 = vset.pattern.permute.xlu0 0
  %3927 = vperm.xlu0 %3926, %v3837
  %v3928 = vpop.permute.xlu0 %3927
  %3931 = vset.pattern.permute.xlu0 0
  %3932 = vperm.xlu0 %3931, %v3838
  %v3933 = vpop.permute.xlu0 %3932
  %3936 = vset.pattern.permute.xlu0 0
  %3937 = vperm.xlu0 %3936, %v3839
  %v3938 = vpop.permute.xlu0 %3937
  %3941 = vset.pattern.permute.xlu0 0
  %3942 = vperm.xlu0 %3941, %v3840
  %v3943 = vpop.permute.xlu0 %3942
  %3946 = vset.pattern.permute.xlu0 0
  %3947 = vperm.xlu0 %3946, %v3841
  %v3948 = vpop.permute.xlu0 %3947
  %3951 = vset.pattern.permute.xlu0 0
  %3952 = vperm.xlu0 %3951, %v3842
  %v3953 = vpop.permute.xlu0 %3952
  %3956 = vset.pattern.permute.xlu0 0
  %3957 = vperm.xlu0 %3956, %v3843
  %v3958 = vpop.permute.xlu0 %3957
  %3961 = vset.pattern.permute.xlu0 0
  %3962 = vperm.xlu0 %3961, %v3844
  %v3963 = vpop.permute.xlu0 %3962
  %v3966 = vsel %vm863, %v3773, 0
  %v3969 = vsel %vm863, %v3775, 0
  %v3972 = vsel %vm863, %v3777, 0
  %v3975 = vsel %vm863, %v3779, 0
  %v3978 = vsel %vm863, %v3781, 0
  %v3981 = vsel %vm863, %v3783, 0
  %v3984 = vsel %vm863, %v3785, 0
  %v3987 = vsel %vm863, %v3787, 0
  %v3990 = vsel %vm863, %v3789, 0
  %v3993 = vsel %vm863, %v3791, 0
  %v3996 = vsel %vm863, %v3793, 0
  %v3999 = vsel %vm863, %v3795, 0
  %v4002 = vsel %vm863, %v3797, 0
  %v4005 = vsel %vm863, %v3799, 0
  %v4008 = vsel %vm863, %v3801, 0
  %v4011 = vsel %vm863, %v3803, 0
  %v4014 = vsel %vm863, %v3805, 0
  %v4017 = vsel %vm863, %v3807, 0
  %v4020 = vsel %vm863, %v3809, 0
  %v4023 = vsel %vm863, %v3811, 0
  %v4026 = vsel %vm863, %v3813, 0
  %v4029 = vsel %vm863, %v3815, 0
  %v4032 = vsel %vm863, %v3817, 0
  %v4035 = vsel %vm863, %v3819, 0
  %4037 = vmatpush.msra.mxu0 %v3765
  %4038 = vmatpush.msra.mxu0 %v3757
  %4039 = vmatpush.msra.mxu0 %v3755
  %4040 = vmatpush.msra.mxu0 %v3753
  %4041 = vmatpush.msra.mxu0 %v1576
  %4042 = vmatpush.msra.mxu0 %v1573
  %4043 = vmatpush.msra.mxu0 %v1570
  %4044 = vmatpush.msra.mxu0 %v1567
  %4045 = vmatpush.msra.mxu0 %v1564
  %4046 = vmatpush.msra.mxu0 %v1561
  %4047 = vmatpush.msra.mxu0 %v1558
  %4048 = vmatpush.msra.mxu0 %v1555
  %4049 = vmatpush.msra.mxu0 %v1552
  %4050 = vmatpush.msra.mxu0 %v1549
  %4051 = vmatpush.msra.mxu0 %v1546
  %4052 = vmatpush.msra.mxu0 %v1543
  %4053 = vmatmul.f32.gmra.mxu0 %v3772
  %v4054 = vpop.f32.mrf.mxu0
  %v4055 = vadd.f32 %v3848, %v4054
  %4056 = vmatmul.f32.gmra.mxu0 %v3774
  %v4057 = vpop.f32.mrf.mxu0
  %v4058 = vadd.f32 %v3853, %v4057
  %4059 = vmatmul.f32.gmra.mxu0 %v3776
  %v4060 = vpop.f32.mrf.mxu0
  %v4061 = vadd.f32 %v3858, %v4060
  %4062 = vmatmul.f32.gmra.mxu0 %v3778
  %v4063 = vpop.f32.mrf.mxu0
  %v4064 = vadd.f32 %v3863, %v4063
  %4065 = vmatmul.f32.gmra.mxu0 %v3780
  %v4066 = vpop.f32.mrf.mxu0
  %v4067 = vadd.f32 %v3868, %v4066
  %4068 = vmatmul.f32.gmra.mxu0 %v3782
  %v4069 = vpop.f32.mrf.mxu0
  %v4070 = vadd.f32 %v3873, %v4069
  %4071 = vmatmul.f32.gmra.mxu0 %v3784
  %v4072 = vpop.f32.mrf.mxu0
  %v4073 = vadd.f32 %v3878, %v4072
  %4074 = vmatmul.f32.gmra.mxu0 %v3786
  %v4075 = vpop.f32.mrf.mxu0
  %v4076 = vadd.f32 %v3883, %v4075
  %4077 = vmatmul.f32.gmra.mxu0 %v3788
  %v4078 = vpop.f32.mrf.mxu0
  %v4079 = vadd.f32 %v3888, %v4078
  %4080 = vmatmul.f32.gmra.mxu0 %v3790
  %v4081 = vpop.f32.mrf.mxu0
  %v4082 = vadd.f32 %v3893, %v4081
  %4083 = vmatmul.f32.gmra.mxu0 %v3792
  %v4084 = vpop.f32.mrf.mxu0
  %v4085 = vadd.f32 %v3898, %v4084
  %4086 = vmatmul.f32.gmra.mxu0 %v3794
  %v4087 = vpop.f32.mrf.mxu0
  %v4088 = vadd.f32 %v3903, %v4087
  %4089 = vmatmul.f32.gmra.mxu0 %v3796
  %v4090 = vpop.f32.mrf.mxu0
  %v4091 = vadd.f32 %v3908, %v4090
  %4092 = vmatmul.f32.gmra.mxu0 %v3798
  %v4093 = vpop.f32.mrf.mxu0
  %v4094 = vadd.f32 %v3913, %v4093
  %4095 = vmatmul.f32.gmra.mxu0 %v3800
  %v4096 = vpop.f32.mrf.mxu0
  %v4097 = vadd.f32 %v3918, %v4096
  %4098 = vmatmul.f32.gmra.mxu0 %v3802
  %v4099 = vpop.f32.mrf.mxu0
  %v4100 = vadd.f32 %v3923, %v4099
  %4101 = vmatmul.f32.gmra.mxu0 %v3804
  %v4102 = vpop.f32.mrf.mxu0
  %v4103 = vadd.f32 %v3928, %v4102
  %4104 = vmatmul.f32.gmra.mxu0 %v3806
  %v4105 = vpop.f32.mrf.mxu0
  %v4106 = vadd.f32 %v3933, %v4105
  %4107 = vmatmul.f32.gmra.mxu0 %v3808
  %v4108 = vpop.f32.mrf.mxu0
  %v4109 = vadd.f32 %v3938, %v4108
  %4110 = vmatmul.f32.gmra.mxu0 %v3810
  %v4111 = vpop.f32.mrf.mxu0
  %v4112 = vadd.f32 %v3943, %v4111
  %4113 = vmatmul.f32.gmra.mxu0 %v3812
  %v4114 = vpop.f32.mrf.mxu0
  %v4115 = vadd.f32 %v3948, %v4114
  %4116 = vmatmul.f32.gmra.mxu0 %v3814
  %v4117 = vpop.f32.mrf.mxu0
  %v4118 = vadd.f32 %v3953, %v4117
  %4119 = vmatmul.f32.gmra.mxu0 %v3816
  %v4120 = vpop.f32.mrf.mxu0
  %v4121 = vadd.f32 %v3958, %v4120
  %4122 = vmatmul.f32.gmra.mxu0 %v3818
  %v4123 = vpop.f32.mrf.mxu0
  %v4124 = vadd.f32 %v3963, %v4123
  %4125 = vdwg.mxu0
  %4126 = vmatpush.msra.mxu0 0.0
  %4127 = vmatpush.msra.mxu0 0.0
  %4128 = vmatpush.msra.mxu0 0.0
  %4129 = vmatpush.msra.mxu0 0.0
  %4130 = vmatpush.msra.mxu0 0.0
  %4131 = vmatpush.msra.mxu0 0.0
  %4132 = vmatpush.msra.mxu0 0.0
  %4133 = vmatpush.msra.mxu0 0.0
  %4134 = vmatpush.msra.mxu0 %v98
  %4135 = vmatpush.msra.mxu0 %v96
  %4136 = vmatpush.msra.mxu0 %v94
  %4137 = vmatpush.msra.mxu0 %v92
  %4138 = vmatpush.msra.mxu0 %v90
  %4139 = vmatpush.msra.mxu0 %v88
  %4140 = vmatpush.msra.mxu0 %v3769
  %4141 = vmatpush.msra.mxu0 %v3767
  %4142 = vmatmul.f32.gmra.mxu0 %v3966
  %v4143 = vpop.f32.mrf.mxu0
  %v4144 = vadd.f32 %v4055, %v4143
  %4145 = vmatmul.f32.gmra.mxu0 %v3969
  %v4146 = vpop.f32.mrf.mxu0
  %v4147 = vadd.f32 %v4058, %v4146
  %4148 = vmatmul.f32.gmra.mxu0 %v3972
  %v4149 = vpop.f32.mrf.mxu0
  %v4150 = vadd.f32 %v4061, %v4149
  %4151 = vmatmul.f32.gmra.mxu0 %v3975
  %v4152 = vpop.f32.mrf.mxu0
  %v4153 = vadd.f32 %v4064, %v4152
  %4154 = vmatmul.f32.gmra.mxu0 %v3978
  %v4155 = vpop.f32.mrf.mxu0
  %v4156 = vadd.f32 %v4067, %v4155
  %4157 = vmatmul.f32.gmra.mxu0 %v3981
  %v4158 = vpop.f32.mrf.mxu0
  %v4159 = vadd.f32 %v4070, %v4158
  %4160 = vmatmul.f32.gmra.mxu0 %v3984
  %v4161 = vpop.f32.mrf.mxu0
  %v4162 = vadd.f32 %v4073, %v4161
  %4163 = vmatmul.f32.gmra.mxu0 %v3987
  %v4164 = vpop.f32.mrf.mxu0
  %v4165 = vadd.f32 %v4076, %v4164
  %4166 = vmatmul.f32.gmra.mxu0 %v3990
  %v4167 = vpop.f32.mrf.mxu0
  %v4168 = vadd.f32 %v4079, %v4167
  %4169 = vmatmul.f32.gmra.mxu0 %v3993
  %v4170 = vpop.f32.mrf.mxu0
  %v4171 = vadd.f32 %v4082, %v4170
  %4172 = vmatmul.f32.gmra.mxu0 %v3996
  %v4173 = vpop.f32.mrf.mxu0
  %v4174 = vadd.f32 %v4085, %v4173
  %4175 = vmatmul.f32.gmra.mxu0 %v3999
  %v4176 = vpop.f32.mrf.mxu0
  %v4177 = vadd.f32 %v4088, %v4176
  %4178 = vmatmul.f32.gmra.mxu0 %v4002
  %v4179 = vpop.f32.mrf.mxu0
  %v4180 = vadd.f32 %v4091, %v4179
  %4181 = vmatmul.f32.gmra.mxu0 %v4005
  %v4182 = vpop.f32.mrf.mxu0
  %v4183 = vadd.f32 %v4094, %v4182
  %4184 = vmatmul.f32.gmra.mxu0 %v4008
  %v4185 = vpop.f32.mrf.mxu0
  %v4186 = vadd.f32 %v4097, %v4185
  %4187 = vmatmul.f32.gmra.mxu0 %v4011
  %v4188 = vpop.f32.mrf.mxu0
  %v4189 = vadd.f32 %v4100, %v4188
  %4190 = vmatmul.f32.gmra.mxu0 %v4014
  %v4191 = vpop.f32.mrf.mxu0
  %v4192 = vadd.f32 %v4103, %v4191
  %4193 = vmatmul.f32.gmra.mxu0 %v4017
  %v4194 = vpop.f32.mrf.mxu0
  %v4195 = vadd.f32 %v4106, %v4194
  %4196 = vmatmul.f32.gmra.mxu0 %v4020
  %v4197 = vpop.f32.mrf.mxu0
  %v4198 = vadd.f32 %v4109, %v4197
  %4199 = vmatmul.f32.gmra.mxu0 %v4023
  %v4200 = vpop.f32.mrf.mxu0
  %v4201 = vadd.f32 %v4112, %v4200
  %4202 = vmatmul.f32.gmra.mxu0 %v4026
  %v4203 = vpop.f32.mrf.mxu0
  %v4204 = vadd.f32 %v4115, %v4203
  %4205 = vmatmul.f32.gmra.mxu0 %v4029
  %v4206 = vpop.f32.mrf.mxu0
  %v4207 = vadd.f32 %v4118, %v4206
  %4208 = vmatmul.f32.gmra.mxu0 %v4032
  %v4209 = vpop.f32.mrf.mxu0
  %v4210 = vadd.f32 %v4121, %v4209
  %4211 = vmatmul.f32.gmra.mxu0 %v4035
  %v4212 = vpop.f32.mrf.mxu0
  %v4213 = vadd.f32 %v4124, %v4212
  %4214 = vdwg.mxu0
  %4215 = vmatpush.msra.mxu0 %v3766
  %4216 = vmatpush.msra.mxu0 %v3758
  %4217 = vmatpush.msra.mxu0 %v3756
  %4218 = vmatpush.msra.mxu0 %v3754
  %4219 = vmatpush.msra.mxu0 %v1682
  %4220 = vmatpush.msra.mxu0 %v1679
  %4221 = vmatpush.msra.mxu0 %v1676
  %4222 = vmatpush.msra.mxu0 %v1673
  %4223 = vmatpush.msra.mxu0 %v1670
  %4224 = vmatpush.msra.mxu0 %v1667
  %4225 = vmatpush.msra.mxu0 %v1664
  %4226 = vmatpush.msra.mxu0 %v1661
  %4227 = vmatpush.msra.mxu0 %v1658
  %4228 = vmatpush.msra.mxu0 %v1655
  %4229 = vmatpush.msra.mxu0 %v1652
  %4230 = vmatpush.msra.mxu0 %v1649
  %4231 = vmatmul.f32.gmra.mxu0 %v3772
  %v4232 = vpop.f32.mrf.mxu0
  %v4233 = vadd.f32 %v3848, %v4232
  %4234 = vmatmul.f32.gmra.mxu0 %v3774
  %v4235 = vpop.f32.mrf.mxu0
  %v4236 = vadd.f32 %v3853, %v4235
  %4237 = vmatmul.f32.gmra.mxu0 %v3776
  %v4238 = vpop.f32.mrf.mxu0
  %v4239 = vadd.f32 %v3858, %v4238
  %4240 = vmatmul.f32.gmra.mxu0 %v3778
  %v4241 = vpop.f32.mrf.mxu0
  %v4242 = vadd.f32 %v3863, %v4241
  %4243 = vmatmul.f32.gmra.mxu0 %v3780
  %v4244 = vpop.f32.mrf.mxu0
  %v4245 = vadd.f32 %v3868, %v4244
  %4246 = vmatmul.f32.gmra.mxu0 %v3782
  %v4247 = vpop.f32.mrf.mxu0
  %v4248 = vadd.f32 %v3873, %v4247
  %4249 = vmatmul.f32.gmra.mxu0 %v3784
  %v4250 = vpop.f32.mrf.mxu0
  %v4251 = vadd.f32 %v3878, %v4250
  %4252 = vmatmul.f32.gmra.mxu0 %v3786
  %v4253 = vpop.f32.mrf.mxu0
  %v4254 = vadd.f32 %v3883, %v4253
  %4255 = vmatmul.f32.gmra.mxu0 %v3788
  %v4256 = vpop.f32.mrf.mxu0
  %v4257 = vadd.f32 %v3888, %v4256
  %4258 = vmatmul.f32.gmra.mxu0 %v3790
  %v4259 = vpop.f32.mrf.mxu0
  %v4260 = vadd.f32 %v3893, %v4259
  %4261 = vmatmul.f32.gmra.mxu0 %v3792
  %v4262 = vpop.f32.mrf.mxu0
  %v4263 = vadd.f32 %v3898, %v4262
  %4264 = vmatmul.f32.gmra.mxu0 %v3794
  %v4265 = vpop.f32.mrf.mxu0
  %v4266 = vadd.f32 %v3903, %v4265
  %4267 = vmatmul.f32.gmra.mxu0 %v3796
  %v4268 = vpop.f32.mrf.mxu0
  %v4269 = vadd.f32 %v3908, %v4268
  %4270 = vmatmul.f32.gmra.mxu0 %v3798
  %v4271 = vpop.f32.mrf.mxu0
  %v4272 = vadd.f32 %v3913, %v4271
  %4273 = vmatmul.f32.gmra.mxu0 %v3800
  %v4274 = vpop.f32.mrf.mxu0
  %v4275 = vadd.f32 %v3918, %v4274
  %4276 = vmatmul.f32.gmra.mxu0 %v3802
  %v4277 = vpop.f32.mrf.mxu0
  %v4278 = vadd.f32 %v3923, %v4277
  %4279 = vmatmul.f32.gmra.mxu0 %v3804
  %v4280 = vpop.f32.mrf.mxu0
  %v4281 = vadd.f32 %v3928, %v4280
  %4282 = vmatmul.f32.gmra.mxu0 %v3806
  %v4283 = vpop.f32.mrf.mxu0
  %v4284 = vadd.f32 %v3933, %v4283
  %4285 = vmatmul.f32.gmra.mxu0 %v3808
  %v4286 = vpop.f32.mrf.mxu0
  %v4287 = vadd.f32 %v3938, %v4286
  %4288 = vmatmul.f32.gmra.mxu0 %v3810
  %v4289 = vpop.f32.mrf.mxu0
  %v4290 = vadd.f32 %v3943, %v4289
  %4291 = vmatmul.f32.gmra.mxu0 %v3812
  %v4292 = vpop.f32.mrf.mxu0
  %v4293 = vadd.f32 %v3948, %v4292
  %4294 = vmatmul.f32.gmra.mxu0 %v3814
  %v4295 = vpop.f32.mrf.mxu0
  %v4296 = vadd.f32 %v3953, %v4295
  %4297 = vmatmul.f32.gmra.mxu0 %v3816
  %v4298 = vpop.f32.mrf.mxu0
  %v4299 = vadd.f32 %v3958, %v4298
  %4300 = vmatmul.f32.gmra.mxu0 %v3818
  %v4301 = vpop.f32.mrf.mxu0
  %v4302 = vadd.f32 %v3963, %v4301
  %4303 = vdwg.mxu0
  %4304 = vmatpush.msra.mxu0 0.0
  %4305 = vmatpush.msra.mxu0 0.0
  %4306 = vmatpush.msra.mxu0 0.0
  %4307 = vmatpush.msra.mxu0 0.0
  %4308 = vmatpush.msra.mxu0 0.0
  %4309 = vmatpush.msra.mxu0 0.0
  %4310 = vmatpush.msra.mxu0 0.0
  %4311 = vmatpush.msra.mxu0 0.0
  %4312 = vmatpush.msra.mxu0 %v99
  %4313 = vmatpush.msra.mxu0 %v97
  %4314 = vmatpush.msra.mxu0 %v95
  %4315 = vmatpush.msra.mxu0 %v93
  %4316 = vmatpush.msra.mxu0 %v91
  %4317 = vmatpush.msra.mxu0 %v89
  %4318 = vmatpush.msra.mxu0 %v3770
  %4319 = vmatpush.msra.mxu0 %v3768
  %4320 = vmatmul.f32.gmra.mxu0 %v3966
  %v4321 = vpop.f32.mrf.mxu0
  %v4322 = vadd.f32 %v4233, %v4321
  %4323 = vmatmul.f32.gmra.mxu0 %v3969
  %v4324 = vpop.f32.mrf.mxu0
  %v4325 = vadd.f32 %v4236, %v4324
  %4326 = vmatmul.f32.gmra.mxu0 %v3972
  %v4327 = vpop.f32.mrf.mxu0
  %v4328 = vadd.f32 %v4239, %v4327
  %4329 = vmatmul.f32.gmra.mxu0 %v3975
  %v4330 = vpop.f32.mrf.mxu0
  %v4331 = vadd.f32 %v4242, %v4330
  %4332 = vmatmul.f32.gmra.mxu0 %v3978
  %v4333 = vpop.f32.mrf.mxu0
  %v4334 = vadd.f32 %v4245, %v4333
  %4335 = vmatmul.f32.gmra.mxu0 %v3981
  %v4336 = vpop.f32.mrf.mxu0
  %v4337 = vadd.f32 %v4248, %v4336
  %4338 = vmatmul.f32.gmra.mxu0 %v3984
  %v4339 = vpop.f32.mrf.mxu0
  %v4340 = vadd.f32 %v4251, %v4339
  %4341 = vmatmul.f32.gmra.mxu0 %v3987
  %v4342 = vpop.f32.mrf.mxu0
  %v4343 = vadd.f32 %v4254, %v4342
  %4344 = vmatmul.f32.gmra.mxu0 %v3990
  %v4345 = vpop.f32.mrf.mxu0
  %v4346 = vadd.f32 %v4257, %v4345
  %4347 = vmatmul.f32.gmra.mxu0 %v3993
  %v4348 = vpop.f32.mrf.mxu0
  %v4349 = vadd.f32 %v4260, %v4348
  %4350 = vmatmul.f32.gmra.mxu0 %v3996
  %v4351 = vpop.f32.mrf.mxu0
  %v4352 = vadd.f32 %v4263, %v4351
  %4353 = vmatmul.f32.gmra.mxu0 %v3999
  %v4354 = vpop.f32.mrf.mxu0
  %v4355 = vadd.f32 %v4266, %v4354
  %4356 = vmatmul.f32.gmra.mxu0 %v4002
  %v4357 = vpop.f32.mrf.mxu0
  %v4358 = vadd.f32 %v4269, %v4357
  %4359 = vmatmul.f32.gmra.mxu0 %v4005
  %v4360 = vpop.f32.mrf.mxu0
  %v4361 = vadd.f32 %v4272, %v4360
  %4362 = vmatmul.f32.gmra.mxu0 %v4008
  %v4363 = vpop.f32.mrf.mxu0
  %v4364 = vadd.f32 %v4275, %v4363
  %4365 = vmatmul.f32.gmra.mxu0 %v4011
  %v4366 = vpop.f32.mrf.mxu0
  %v4367 = vadd.f32 %v4278, %v4366
  %4368 = vmatmul.f32.gmra.mxu0 %v4014
  %v4369 = vpop.f32.mrf.mxu0
  %v4370 = vadd.f32 %v4281, %v4369
  %4371 = vmatmul.f32.gmra.mxu0 %v4017
  %v4372 = vpop.f32.mrf.mxu0
  %v4373 = vadd.f32 %v4284, %v4372
  %4374 = vmatmul.f32.gmra.mxu0 %v4020
  %v4375 = vpop.f32.mrf.mxu0
  %v4376 = vadd.f32 %v4287, %v4375
  %4377 = vmatmul.f32.gmra.mxu0 %v4023
  %v4378 = vpop.f32.mrf.mxu0
  %v4379 = vadd.f32 %v4290, %v4378
  %4380 = vmatmul.f32.gmra.mxu0 %v4026
  %v4381 = vpop.f32.mrf.mxu0
  %v4382 = vadd.f32 %v4293, %v4381
  %4383 = vmatmul.f32.gmra.mxu0 %v4029
  %v4384 = vpop.f32.mrf.mxu0
  %v4385 = vadd.f32 %v4296, %v4384
  %4386 = vmatmul.f32.gmra.mxu0 %v4032
  %v4387 = vpop.f32.mrf.mxu0
  %v4388 = vadd.f32 %v4299, %v4387
  %4389 = vmatmul.f32.gmra.mxu0 %v4035
  %v4390 = vpop.f32.mrf.mxu0
  %v4391 = vadd.f32 %v4302, %v4390
  %4392 = vdwg.mxu0
  %v4393 = vmax.f32 %v4144, 0.0
  %v4394 = vmax.f32 %v4322, 0.0
  %v4395 = vmax.f32 %v4147, 0.0
  %v4396 = vmax.f32 %v4325, 0.0
  %v4397 = vmax.f32 %v4150, 0.0
  %v4398 = vmax.f32 %v4328, 0.0
  %v4399 = vmax.f32 %v4153, 0.0
  %v4400 = vmax.f32 %v4331, 0.0
  %v4401 = vmax.f32 %v4156, 0.0
  %v4402 = vmax.f32 %v4334, 0.0
  %v4403 = vmax.f32 %v4159, 0.0
  %v4404 = vmax.f32 %v4337, 0.0
  %v4405 = vmax.f32 %v4162, 0.0
  %v4406 = vmax.f32 %v4340, 0.0
  %v4407 = vmax.f32 %v4165, 0.0
  %v4408 = vmax.f32 %v4343, 0.0
  %v4409 = vmax.f32 %v4168, 0.0
  %v4410 = vmax.f32 %v4346, 0.0
  %v4411 = vmax.f32 %v4171, 0.0
  %v4412 = vmax.f32 %v4349, 0.0
  %v4413 = vmax.f32 %v4174, 0.0
  %v4414 = vmax.f32 %v4352, 0.0
  %v4415 = vmax.f32 %v4177, 0.0
  %v4416 = vmax.f32 %v4355, 0.0
  %v4417 = vmax.f32 %v4180, 0.0
  %v4418 = vmax.f32 %v4358, 0.0
  %v4419 = vmax.f32 %v4183, 0.0
  %v4420 = vmax.f32 %v4361, 0.0
  %v4421 = vmax.f32 %v4186, 0.0
  %v4422 = vmax.f32 %v4364, 0.0
  %v4423 = vmax.f32 %v4189, 0.0
  %v4424 = vmax.f32 %v4367, 0.0
  %v4425 = vmax.f32 %v4192, 0.0
  %v4426 = vmax.f32 %v4370, 0.0
  %v4427 = vmax.f32 %v4195, 0.0
  %v4428 = vmax.f32 %v4373, 0.0
  %v4429 = vmax.f32 %v4198, 0.0
  %v4430 = vmax.f32 %v4376, 0.0
  %v4431 = vmax.f32 %v4201, 0.0
  %v4432 = vmax.f32 %v4379, 0.0
  %v4433 = vmax.f32 %v4204, 0.0
  %v4434 = vmax.f32 %v4382, 0.0
  %v4435 = vmax.f32 %v4207, 0.0
  %v4436 = vmax.f32 %v4385, 0.0
  %v4437 = vmax.f32 %v4210, 0.0
  %v4438 = vmax.f32 %v4388, 0.0
  %v4439 = vmax.f32 %v4213, 0.0
  %v4440 = vmax.f32 %v4391, 0.0
  %s4441 = scalar_lea.vmem %s10, 192
  %v4442 = vld [vmem:[%s4441] sm:$0xff]
  %v4443 = vld [vmem:[%s4441 + $0x8] sm:$0xff]
  %v4444 = vld [vmem:[%s4441 + $0x10] sm:$0xff]
  %v4445 = vld [vmem:[%s4441 + $0x18] sm:$0xff]
  %v4446 = vld [vmem:[%s4441 + $0x20] sm:$0xff]
  %v4447 = vld [vmem:[%s4441 + $0x28] sm:$0xff]
  %v4448 = vld [vmem:[%s4441 + $0x30] sm:$0xff]
  %v4449 = vld [vmem:[%s4441 + $0x38] sm:$0xff]
  %v4450 = vld [vmem:[%s4441 + $0x40] sm:$0xff]
  %v4451 = vld [vmem:[%s4441 + $0x48] sm:$0xff]
  %v4452 = vld [vmem:[%s4441 + $0x50] sm:$0xff]
  %v4453 = vld [vmem:[%s4441 + $0x58] sm:$0xff]
  %v4454 = vld [vmem:[%s4441 + $0x60] sm:$0xff]
  %v4455 = vld [vmem:[%s4441 + $0x68] sm:$0xff]
  %v4456 = vld [vmem:[%s4441 + $0x70] sm:$0xff]
  %v4457 = vld [vmem:[%s4441 + $0x78] sm:$0xff]
  %v4458 = vld [vmem:[%s4441 + $0x80] sm:$0xff]
  %v4459 = vld [vmem:[%s4441 + $0x88] sm:$0xff]
  %v4460 = vld [vmem:[%s4441 + $0x90] sm:$0xff]
  %v4461 = vld [vmem:[%s4441 + $0x98] sm:$0xff]
  %v4462 = vld [vmem:[%s4441 + $0xa0] sm:$0xff]
  %v4463 = vld [vmem:[%s4441 + $0xa8] sm:$0xff]
  %v4464 = vld [vmem:[%s4441 + $0xb0] sm:$0xff]
  %v4465 = vld [vmem:[%s4441 + $0xb8] sm:$0xff]
  %s4466 = scalar_lea.vmem %s11, 96
  %v4467 = vld [vmem:[%s4466] sm:$0xff]
  %v4468 = vld [vmem:[%s4466 + $0x8] sm:$0xff]
  %v4469 = vld [vmem:[%s4466 + $0x10] sm:$0xff]
  %v4470 = vld [vmem:[%s4466 + $0x18] sm:$0xff]
  %v4471 = vld [vmem:[%s4466 + $0x20] sm:$0xff]
  %v4472 = vld [vmem:[%s4466 + $0x28] sm:$0xff]
  %v4473 = vld [vmem:[%s4466 + $0x30] sm:$0xff]
  %v4474 = vld [vmem:[%s4466 + $0x38] sm:$0xff]
  %v4475 = vld [vmem:[%s4466 + $0x40] sm:$0xff]
  %v4476 = vld [vmem:[%s4466 + $0x48] sm:$0xff]
  %v4477 = vld [vmem:[%s4466 + $0x50] sm:$0xff]
  %v4478 = vld [vmem:[%s4466 + $0x58] sm:$0xff]
  %4480 = vset.pattern.permute.xlu0 0
  %4481 = vperm.xlu0 %4480, %v4467
  %v4482 = vpop.permute.xlu0 %4481
  %4485 = vset.pattern.permute.xlu0 0
  %4486 = vperm.xlu0 %4485, %v4468
  %v4487 = vpop.permute.xlu0 %4486
  %4490 = vset.pattern.permute.xlu0 0
  %4491 = vperm.xlu0 %4490, %v4469
  %v4492 = vpop.permute.xlu0 %4491
  %4495 = vset.pattern.permute.xlu0 0
  %4496 = vperm.xlu0 %4495, %v4470
  %v4497 = vpop.permute.xlu0 %4496
  %4500 = vset.pattern.permute.xlu0 0
  %4501 = vperm.xlu0 %4500, %v4471
  %v4502 = vpop.permute.xlu0 %4501
  %4505 = vset.pattern.permute.xlu0 0
  %4506 = vperm.xlu0 %4505, %v4472
  %v4507 = vpop.permute.xlu0 %4506
  %4510 = vset.pattern.permute.xlu0 0
  %4511 = vperm.xlu0 %4510, %v4473
  %v4512 = vpop.permute.xlu0 %4511
  %4515 = vset.pattern.permute.xlu0 0
  %4516 = vperm.xlu0 %4515, %v4474
  %v4517 = vpop.permute.xlu0 %4516
  %4520 = vset.pattern.permute.xlu0 0
  %4521 = vperm.xlu0 %4520, %v4475
  %v4522 = vpop.permute.xlu0 %4521
  %4525 = vset.pattern.permute.xlu0 0
  %4526 = vperm.xlu0 %4525, %v4476
  %v4527 = vpop.permute.xlu0 %4526
  %4530 = vset.pattern.permute.xlu0 0
  %4531 = vperm.xlu0 %4530, %v4477
  %v4532 = vpop.permute.xlu0 %4531
  %4535 = vset.pattern.permute.xlu0 0
  %4536 = vperm.xlu0 %4535, %v4478
  %v4537 = vpop.permute.xlu0 %4536
  %v4540 = vsel %vm863, %v4443, 0
  %v4543 = vsel %vm863, %v4445, 0
  %v4546 = vsel %vm863, %v4447, 0
  %v4549 = vsel %vm863, %v4449, 0
  %v4552 = vsel %vm863, %v4451, 0
  %v4555 = vsel %vm863, %v4453, 0
  %v4558 = vsel %vm863, %v4455, 0
  %v4561 = vsel %vm863, %v4457, 0
  %v4564 = vsel %vm863, %v4459, 0
  %v4567 = vsel %vm863, %v4461, 0
  %v4570 = vsel %vm863, %v4463, 0
  %v4573 = vsel %vm863, %v4465, 0
  %4575 = vmatpush.msra.mxu0 %v4423
  %4576 = vmatpush.msra.mxu0 %v4421
  %4577 = vmatpush.msra.mxu0 %v4419
  %4578 = vmatpush.msra.mxu0 %v4417
  %4579 = vmatpush.msra.mxu0 %v4415
  %4580 = vmatpush.msra.mxu0 %v4413
  %4581 = vmatpush.msra.mxu0 %v4411
  %4582 = vmatpush.msra.mxu0 %v4409
  %4583 = vmatpush.msra.mxu0 %v4407
  %4584 = vmatpush.msra.mxu0 %v4405
  %4585 = vmatpush.msra.mxu0 %v4403
  %4586 = vmatpush.msra.mxu0 %v4401
  %4587 = vmatpush.msra.mxu0 %v4399
  %4588 = vmatpush.msra.mxu0 %v4397
  %4589 = vmatpush.msra.mxu0 %v4395
  %4590 = vmatpush.msra.mxu0 %v4393
  %4591 = vmatmul.f32.gmra.mxu0 %v4442
  %v4592 = vpop.f32.mrf.mxu0
  %v4593 = vadd.f32 %v4482, %v4592
  %4594 = vmatmul.f32.gmra.mxu0 %v4444
  %v4595 = vpop.f32.mrf.mxu0
  %v4596 = vadd.f32 %v4487, %v4595
  %4597 = vmatmul.f32.gmra.mxu0 %v4446
  %v4598 = vpop.f32.mrf.mxu0
  %v4599 = vadd.f32 %v4492, %v4598
  %4600 = vmatmul.f32.gmra.mxu0 %v4448
  %v4601 = vpop.f32.mrf.mxu0
  %v4602 = vadd.f32 %v4497, %v4601
  %4603 = vmatmul.f32.gmra.mxu0 %v4450
  %v4604 = vpop.f32.mrf.mxu0
  %v4605 = vadd.f32 %v4502, %v4604
  %4606 = vmatmul.f32.gmra.mxu0 %v4452
  %v4607 = vpop.f32.mrf.mxu0
  %v4608 = vadd.f32 %v4507, %v4607
  %4609 = vmatmul.f32.gmra.mxu0 %v4454
  %v4610 = vpop.f32.mrf.mxu0
  %v4611 = vadd.f32 %v4512, %v4610
  %4612 = vmatmul.f32.gmra.mxu0 %v4456
  %v4613 = vpop.f32.mrf.mxu0
  %v4614 = vadd.f32 %v4517, %v4613
  %4615 = vmatmul.f32.gmra.mxu0 %v4458
  %v4616 = vpop.f32.mrf.mxu0
  %v4617 = vadd.f32 %v4522, %v4616
  %4618 = vmatmul.f32.gmra.mxu0 %v4460
  %v4619 = vpop.f32.mrf.mxu0
  %v4620 = vadd.f32 %v4527, %v4619
  %4621 = vmatmul.f32.gmra.mxu0 %v4462
  %v4622 = vpop.f32.mrf.mxu0
  %v4623 = vadd.f32 %v4532, %v4622
  %4624 = vmatmul.f32.gmra.mxu0 %v4464
  %v4625 = vpop.f32.mrf.mxu0
  %v4626 = vadd.f32 %v4537, %v4625
  %4627 = vdwg.mxu0
  %4628 = vmatpush.msra.mxu0 0.0
  %4629 = vmatpush.msra.mxu0 0.0
  %4630 = vmatpush.msra.mxu0 0.0
  %4631 = vmatpush.msra.mxu0 0.0
  %4632 = vmatpush.msra.mxu0 0.0
  %4633 = vmatpush.msra.mxu0 0.0
  %4634 = vmatpush.msra.mxu0 0.0
  %4635 = vmatpush.msra.mxu0 0.0
  %4636 = vmatpush.msra.mxu0 %v4439
  %4637 = vmatpush.msra.mxu0 %v4437
  %4638 = vmatpush.msra.mxu0 %v4435
  %4639 = vmatpush.msra.mxu0 %v4433
  %4640 = vmatpush.msra.mxu0 %v4431
  %4641 = vmatpush.msra.mxu0 %v4429
  %4642 = vmatpush.msra.mxu0 %v4427
  %4643 = vmatpush.msra.mxu0 %v4425
  %4644 = vmatmul.f32.gmra.mxu0 %v4540
  %v4645 = vpop.f32.mrf.mxu0
  %v4646 = vadd.f32 %v4593, %v4645
  %4647 = vmatmul.f32.gmra.mxu0 %v4543
  %v4648 = vpop.f32.mrf.mxu0
  %v4649 = vadd.f32 %v4596, %v4648
  %4650 = vmatmul.f32.gmra.mxu0 %v4546
  %v4651 = vpop.f32.mrf.mxu0
  %v4652 = vadd.f32 %v4599, %v4651
  %4653 = vmatmul.f32.gmra.mxu0 %v4549
  %v4654 = vpop.f32.mrf.mxu0
  %v4655 = vadd.f32 %v4602, %v4654
  %4656 = vmatmul.f32.gmra.mxu0 %v4552
  %v4657 = vpop.f32.mrf.mxu0
  %v4658 = vadd.f32 %v4605, %v4657
  %4659 = vmatmul.f32.gmra.mxu0 %v4555
  %v4660 = vpop.f32.mrf.mxu0
  %v4661 = vadd.f32 %v4608, %v4660
  %4662 = vmatmul.f32.gmra.mxu0 %v4558
  %v4663 = vpop.f32.mrf.mxu0
  %v4664 = vadd.f32 %v4611, %v4663
  %4665 = vmatmul.f32.gmra.mxu0 %v4561
  %v4666 = vpop.f32.mrf.mxu0
  %v4667 = vadd.f32 %v4614, %v4666
  %4668 = vmatmul.f32.gmra.mxu0 %v4564
  %v4669 = vpop.f32.mrf.mxu0
  %v4670 = vadd.f32 %v4617, %v4669
  %4671 = vmatmul.f32.gmra.mxu0 %v4567
  %v4672 = vpop.f32.mrf.mxu0
  %v4673 = vadd.f32 %v4620, %v4672
  %4674 = vmatmul.f32.gmra.mxu0 %v4570
  %v4675 = vpop.f32.mrf.mxu0
  %v4676 = vadd.f32 %v4623, %v4675
  %4677 = vmatmul.f32.gmra.mxu0 %v4573
  %v4678 = vpop.f32.mrf.mxu0
  %v4679 = vadd.f32 %v4626, %v4678
  %4680 = vdwg.mxu0
  %4681 = vmatpush.msra.mxu0 %v4424
  %4682 = vmatpush.msra.mxu0 %v4422
  %4683 = vmatpush.msra.mxu0 %v4420
  %4684 = vmatpush.msra.mxu0 %v4418
  %4685 = vmatpush.msra.mxu0 %v4416
  %4686 = vmatpush.msra.mxu0 %v4414
  %4687 = vmatpush.msra.mxu0 %v4412
  %4688 = vmatpush.msra.mxu0 %v4410
  %4689 = vmatpush.msra.mxu0 %v4408
  %4690 = vmatpush.msra.mxu0 %v4406
  %4691 = vmatpush.msra.mxu0 %v4404
  %4692 = vmatpush.msra.mxu0 %v4402
  %4693 = vmatpush.msra.mxu0 %v4400
  %4694 = vmatpush.msra.mxu0 %v4398
  %4695 = vmatpush.msra.mxu0 %v4396
  %4696 = vmatpush.msra.mxu0 %v4394
  %4697 = vmatmul.f32.gmra.mxu0 %v4442
  %v4698 = vpop.f32.mrf.mxu0
  %v4699 = vadd.f32 %v4482, %v4698
  %4700 = vmatmul.f32.gmra.mxu0 %v4444
  %v4701 = vpop.f32.mrf.mxu0
  %v4702 = vadd.f32 %v4487, %v4701
  %4703 = vmatmul.f32.gmra.mxu0 %v4446
  %v4704 = vpop.f32.mrf.mxu0
  %v4705 = vadd.f32 %v4492, %v4704
  %4706 = vmatmul.f32.gmra.mxu0 %v4448
  %v4707 = vpop.f32.mrf.mxu0
  %v4708 = vadd.f32 %v4497, %v4707
  %4709 = vmatmul.f32.gmra.mxu0 %v4450
  %v4710 = vpop.f32.mrf.mxu0
  %v4711 = vadd.f32 %v4502, %v4710
  %4712 = vmatmul.f32.gmra.mxu0 %v4452
  %v4713 = vpop.f32.mrf.mxu0
  %v4714 = vadd.f32 %v4507, %v4713
  %4715 = vmatmul.f32.gmra.mxu0 %v4454
  %v4716 = vpop.f32.mrf.mxu0
  %v4717 = vadd.f32 %v4512, %v4716
  %4718 = vmatmul.f32.gmra.mxu0 %v4456
  %v4719 = vpop.f32.mrf.mxu0
  %v4720 = vadd.f32 %v4517, %v4719
  %4721 = vmatmul.f32.gmra.mxu0 %v4458
  %v4722 = vpop.f32.mrf.mxu0
  %v4723 = vadd.f32 %v4522, %v4722
  %4724 = vmatmul.f32.gmra.mxu0 %v4460
  %v4725 = vpop.f32.mrf.mxu0
  %v4726 = vadd.f32 %v4527, %v4725
  %4727 = vmatmul.f32.gmra.mxu0 %v4462
  %v4728 = vpop.f32.mrf.mxu0
  %v4729 = vadd.f32 %v4532, %v4728
  %4730 = vmatmul.f32.gmra.mxu0 %v4464
  %v4731 = vpop.f32.mrf.mxu0
  %v4732 = vadd.f32 %v4537, %v4731
  %4733 = vdwg.mxu0
  %4734 = vmatpush.msra.mxu0 0.0
  %4735 = vmatpush.msra.mxu0 0.0
  %4736 = vmatpush.msra.mxu0 0.0
  %4737 = vmatpush.msra.mxu0 0.0
  %4738 = vmatpush.msra.mxu0 0.0
  %4739 = vmatpush.msra.mxu0 0.0
  %4740 = vmatpush.msra.mxu0 0.0
  %4741 = vmatpush.msra.mxu0 0.0
  %4742 = vmatpush.msra.mxu0 %v4440
  %4743 = vmatpush.msra.mxu0 %v4438
  %4744 = vmatpush.msra.mxu0 %v4436
  %4745 = vmatpush.msra.mxu0 %v4434
  %4746 = vmatpush.msra.mxu0 %v4432
  %4747 = vmatpush.msra.mxu0 %v4430
  %4748 = vmatpush.msra.mxu0 %v4428
  %4749 = vmatpush.msra.mxu0 %v4426
  %4750 = vmatmul.f32.gmra.mxu0 %v4540
  %v4751 = vpop.f32.mrf.mxu0
  %v4752 = vadd.f32 %v4699, %v4751
  %4753 = vmatmul.f32.gmra.mxu0 %v4543
  %v4754 = vpop.f32.mrf.mxu0
  %v4755 = vadd.f32 %v4702, %v4754
  %4756 = vmatmul.f32.gmra.mxu0 %v4546
  %v4757 = vpop.f32.mrf.mxu0
  %v4758 = vadd.f32 %v4705, %v4757
  %4759 = vmatmul.f32.gmra.mxu0 %v4549
  %v4760 = vpop.f32.mrf.mxu0
  %v4761 = vadd.f32 %v4708, %v4760
  %4762 = vmatmul.f32.gmra.mxu0 %v4552
  %v4763 = vpop.f32.mrf.mxu0
  %v4764 = vadd.f32 %v4711, %v4763
  %4765 = vmatmul.f32.gmra.mxu0 %v4555
  %v4766 = vpop.f32.mrf.mxu0
  %v4767 = vadd.f32 %v4714, %v4766
  %4768 = vmatmul.f32.gmra.mxu0 %v4558
  %v4769 = vpop.f32.mrf.mxu0
  %v4770 = vadd.f32 %v4717, %v4769
  %4771 = vmatmul.f32.gmra.mxu0 %v4561
  %v4772 = vpop.f32.mrf.mxu0
  %v4773 = vadd.f32 %v4720, %v4772
  %4774 = vmatmul.f32.gmra.mxu0 %v4564
  %v4775 = vpop.f32.mrf.mxu0
  %v4776 = vadd.f32 %v4723, %v4775
  %4777 = vmatmul.f32.gmra.mxu0 %v4567
  %v4778 = vpop.f32.mrf.mxu0
  %v4779 = vadd.f32 %v4726, %v4778
  %4780 = vmatmul.f32.gmra.mxu0 %v4570
  %v4781 = vpop.f32.mrf.mxu0
  %v4782 = vadd.f32 %v4729, %v4781
  %4783 = vmatmul.f32.gmra.mxu0 %v4573
  %v4784 = vpop.f32.mrf.mxu0
  %v4785 = vadd.f32 %v4732, %v4784
  %4786 = vdwg.mxu0
  %v4787 = vmul.f32 %v4646, %v267
  %v4788 = vmul.f32 %v4752, %v268
  %v4789 = vmul.f32 %v4649, %v270
  %v4790 = vmul.f32 %v4755, %v271
  %v4791 = vmul.f32 %v4652, %v273
  %v4792 = vmul.f32 %v4758, %v274
  %v4793 = vmul.f32 %v4664, %v267
  %v4794 = vmul.f32 %v4770, %v268
  %v4795 = vmul.f32 %v4667, %v270
  %v4796 = vmul.f32 %v4773, %v271
  %v4797 = vmul.f32 %v4670, %v273
  %v4798 = vmul.f32 %v4776, %v274
  %4799 = vmatpush.msra.mxu0 %v144
  %4800 = vmatpush.msra.mxu0 %v142
  %4801 = vmatpush.msra.mxu0 %v140
  %4802 = vmatpush.msra.mxu0 %v138
  %4803 = vmatpush.msra.mxu0 %v136
  %4804 = vmatpush.msra.mxu0 %v134
  %4805 = vmatpush.msra.mxu0 %v132
  %4806 = vmatpush.msra.mxu0 %v130
  %4807 = vmatpush.msra.mxu0 %v128
  %4808 = vmatpush.msra.mxu0 %v126
  %4809 = vmatpush.msra.mxu0 %v124
  %4810 = vmatpush.msra.mxu0 %v122
  %4811 = vmatpush.msra.mxu0 %v120
  %4812 = vmatpush.msra.mxu0 %v118
  %4813 = vmatpush.msra.mxu0 %v116
  %4814 = vmatpush.msra.mxu0 %v114
  %4815 = vmatmul.f32.gmra.mxu0 %v4787
  %v4816 = vpop.f32.mrf.mxu0
  %v4817 = vadd.f32 0.0, %v4816
  %4818 = vmatmul.f32.gmra.mxu0 %v4789
  %v4819 = vpop.f32.mrf.mxu0
  %v4820 = vadd.f32 0.0, %v4819
  %4821 = vmatmul.f32.gmra.mxu0 %v4791
  %v4822 = vpop.f32.mrf.mxu0
  %v4823 = vadd.f32 0.0, %v4822
  %4824 = vmatmul.f32.gmra.mxu0 %v4793
  %v4825 = vpop.f32.mrf.mxu0
  %v4826 = vadd.f32 0.0, %v4825
  %4827 = vmatmul.f32.gmra.mxu0 %v4795
  %v4828 = vpop.f32.mrf.mxu0
  %v4829 = vadd.f32 0.0, %v4828
  %4830 = vmatmul.f32.gmra.mxu0 %v4797
  %v4831 = vpop.f32.mrf.mxu0
  %v4832 = vadd.f32 0.0, %v4831
  %4833 = vdwg.mxu0
  %4834 = vmatpush.msra.mxu0 %v176
  %4835 = vmatpush.msra.mxu0 %v174
  %4836 = vmatpush.msra.mxu0 %v172
  %4837 = vmatpush.msra.mxu0 %v170
  %4838 = vmatpush.msra.mxu0 %v168
  %4839 = vmatpush.msra.mxu0 %v166
  %4840 = vmatpush.msra.mxu0 %v164
  %4841 = vmatpush.msra.mxu0 %v162
  %4842 = vmatpush.msra.mxu0 %v160
  %4843 = vmatpush.msra.mxu0 %v158
  %4844 = vmatpush.msra.mxu0 %v156
  %4845 = vmatpush.msra.mxu0 %v154
  %4846 = vmatpush.msra.mxu0 %v152
  %4847 = vmatpush.msra.mxu0 %v150
  %4848 = vmatpush.msra.mxu0 %v148
  %4849 = vmatpush.msra.mxu0 %v146
  %4850 = vmatmul.f32.gmra.mxu0 %v4788
  %v4851 = vpop.f32.mrf.mxu0
  %v4852 = vadd.f32 %v4817, %v4851
  %4853 = vmatmul.f32.gmra.mxu0 %v4790
  %v4854 = vpop.f32.mrf.mxu0
  %v4855 = vadd.f32 %v4820, %v4854
  %4856 = vmatmul.f32.gmra.mxu0 %v4792
  %v4857 = vpop.f32.mrf.mxu0
  %v4858 = vadd.f32 %v4823, %v4857
  %4859 = vmatmul.f32.gmra.mxu0 %v4794
  %v4860 = vpop.f32.mrf.mxu0
  %v4861 = vadd.f32 %v4826, %v4860
  %4862 = vmatmul.f32.gmra.mxu0 %v4796
  %v4863 = vpop.f32.mrf.mxu0
  %v4864 = vadd.f32 %v4829, %v4863
  %4865 = vmatmul.f32.gmra.mxu0 %v4798
  %v4866 = vpop.f32.mrf.mxu0
  %v4867 = vadd.f32 %v4832, %v4866
  %4868 = vdwg.mxu0
  %4869 = vmatpush.msra.mxu0 %v145
  %4870 = vmatpush.msra.mxu0 %v143
  %4871 = vmatpush.msra.mxu0 %v141
  %4872 = vmatpush.msra.mxu0 %v139
  %4873 = vmatpush.msra.mxu0 %v137
  %4874 = vmatpush.msra.mxu0 %v135
  %4875 = vmatpush.msra.mxu0 %v133
  %4876 = vmatpush.msra.mxu0 %v131
  %4877 = vmatpush.msra.mxu0 %v129
  %4878 = vmatpush.msra.mxu0 %v127
  %4879 = vmatpush.msra.mxu0 %v125
  %4880 = vmatpush.msra.mxu0 %v123
  %4881 = vmatpush.msra.mxu0 %v121
  %4882 = vmatpush.msra.mxu0 %v119
  %4883 = vmatpush.msra.mxu0 %v117
  %4884 = vmatpush.msra.mxu0 %v115
  %4885 = vmatmul.f32.gmra.mxu0 %v4787
  %v4886 = vpop.f32.mrf.mxu0
  %v4887 = vadd.f32 0.0, %v4886
  %4888 = vmatmul.f32.gmra.mxu0 %v4789
  %v4889 = vpop.f32.mrf.mxu0
  %v4890 = vadd.f32 0.0, %v4889
  %4891 = vmatmul.f32.gmra.mxu0 %v4791
  %v4892 = vpop.f32.mrf.mxu0
  %v4893 = vadd.f32 0.0, %v4892
  %4894 = vmatmul.f32.gmra.mxu0 %v4793
  %v4895 = vpop.f32.mrf.mxu0
  %v4896 = vadd.f32 0.0, %v4895
  %4897 = vmatmul.f32.gmra.mxu0 %v4795
  %v4898 = vpop.f32.mrf.mxu0
  %v4899 = vadd.f32 0.0, %v4898
  %4900 = vmatmul.f32.gmra.mxu0 %v4797
  %v4901 = vpop.f32.mrf.mxu0
  %v4902 = vadd.f32 0.0, %v4901
  %4903 = vdwg.mxu0
  %4904 = vmatpush.msra.mxu0 %v177
  %4905 = vmatpush.msra.mxu0 %v175
  %4906 = vmatpush.msra.mxu0 %v173
  %4907 = vmatpush.msra.mxu0 %v171
  %4908 = vmatpush.msra.mxu0 %v169
  %4909 = vmatpush.msra.mxu0 %v167
  %4910 = vmatpush.msra.mxu0 %v165
  %4911 = vmatpush.msra.mxu0 %v163
  %4912 = vmatpush.msra.mxu0 %v161
  %4913 = vmatpush.msra.mxu0 %v159
  %4914 = vmatpush.msra.mxu0 %v157
  %4915 = vmatpush.msra.mxu0 %v155
  %4916 = vmatpush.msra.mxu0 %v153
  %4917 = vmatpush.msra.mxu0 %v151
  %4918 = vmatpush.msra.mxu0 %v149
  %4919 = vmatpush.msra.mxu0 %v147
  %4920 = vmatmul.f32.gmra.mxu0 %v4788
  %v4921 = vpop.f32.mrf.mxu0
  %v4922 = vadd.f32 %v4887, %v4921
  %4923 = vmatmul.f32.gmra.mxu0 %v4790
  %v4924 = vpop.f32.mrf.mxu0
  %v4925 = vadd.f32 %v4890, %v4924
  %4926 = vmatmul.f32.gmra.mxu0 %v4792
  %v4927 = vpop.f32.mrf.mxu0
  %v4928 = vadd.f32 %v4893, %v4927
  %4929 = vmatmul.f32.gmra.mxu0 %v4794
  %v4930 = vpop.f32.mrf.mxu0
  %v4931 = vadd.f32 %v4896, %v4930
  %4932 = vmatmul.f32.gmra.mxu0 %v4796
  %v4933 = vpop.f32.mrf.mxu0
  %v4934 = vadd.f32 %v4899, %v4933
  %4935 = vmatmul.f32.gmra.mxu0 %v4798
  %v4936 = vpop.f32.mrf.mxu0
  %v4937 = vadd.f32 %v4902, %v4936
  %4938 = vdwg.mxu0
  %4939 = vmatpush.msra.mxu0 %v208
  %4940 = vmatpush.msra.mxu0 %v206
  %4941 = vmatpush.msra.mxu0 %v204
  %4942 = vmatpush.msra.mxu0 %v202
  %4943 = vmatpush.msra.mxu0 %v200
  %4944 = vmatpush.msra.mxu0 %v198
  %4945 = vmatpush.msra.mxu0 %v196
  %4946 = vmatpush.msra.mxu0 %v194
  %4947 = vmatpush.msra.mxu0 %v192
  %4948 = vmatpush.msra.mxu0 %v190
  %4949 = vmatpush.msra.mxu0 %v188
  %4950 = vmatpush.msra.mxu0 %v186
  %4951 = vmatpush.msra.mxu0 %v184
  %4952 = vmatpush.msra.mxu0 %v182
  %4953 = vmatpush.msra.mxu0 %v180
  %4954 = vmatpush.msra.mxu0 %v178
  %4955 = vmatmul.f32.gmra.mxu0 %v4787
  %v4956 = vpop.f32.mrf.mxu0
  %v4957 = vadd.f32 0.0, %v4956
  %4958 = vmatmul.f32.gmra.mxu0 %v4789
  %v4959 = vpop.f32.mrf.mxu0
  %v4960 = vadd.f32 0.0, %v4959
  %4961 = vmatmul.f32.gmra.mxu0 %v4791
  %v4962 = vpop.f32.mrf.mxu0
  %v4963 = vadd.f32 0.0, %v4962
  %4964 = vmatmul.f32.gmra.mxu0 %v4793
  %v4965 = vpop.f32.mrf.mxu0
  %v4966 = vadd.f32 0.0, %v4965
  %4967 = vmatmul.f32.gmra.mxu0 %v4795
  %v4968 = vpop.f32.mrf.mxu0
  %v4969 = vadd.f32 0.0, %v4968
  %4970 = vmatmul.f32.gmra.mxu0 %v4797
  %v4971 = vpop.f32.mrf.mxu0
  %v4972 = vadd.f32 0.0, %v4971
  %4973 = vdwg.mxu0
  %4974 = vmatpush.msra.mxu0 %v240
  %4975 = vmatpush.msra.mxu0 %v238
  %4976 = vmatpush.msra.mxu0 %v236
  %4977 = vmatpush.msra.mxu0 %v234
  %4978 = vmatpush.msra.mxu0 %v232
  %4979 = vmatpush.msra.mxu0 %v230
  %4980 = vmatpush.msra.mxu0 %v228
  %4981 = vmatpush.msra.mxu0 %v226
  %4982 = vmatpush.msra.mxu0 %v224
  %4983 = vmatpush.msra.mxu0 %v222
  %4984 = vmatpush.msra.mxu0 %v220
  %4985 = vmatpush.msra.mxu0 %v218
  %4986 = vmatpush.msra.mxu0 %v216
  %4987 = vmatpush.msra.mxu0 %v214
  %4988 = vmatpush.msra.mxu0 %v212
  %4989 = vmatpush.msra.mxu0 %v210
  %4990 = vmatmul.f32.gmra.mxu0 %v4788
  %v4991 = vpop.f32.mrf.mxu0
  %v4992 = vadd.f32 %v4957, %v4991
  %4993 = vmatmul.f32.gmra.mxu0 %v4790
  %v4994 = vpop.f32.mrf.mxu0
  %v4995 = vadd.f32 %v4960, %v4994
  %4996 = vmatmul.f32.gmra.mxu0 %v4792
  %v4997 = vpop.f32.mrf.mxu0
  %v4998 = vadd.f32 %v4963, %v4997
  %4999 = vmatmul.f32.gmra.mxu0 %v4794
  %v5000 = vpop.f32.mrf.mxu0
  %v5001 = vadd.f32 %v4966, %v5000
  %5002 = vmatmul.f32.gmra.mxu0 %v4796
  %v5003 = vpop.f32.mrf.mxu0
  %v5004 = vadd.f32 %v4969, %v5003
  %5005 = vmatmul.f32.gmra.mxu0 %v4798
  %v5006 = vpop.f32.mrf.mxu0
  %v5007 = vadd.f32 %v4972, %v5006
  %5008 = vdwg.mxu0
  %5009 = vmatpush.msra.mxu0 %v209
  %5010 = vmatpush.msra.mxu0 %v207
  %5011 = vmatpush.msra.mxu0 %v205
  %5012 = vmatpush.msra.mxu0 %v203
  %5013 = vmatpush.msra.mxu0 %v201
  %5014 = vmatpush.msra.mxu0 %v199
  %5015 = vmatpush.msra.mxu0 %v197
  %5016 = vmatpush.msra.mxu0 %v195
  %5017 = vmatpush.msra.mxu0 %v193
  %5018 = vmatpush.msra.mxu0 %v191
  %5019 = vmatpush.msra.mxu0 %v189
  %5020 = vmatpush.msra.mxu0 %v187
  %5021 = vmatpush.msra.mxu0 %v185
  %5022 = vmatpush.msra.mxu0 %v183
  %5023 = vmatpush.msra.mxu0 %v181
  %5024 = vmatpush.msra.mxu0 %v179
  %5025 = vmatmul.f32.gmra.mxu0 %v4787
  %v5026 = vpop.f32.mrf.mxu0
  %v5027 = vadd.f32 0.0, %v5026
  %5028 = vmatmul.f32.gmra.mxu0 %v4789
  %v5029 = vpop.f32.mrf.mxu0
  %v5030 = vadd.f32 0.0, %v5029
  %5031 = vmatmul.f32.gmra.mxu0 %v4791
  %v5032 = vpop.f32.mrf.mxu0
  %v5033 = vadd.f32 0.0, %v5032
  %5034 = vmatmul.f32.gmra.mxu0 %v4793
  %v5035 = vpop.f32.mrf.mxu0
  %v5036 = vadd.f32 0.0, %v5035
  %5037 = vmatmul.f32.gmra.mxu0 %v4795
  %v5038 = vpop.f32.mrf.mxu0
  %v5039 = vadd.f32 0.0, %v5038
  %5040 = vmatmul.f32.gmra.mxu0 %v4797
  %v5041 = vpop.f32.mrf.mxu0
  %v5042 = vadd.f32 0.0, %v5041
  %5043 = vdwg.mxu0
  %5044 = vmatpush.msra.mxu0 %v241
  %5045 = vmatpush.msra.mxu0 %v239
  %5046 = vmatpush.msra.mxu0 %v237
  %5047 = vmatpush.msra.mxu0 %v235
  %5048 = vmatpush.msra.mxu0 %v233
  %5049 = vmatpush.msra.mxu0 %v231
  %5050 = vmatpush.msra.mxu0 %v229
  %5051 = vmatpush.msra.mxu0 %v227
  %5052 = vmatpush.msra.mxu0 %v225
  %5053 = vmatpush.msra.mxu0 %v223
  %5054 = vmatpush.msra.mxu0 %v221
  %5055 = vmatpush.msra.mxu0 %v219
  %5056 = vmatpush.msra.mxu0 %v217
  %5057 = vmatpush.msra.mxu0 %v215
  %5058 = vmatpush.msra.mxu0 %v213
  %5059 = vmatpush.msra.mxu0 %v211
  %5060 = vmatmul.f32.gmra.mxu0 %v4788
  %v5061 = vpop.f32.mrf.mxu0
  %v5062 = vadd.f32 %v5027, %v5061
  %5063 = vmatmul.f32.gmra.mxu0 %v4790
  %v5064 = vpop.f32.mrf.mxu0
  %v5065 = vadd.f32 %v5030, %v5064
  %5066 = vmatmul.f32.gmra.mxu0 %v4792
  %v5067 = vpop.f32.mrf.mxu0
  %v5068 = vadd.f32 %v5033, %v5067
  %5069 = vmatmul.f32.gmra.mxu0 %v4794
  %v5070 = vpop.f32.mrf.mxu0
  %v5071 = vadd.f32 %v5036, %v5070
  %5072 = vmatmul.f32.gmra.mxu0 %v4796
  %v5073 = vpop.f32.mrf.mxu0
  %v5074 = vadd.f32 %v5039, %v5073
  %5075 = vmatmul.f32.gmra.mxu0 %v4798
  %v5076 = vpop.f32.mrf.mxu0
  %v5077 = vadd.f32 %v5042, %v5076
  %5078 = vdwg.mxu0
  %v5079 = vadd.f32 %v4852, %v5001
  %v5080 = vadd.f32 %v4922, %v5071
  %v5081 = vadd.f32 %v4855, %v5004
  %v5082 = vadd.f32 %v4925, %v5074
  %v5083 = vadd.f32 %v4858, %v5007
  %v5084 = vadd.f32 %v4928, %v5077
  %v5085 = vsub.f32 %v4861, %v4992
  %v5086 = vsub.f32 %v4931, %v5062
  %v5087 = vsub.f32 %v4864, %v4995
  %v5088 = vsub.f32 %v4934, %v5065
  %v5089 = vsub.f32 %v4867, %v4998
  %v5090 = vsub.f32 %v4937, %v5068
  %v5091 = vmul.f32 %v5079, %v100
  %v5092 = vmul.f32 %v5080, %v101
  %v5093 = vmul.f32 %v5081, %v102
  %v5094 = vmul.f32 %v5082, %v103
  %v5095 = vmul.f32 %v5083, %v104
  %v5096 = vmul.f32 %v5084, %v105
  %v5097 = vmul.f32 %v5085, %v106
  %v5098 = vmul.f32 %v5086, %v107
  %v5099 = vmul.f32 %v5087, %v108
  %v5100 = vmul.f32 %v5088, %v109
  %v5101 = vmul.f32 %v5089, %v110
  %v5102 = vmul.f32 %v5090, %v111
  %v5103 = vadd.f32 %v5091, %v5097
  %v5104 = vadd.f32 %v5092, %v5098
  %v5105 = vadd.f32 %v5093, %v5099
  %v5106 = vadd.f32 %v5094, %v5100
  %v5107 = vadd.f32 %v5095, %v5101
  %v5108 = vadd.f32 %v5096, %v5102
  %v5109 = vmul.f32 %v5085, %v100
  %v5110 = vmul.f32 %v5086, %v101
  %v5111 = vmul.f32 %v5087, %v102
  %v5112 = vmul.f32 %v5088, %v103
  %v5113 = vmul.f32 %v5089, %v104
  %v5114 = vmul.f32 %v5090, %v105
  %v5115 = vmul.f32 %v5079, %v106
  %v5116 = vmul.f32 %v5080, %v107
  %v5117 = vmul.f32 %v5081, %v108
  %v5118 = vmul.f32 %v5082, %v109
  %v5119 = vmul.f32 %v5083, %v110
  %v5120 = vmul.f32 %v5084, %v111
  %v5121 = vsub.f32 %v5109, %v5115
  %v5122 = vsub.f32 %v5110, %v5116
  %v5123 = vsub.f32 %v5111, %v5117
  %v5124 = vsub.f32 %v5112, %v5118
  %v5125 = vsub.f32 %v5113, %v5119
  %v5126 = vsub.f32 %v5114, %v5120
  %5127 = vmatpush.msra.mxu0 0.0
  %5128 = vmatpush.msra.mxu0 0.0
  %5129 = vmatpush.msra.mxu0 0.0
  %5130 = vmatpush.msra.mxu0 0.0
  %5131 = vmatpush.msra.mxu0 0.0
  %5132 = vmatpush.msra.mxu0 0.0
  %5133 = vmatpush.msra.mxu0 0.0
  %5134 = vmatpush.msra.mxu0 0.0
  %5135 = vmatpush.msra.mxu0 0.0
  %5136 = vmatpush.msra.mxu0 0.0
  %5137 = vmatpush.msra.mxu0 %v5125
  %5138 = vmatpush.msra.mxu0 %v5123
  %5139 = vmatpush.msra.mxu0 %v5121
  %5140 = vmatpush.msra.mxu0 %v5107
  %5141 = vmatpush.msra.mxu0 %v5105
  %5142 = vmatpush.msra.mxu0 %v5103
  %5143 = vmatmul.f32.gmra.mxu0 %v2026
  %v5144 = vpop.f32.mrf.mxu0
  %v5145 = vadd.f32 0.0, %v5144
  %5146 = vmatmul.f32.gmra.mxu0 %v2029
  %v5147 = vpop.f32.mrf.mxu0
  %v5148 = vadd.f32 0.0, %v5147
  %5149 = vdwg.mxu0
  %5150 = vmatpush.msra.mxu0 0.0
  %5151 = vmatpush.msra.mxu0 0.0
  %5152 = vmatpush.msra.mxu0 0.0
  %5153 = vmatpush.msra.mxu0 0.0
  %5154 = vmatpush.msra.mxu0 0.0
  %5155 = vmatpush.msra.mxu0 0.0
  %5156 = vmatpush.msra.mxu0 0.0
  %5157 = vmatpush.msra.mxu0 0.0
  %5158 = vmatpush.msra.mxu0 0.0
  %5159 = vmatpush.msra.mxu0 0.0
  %5160 = vmatpush.msra.mxu0 %v5126
  %5161 = vmatpush.msra.mxu0 %v5124
  %5162 = vmatpush.msra.mxu0 %v5122
  %5163 = vmatpush.msra.mxu0 %v5108
  %5164 = vmatpush.msra.mxu0 %v5106
  %5165 = vmatpush.msra.mxu0 %v5104
  %5166 = vmatmul.f32.gmra.mxu0 %v2026
  %v5167 = vpop.f32.mrf.mxu0
  %v5168 = vadd.f32 0.0, %v5167
  %5169 = vmatmul.f32.gmra.mxu0 %v2029
  %v5170 = vpop.f32.mrf.mxu0
  %v5171 = vadd.f32 0.0, %v5170
  %5172 = vdwg.mxu0
  %v5173 = vsel %vm269, %v5148, 0.0
  %v5174 = vsel %vm269, %v5171, 0.0
  %s5175 = scalar_lea.vmem %s12, 144
  %v5176 = vld [vmem:[%s5175] sm:$0xff]
  %v5177 = vld [vmem:[%s5175 + $0x8] sm:$0xff]
  %v5178 = vld [vmem:[%s5175 + $0x10] sm:$0xff]
  %v5179 = vld [vmem:[%s5175 + $0x18] sm:$0xff]
  %v5180 = vld [vmem:[%s5175 + $0x20] sm:$0xff]
  %v5181 = vld [vmem:[%s5175 + $0x28] sm:$0xff]
  %v5182 = vld [vmem:[%s5175 + $0x30] sm:$0xff]
  %v5183 = vld [vmem:[%s5175 + $0x38] sm:$0xff]
  %v5184 = vld [vmem:[%s5175 + $0x40] sm:$0xff]
  %v5185 = vld [vmem:[%s5175 + $0x48] sm:$0xff]
  %v5186 = vld [vmem:[%s5175 + $0x50] sm:$0xff]
  %v5187 = vld [vmem:[%s5175 + $0x58] sm:$0xff]
  %v5188 = vld [vmem:[%s5175 + $0x60] sm:$0xff]
  %v5189 = vld [vmem:[%s5175 + $0x68] sm:$0xff]
  %v5190 = vld [vmem:[%s5175 + $0x70] sm:$0xff]
  %v5191 = vld [vmem:[%s5175 + $0x78] sm:$0xff]
  %v5192 = vld [vmem:[%s5175 + $0x80] sm:$0xff]
  %v5193 = vld [vmem:[%s5175 + $0x88] sm:$0xff]
  %s5194 = scalar_lea.vmem %s13, 48
  %v5195 = vld [vmem:[%s5194] sm:$0xff]
  %v5196 = vld [vmem:[%s5194 + $0x8] sm:$0xff]
  %v5197 = vld [vmem:[%s5194 + $0x10] sm:$0xff]
  %v5198 = vld [vmem:[%s5194 + $0x18] sm:$0xff]
  %v5199 = vld [vmem:[%s5194 + $0x20] sm:$0xff]
  %v5200 = vld [vmem:[%s5194 + $0x28] sm:$0xff]
  %5201 = vrot.lane.b32.xlu0 %v3263, 17
  %v5202 = vpop.permute.xlu0 %5201
  %5203 = vrot.lane.b32.xlu0 %v3266, 17
  %v5204 = vpop.permute.xlu0 %5203
  %5205 = vrot.lane.b32.xlu0 %v3269, 17
  %v5206 = vpop.permute.xlu0 %5205
  %5207 = vrot.lane.b32.xlu0 %v5145, 17
  %v5208 = vpop.permute.xlu0 %5207
  %5209 = vrot.lane.b32.xlu0 %v5173, 17
  %v5210 = vpop.permute.xlu0 %5209
  %5211 = vrot.lane.b32.xlu0 %v3367, 17
  %v5212 = vpop.permute.xlu0 %5211
  %5213 = vrot.lane.b32.xlu0 %v3370, 17
  %v5214 = vpop.permute.xlu0 %5213
  %5215 = vrot.lane.b32.xlu0 %v3373, 17
  %v5216 = vpop.permute.xlu0 %5215
  %5217 = vrot.lane.b32.xlu0 %v5168, 17
  %v5218 = vpop.permute.xlu0 %5217
  %5219 = vrot.lane.b32.xlu0 %v5174, 17
  %v5220 = vpop.permute.xlu0 %5219
  %v5221 = vsel %vm2125, %v5202, %v5212
  %v5222 = vsel %vm2125, %v5204, %v5214
  %v5223 = vsel %vm2125, %v5206, %v5216
  %v5224 = vsel %vm2125, %v5208, %v5218
  %v5225 = vsel %vm2125, %v5210, %v5220
  %v5226 = vsel %vm2125, %v5212, %v5202
  %v5227 = vsel %vm2125, %v5214, %v5204
  %v5228 = vsel %vm2125, %v5216, %v5206
  %v5229 = vsel %vm2125, %v5218, %v5208
  %v5230 = vsel %vm2125, %v5220, %v5210
  %v5231 = vmul.f32 %v5226, %v2137
  %v5232 = vmul.f32 %v5221, %v2138
  %v5233 = vmul.f32 %v5227, %v2137
  %v5234 = vmul.f32 %v5222, %v2138
  %v5235 = vmul.f32 %v5228, %v2137
  %v5236 = vmul.f32 %v5223, %v2138
  %v5237 = vmul.f32 %v5229, %v2137
  %v5238 = vmul.f32 %v5224, %v2138
  %v5239 = vmul.f32 %v5230, %v2137
  %v5240 = vmul.f32 %v5225, %v2138
  %5241 = vrot.lane.b32.xlu0 %v3263, 16
  %v5242 = vpop.permute.xlu0 %5241
  %5243 = vrot.lane.b32.xlu0 %v3266, 16
  %v5244 = vpop.permute.xlu0 %5243
  %5245 = vrot.lane.b32.xlu0 %v3269, 16
  %v5246 = vpop.permute.xlu0 %5245
  %5247 = vrot.lane.b32.xlu0 %v5145, 16
  %v5248 = vpop.permute.xlu0 %5247
  %5249 = vrot.lane.b32.xlu0 %v5173, 16
  %v5250 = vpop.permute.xlu0 %5249
  %5251 = vrot.lane.b32.xlu0 %v3367, 16
  %v5252 = vpop.permute.xlu0 %5251
  %5253 = vrot.lane.b32.xlu0 %v3370, 16
  %v5254 = vpop.permute.xlu0 %5253
  %5255 = vrot.lane.b32.xlu0 %v3373, 16
  %v5256 = vpop.permute.xlu0 %5255
  %5257 = vrot.lane.b32.xlu0 %v5168, 16
  %v5258 = vpop.permute.xlu0 %5257
  %5259 = vrot.lane.b32.xlu0 %v5174, 16
  %v5260 = vpop.permute.xlu0 %5259
  %v5261 = vsel %vm2171, %v5242, %v5252
  %v5262 = vsel %vm2171, %v5244, %v5254
  %v5263 = vsel %vm2171, %v5246, %v5256
  %v5264 = vsel %vm2171, %v5248, %v5258
  %v5265 = vsel %vm2171, %v5250, %v5260
  %v5266 = vsel %vm2171, %v5252, %v5242
  %v5267 = vsel %vm2171, %v5254, %v5244
  %v5268 = vsel %vm2171, %v5256, %v5246
  %v5269 = vsel %vm2171, %v5258, %v5248
  %v5270 = vsel %vm2171, %v5260, %v5250
  %v5271 = vmul.f32 %v5266, %v2183
  %v5272 = vmul.f32 %v5261, %v2184
  %v5273 = vmul.f32 %v5267, %v2183
  %v5274 = vmul.f32 %v5262, %v2184
  %v5275 = vmul.f32 %v5268, %v2183
  %v5276 = vmul.f32 %v5263, %v2184
  %v5277 = vmul.f32 %v5269, %v2183
  %v5278 = vmul.f32 %v5264, %v2184
  %v5279 = vmul.f32 %v5270, %v2183
  %v5280 = vmul.f32 %v5265, %v2184
  %5281 = vrot.lane.b32.xlu0 %v3263, 15
  %v5282 = vpop.permute.xlu0 %5281
  %5283 = vrot.lane.b32.xlu0 %v3266, 15
  %v5284 = vpop.permute.xlu0 %5283
  %5285 = vrot.lane.b32.xlu0 %v3269, 15
  %v5286 = vpop.permute.xlu0 %5285
  %5287 = vrot.lane.b32.xlu0 %v5145, 15
  %v5288 = vpop.permute.xlu0 %5287
  %5289 = vrot.lane.b32.xlu0 %v5173, 15
  %v5290 = vpop.permute.xlu0 %5289
  %5291 = vrot.lane.b32.xlu0 %v3367, 15
  %v5292 = vpop.permute.xlu0 %5291
  %5293 = vrot.lane.b32.xlu0 %v3370, 15
  %v5294 = vpop.permute.xlu0 %5293
  %5295 = vrot.lane.b32.xlu0 %v3373, 15
  %v5296 = vpop.permute.xlu0 %5295
  %5297 = vrot.lane.b32.xlu0 %v5168, 15
  %v5298 = vpop.permute.xlu0 %5297
  %5299 = vrot.lane.b32.xlu0 %v5174, 15
  %v5300 = vpop.permute.xlu0 %5299
  %v5301 = vsel %vm2217, %v5282, %v5292
  %v5302 = vsel %vm2217, %v5284, %v5294
  %v5303 = vsel %vm2217, %v5286, %v5296
  %v5304 = vsel %vm2217, %v5288, %v5298
  %v5305 = vsel %vm2217, %v5290, %v5300
  %v5306 = vsel %vm2217, %v5292, %v5282
  %v5307 = vsel %vm2217, %v5294, %v5284
  %v5308 = vsel %vm2217, %v5296, %v5286
  %v5309 = vsel %vm2217, %v5298, %v5288
  %v5310 = vsel %vm2217, %v5300, %v5290
  %v5311 = vmul.f32 %v5306, %v2229
  %v5312 = vmul.f32 %v5301, %v2230
  %v5313 = vmul.f32 %v5307, %v2229
  %v5314 = vmul.f32 %v5302, %v2230
  %v5315 = vmul.f32 %v5308, %v2229
  %v5316 = vmul.f32 %v5303, %v2230
  %v5317 = vmul.f32 %v5309, %v2229
  %v5318 = vmul.f32 %v5304, %v2230
  %v5319 = vmul.f32 %v5310, %v2229
  %v5320 = vmul.f32 %v5305, %v2230
  %5321 = vrot.lane.b32.xlu0 %v3263, 1
  %v5322 = vpop.permute.xlu0 %5321
  %5323 = vrot.lane.b32.xlu0 %v3266, 1
  %v5324 = vpop.permute.xlu0 %5323
  %5325 = vrot.lane.b32.xlu0 %v3269, 1
  %v5326 = vpop.permute.xlu0 %5325
  %5327 = vrot.lane.b32.xlu0 %v5145, 1
  %v5328 = vpop.permute.xlu0 %5327
  %5329 = vrot.lane.b32.xlu0 %v5173, 1
  %v5330 = vpop.permute.xlu0 %5329
  %5331 = vrot.lane.b32.xlu0 %v3367, 1
  %v5332 = vpop.permute.xlu0 %5331
  %5333 = vrot.lane.b32.xlu0 %v3370, 1
  %v5334 = vpop.permute.xlu0 %5333
  %5335 = vrot.lane.b32.xlu0 %v3373, 1
  %v5336 = vpop.permute.xlu0 %5335
  %5337 = vrot.lane.b32.xlu0 %v5168, 1
  %v5338 = vpop.permute.xlu0 %5337
  %5339 = vrot.lane.b32.xlu0 %v5174, 1
  %v5340 = vpop.permute.xlu0 %5339
  %v5341 = vsel %vm2263, %v5322, %v5332
  %v5342 = vsel %vm2263, %v5324, %v5334
  %v5343 = vsel %vm2263, %v5326, %v5336
  %v5344 = vsel %vm2263, %v5328, %v5338
  %v5345 = vsel %vm2263, %v5330, %v5340
  %v5346 = vsel %vm2263, %v5332, %v5322
  %v5347 = vsel %vm2263, %v5334, %v5324
  %v5348 = vsel %vm2263, %v5336, %v5326
  %v5349 = vsel %vm2263, %v5338, %v5328
  %v5350 = vsel %vm2263, %v5340, %v5330
  %v5351 = vmul.f32 %v5346, %v2275
  %v5352 = vmul.f32 %v5341, %v2276
  %v5353 = vmul.f32 %v5347, %v2275
  %v5354 = vmul.f32 %v5342, %v2276
  %v5355 = vmul.f32 %v5348, %v2275
  %v5356 = vmul.f32 %v5343, %v2276
  %v5357 = vmul.f32 %v5349, %v2275
  %v5358 = vmul.f32 %v5344, %v2276
  %v5359 = vmul.f32 %v5350, %v2275
  %v5360 = vmul.f32 %v5345, %v2276
  %5361 = vrot.lane.b32.xlu0 %v3263, 127
  %v5362 = vpop.permute.xlu0 %5361
  %5363 = vrot.lane.b32.xlu0 %v3266, 127
  %v5364 = vpop.permute.xlu0 %5363
  %5365 = vrot.lane.b32.xlu0 %v3269, 127
  %v5366 = vpop.permute.xlu0 %5365
  %5367 = vrot.lane.b32.xlu0 %v5145, 127
  %v5368 = vpop.permute.xlu0 %5367
  %5369 = vrot.lane.b32.xlu0 %v5173, 127
  %v5370 = vpop.permute.xlu0 %5369
  %5371 = vrot.lane.b32.xlu0 %v3367, 127
  %v5372 = vpop.permute.xlu0 %5371
  %5373 = vrot.lane.b32.xlu0 %v3370, 127
  %v5374 = vpop.permute.xlu0 %5373
  %5375 = vrot.lane.b32.xlu0 %v3373, 127
  %v5376 = vpop.permute.xlu0 %5375
  %5377 = vrot.lane.b32.xlu0 %v5168, 127
  %v5378 = vpop.permute.xlu0 %5377
  %5379 = vrot.lane.b32.xlu0 %v5174, 127
  %v5380 = vpop.permute.xlu0 %5379
  %v5381 = vsel %vm2309, %v5362, %v5372
  %v5382 = vsel %vm2309, %v5364, %v5374
  %v5383 = vsel %vm2309, %v5366, %v5376
  %v5384 = vsel %vm2309, %v5368, %v5378
  %v5385 = vsel %vm2309, %v5370, %v5380
  %v5386 = vsel %vm2309, %v5372, %v5362
  %v5387 = vsel %vm2309, %v5374, %v5364
  %v5388 = vsel %vm2309, %v5376, %v5366
  %v5389 = vsel %vm2309, %v5378, %v5368
  %v5390 = vsel %vm2309, %v5380, %v5370
  %v5391 = vmul.f32 %v5381, %v2321
  %v5392 = vmul.f32 %v5386, %v2322
  %v5393 = vmul.f32 %v5382, %v2321
  %v5394 = vmul.f32 %v5387, %v2322
  %v5395 = vmul.f32 %v5383, %v2321
  %v5396 = vmul.f32 %v5388, %v2322
  %v5397 = vmul.f32 %v5384, %v2321
  %v5398 = vmul.f32 %v5389, %v2322
  %v5399 = vmul.f32 %v5385, %v2321
  %v5400 = vmul.f32 %v5390, %v2322
  %5401 = vrot.lane.b32.xlu0 %v3263, 113
  %v5402 = vpop.permute.xlu0 %5401
  %5403 = vrot.lane.b32.xlu0 %v3266, 113
  %v5404 = vpop.permute.xlu0 %5403
  %5405 = vrot.lane.b32.xlu0 %v3269, 113
  %v5406 = vpop.permute.xlu0 %5405
  %5407 = vrot.lane.b32.xlu0 %v5145, 113
  %v5408 = vpop.permute.xlu0 %5407
  %5409 = vrot.lane.b32.xlu0 %v5173, 113
  %v5410 = vpop.permute.xlu0 %5409
  %5411 = vrot.lane.b32.xlu0 %v3367, 113
  %v5412 = vpop.permute.xlu0 %5411
  %5413 = vrot.lane.b32.xlu0 %v3370, 113
  %v5414 = vpop.permute.xlu0 %5413
  %5415 = vrot.lane.b32.xlu0 %v3373, 113
  %v5416 = vpop.permute.xlu0 %5415
  %5417 = vrot.lane.b32.xlu0 %v5168, 113
  %v5418 = vpop.permute.xlu0 %5417
  %5419 = vrot.lane.b32.xlu0 %v5174, 113
  %v5420 = vpop.permute.xlu0 %5419
  %v5421 = vsel %vm2355, %v5402, %v5412
  %v5422 = vsel %vm2355, %v5404, %v5414
  %v5423 = vsel %vm2355, %v5406, %v5416
  %v5424 = vsel %vm2355, %v5408, %v5418
  %v5425 = vsel %vm2355, %v5410, %v5420
  %v5426 = vsel %vm2355, %v5412, %v5402
  %v5427 = vsel %vm2355, %v5414, %v5404
  %v5428 = vsel %vm2355, %v5416, %v5406
  %v5429 = vsel %vm2355, %v5418, %v5408
  %v5430 = vsel %vm2355, %v5420, %v5410
  %v5431 = vmul.f32 %v5421, %v2367
  %v5432 = vmul.f32 %v5426, %v2368
  %v5433 = vmul.f32 %v5422, %v2367
  %v5434 = vmul.f32 %v5427, %v2368
  %v5435 = vmul.f32 %v5423, %v2367
  %v5436 = vmul.f32 %v5428, %v2368
  %v5437 = vmul.f32 %v5424, %v2367
  %v5438 = vmul.f32 %v5429, %v2368
  %v5439 = vmul.f32 %v5425, %v2367
  %v5440 = vmul.f32 %v5430, %v2368
  %5441 = vrot.lane.b32.xlu0 %v3263, 112
  %v5442 = vpop.permute.xlu0 %5441
  %5443 = vrot.lane.b32.xlu0 %v3266, 112
  %v5444 = vpop.permute.xlu0 %5443
  %5445 = vrot.lane.b32.xlu0 %v3269, 112
  %v5446 = vpop.permute.xlu0 %5445
  %5447 = vrot.lane.b32.xlu0 %v5145, 112
  %v5448 = vpop.permute.xlu0 %5447
  %5449 = vrot.lane.b32.xlu0 %v5173, 112
  %v5450 = vpop.permute.xlu0 %5449
  %5451 = vrot.lane.b32.xlu0 %v3367, 112
  %v5452 = vpop.permute.xlu0 %5451
  %5453 = vrot.lane.b32.xlu0 %v3370, 112
  %v5454 = vpop.permute.xlu0 %5453
  %5455 = vrot.lane.b32.xlu0 %v3373, 112
  %v5456 = vpop.permute.xlu0 %5455
  %5457 = vrot.lane.b32.xlu0 %v5168, 112
  %v5458 = vpop.permute.xlu0 %5457
  %5459 = vrot.lane.b32.xlu0 %v5174, 112
  %v5460 = vpop.permute.xlu0 %5459
  %v5461 = vsel %vm2401, %v5442, %v5452
  %v5462 = vsel %vm2401, %v5444, %v5454
  %v5463 = vsel %vm2401, %v5446, %v5456
  %v5464 = vsel %vm2401, %v5448, %v5458
  %v5465 = vsel %vm2401, %v5450, %v5460
  %v5466 = vsel %vm2401, %v5452, %v5442
  %v5467 = vsel %vm2401, %v5454, %v5444
  %v5468 = vsel %vm2401, %v5456, %v5446
  %v5469 = vsel %vm2401, %v5458, %v5448
  %v5470 = vsel %vm2401, %v5460, %v5450
  %v5471 = vmul.f32 %v5461, %v2413
  %v5472 = vmul.f32 %v5466, %v2414
  %v5473 = vmul.f32 %v5462, %v2413
  %v5474 = vmul.f32 %v5467, %v2414
  %v5475 = vmul.f32 %v5463, %v2413
  %v5476 = vmul.f32 %v5468, %v2414
  %v5477 = vmul.f32 %v5464, %v2413
  %v5478 = vmul.f32 %v5469, %v2414
  %v5479 = vmul.f32 %v5465, %v2413
  %v5480 = vmul.f32 %v5470, %v2414
  %5481 = vrot.lane.b32.xlu0 %v3263, 111
  %v5482 = vpop.permute.xlu0 %5481
  %5483 = vrot.lane.b32.xlu0 %v3266, 111
  %v5484 = vpop.permute.xlu0 %5483
  %5485 = vrot.lane.b32.xlu0 %v3269, 111
  %v5486 = vpop.permute.xlu0 %5485
  %5487 = vrot.lane.b32.xlu0 %v5145, 111
  %v5488 = vpop.permute.xlu0 %5487
  %5489 = vrot.lane.b32.xlu0 %v5173, 111
  %v5490 = vpop.permute.xlu0 %5489
  %5491 = vrot.lane.b32.xlu0 %v3367, 111
  %v5492 = vpop.permute.xlu0 %5491
  %5493 = vrot.lane.b32.xlu0 %v3370, 111
  %v5494 = vpop.permute.xlu0 %5493
  %5495 = vrot.lane.b32.xlu0 %v3373, 111
  %v5496 = vpop.permute.xlu0 %5495
  %5497 = vrot.lane.b32.xlu0 %v5168, 111
  %v5498 = vpop.permute.xlu0 %5497
  %5499 = vrot.lane.b32.xlu0 %v5174, 111
  %v5500 = vpop.permute.xlu0 %5499
  %v5501 = vsel %vm2447, %v5482, %v5492
  %v5502 = vsel %vm2447, %v5484, %v5494
  %v5503 = vsel %vm2447, %v5486, %v5496
  %v5504 = vsel %vm2447, %v5488, %v5498
  %v5505 = vsel %vm2447, %v5490, %v5500
  %v5506 = vsel %vm2447, %v5492, %v5482
  %v5507 = vsel %vm2447, %v5494, %v5484
  %v5508 = vsel %vm2447, %v5496, %v5486
  %v5509 = vsel %vm2447, %v5498, %v5488
  %v5510 = vsel %vm2447, %v5500, %v5490
  %v5511 = vmul.f32 %v5501, %v2459
  %v5512 = vmul.f32 %v5506, %v2460
  %v5513 = vmul.f32 %v5502, %v2459
  %v5514 = vmul.f32 %v5507, %v2460
  %v5515 = vmul.f32 %v5503, %v2459
  %v5516 = vmul.f32 %v5508, %v2460
  %v5517 = vmul.f32 %v5504, %v2459
  %v5518 = vmul.f32 %v5509, %v2460
  %v5519 = vmul.f32 %v5505, %v2459
  %v5520 = vmul.f32 %v5510, %v2460
  %5522 = vset.pattern.permute.xlu0 0
  %5523 = vperm.xlu0 %5522, %v5195
  %v5524 = vpop.permute.xlu0 %5523
  %5527 = vset.pattern.permute.xlu0 0
  %5528 = vperm.xlu0 %5527, %v5196
  %v5529 = vpop.permute.xlu0 %5528
  %5532 = vset.pattern.permute.xlu0 0
  %5533 = vperm.xlu0 %5532, %v5197
  %v5534 = vpop.permute.xlu0 %5533
  %5537 = vset.pattern.permute.xlu0 0
  %5538 = vperm.xlu0 %5537, %v5198
  %v5539 = vpop.permute.xlu0 %5538
  %5542 = vset.pattern.permute.xlu0 0
  %5543 = vperm.xlu0 %5542, %v5199
  %v5544 = vpop.permute.xlu0 %5543
  %5547 = vset.pattern.permute.xlu0 0
  %5548 = vperm.xlu0 %5547, %v5200
  %v5549 = vpop.permute.xlu0 %5548
  %v5552 = vsel %vm2503, %v5178, 0
  %v5555 = vsel %vm2503, %v5181, 0
  %v5558 = vsel %vm2503, %v5184, 0
  %v5561 = vsel %vm2503, %v5187, 0
  %v5564 = vsel %vm2503, %v5190, 0
  %v5567 = vsel %vm2503, %v5193, 0
  %5569 = vmatpush.msra.mxu0 %v5351
  %5570 = vmatpush.msra.mxu0 %v5319
  %5571 = vmatpush.msra.mxu0 %v5317
  %5572 = vmatpush.msra.mxu0 %v5315
  %5573 = vmatpush.msra.mxu0 %v5313
  %5574 = vmatpush.msra.mxu0 %v5311
  %5575 = vmatpush.msra.mxu0 %v5279
  %5576 = vmatpush.msra.mxu0 %v5277
  %5577 = vmatpush.msra.mxu0 %v5275
  %5578 = vmatpush.msra.mxu0 %v5273
  %5579 = vmatpush.msra.mxu0 %v5271
  %5580 = vmatpush.msra.mxu0 %v5239
  %5581 = vmatpush.msra.mxu0 %v5237
  %5582 = vmatpush.msra.mxu0 %v5235
  %5583 = vmatpush.msra.mxu0 %v5233
  %5584 = vmatpush.msra.mxu0 %v5231
  %5585 = vmatmul.f32.gmra.mxu0 %v5176
  %v5586 = vpop.f32.mrf.mxu0
  %v5587 = vadd.f32 %v5524, %v5586
  %5588 = vmatmul.f32.gmra.mxu0 %v5179
  %v5589 = vpop.f32.mrf.mxu0
  %v5590 = vadd.f32 %v5529, %v5589
  %5591 = vmatmul.f32.gmra.mxu0 %v5182
  %v5592 = vpop.f32.mrf.mxu0
  %v5593 = vadd.f32 %v5534, %v5592
  %5594 = vmatmul.f32.gmra.mxu0 %v5185
  %v5595 = vpop.f32.mrf.mxu0
  %v5596 = vadd.f32 %v5539, %v5595
  %5597 = vmatmul.f32.gmra.mxu0 %v5188
  %v5598 = vpop.f32.mrf.mxu0
  %v5599 = vadd.f32 %v5544, %v5598
  %5600 = vmatmul.f32.gmra.mxu0 %v5191
  %v5601 = vpop.f32.mrf.mxu0
  %v5602 = vadd.f32 %v5549, %v5601
  %5603 = vdwg.mxu0
  %5604 = vmatpush.msra.mxu0 %v5433
  %5605 = vmatpush.msra.mxu0 %v5431
  %5606 = vmatpush.msra.mxu0 %v5399
  %5607 = vmatpush.msra.mxu0 %v5397
  %5608 = vmatpush.msra.mxu0 %v5395
  %5609 = vmatpush.msra.mxu0 %v5393
  %5610 = vmatpush.msra.mxu0 %v5391
  %5611 = vmatpush.msra.mxu0 %v5173
  %5612 = vmatpush.msra.mxu0 %v5145
  %5613 = vmatpush.msra.mxu0 %v3269
  %5614 = vmatpush.msra.mxu0 %v3266
  %5615 = vmatpush.msra.mxu0 %v3263
  %5616 = vmatpush.msra.mxu0 %v5359
  %5617 = vmatpush.msra.mxu0 %v5357
  %5618 = vmatpush.msra.mxu0 %v5355
  %5619 = vmatpush.msra.mxu0 %v5353
  %5620 = vmatmul.f32.gmra.mxu0 %v5177
  %v5621 = vpop.f32.mrf.mxu0
  %v5622 = vadd.f32 %v5587, %v5621
  %5623 = vmatmul.f32.gmra.mxu0 %v5180
  %v5624 = vpop.f32.mrf.mxu0
  %v5625 = vadd.f32 %v5590, %v5624
  %5626 = vmatmul.f32.gmra.mxu0 %v5183
  %v5627 = vpop.f32.mrf.mxu0
  %v5628 = vadd.f32 %v5593, %v5627
  %5629 = vmatmul.f32.gmra.mxu0 %v5186
  %v5630 = vpop.f32.mrf.mxu0
  %v5631 = vadd.f32 %v5596, %v5630
  %5632 = vmatmul.f32.gmra.mxu0 %v5189
  %v5633 = vpop.f32.mrf.mxu0
  %v5634 = vadd.f32 %v5599, %v5633
  %5635 = vmatmul.f32.gmra.mxu0 %v5192
  %v5636 = vpop.f32.mrf.mxu0
  %v5637 = vadd.f32 %v5602, %v5636
  %5638 = vdwg.mxu0
  %5639 = vmatpush.msra.mxu0 0.0
  %5640 = vmatpush.msra.mxu0 0.0
  %5641 = vmatpush.msra.mxu0 0.0
  %5642 = vmatpush.msra.mxu0 %v5519
  %5643 = vmatpush.msra.mxu0 %v5517
  %5644 = vmatpush.msra.mxu0 %v5515
  %5645 = vmatpush.msra.mxu0 %v5513
  %5646 = vmatpush.msra.mxu0 %v5511
  %5647 = vmatpush.msra.mxu0 %v5479
  %5648 = vmatpush.msra.mxu0 %v5477
  %5649 = vmatpush.msra.mxu0 %v5475
  %5650 = vmatpush.msra.mxu0 %v5473
  %5651 = vmatpush.msra.mxu0 %v5471
  %5652 = vmatpush.msra.mxu0 %v5439
  %5653 = vmatpush.msra.mxu0 %v5437
  %5654 = vmatpush.msra.mxu0 %v5435
  %5655 = vmatmul.f32.gmra.mxu0 %v5552
  %v5656 = vpop.f32.mrf.mxu0
  %v5657 = vadd.f32 %v5622, %v5656
  %5658 = vmatmul.f32.gmra.mxu0 %v5555
  %v5659 = vpop.f32.mrf.mxu0
  %v5660 = vadd.f32 %v5625, %v5659
  %5661 = vmatmul.f32.gmra.mxu0 %v5558
  %v5662 = vpop.f32.mrf.mxu0
  %v5663 = vadd.f32 %v5628, %v5662
  %5664 = vmatmul.f32.gmra.mxu0 %v5561
  %v5665 = vpop.f32.mrf.mxu0
  %v5666 = vadd.f32 %v5631, %v5665
  %5667 = vmatmul.f32.gmra.mxu0 %v5564
  %v5668 = vpop.f32.mrf.mxu0
  %v5669 = vadd.f32 %v5634, %v5668
  %5670 = vmatmul.f32.gmra.mxu0 %v5567
  %v5671 = vpop.f32.mrf.mxu0
  %v5672 = vadd.f32 %v5637, %v5671
  %5673 = vdwg.mxu0
  %5674 = vmatpush.msra.mxu0 %v5352
  %5675 = vmatpush.msra.mxu0 %v5320
  %5676 = vmatpush.msra.mxu0 %v5318
  %5677 = vmatpush.msra.mxu0 %v5316
  %5678 = vmatpush.msra.mxu0 %v5314
  %5679 = vmatpush.msra.mxu0 %v5312
  %5680 = vmatpush.msra.mxu0 %v5280
  %5681 = vmatpush.msra.mxu0 %v5278
  %5682 = vmatpush.msra.mxu0 %v5276
  %5683 = vmatpush.msra.mxu0 %v5274
  %5684 = vmatpush.msra.mxu0 %v5272
  %5685 = vmatpush.msra.mxu0 %v5240
  %5686 = vmatpush.msra.mxu0 %v5238
  %5687 = vmatpush.msra.mxu0 %v5236
  %5688 = vmatpush.msra.mxu0 %v5234
  %5689 = vmatpush.msra.mxu0 %v5232
  %5690 = vmatmul.f32.gmra.mxu0 %v5176
  %v5691 = vpop.f32.mrf.mxu0
  %v5692 = vadd.f32 %v5524, %v5691
  %5693 = vmatmul.f32.gmra.mxu0 %v5179
  %v5694 = vpop.f32.mrf.mxu0
  %v5695 = vadd.f32 %v5529, %v5694
  %5696 = vmatmul.f32.gmra.mxu0 %v5182
  %v5697 = vpop.f32.mrf.mxu0
  %v5698 = vadd.f32 %v5534, %v5697
  %5699 = vmatmul.f32.gmra.mxu0 %v5185
  %v5700 = vpop.f32.mrf.mxu0
  %v5701 = vadd.f32 %v5539, %v5700
  %5702 = vmatmul.f32.gmra.mxu0 %v5188
  %v5703 = vpop.f32.mrf.mxu0
  %v5704 = vadd.f32 %v5544, %v5703
  %5705 = vmatmul.f32.gmra.mxu0 %v5191
  %v5706 = vpop.f32.mrf.mxu0
  %v5707 = vadd.f32 %v5549, %v5706
  %5708 = vdwg.mxu0
  %5709 = vmatpush.msra.mxu0 %v5434
  %5710 = vmatpush.msra.mxu0 %v5432
  %5711 = vmatpush.msra.mxu0 %v5400
  %5712 = vmatpush.msra.mxu0 %v5398
  %5713 = vmatpush.msra.mxu0 %v5396
  %5714 = vmatpush.msra.mxu0 %v5394
  %5715 = vmatpush.msra.mxu0 %v5392
  %5716 = vmatpush.msra.mxu0 %v5174
  %5717 = vmatpush.msra.mxu0 %v5168
  %5718 = vmatpush.msra.mxu0 %v3373
  %5719 = vmatpush.msra.mxu0 %v3370
  %5720 = vmatpush.msra.mxu0 %v3367
  %5721 = vmatpush.msra.mxu0 %v5360
  %5722 = vmatpush.msra.mxu0 %v5358
  %5723 = vmatpush.msra.mxu0 %v5356
  %5724 = vmatpush.msra.mxu0 %v5354
  %5725 = vmatmul.f32.gmra.mxu0 %v5177
  %v5726 = vpop.f32.mrf.mxu0
  %v5727 = vadd.f32 %v5692, %v5726
  %5728 = vmatmul.f32.gmra.mxu0 %v5180
  %v5729 = vpop.f32.mrf.mxu0
  %v5730 = vadd.f32 %v5695, %v5729
  %5731 = vmatmul.f32.gmra.mxu0 %v5183
  %v5732 = vpop.f32.mrf.mxu0
  %v5733 = vadd.f32 %v5698, %v5732
  %5734 = vmatmul.f32.gmra.mxu0 %v5186
  %v5735 = vpop.f32.mrf.mxu0
  %v5736 = vadd.f32 %v5701, %v5735
  %5737 = vmatmul.f32.gmra.mxu0 %v5189
  %v5738 = vpop.f32.mrf.mxu0
  %v5739 = vadd.f32 %v5704, %v5738
  %5740 = vmatmul.f32.gmra.mxu0 %v5192
  %v5741 = vpop.f32.mrf.mxu0
  %v5742 = vadd.f32 %v5707, %v5741
  %5743 = vdwg.mxu0
  %5744 = vmatpush.msra.mxu0 0.0
  %5745 = vmatpush.msra.mxu0 0.0
  %5746 = vmatpush.msra.mxu0 0.0
  %5747 = vmatpush.msra.mxu0 %v5520
  %5748 = vmatpush.msra.mxu0 %v5518
  %5749 = vmatpush.msra.mxu0 %v5516
  %5750 = vmatpush.msra.mxu0 %v5514
  %5751 = vmatpush.msra.mxu0 %v5512
  %5752 = vmatpush.msra.mxu0 %v5480
  %5753 = vmatpush.msra.mxu0 %v5478
  %5754 = vmatpush.msra.mxu0 %v5476
  %5755 = vmatpush.msra.mxu0 %v5474
  %5756 = vmatpush.msra.mxu0 %v5472
  %5757 = vmatpush.msra.mxu0 %v5440
  %5758 = vmatpush.msra.mxu0 %v5438
  %5759 = vmatpush.msra.mxu0 %v5436
  %5760 = vmatmul.f32.gmra.mxu0 %v5552
  %v5761 = vpop.f32.mrf.mxu0
  %v5762 = vadd.f32 %v5727, %v5761
  %5763 = vmatmul.f32.gmra.mxu0 %v5555
  %v5764 = vpop.f32.mrf.mxu0
  %v5765 = vadd.f32 %v5730, %v5764
  %5766 = vmatmul.f32.gmra.mxu0 %v5558
  %v5767 = vpop.f32.mrf.mxu0
  %v5768 = vadd.f32 %v5733, %v5767
  %5769 = vmatmul.f32.gmra.mxu0 %v5561
  %v5770 = vpop.f32.mrf.mxu0
  %v5771 = vadd.f32 %v5736, %v5770
  %5772 = vmatmul.f32.gmra.mxu0 %v5564
  %v5773 = vpop.f32.mrf.mxu0
  %v5774 = vadd.f32 %v5739, %v5773
  %5775 = vmatmul.f32.gmra.mxu0 %v5567
  %v5776 = vpop.f32.mrf.mxu0
  %v5777 = vadd.f32 %v5742, %v5776
  %5778 = vdwg.mxu0
  %v5779 = vmax.f32 %v5657, 0.0
  %v5780 = vmax.f32 %v5762, 0.0
  %v5781 = vmax.f32 %v5660, 0.0
  %v5782 = vmax.f32 %v5765, 0.0
  %v5783 = vmax.f32 %v5663, 0.0
  %v5784 = vmax.f32 %v5768, 0.0
  %v5785 = vmax.f32 %v5666, 0.0
  %v5786 = vmax.f32 %v5771, 0.0
  %v5787 = vmax.f32 %v5669, 0.0
  %v5788 = vmax.f32 %v5774, 0.0
  %v5789 = vmax.f32 %v5672, 0.0
  %v5790 = vmax.f32 %v5777, 0.0
  %s5791 = scalar_lea.vmem %s14, 96
  %v5792 = vld [vmem:[%s5791] sm:$0xff]
  %v5793 = vld [vmem:[%s5791 + $0x8] sm:$0xff]
  %v5794 = vld [vmem:[%s5791 + $0x10] sm:$0xff]
  %v5795 = vld [vmem:[%s5791 + $0x18] sm:$0xff]
  %v5796 = vld [vmem:[%s5791 + $0x20] sm:$0xff]
  %v5797 = vld [vmem:[%s5791 + $0x28] sm:$0xff]
  %v5798 = vld [vmem:[%s5791 + $0x30] sm:$0xff]
  %v5799 = vld [vmem:[%s5791 + $0x38] sm:$0xff]
  %v5800 = vld [vmem:[%s5791 + $0x40] sm:$0xff]
  %v5801 = vld [vmem:[%s5791 + $0x48] sm:$0xff]
  %v5802 = vld [vmem:[%s5791 + $0x50] sm:$0xff]
  %v5803 = vld [vmem:[%s5791 + $0x58] sm:$0xff]
  %s5804 = scalar_lea.vmem %s15, 24
  %v5805 = vld [vmem:[%s5804] sm:$0xff]
  %v5806 = vld [vmem:[%s5804 + $0x8] sm:$0xff]
  %v5807 = vld [vmem:[%s5804 + $0x10] sm:$0xff]
  %5808 = vrot.lane.b32.xlu0 %v5779, 17
  %v5809 = vpop.permute.xlu0 %5808
  %5810 = vrot.lane.b32.xlu0 %v5781, 17
  %v5811 = vpop.permute.xlu0 %5810
  %5812 = vrot.lane.b32.xlu0 %v5783, 17
  %v5813 = vpop.permute.xlu0 %5812
  %5814 = vrot.lane.b32.xlu0 %v5785, 17
  %v5815 = vpop.permute.xlu0 %5814
  %5816 = vrot.lane.b32.xlu0 %v5787, 17
  %v5817 = vpop.permute.xlu0 %5816
  %5818 = vrot.lane.b32.xlu0 %v5789, 17
  %v5819 = vpop.permute.xlu0 %5818
  %5820 = vrot.lane.b32.xlu0 %v5780, 17
  %v5821 = vpop.permute.xlu0 %5820
  %5822 = vrot.lane.b32.xlu0 %v5782, 17
  %v5823 = vpop.permute.xlu0 %5822
  %5824 = vrot.lane.b32.xlu0 %v5784, 17
  %v5825 = vpop.permute.xlu0 %5824
  %5826 = vrot.lane.b32.xlu0 %v5786, 17
  %v5827 = vpop.permute.xlu0 %5826
  %5828 = vrot.lane.b32.xlu0 %v5788, 17
  %v5829 = vpop.permute.xlu0 %5828
  %5830 = vrot.lane.b32.xlu0 %v5790, 17
  %v5831 = vpop.permute.xlu0 %5830
  %v5832 = vsel %vm2125, %v5809, %v5821
  %v5833 = vsel %vm2125, %v5811, %v5823
  %v5834 = vsel %vm2125, %v5813, %v5825
  %v5835 = vsel %vm2125, %v5815, %v5827
  %v5836 = vsel %vm2125, %v5817, %v5829
  %v5837 = vsel %vm2125, %v5819, %v5831
  %v5838 = vsel %vm2125, %v5821, %v5809
  %v5839 = vsel %vm2125, %v5823, %v5811
  %v5840 = vsel %vm2125, %v5825, %v5813
  %v5841 = vsel %vm2125, %v5827, %v5815
  %v5842 = vsel %vm2125, %v5829, %v5817
  %v5843 = vsel %vm2125, %v5831, %v5819
  %v5844 = vmul.f32 %v5838, %v2137
  %v5845 = vmul.f32 %v5832, %v2138
  %v5846 = vmul.f32 %v5839, %v2137
  %v5847 = vmul.f32 %v5833, %v2138
  %v5848 = vmul.f32 %v5840, %v2137
  %v5849 = vmul.f32 %v5834, %v2138
  %v5850 = vmul.f32 %v5841, %v2137
  %v5851 = vmul.f32 %v5835, %v2138
  %v5852 = vmul.f32 %v5842, %v2137
  %v5853 = vmul.f32 %v5836, %v2138
  %v5854 = vmul.f32 %v5843, %v2137
  %v5855 = vmul.f32 %v5837, %v2138
  %5856 = vrot.lane.b32.xlu0 %v5779, 16
  %v5857 = vpop.permute.xlu0 %5856
  %5858 = vrot.lane.b32.xlu0 %v5781, 16
  %v5859 = vpop.permute.xlu0 %5858
  %5860 = vrot.lane.b32.xlu0 %v5783, 16
  %v5861 = vpop.permute.xlu0 %5860
  %5862 = vrot.lane.b32.xlu0 %v5785, 16
  %v5863 = vpop.permute.xlu0 %5862
  %5864 = vrot.lane.b32.xlu0 %v5787, 16
  %v5865 = vpop.permute.xlu0 %5864
  %5866 = vrot.lane.b32.xlu0 %v5789, 16
  %v5867 = vpop.permute.xlu0 %5866
  %5868 = vrot.lane.b32.xlu0 %v5780, 16
  %v5869 = vpop.permute.xlu0 %5868
  %5870 = vrot.lane.b32.xlu0 %v5782, 16
  %v5871 = vpop.permute.xlu0 %5870
  %5872 = vrot.lane.b32.xlu0 %v5784, 16
  %v5873 = vpop.permute.xlu0 %5872
  %5874 = vrot.lane.b32.xlu0 %v5786, 16
  %v5875 = vpop.permute.xlu0 %5874
  %5876 = vrot.lane.b32.xlu0 %v5788, 16
  %v5877 = vpop.permute.xlu0 %5876
  %5878 = vrot.lane.b32.xlu0 %v5790, 16
  %v5879 = vpop.permute.xlu0 %5878
  %v5880 = vsel %vm2171, %v5857, %v5869
  %v5881 = vsel %vm2171, %v5859, %v5871
  %v5882 = vsel %vm2171, %v5861, %v5873
  %v5883 = vsel %vm2171, %v5863, %v5875
  %v5884 = vsel %vm2171, %v5865, %v5877
  %v5885 = vsel %vm2171, %v5867, %v5879
  %v5886 = vsel %vm2171, %v5869, %v5857
  %v5887 = vsel %vm2171, %v5871, %v5859
  %v5888 = vsel %vm2171, %v5873, %v5861
  %v5889 = vsel %vm2171, %v5875, %v5863
  %v5890 = vsel %vm2171, %v5877, %v5865
  %v5891 = vsel %vm2171, %v5879, %v5867
  %v5892 = vmul.f32 %v5886, %v2183
  %v5893 = vmul.f32 %v5880, %v2184
  %v5894 = vmul.f32 %v5887, %v2183
  %v5895 = vmul.f32 %v5881, %v2184
  %v5896 = vmul.f32 %v5888, %v2183
  %v5897 = vmul.f32 %v5882, %v2184
  %v5898 = vmul.f32 %v5889, %v2183
  %v5899 = vmul.f32 %v5883, %v2184
  %v5900 = vmul.f32 %v5890, %v2183
  %v5901 = vmul.f32 %v5884, %v2184
  %v5902 = vmul.f32 %v5891, %v2183
  %v5903 = vmul.f32 %v5885, %v2184
  %5904 = vrot.lane.b32.xlu0 %v5779, 15
  %v5905 = vpop.permute.xlu0 %5904
  %5906 = vrot.lane.b32.xlu0 %v5781, 15
  %v5907 = vpop.permute.xlu0 %5906
  %5908 = vrot.lane.b32.xlu0 %v5783, 15
  %v5909 = vpop.permute.xlu0 %5908
  %5910 = vrot.lane.b32.xlu0 %v5785, 15
  %v5911 = vpop.permute.xlu0 %5910
  %5912 = vrot.lane.b32.xlu0 %v5787, 15
  %v5913 = vpop.permute.xlu0 %5912
  %5914 = vrot.lane.b32.xlu0 %v5789, 15
  %v5915 = vpop.permute.xlu0 %5914
  %5916 = vrot.lane.b32.xlu0 %v5780, 15
  %v5917 = vpop.permute.xlu0 %5916
  %5918 = vrot.lane.b32.xlu0 %v5782, 15
  %v5919 = vpop.permute.xlu0 %5918
  %5920 = vrot.lane.b32.xlu0 %v5784, 15
  %v5921 = vpop.permute.xlu0 %5920
  %5922 = vrot.lane.b32.xlu0 %v5786, 15
  %v5923 = vpop.permute.xlu0 %5922
  %5924 = vrot.lane.b32.xlu0 %v5788, 15
  %v5925 = vpop.permute.xlu0 %5924
  %5926 = vrot.lane.b32.xlu0 %v5790, 15
  %v5927 = vpop.permute.xlu0 %5926
  %v5928 = vsel %vm2217, %v5905, %v5917
  %v5929 = vsel %vm2217, %v5907, %v5919
  %v5930 = vsel %vm2217, %v5909, %v5921
  %v5931 = vsel %vm2217, %v5911, %v5923
  %v5932 = vsel %vm2217, %v5913, %v5925
  %v5933 = vsel %vm2217, %v5915, %v5927
  %v5934 = vsel %vm2217, %v5917, %v5905
  %v5935 = vsel %vm2217, %v5919, %v5907
  %v5936 = vsel %vm2217, %v5921, %v5909
  %v5937 = vsel %vm2217, %v5923, %v5911
  %v5938 = vsel %vm2217, %v5925, %v5913
  %v5939 = vsel %vm2217, %v5927, %v5915
  %v5940 = vmul.f32 %v5934, %v2229
  %v5941 = vmul.f32 %v5928, %v2230
  %v5942 = vmul.f32 %v5935, %v2229
  %v5943 = vmul.f32 %v5929, %v2230
  %v5944 = vmul.f32 %v5936, %v2229
  %v5945 = vmul.f32 %v5930, %v2230
  %v5946 = vmul.f32 %v5937, %v2229
  %v5947 = vmul.f32 %v5931, %v2230
  %v5948 = vmul.f32 %v5938, %v2229
  %v5949 = vmul.f32 %v5932, %v2230
  %v5950 = vmul.f32 %v5939, %v2229
  %v5951 = vmul.f32 %v5933, %v2230
  %5952 = vrot.lane.b32.xlu0 %v5779, 1
  %v5953 = vpop.permute.xlu0 %5952
  %5954 = vrot.lane.b32.xlu0 %v5781, 1
  %v5955 = vpop.permute.xlu0 %5954
  %5956 = vrot.lane.b32.xlu0 %v5783, 1
  %v5957 = vpop.permute.xlu0 %5956
  %5958 = vrot.lane.b32.xlu0 %v5785, 1
  %v5959 = vpop.permute.xlu0 %5958
  %5960 = vrot.lane.b32.xlu0 %v5787, 1
  %v5961 = vpop.permute.xlu0 %5960
  %5962 = vrot.lane.b32.xlu0 %v5789, 1
  %v5963 = vpop.permute.xlu0 %5962
  %5964 = vrot.lane.b32.xlu0 %v5780, 1
  %v5965 = vpop.permute.xlu0 %5964
  %5966 = vrot.lane.b32.xlu0 %v5782, 1
  %v5967 = vpop.permute.xlu0 %5966
  %5968 = vrot.lane.b32.xlu0 %v5784, 1
  %v5969 = vpop.permute.xlu0 %5968
  %5970 = vrot.lane.b32.xlu0 %v5786, 1
  %v5971 = vpop.permute.xlu0 %5970
  %5972 = vrot.lane.b32.xlu0 %v5788, 1
  %v5973 = vpop.permute.xlu0 %5972
  %5974 = vrot.lane.b32.xlu0 %v5790, 1
  %v5975 = vpop.permute.xlu0 %5974
  %v5976 = vsel %vm2263, %v5953, %v5965
  %v5977 = vsel %vm2263, %v5955, %v5967
  %v5978 = vsel %vm2263, %v5957, %v5969
  %v5979 = vsel %vm2263, %v5959, %v5971
  %v5980 = vsel %vm2263, %v5961, %v5973
  %v5981 = vsel %vm2263, %v5963, %v5975
  %v5982 = vsel %vm2263, %v5965, %v5953
  %v5983 = vsel %vm2263, %v5967, %v5955
  %v5984 = vsel %vm2263, %v5969, %v5957
  %v5985 = vsel %vm2263, %v5971, %v5959
  %v5986 = vsel %vm2263, %v5973, %v5961
  %v5987 = vsel %vm2263, %v5975, %v5963
  %v5988 = vmul.f32 %v5982, %v2275
  %v5989 = vmul.f32 %v5976, %v2276
  %v5990 = vmul.f32 %v5983, %v2275
  %v5991 = vmul.f32 %v5977, %v2276
  %v5992 = vmul.f32 %v5984, %v2275
  %v5993 = vmul.f32 %v5978, %v2276
  %v5994 = vmul.f32 %v5985, %v2275
  %v5995 = vmul.f32 %v5979, %v2276
  %v5996 = vmul.f32 %v5986, %v2275
  %v5997 = vmul.f32 %v5980, %v2276
  %v5998 = vmul.f32 %v5987, %v2275
  %v5999 = vmul.f32 %v5981, %v2276
  %6000 = vrot.lane.b32.xlu0 %v5779, 127
  %v6001 = vpop.permute.xlu0 %6000
  %6002 = vrot.lane.b32.xlu0 %v5781, 127
  %v6003 = vpop.permute.xlu0 %6002
  %6004 = vrot.lane.b32.xlu0 %v5783, 127
  %v6005 = vpop.permute.xlu0 %6004
  %6006 = vrot.lane.b32.xlu0 %v5785, 127
  %v6007 = vpop.permute.xlu0 %6006
  %6008 = vrot.lane.b32.xlu0 %v5787, 127
  %v6009 = vpop.permute.xlu0 %6008
  %6010 = vrot.lane.b32.xlu0 %v5789, 127
  %v6011 = vpop.permute.xlu0 %6010
  %6012 = vrot.lane.b32.xlu0 %v5780, 127
  %v6013 = vpop.permute.xlu0 %6012
  %6014 = vrot.lane.b32.xlu0 %v5782, 127
  %v6015 = vpop.permute.xlu0 %6014
  %6016 = vrot.lane.b32.xlu0 %v5784, 127
  %v6017 = vpop.permute.xlu0 %6016
  %6018 = vrot.lane.b32.xlu0 %v5786, 127
  %v6019 = vpop.permute.xlu0 %6018
  %6020 = vrot.lane.b32.xlu0 %v5788, 127
  %v6021 = vpop.permute.xlu0 %6020
  %6022 = vrot.lane.b32.xlu0 %v5790, 127
  %v6023 = vpop.permute.xlu0 %6022
  %v6024 = vsel %vm2309, %v6001, %v6013
  %v6025 = vsel %vm2309, %v6003, %v6015
  %v6026 = vsel %vm2309, %v6005, %v6017
  %v6027 = vsel %vm2309, %v6007, %v6019
  %v6028 = vsel %vm2309, %v6009, %v6021
  %v6029 = vsel %vm2309, %v6011, %v6023
  %v6030 = vsel %vm2309, %v6013, %v6001
  %v6031 = vsel %vm2309, %v6015, %v6003
  %v6032 = vsel %vm2309, %v6017, %v6005
  %v6033 = vsel %vm2309, %v6019, %v6007
  %v6034 = vsel %vm2309, %v6021, %v6009
  %v6035 = vsel %vm2309, %v6023, %v6011
  %v6036 = vmul.f32 %v6024, %v2321
  %v6037 = vmul.f32 %v6030, %v2322
  %v6038 = vmul.f32 %v6025, %v2321
  %v6039 = vmul.f32 %v6031, %v2322
  %v6040 = vmul.f32 %v6026, %v2321
  %v6041 = vmul.f32 %v6032, %v2322
  %v6042 = vmul.f32 %v6027, %v2321
  %v6043 = vmul.f32 %v6033, %v2322
  %v6044 = vmul.f32 %v6028, %v2321
  %v6045 = vmul.f32 %v6034, %v2322
  %v6046 = vmul.f32 %v6029, %v2321
  %v6047 = vmul.f32 %v6035, %v2322
  %6048 = vrot.lane.b32.xlu0 %v5779, 113
  %v6049 = vpop.permute.xlu0 %6048
  %6050 = vrot.lane.b32.xlu0 %v5781, 113
  %v6051 = vpop.permute.xlu0 %6050
  %6052 = vrot.lane.b32.xlu0 %v5783, 113
  %v6053 = vpop.permute.xlu0 %6052
  %6054 = vrot.lane.b32.xlu0 %v5785, 113
  %v6055 = vpop.permute.xlu0 %6054
  %6056 = vrot.lane.b32.xlu0 %v5787, 113
  %v6057 = vpop.permute.xlu0 %6056
  %6058 = vrot.lane.b32.xlu0 %v5789, 113
  %v6059 = vpop.permute.xlu0 %6058
  %6060 = vrot.lane.b32.xlu0 %v5780, 113
  %v6061 = vpop.permute.xlu0 %6060
  %6062 = vrot.lane.b32.xlu0 %v5782, 113
  %v6063 = vpop.permute.xlu0 %6062
  %6064 = vrot.lane.b32.xlu0 %v5784, 113
  %v6065 = vpop.permute.xlu0 %6064
  %6066 = vrot.lane.b32.xlu0 %v5786, 113
  %v6067 = vpop.permute.xlu0 %6066
  %6068 = vrot.lane.b32.xlu0 %v5788, 113
  %v6069 = vpop.permute.xlu0 %6068
  %6070 = vrot.lane.b32.xlu0 %v5790, 113
  %v6071 = vpop.permute.xlu0 %6070
  %v6072 = vsel %vm2355, %v6049, %v6061
  %v6073 = vsel %vm2355, %v6051, %v6063
  %v6074 = vsel %vm2355, %v6053, %v6065
  %v6075 = vsel %vm2355, %v6055, %v6067
  %v6076 = vsel %vm2355, %v6057, %v6069
  %v6077 = vsel %vm2355, %v6059, %v6071
  %v6078 = vsel %vm2355, %v6061, %v6049
  %v6079 = vsel %vm2355, %v6063, %v6051
  %v6080 = vsel %vm2355, %v6065, %v6053
  %v6081 = vsel %vm2355, %v6067, %v6055
  %v6082 = vsel %vm2355, %v6069, %v6057
  %v6083 = vsel %vm2355, %v6071, %v6059
  %v6084 = vmul.f32 %v6072, %v2367
  %v6085 = vmul.f32 %v6078, %v2368
  %v6086 = vmul.f32 %v6073, %v2367
  %v6087 = vmul.f32 %v6079, %v2368
  %v6088 = vmul.f32 %v6074, %v2367
  %v6089 = vmul.f32 %v6080, %v2368
  %v6090 = vmul.f32 %v6075, %v2367
  %v6091 = vmul.f32 %v6081, %v2368
  %v6092 = vmul.f32 %v6076, %v2367
  %v6093 = vmul.f32 %v6082, %v2368
  %v6094 = vmul.f32 %v6077, %v2367
  %v6095 = vmul.f32 %v6083, %v2368
  %6096 = vrot.lane.b32.xlu0 %v5779, 112
  %v6097 = vpop.permute.xlu0 %6096
  %6098 = vrot.lane.b32.xlu0 %v5781, 112
  %v6099 = vpop.permute.xlu0 %6098
  %6100 = vrot.lane.b32.xlu0 %v5783, 112
  %v6101 = vpop.permute.xlu0 %6100
  %6102 = vrot.lane.b32.xlu0 %v5785, 112
  %v6103 = vpop.permute.xlu0 %6102
  %6104 = vrot.lane.b32.xlu0 %v5787, 112
  %v6105 = vpop.permute.xlu0 %6104
  %6106 = vrot.lane.b32.xlu0 %v5789, 112
  %v6107 = vpop.permute.xlu0 %6106
  %6108 = vrot.lane.b32.xlu0 %v5780, 112
  %v6109 = vpop.permute.xlu0 %6108
  %6110 = vrot.lane.b32.xlu0 %v5782, 112
  %v6111 = vpop.permute.xlu0 %6110
  %6112 = vrot.lane.b32.xlu0 %v5784, 112
  %v6113 = vpop.permute.xlu0 %6112
  %6114 = vrot.lane.b32.xlu0 %v5786, 112
  %v6115 = vpop.permute.xlu0 %6114
  %6116 = vrot.lane.b32.xlu0 %v5788, 112
  %v6117 = vpop.permute.xlu0 %6116
  %6118 = vrot.lane.b32.xlu0 %v5790, 112
  %v6119 = vpop.permute.xlu0 %6118
  %v6120 = vsel %vm2401, %v6097, %v6109
  %v6121 = vsel %vm2401, %v6099, %v6111
  %v6122 = vsel %vm2401, %v6101, %v6113
  %v6123 = vsel %vm2401, %v6103, %v6115
  %v6124 = vsel %vm2401, %v6105, %v6117
  %v6125 = vsel %vm2401, %v6107, %v6119
  %v6126 = vsel %vm2401, %v6109, %v6097
  %v6127 = vsel %vm2401, %v6111, %v6099
  %v6128 = vsel %vm2401, %v6113, %v6101
  %v6129 = vsel %vm2401, %v6115, %v6103
  %v6130 = vsel %vm2401, %v6117, %v6105
  %v6131 = vsel %vm2401, %v6119, %v6107
  %v6132 = vmul.f32 %v6120, %v2413
  %v6133 = vmul.f32 %v6126, %v2414
  %v6134 = vmul.f32 %v6121, %v2413
  %v6135 = vmul.f32 %v6127, %v2414
  %v6136 = vmul.f32 %v6122, %v2413
  %v6137 = vmul.f32 %v6128, %v2414
  %v6138 = vmul.f32 %v6123, %v2413
  %v6139 = vmul.f32 %v6129, %v2414
  %v6140 = vmul.f32 %v6124, %v2413
  %v6141 = vmul.f32 %v6130, %v2414
  %v6142 = vmul.f32 %v6125, %v2413
  %v6143 = vmul.f32 %v6131, %v2414
  %6144 = vrot.lane.b32.xlu0 %v5779, 111
  %v6145 = vpop.permute.xlu0 %6144
  %6146 = vrot.lane.b32.xlu0 %v5781, 111
  %v6147 = vpop.permute.xlu0 %6146
  %6148 = vrot.lane.b32.xlu0 %v5783, 111
  %v6149 = vpop.permute.xlu0 %6148
  %6150 = vrot.lane.b32.xlu0 %v5785, 111
  %v6151 = vpop.permute.xlu0 %6150
  %6152 = vrot.lane.b32.xlu0 %v5787, 111
  %v6153 = vpop.permute.xlu0 %6152
  %6154 = vrot.lane.b32.xlu0 %v5789, 111
  %v6155 = vpop.permute.xlu0 %6154
  %6156 = vrot.lane.b32.xlu0 %v5780, 111
  %v6157 = vpop.permute.xlu0 %6156
  %6158 = vrot.lane.b32.xlu0 %v5782, 111
  %v6159 = vpop.permute.xlu0 %6158
  %6160 = vrot.lane.b32.xlu0 %v5784, 111
  %v6161 = vpop.permute.xlu0 %6160
  %6162 = vrot.lane.b32.xlu0 %v5786, 111
  %v6163 = vpop.permute.xlu0 %6162
  %6164 = vrot.lane.b32.xlu0 %v5788, 111
  %v6165 = vpop.permute.xlu0 %6164
  %6166 = vrot.lane.b32.xlu0 %v5790, 111
  %v6167 = vpop.permute.xlu0 %6166
  %v6168 = vsel %vm2447, %v6145, %v6157
  %v6169 = vsel %vm2447, %v6147, %v6159
  %v6170 = vsel %vm2447, %v6149, %v6161
  %v6171 = vsel %vm2447, %v6151, %v6163
  %v6172 = vsel %vm2447, %v6153, %v6165
  %v6173 = vsel %vm2447, %v6155, %v6167
  %v6174 = vsel %vm2447, %v6157, %v6145
  %v6175 = vsel %vm2447, %v6159, %v6147
  %v6176 = vsel %vm2447, %v6161, %v6149
  %v6177 = vsel %vm2447, %v6163, %v6151
  %v6178 = vsel %vm2447, %v6165, %v6153
  %v6179 = vsel %vm2447, %v6167, %v6155
  %v6180 = vmul.f32 %v6168, %v2459
  %v6181 = vmul.f32 %v6174, %v2460
  %v6182 = vmul.f32 %v6169, %v2459
  %v6183 = vmul.f32 %v6175, %v2460
  %v6184 = vmul.f32 %v6170, %v2459
  %v6185 = vmul.f32 %v6176, %v2460
  %v6186 = vmul.f32 %v6171, %v2459
  %v6187 = vmul.f32 %v6177, %v2460
  %v6188 = vmul.f32 %v6172, %v2459
  %v6189 = vmul.f32 %v6178, %v2460
  %v6190 = vmul.f32 %v6173, %v2459
  %v6191 = vmul.f32 %v6179, %v2460
  %6193 = vset.pattern.permute.xlu0 0
  %6194 = vperm.xlu0 %6193, %v5805
  %v6195 = vpop.permute.xlu0 %6194
  %6198 = vset.pattern.permute.xlu0 0
  %6199 = vperm.xlu0 %6198, %v5806
  %v6200 = vpop.permute.xlu0 %6199
  %6203 = vset.pattern.permute.xlu0 0
  %6204 = vperm.xlu0 %6203, %v5807
  %v6205 = vpop.permute.xlu0 %6204
  %v6208 = vsel %vm2024, %v5795, 0
  %v6211 = vsel %vm2024, %v5799, 0
  %v6214 = vsel %vm2024, %v5803, 0
  %6216 = vmatpush.msra.mxu0 %v5946
  %6217 = vmatpush.msra.mxu0 %v5944
  %6218 = vmatpush.msra.mxu0 %v5942
  %6219 = vmatpush.msra.mxu0 %v5940
  %6220 = vmatpush.msra.mxu0 %v5902
  %6221 = vmatpush.msra.mxu0 %v5900
  %6222 = vmatpush.msra.mxu0 %v5898
  %6223 = vmatpush.msra.mxu0 %v5896
  %6224 = vmatpush.msra.mxu0 %v5894
  %6225 = vmatpush.msra.mxu0 %v5892
  %6226 = vmatpush.msra.mxu0 %v5854
  %6227 = vmatpush.msra.mxu0 %v5852
  %6228 = vmatpush.msra.mxu0 %v5850
  %6229 = vmatpush.msra.mxu0 %v5848
  %6230 = vmatpush.msra.mxu0 %v5846
  %6231 = vmatpush.msra.mxu0 %v5844
  %6232 = vmatmul.f32.gmra.mxu0 %v5792
  %v6233 = vpop.f32.mrf.mxu0
  %v6234 = vadd.f32 %v6195, %v6233
  %6235 = vmatmul.f32.gmra.mxu0 %v5796
  %v6236 = vpop.f32.mrf.mxu0
  %v6237 = vadd.f32 %v6200, %v6236
  %6238 = vmatmul.f32.gmra.mxu0 %v5800
  %v6239 = vpop.f32.mrf.mxu0
  %v6240 = vadd.f32 %v6205, %v6239
  %6241 = vdwg.mxu0
  %6242 = vmatpush.msra.mxu0 %v6038
  %6243 = vmatpush.msra.mxu0 %v6036
  %6244 = vmatpush.msra.mxu0 %v5789
  %6245 = vmatpush.msra.mxu0 %v5787
  %6246 = vmatpush.msra.mxu0 %v5785
  %6247 = vmatpush.msra.mxu0 %v5783
  %6248 = vmatpush.msra.mxu0 %v5781
  %6249 = vmatpush.msra.mxu0 %v5779
  %6250 = vmatpush.msra.mxu0 %v5998
  %6251 = vmatpush.msra.mxu0 %v5996
  %6252 = vmatpush.msra.mxu0 %v5994
  %6253 = vmatpush.msra.mxu0 %v5992
  %6254 = vmatpush.msra.mxu0 %v5990
  %6255 = vmatpush.msra.mxu0 %v5988
  %6256 = vmatpush.msra.mxu0 %v5950
  %6257 = vmatpush.msra.mxu0 %v5948
  %6258 = vmatmul.f32.gmra.mxu0 %v5793
  %v6259 = vpop.f32.mrf.mxu0
  %v6260 = vadd.f32 %v6234, %v6259
  %6261 = vmatmul.f32.gmra.mxu0 %v5797
  %v6262 = vpop.f32.mrf.mxu0
  %v6263 = vadd.f32 %v6237, %v6262
  %6264 = vmatmul.f32.gmra.mxu0 %v5801
  %v6265 = vpop.f32.mrf.mxu0
  %v6266 = vadd.f32 %v6240, %v6265
  %6267 = vdwg.mxu0
  %6268 = vmatpush.msra.mxu0 %v6142
  %6269 = vmatpush.msra.mxu0 %v6140
  %6270 = vmatpush.msra.mxu0 %v6138
  %6271 = vmatpush.msra.mxu0 %v6136
  %6272 = vmatpush.msra.mxu0 %v6134
  %6273 = vmatpush.msra.mxu0 %v6132
  %6274 = vmatpush.msra.mxu0 %v6094
  %6275 = vmatpush.msra.mxu0 %v6092
  %6276 = vmatpush.msra.mxu0 %v6090
  %6277 = vmatpush.msra.mxu0 %v6088
  %6278 = vmatpush.msra.mxu0 %v6086
  %6279 = vmatpush.msra.mxu0 %v6084
  %6280 = vmatpush.msra.mxu0 %v6046
  %6281 = vmatpush.msra.mxu0 %v6044
  %6282 = vmatpush.msra.mxu0 %v6042
  %6283 = vmatpush.msra.mxu0 %v6040
  %6284 = vmatmul.f32.gmra.mxu0 %v5794
  %v6285 = vpop.f32.mrf.mxu0
  %v6286 = vadd.f32 %v6260, %v6285
  %6287 = vmatmul.f32.gmra.mxu0 %v5798
  %v6288 = vpop.f32.mrf.mxu0
  %v6289 = vadd.f32 %v6263, %v6288
  %6290 = vmatmul.f32.gmra.mxu0 %v5802
  %v6291 = vpop.f32.mrf.mxu0
  %v6292 = vadd.f32 %v6266, %v6291
  %6293 = vdwg.mxu0
  %6294 = vmatpush.msra.mxu0 0.0
  %6295 = vmatpush.msra.mxu0 0.0
  %6296 = vmatpush.msra.mxu0 0.0
  %6297 = vmatpush.msra.mxu0 0.0
  %6298 = vmatpush.msra.mxu0 0.0
  %6299 = vmatpush.msra.mxu0 0.0
  %6300 = vmatpush.msra.mxu0 0.0
  %6301 = vmatpush.msra.mxu0 0.0
  %6302 = vmatpush.msra.mxu0 0.0
  %6303 = vmatpush.msra.mxu0 0.0
  %6304 = vmatpush.msra.mxu0 %v6190
  %6305 = vmatpush.msra.mxu0 %v6188
  %6306 = vmatpush.msra.mxu0 %v6186
  %6307 = vmatpush.msra.mxu0 %v6184
  %6308 = vmatpush.msra.mxu0 %v6182
  %6309 = vmatpush.msra.mxu0 %v6180
  %6310 = vmatmul.f32.gmra.mxu0 %v6208
  %v6311 = vpop.f32.mrf.mxu0
  %v6312 = vadd.f32 %v6286, %v6311
  %6313 = vmatmul.f32.gmra.mxu0 %v6211
  %v6314 = vpop.f32.mrf.mxu0
  %v6315 = vadd.f32 %v6289, %v6314
  %6316 = vmatmul.f32.gmra.mxu0 %v6214
  %v6317 = vpop.f32.mrf.mxu0
  %v6318 = vadd.f32 %v6292, %v6317
  %6319 = vdwg.mxu0
  %6320 = vmatpush.msra.mxu0 %v5947
  %6321 = vmatpush.msra.mxu0 %v5945
  %6322 = vmatpush.msra.mxu0 %v5943
  %6323 = vmatpush.msra.mxu0 %v5941
  %6324 = vmatpush.msra.mxu0 %v5903
  %6325 = vmatpush.msra.mxu0 %v5901
  %6326 = vmatpush.msra.mxu0 %v5899
  %6327 = vmatpush.msra.mxu0 %v5897
  %6328 = vmatpush.msra.mxu0 %v5895
  %6329 = vmatpush.msra.mxu0 %v5893
  %6330 = vmatpush.msra.mxu0 %v5855
  %6331 = vmatpush.msra.mxu0 %v5853
  %6332 = vmatpush.msra.mxu0 %v5851
  %6333 = vmatpush.msra.mxu0 %v5849
  %6334 = vmatpush.msra.mxu0 %v5847
  %6335 = vmatpush.msra.mxu0 %v5845
  %6336 = vmatmul.f32.gmra.mxu0 %v5792
  %v6337 = vpop.f32.mrf.mxu0
  %v6338 = vadd.f32 %v6195, %v6337
  %6339 = vmatmul.f32.gmra.mxu0 %v5796
  %v6340 = vpop.f32.mrf.mxu0
  %v6341 = vadd.f32 %v6200, %v6340
  %6342 = vmatmul.f32.gmra.mxu0 %v5800
  %v6343 = vpop.f32.mrf.mxu0
  %v6344 = vadd.f32 %v6205, %v6343
  %6345 = vdwg.mxu0
  %6346 = vmatpush.msra.mxu0 %v6039
  %6347 = vmatpush.msra.mxu0 %v6037
  %6348 = vmatpush.msra.mxu0 %v5790
  %6349 = vmatpush.msra.mxu0 %v5788
  %6350 = vmatpush.msra.mxu0 %v5786
  %6351 = vmatpush.msra.mxu0 %v5784
  %6352 = vmatpush.msra.mxu0 %v5782
  %6353 = vmatpush.msra.mxu0 %v5780
  %6354 = vmatpush.msra.mxu0 %v5999
  %6355 = vmatpush.msra.mxu0 %v5997
  %6356 = vmatpush.msra.mxu0 %v5995
  %6357 = vmatpush.msra.mxu0 %v5993
  %6358 = vmatpush.msra.mxu0 %v5991
  %6359 = vmatpush.msra.mxu0 %v5989
  %6360 = vmatpush.msra.mxu0 %v5951
  %6361 = vmatpush.msra.mxu0 %v5949
  %6362 = vmatmul.f32.gmra.mxu0 %v5793
  %v6363 = vpop.f32.mrf.mxu0
  %v6364 = vadd.f32 %v6338, %v6363
  %6365 = vmatmul.f32.gmra.mxu0 %v5797
  %v6366 = vpop.f32.mrf.mxu0
  %v6367 = vadd.f32 %v6341, %v6366
  %6368 = vmatmul.f32.gmra.mxu0 %v5801
  %v6369 = vpop.f32.mrf.mxu0
  %v6370 = vadd.f32 %v6344, %v6369
  %6371 = vdwg.mxu0
  %6372 = vmatpush.msra.mxu0 %v6143
  %6373 = vmatpush.msra.mxu0 %v6141
  %6374 = vmatpush.msra.mxu0 %v6139
  %6375 = vmatpush.msra.mxu0 %v6137
  %6376 = vmatpush.msra.mxu0 %v6135
  %6377 = vmatpush.msra.mxu0 %v6133
  %6378 = vmatpush.msra.mxu0 %v6095
  %6379 = vmatpush.msra.mxu0 %v6093
  %6380 = vmatpush.msra.mxu0 %v6091
  %6381 = vmatpush.msra.mxu0 %v6089
  %6382 = vmatpush.msra.mxu0 %v6087
  %6383 = vmatpush.msra.mxu0 %v6085
  %6384 = vmatpush.msra.mxu0 %v6047
  %6385 = vmatpush.msra.mxu0 %v6045
  %6386 = vmatpush.msra.mxu0 %v6043
  %6387 = vmatpush.msra.mxu0 %v6041
  %6388 = vmatmul.f32.gmra.mxu0 %v5794
  %v6389 = vpop.f32.mrf.mxu0
  %v6390 = vadd.f32 %v6364, %v6389
  %6391 = vmatmul.f32.gmra.mxu0 %v5798
  %v6392 = vpop.f32.mrf.mxu0
  %v6393 = vadd.f32 %v6367, %v6392
  %6394 = vmatmul.f32.gmra.mxu0 %v5802
  %v6395 = vpop.f32.mrf.mxu0
  %v6396 = vadd.f32 %v6370, %v6395
  %6397 = vdwg.mxu0
  %6398 = vmatpush.msra.mxu0 0.0
  %6399 = vmatpush.msra.mxu0 0.0
  %6400 = vmatpush.msra.mxu0 0.0
  %6401 = vmatpush.msra.mxu0 0.0
  %6402 = vmatpush.msra.mxu0 0.0
  %6403 = vmatpush.msra.mxu0 0.0
  %6404 = vmatpush.msra.mxu0 0.0
  %6405 = vmatpush.msra.mxu0 0.0
  %6406 = vmatpush.msra.mxu0 0.0
  %6407 = vmatpush.msra.mxu0 0.0
  %6408 = vmatpush.msra.mxu0 %v6191
  %6409 = vmatpush.msra.mxu0 %v6189
  %6410 = vmatpush.msra.mxu0 %v6187
  %6411 = vmatpush.msra.mxu0 %v6185
  %6412 = vmatpush.msra.mxu0 %v6183
  %6413 = vmatpush.msra.mxu0 %v6181
  %6414 = vmatmul.f32.gmra.mxu0 %v6208
  %v6415 = vpop.f32.mrf.mxu0
  %v6416 = vadd.f32 %v6390, %v6415
  %6417 = vmatmul.f32.gmra.mxu0 %v6211
  %v6418 = vpop.f32.mrf.mxu0
  %v6419 = vadd.f32 %v6393, %v6418
  %6420 = vmatmul.f32.gmra.mxu0 %v6214
  %v6421 = vpop.f32.mrf.mxu0
  %v6422 = vadd.f32 %v6396, %v6421
  %6423 = vdwg.mxu0
  %6424 = vst [vmem:[%s17] sm:$0xff] %v6312
  %6425 = vst [vmem:[%s17 + $0x8] sm:$0xff] %v6416
  %6426 = vst [vmem:[%s17 + $0x10] sm:$0xff] %v6315
  %6427 = vst [vmem:[%s17 + $0x18] sm:$0xff] %v6419
  %6428 = vst [vmem:[%s17 + $0x20] sm:$0xff] %v6318
  %6429 = vst [vmem:[%s17 + $0x28] sm:$0xff] %v6422
  %6430 = vst [vmem:[%s18] sm:$0xff] %v4646
  %6431 = vst [vmem:[%s18 + $0x8] sm:$0xff] %v4752
  %6432 = vst [vmem:[%s18 + $0x10] sm:$0xff] %v4649
  %6433 = vst [vmem:[%s18 + $0x18] sm:$0xff] %v4755
  %6434 = vst [vmem:[%s18 + $0x20] sm:$0xff] %v4652
  %6435 = vst [vmem:[%s18 + $0x28] sm:$0xff] %v4758
  %6436 = vst [vmem:[%s18 + $0x30] sm:$0xff] %v4655
  %6437 = vst [vmem:[%s18 + $0x38] sm:$0xff] %v4761
  %6438 = vst [vmem:[%s18 + $0x40] sm:$0xff] %v4658
  %6439 = vst [vmem:[%s18 + $0x48] sm:$0xff] %v4764
  %6440 = vst [vmem:[%s18 + $0x50] sm:$0xff] %v4661
  %6441 = vst [vmem:[%s18 + $0x58] sm:$0xff] %v4767
  %6442 = vst [vmem:[%s18 + $0x60] sm:$0xff] %v4664
  %6443 = vst [vmem:[%s18 + $0x68] sm:$0xff] %v4770
  %6444 = vst [vmem:[%s18 + $0x70] sm:$0xff] %v4667
  %6445 = vst [vmem:[%s18 + $0x78] sm:$0xff] %v4773
  %6446 = vst [vmem:[%s18 + $0x80] sm:$0xff] %v4670
  %6447 = vst [vmem:[%s18 + $0x88] sm:$0xff] %v4776
  %6448 = vst [vmem:[%s18 + $0x90] sm:$0xff] %v4673
  %6449 = vst [vmem:[%s18 + $0x98] sm:$0xff] %v4779
  %6450 = vst [vmem:[%s18 + $0xa0] sm:$0xff] %v4676
  %6451 = vst [vmem:[%s18 + $0xa8] sm:$0xff] %v4782
  %6452 = vst [vmem:[%s18 + $0xb0] sm:$0xff] %v4679
  %6453 = vst [vmem:[%s18 + $0xb8] sm:$0xff] %v4785
  // Predicated region
  $region70: #{xpdnet_forward_all_unrolls.1} parent=0 // pred_check
    _
  $region71: #{xpdnet_forward_all_unrolls.1} parent=0 // pred_check_branch
    %6455 = sbr.rel (0) target = $region73
  $region72: #{xpdnet_forward_all_unrolls.1} parent=0 // pred_region
    _
  $region73: #{xpdnet_forward_all_unrolls.1} parent=0 // pred_fallthru
    _
  // Predicated region
  $region74: #{xpdnet_forward_all_unrolls.1} parent=0 // pred_check
    _
  $region75: #{xpdnet_forward_all_unrolls.1} parent=0 // pred_check_branch
    %6457 = sbr.rel (0) target = $region77
  $region76: #{xpdnet_forward_all_unrolls.1} parent=0 // pred_region
    _
  $region77: #{xpdnet_forward_all_unrolls.1} parent=0 // pred_fallthru
    _
  // Predicated region
  $region78: #{xpdnet_forward_all_unrolls.1} parent=0 // pred_check
    _
  $region79: #{xpdnet_forward_all_unrolls.1} parent=0 // pred_check_branch
    %6459 = sbr.rel (0) target = $region81
  $region80: #{xpdnet_forward_all_unrolls.1} parent=0 // pred_region
    _
  $region81: #{xpdnet_forward_all_unrolls.1} parent=0 // pred_fallthru
    _
  // Predicated region
  $region82: #{xpdnet_forward_all_unrolls.1} parent=0 // pred_check
    _
  $region83: #{xpdnet_forward_all_unrolls.1} parent=0 // pred_check_branch
    %6461 = sbr.rel (0) target = $region85
  $region84: #{xpdnet_forward_all_unrolls.1} parent=0 // pred_region
    _
  $region85: #{xpdnet_forward_all_unrolls.1} parent=0 // pred_fallthru
    _

</llo_original>
